<compile_context>
chip_gen: v5e
topology: v5e:2x2
jax: 0.10.0
libtpu: 0.0.40
codegen_flags: <defaults>
</compile_context>

<pallas_src>
import math
import functools

import jax
import jax.numpy as jnp
from jax.experimental import pallas as pl
from jax.experimental.pallas import tpu as pltpu


# ---------------------------------------------------------------------------
# Config (small, consistent with the module: hidden_size divisible by num_heads)
# ---------------------------------------------------------------------------
HIDDEN = 32
NUM_HEADS = 4
HEAD_DIM = HIDDEN // NUM_HEADS
NUM_LAYERS = 2
PATCHES = 8          # tokens per modality; total tokens = 2 * PATCHES
BATCH = 4
BATCH_TILE = 2       # samples per grid step (fills exposed MXU/EUP/XLU latency)
LN_EPS = 1e-6


# ---------------------------------------------------------------------------
# Fused Encoder kernel: one grid step == BATCH_TILE samples' full forward.
# ---------------------------------------------------------------------------
def _encoder_kernel(x_ref, wqkv_ref, bqkv_ref, wo_ref, bo_ref,
                    lng_ref, lnb_ref, encg_ref, encb_ref, o_ref, x_sc,
                    *, num_layers, num_heads, head_dim, hidden, patches):
    H = hidden
    bt = x_ref.shape[0]                                   # samples per step

    def layer_norm(v, g, b):
        # v: (..., H); g, b: (1, H). Biased variance, matching torch.nn.LayerNorm.
        mu = jnp.mean(v, axis=-1, keepdims=True)
        var = jnp.mean((v - mu) ** 2, axis=-1, keepdims=True)
        return (v - mu) * jax.lax.rsqrt(var + LN_EPS) * g + b

    def project(xn, w, b):
        # xn: (bt, Nt, H) f32; w: (H, out) bf16; b: (1, out) f32.
        # One matmul over all bt*Nt tokens (bf16 operands, f32 accumulation).
        nt = xn.shape[1]
        y = jnp.dot(xn.reshape(bt * nt, H).astype(jnp.bfloat16), w,
                    preferred_element_type=jnp.float32) + b
        return y.reshape(bt, nt, w.shape[-1])

    def mha(q, k, v, wo, bo):
        # q: (bt, Nq, H) f32 -- already scaled by 1/sqrt(head_dim) (folded into Q
        # weights). k, v: (bt, Nk, H); wo: (H, H) bf16; bo: (1, H) f32.
        nq = q.shape[1]
        ctx_heads = []
        for h in range(num_heads):                        # static unrolled head loop
            lo = h * head_dim
            hi = lo + head_dim
            qh = q[:, :, lo:hi].astype(jnp.bfloat16)      # (bt, Nq, hd)
            kh = k[:, :, lo:hi].astype(jnp.bfloat16)      # (bt, Nk, hd)
            vh = v[:, :, lo:hi].astype(jnp.bfloat16)      # (bt, Nk, hd)
            # Sample-batched scores without transposing K (contract trailing dims).
            s = jnp.einsum('bqd,bkd->bqk', qh, kh,
                           preferred_element_type=jnp.float32)       # (bt, Nq, Nk)
            s = s - jnp.max(s, axis=-1, keepdims=True)
            e = jnp.exp(s)
            p = e / jnp.sum(e, axis=-1, keepdims=True)    # exact softmax (f32)
            ctx_heads.append(
                jnp.einsum('bqk,bkd->bqd', p.astype(jnp.bfloat16), vh,
                           preferred_element_type=jnp.float32))      # (bt, Nq, hd)
        # Single fused out-projection over all heads and samples (no K=8 matmuls).
        ctx = jnp.concatenate(ctx_heads, axis=-1)         # (bt, Nq, H)
        out = jnp.dot(ctx.reshape(bt * nq, H).astype(jnp.bfloat16), wo,
                      preferred_element_type=jnp.float32) + bo
        return out.reshape(bt, nq, H)

    x = x_ref[...].astype(jnp.float32)                    # (bt, 2P, H), VMEM resident

    for l in range(num_layers):
        g = lng_ref[l]                                    # (1, H)
        b = lnb_ref[l]                                    # (1, H)

        # ---- self-attention over concatenated [rgb, d] tokens ----
        w_s = wqkv_ref[l, 0]                              # (H, 3H) bf16, fused Q|K|V
        b_s = bqkv_ref[l, 0]                              # (1, 3H) f32
        xn = layer_norm(x, g, b)
        qkv = project(xn, w_s, b_s)                       # (bt, 2P, 3H)
        x = x + mha(qkv[..., :H], qkv[..., H:2 * H], qkv[..., 2 * H:],
                    wo_ref[l, 0], bo_ref[l, 0])

        # ---- split modalities (pure in-VMEM slices) ----
        f_rgb = x[:, :patches, :]                         # (bt, P, H)
        f_d = x[:, patches:, :]                           # (bt, P, H)
        f_rgb2 = layer_norm(f_rgb, g, b)                  # reused as Q of 2nd cross-attn
        f_dn = layer_norm(f_d, g, b)

        w_c = wqkv_ref[l, 1]                              # (H, 3H) bf16
        b_c = bqkv_ref[l, 1]                              # (1, 3H) f32
        wo_c = wo_ref[l, 1]                               # (H, H) bf16
        bo_c = bo_ref[l, 1]                               # (1, H) f32

        # cross-attn #1: depth queries attend to rgb keys/values (fused KV matmul)
        q_d = project(f_dn, w_c[:, :H], b_c[:, :H])
        kv_r = project(f_rgb2, w_c[:, H:], b_c[:, H:])
        f_d = f_d + mha(q_d, kv_r[..., :H], kv_r[..., H:], wo_c, bo_c)

        # cross-attn #2 (same weights): rgb queries (original LN(f_rgb)) attend to
        # the freshly layer-normed, updated depth tokens.
        f_dn2 = layer_norm(f_d, g, b)
        q_r = project(f_rgb2, w_c[:, :H], b_c[:, :H])
        kv_d = project(f_dn2, w_c[:, H:], b_c[:, H:])
        f_rgb = f_rgb + mha(q_r, kv_d[..., :H], kv_d[..., H:], wo_c, bo_c)

        # Recombine halves via aligned row-slice stores into the VMEM scratch
        # (avoids a full-activation concat materialisation every layer).
        x_sc[:, :patches, :] = f_rgb
        x_sc[:, patches:, :] = f_d
        x = x_sc[...]

    # final encoder LayerNorm
    x = layer_norm(x, encg_ref[...], encb_ref[...])
    # TODO(synk): output last dim is H=32 (<128 lanes) -> masked stores; negligible
    # at this size. If N/H grow, present the output lane-dense as (bt, N*H) via a
    # wrapper-side reshape so the final store is an unmasked full-lane vst.
    o_ref[...] = x.astype(o_ref.dtype)


# ---------------------------------------------------------------------------
# Wrapper: single fused pallas_call for the whole Encoder.
# ---------------------------------------------------------------------------
def encoder_forward(x, packed, *, patches=PATCHES, batch_tile=BATCH_TILE):
    B, N, H = x.shape
    L = packed["wqkv"].shape[0]
    bt = min(batch_tile, B)
    assert B % bt == 0, "batch must be divisible by the batch tile"
    kernel = functools.partial(
        _encoder_kernel, num_layers=L, num_heads=NUM_HEADS,
        head_dim=HEAD_DIM, hidden=H, patches=patches)

    def const_spec(arr):
        nd = arr.ndim
        return pl.BlockSpec(arr.shape, lambda b, _nd=nd: (0,) * _nd)

    out = pl.pallas_call(
        kernel,
        out_shape=jax.ShapeDtypeStruct((B, N, H), x.dtype),
        grid=(B // bt,),                                   # multiple of 2 for v7x
        in_specs=[
            pl.BlockSpec((bt, N, H), lambda b: (b, 0, 0)),  # activations
            const_spec(packed["wqkv"]),                     # (L, 2, H, 3H) bf16
            const_spec(packed["bqkv"]),                     # (L, 2, 1, 3H) f32
            const_spec(packed["wo"]),                       # (L, 2, H, H)  bf16
            const_spec(packed["bo"]),                       # (L, 2, 1, H)  f32
            const_spec(packed["ln_g"]),                     # (L, 1, H)
            const_spec(packed["ln_b"]),                     # (L, 1, H)
            const_spec(packed["enc_g"]),                    # (1, H)
            const_spec(packed["enc_b"]),                    # (1, H)
        ],
        out_specs=pl.BlockSpec((bt, N, H), lambda b: (b, 0, 0)),
        scratch_shapes=[pltpu.VMEM((bt, N, H), jnp.float32)],
        # TODO(synk): if an xprof trace on v7x shows one core idle, switch this
        # axis to pltpu.CORE_PARALLEL (or a core_map) -- no-op on v5e/v6e.
        compiler_params=pltpu.CompilerParams(
            dimension_semantics=("parallel",)),
    )(x, packed["wqkv"], packed["bqkv"], packed["wo"], packed["bo"],
      packed["ln_g"], packed["ln_b"], packed["enc_g"], packed["enc_b"])
    return out, []   # vis=False -> attn_weights stays empty, like the PyTorch module


# ---------------------------------------------------------------------------
# Parameter init (deterministic, synthetic) + packing into stacked VMEM blobs.
# ---------------------------------------------------------------------------
def init_attention_params(key, hidden):
    ks = jax.random.split(key, 8)
    s = 0.02
    return {
        "wq": s * jax.random.normal(ks[0], (hidden, hidden), jnp.float32),
        "bq": s * jax.random.normal(ks[1], (hidden,), jnp.float32),
        "wk": s * jax.random.normal(ks[2], (hidden, hidden), jnp.float32),
        "bk": s * jax.random.normal(ks[3], (hidden,), jnp.float32),
        "wv": s * jax.random.normal(ks[4], (hidden, hidden), jnp.float32),
        "bv": s * jax.random.normal(ks[5], (hidden,), jnp.float32),
        "wo": s * jax.random.normal(ks[6], (hidden, hidden), jnp.float32),
        "bo": s * jax.random.normal(ks[7], (hidden,), jnp.float32),
    }


def init_encoder_params(key, hidden, num_layers):
    layers = []
    for i in range(num_layers):
        k_self, k_cross, k_ln, key = jax.random.split(jax.random.fold_in(key, i), 4)
        kg, kb = jax.random.split(k_ln)
        layers.append({
            "self_attn": init_attention_params(k_self, hidden),
            "cross_attn": init_attention_params(k_cross, hidden),
            # shared attention_norm of the Block (used in 5 places)
            "ln_g": 1.0 + 0.1 * jax.random.normal(kg, (hidden,), jnp.float32),
            "ln_b": 0.1 * jax.random.normal(kb, (hidden,), jnp.float32),
        })
    kg, kb = jax.random.split(key)
    return {
        "layers": layers,
        "enc_ln_g": 1.0 + 0.1 * jax.random.normal(kg, (hidden,), jnp.float32),
        "enc_ln_b": 0.1 * jax.random.normal(kb, (hidden,), jnp.float32),
    }


def pack_encoder_params(raw):
    """Stack per-layer weights into a few blobs; fuse Q|K|V; fold 1/sqrt(hd) into Q
    (weights + bias) BEFORE the bf16 cast.  Matmul weights are stored in bf16 (MXU
    native rate); biases and LayerNorm params stay f32."""
    scale = 1.0 / math.sqrt(HEAD_DIM)
    wqkv, bqkv, wo, bo, lg, lb = [], [], [], [], [], []
    for lp in raw["layers"]:
        w_pair, b_pair, wo_pair, bo_pair = [], [], [], []
        for name in ("self_attn", "cross_attn"):
            p = lp[name]
            w_pair.append(jnp.concatenate([p["wq"] * scale, p["wk"], p["wv"]], axis=1))
            b_pair.append(jnp.concatenate([p["bq"] * scale, p["bk"], p["bv"]])[None, :])
            wo_pair.append(p["wo"])
            bo_pair.append(p["bo"][None, :])
        wqkv.append(jnp.stack(w_pair))
        bqkv.append(jnp.stack(b_pair))
        wo.append(jnp.stack(wo_pair))
        bo.append(jnp.stack(bo_pair))
        lg.append(lp["ln_g"][None, :])
        lb.append(lp["ln_b"][None, :])
    return {
        "wqkv": jnp.stack(wqkv).astype(jnp.bfloat16),   # (L, 2, H, 3H)
        "bqkv": jnp.stack(bqkv),                        # (L, 2, 1, 3H) f32
        "wo": jnp.stack(wo).astype(jnp.bfloat16),       # (L, 2, H, H)
        "bo": jnp.stack(bo),                            # (L, 2, 1, H)  f32
        "ln_g": jnp.stack(lg),                          # (L, 1, H)
        "ln_b": jnp.stack(lb),                          # (L, 1, H)
        "enc_g": raw["enc_ln_g"][None, :],              # (1, H)
        "enc_b": raw["enc_ln_b"][None, :],              # (1, H)
    }


# ---------------------------------------------------------------------------
# Pure-JAX reference (mirrors the PyTorch module exactly, f32) for a numeric check.
# ---------------------------------------------------------------------------
def _ref_layernorm(x, g, b):
    mu = jnp.mean(x, axis=-1, keepdims=True)
    var = jnp.mean((x - mu) ** 2, axis=-1, keepdims=True)
    return (x - mu) / jnp.sqrt(var + LN_EPS) * g + b


def _ref_attention(q_in, k_in, v_in, p):
    q = q_in @ p["wq"] + p["bq"]
    k = k_in @ p["wk"] + p["bk"]
    v = v_in @ p["wv"] + p["bv"]
    B, Nq, H = q.shape
    Nk = k.shape[1]

    def heads(t, n):
        return t.reshape(B, n, NUM_HEADS, HEAD_DIM).transpose(0, 2, 1, 3)

    qh, kh, vh = heads(q, Nq), heads(k, Nk), heads(v, Nk)
    s = jnp.einsum("bhqd,bhkd->bhqk", qh, kh) / math.sqrt(HEAD_DIM)
    a = jax.nn.softmax(s, axis=-1)
    ctx = jnp.einsum("bhqk,bhkd->bhqd", a, vh)
    ctx = ctx.transpose(0, 2, 1, 3).reshape(B, Nq, H)
    return ctx @ p["wo"] + p["bo"]


def _ref_block(feat, lp, patches):
    g, b = lp["ln_g"], lp["ln_b"]
    h = feat
    x = _ref_layernorm(feat, g, b)
    x = _ref_attention(x, x, x, lp["self_attn"])
    feat = x + h
    f_rgb = feat[:, :patches, :]
    f_d = feat[:, patches:, :]
    f_rgb2 = _ref_layernorm(f_rgb, g, b)
    f_d2 = _ref_layernorm(f_d, g, b)
    f_d2 = _ref_attention(f_d2, f_rgb2, f_rgb2, lp["cross_attn"])
    f_d = f_d + f_d2
    f_d2 = _ref_layernorm(f_d, g, b)
    f_rgb2 = _ref_attention(f_rgb2, f_d2, f_d2, lp["cross_attn"])
    f_rgb = f_rgb + f_rgb2
    return jnp.concatenate([f_rgb, f_d], axis=1)


def _ref_encoder(x, raw, patches):
    for lp in raw["layers"]:
        x = _ref_block(x, lp, patches)
    return _ref_layernorm(x, raw["enc_ln_g"], raw["enc_ln_b"])


# ---------------------------------------------------------------------------
if __name__ == "__main__":
    key = jax.random.PRNGKey(0)
    k_x, k_p = jax.random.split(key)

    x = jax.random.normal(k_x, (BATCH, 2 * PATCHES, HIDDEN), jnp.float32)
    raw_params = init_encoder_params(k_p, HIDDEN, NUM_LAYERS)
    packed = pack_encoder_params(raw_params)

    fwd = jax.jit(lambda xx, pp: encoder_forward(xx, pp, patches=PATCHES))
    encoded, attn_weights = fwd(x, packed)
    encoded = jax.block_until_ready(encoded)

    assert encoded.shape == (BATCH, 2 * PATCHES, HIDDEN)
    assert encoded.dtype == jnp.float32
    assert attn_weights == []  # vis=False

    ref = _ref_encoder(x, raw_params, PATCHES)
    max_err = float(jnp.max(jnp.abs(encoded - ref)))
    # bf16 matmul operands bound the error at ~1e-3 here; 2e-2 catches real
    # regressions while leaving margin for the bf16 quantisation.
    assert max_err < 2e-2, f"max abs error vs reference: {max_err}"
    print("KERNEL_OK")
</pallas_src>

<mosaic_0001>
module attributes {stable_mosaic.version = 11 : i64} {
  func.func @_encoder_kernel(%arg0: i32, %arg1: memref<2x16x32xf32, #tpu.memory_space<vmem>>, %arg2: memref<2x2x32x96xbf16, #tpu.memory_space<vmem>>, %arg3: memref<2x2x1x96xf32, #tpu.memory_space<vmem>>, %arg4: memref<2x2x32x32xbf16, #tpu.memory_space<vmem>>, %arg5: memref<2x2x1x32xf32, #tpu.memory_space<vmem>>, %arg6: memref<2x1x32xf32, #tpu.memory_space<vmem>>, %arg7: memref<2x1x32xf32, #tpu.memory_space<vmem>>, %arg8: memref<1x32xf32, #tpu.memory_space<vmem>>, %arg9: memref<1x32xf32, #tpu.memory_space<vmem>>, %arg10: memref<2x16x32xf32, #tpu.memory_space<vmem>>, %arg11: memref<2x16x32xf32, #tpu.memory_space<vmem>>) attributes {dimension_semantics = [#tpu.dimension_semantics<parallel>], iteration_bounds = array<i64: 2>, scalar_prefetch = 0 : i64, scratch_operands = 1 : i64, tpu.core_type = #tpu.core_type<tc>, window_params = [{transform_indices = @transform_0, window_bounds = array<i64: 2, 16, 32>}, {pipeline_mode = #tpu.pipeline_mode<synchronous>, transform_indices = @transform_1, window_bounds = array<i64: 2, 2, 32, 96>}, {pipeline_mode = #tpu.pipeline_mode<synchronous>, transform_indices = @transform_2, window_bounds = array<i64: 2, 2, 1, 96>}, {pipeline_mode = #tpu.pipeline_mode<synchronous>, transform_indices = @transform_3, window_bounds = array<i64: 2, 2, 32, 32>}, {pipeline_mode = #tpu.pipeline_mode<synchronous>, transform_indices = @transform_4, window_bounds = array<i64: 2, 2, 1, 32>}, {pipeline_mode = #tpu.pipeline_mode<synchronous>, transform_indices = @transform_5, window_bounds = array<i64: 2, 1, 32>}, {pipeline_mode = #tpu.pipeline_mode<synchronous>, transform_indices = @transform_6, window_bounds = array<i64: 2, 1, 32>}, {pipeline_mode = #tpu.pipeline_mode<synchronous>, transform_indices = @transform_7, window_bounds = array<i64: 1, 32>}, {pipeline_mode = #tpu.pipeline_mode<synchronous>, transform_indices = @transform_8, window_bounds = array<i64: 1, 32>}, {transform_indices = @transform_9, window_bounds = array<i64: 2, 16, 32>}]} {
    %c0 = arith.constant 0 : index
    %c0_0 = arith.constant 0 : index
    %c0_1 = arith.constant 0 : index
    %0 = vector.load %arg1[%c0, %c0_0, %c0_1] : memref<2x16x32xf32, #tpu.memory_space<vmem>>, vector<2x16x32xf32>
    %c0_2 = arith.constant 0 : index
    %c0_3 = arith.constant 0 : index
    %c0_4 = arith.constant 0 : index
    %1 = vector.load %arg6[%c0_2, %c0_3, %c0_4] : memref<2x1x32xf32, #tpu.memory_space<vmem>>, vector<1x1x32xf32>
    %2 = vector.shape_cast %1 : vector<1x1x32xf32> to vector<1x32xf32>
    %c0_5 = arith.constant 0 : index
    %c0_6 = arith.constant 0 : index
    %c0_7 = arith.constant 0 : index
    %3 = vector.load %arg7[%c0_5, %c0_6, %c0_7] : memref<2x1x32xf32, #tpu.memory_space<vmem>>, vector<1x1x32xf32>
    %4 = vector.shape_cast %3 : vector<1x1x32xf32> to vector<1x32xf32>
    %c0_8 = arith.constant 0 : index
    %c0_9 = arith.constant 0 : index
    %c0_10 = arith.constant 0 : index
    %c0_11 = arith.constant 0 : index
    %5 = vector.load %arg2[%c0_8, %c0_9, %c0_10, %c0_11] : memref<2x2x32x96xbf16, #tpu.memory_space<vmem>>, vector<1x1x32x96xbf16>
    %6 = vector.shape_cast %5 : vector<1x1x32x96xbf16> to vector<32x96xbf16>
    %c0_12 = arith.constant 0 : index
    %c0_13 = arith.constant 0 : index
    %c0_14 = arith.constant 0 : index
    %c0_15 = arith.constant 0 : index
    %7 = vector.load %arg3[%c0_12, %c0_13, %c0_14, %c0_15] : memref<2x2x1x96xf32, #tpu.memory_space<vmem>>, vector<1x1x1x96xf32>
    %8 = vector.shape_cast %7 : vector<1x1x1x96xf32> to vector<1x96xf32>
    %cst = arith.constant dense<0.000000e+00> : vector<2x16xf32>
    %9 = vector.multi_reduction <add>, %0, %cst [2] : vector<2x16x32xf32> to vector<2x16xf32>
    %10 = vector.shape_cast %9 : vector<2x16xf32> to vector<2x16x1xf32>
    %cst_16 = arith.constant 3.200000e+01 : f32
    %11 = vector.broadcast %cst_16 : f32 to vector<2x16x1xf32>
    %12 = arith.divf %10, %11 : vector<2x16x1xf32>
    %13 = vector.broadcast %12 : vector<2x16x1xf32> to vector<2x16x32xf32>
    %14 = arith.subf %0, %13 : vector<2x16x32xf32>
    %15 = arith.mulf %14, %14 : vector<2x16x32xf32>
    %cst_17 = arith.constant dense<0.000000e+00> : vector<2x16xf32>
    %16 = vector.multi_reduction <add>, %15, %cst_17 [2] : vector<2x16x32xf32> to vector<2x16xf32>
    %17 = vector.shape_cast %16 : vector<2x16xf32> to vector<2x16x1xf32>
    %cst_18 = arith.constant 3.200000e+01 : f32
    %18 = vector.broadcast %cst_18 : f32 to vector<2x16x1xf32>
    %19 = arith.divf %17, %18 : vector<2x16x1xf32>
    %20 = vector.broadcast %12 : vector<2x16x1xf32> to vector<2x16x32xf32>
    %21 = arith.subf %0, %20 : vector<2x16x32xf32>
    %cst_19 = arith.constant 9.99999997E-7 : f32
    %22 = vector.broadcast %cst_19 : f32 to vector<2x16x1xf32>
    %23 = arith.addf %19, %22 : vector<2x16x1xf32>
    %24 = math.rsqrt %23 : vector<2x16x1xf32>
    %25 = vector.broadcast %24 : vector<2x16x1xf32> to vector<2x16x32xf32>
    %26 = arith.mulf %21, %25 : vector<2x16x32xf32>
    %27 = vector.shape_cast %2 : vector<1x32xf32> to vector<1x1x32xf32>
    %28 = vector.broadcast %27 : vector<1x1x32xf32> to vector<2x16x32xf32>
    %29 = arith.mulf %26, %28 : vector<2x16x32xf32>
    %30 = vector.shape_cast %4 : vector<1x32xf32> to vector<1x1x32xf32>
    %31 = vector.broadcast %30 : vector<1x1x32xf32> to vector<2x16x32xf32>
    %32 = arith.addf %29, %31 : vector<2x16x32xf32>
    %33 = vector.shape_cast %32 : vector<2x16x32xf32> to vector<32x32xf32>
    %34 = arith.truncf %33 : vector<32x32xf32> to vector<32x32xbf16>
    %cst_20 = arith.constant dense<0.000000e+00> : vector<32x96xf32>
    %35 = tpu.matmul %34, %6, %cst_20 {dimension_numbers = #tpu.dot_dimension_numbers<[1], [0], [0], [1], [0, 0, 1, 1], [], []>} : vector<32x32xbf16>, vector<32x96xbf16>, vector<32x96xf32> -> vector<32x96xf32>
    %36 = vector.broadcast %8 : vector<1x96xf32> to vector<32x96xf32>
    %37 = arith.addf %35, %36 : vector<32x96xf32>
    %38 = vector.shape_cast %37 : vector<32x96xf32> to vector<2x16x96xf32>
    %39 = vector.extract_strided_slice %38 {offsets = [0, 0, 0], sizes = [2, 16, 32], strides = [1, 1, 1]} : vector<2x16x96xf32> to vector<2x16x32xf32>
    %40 = vector.extract_strided_slice %38 {offsets = [0, 0, 32], sizes = [2, 16, 32], strides = [1, 1, 1]} : vector<2x16x96xf32> to vector<2x16x32xf32>
    %41 = vector.extract_strided_slice %38 {offsets = [0, 0, 64], sizes = [2, 16, 32], strides = [1, 1, 1]} : vector<2x16x96xf32> to vector<2x16x32xf32>
    %c0_21 = arith.constant 0 : index
    %c0_22 = arith.constant 0 : index
    %c0_23 = arith.constant 0 : index
    %c0_24 = arith.constant 0 : index
    %42 = vector.load %arg4[%c0_21, %c0_22, %c0_23, %c0_24] : memref<2x2x32x32xbf16, #tpu.memory_space<vmem>>, vector<1x1x32x32xbf16>
    %43 = vector.shape_cast %42 : vector<1x1x32x32xbf16> to vector<32x32xbf16>
    %c0_25 = arith.constant 0 : index
    %c0_26 = arith.constant 0 : index
    %c0_27 = arith.constant 0 : index
    %c0_28 = arith.constant 0 : index
    %44 = vector.load %arg5[%c0_25, %c0_26, %c0_27, %c0_28] : memref<2x2x1x32xf32, #tpu.memory_space<vmem>>, vector<1x1x1x32xf32>
    %45 = vector.shape_cast %44 : vector<1x1x1x32xf32> to vector<1x32xf32>
    %46 = vector.extract_strided_slice %39 {offsets = [0, 0, 0], sizes = [2, 16, 8], strides = [1, 1, 1]} : vector<2x16x32xf32> to vector<2x16x8xf32>
    %47 = arith.truncf %46 : vector<2x16x8xf32> to vector<2x16x8xbf16>
    %48 = vector.extract_strided_slice %40 {offsets = [0, 0, 0], sizes = [2, 16, 8], strides = [1, 1, 1]} : vector<2x16x32xf32> to vector<2x16x8xf32>
    %49 = arith.truncf %48 : vector<2x16x8xf32> to vector<2x16x8xbf16>
    %50 = vector.extract_strided_slice %41 {offsets = [0, 0, 0], sizes = [2, 16, 8], strides = [1, 1, 1]} : vector<2x16x32xf32> to vector<2x16x8xf32>
    %51 = arith.truncf %50 : vector<2x16x8xf32> to vector<2x16x8xbf16>
    "tpu.trace_start"() <{level = 10 : i32, message = "bqd,bkd->bqk"}> : () -> ()
    %cst_29 = arith.constant dense<0.000000e+00> : vector<2x16x16xf32>
    %52 = tpu.matmul %47, %49, %cst_29 {dimension_numbers = #tpu.dot_dimension_numbers<[2], [2], [1], [1], [0, 0, 0, 1, 1, 1], [0], [0]>} : vector<2x16x8xbf16>, vector<2x16x8xbf16>, vector<2x16x16xf32> -> vector<2x16x16xf32>
    "tpu.trace_stop"() : () -> ()
    %cst_30 = arith.constant dense<0xFF800000> : vector<2x16xf32>
    %53 = vector.multi_reduction <maximumf>, %52, %cst_30 [2] : vector<2x16x16xf32> to vector<2x16xf32>
    %54 = vector.shape_cast %53 : vector<2x16xf32> to vector<2x16x1xf32>
    %55 = vector.broadcast %54 : vector<2x16x1xf32> to vector<2x16x16xf32>
    %56 = arith.subf %52, %55 : vector<2x16x16xf32>
    %57 = math.exp %56 : vector<2x16x16xf32>
    %cst_31 = arith.constant dense<0.000000e+00> : vector<2x16xf32>
    %58 = vector.multi_reduction <add>, %57, %cst_31 [2] : vector<2x16x16xf32> to vector<2x16xf32>
    %59 = vector.shape_cast %58 : vector<2x16xf32> to vector<2x16x1xf32>
    %60 = vector.broadcast %59 : vector<2x16x1xf32> to vector<2x16x16xf32>
    %61 = arith.divf %57, %60 : vector<2x16x16xf32>
    %62 = arith.truncf %61 : vector<2x16x16xf32> to vector<2x16x16xbf16>
    "tpu.trace_start"() <{level = 10 : i32, message = "bqk,bkd->bqd"}> : () -> ()
    %cst_32 = arith.constant dense<0.000000e+00> : vector<2x16x8xf32>
    %63 = tpu.matmul %62, %51, %cst_32 {dimension_numbers = #tpu.dot_dimension_numbers<[2], [1], [1], [2], [0, 0, 0, 1, 1, 2], [0], [0]>} : vector<2x16x16xbf16>, vector<2x16x8xbf16>, vector<2x16x8xf32> -> vector<2x16x8xf32>
    "tpu.trace_stop"() : () -> ()
    %64 = vector.extract_strided_slice %39 {offsets = [0, 0, 8], sizes = [2, 16, 8], strides = [1, 1, 1]} : vector<2x16x32xf32> to vector<2x16x8xf32>
    %65 = arith.truncf %64 : vector<2x16x8xf32> to vector<2x16x8xbf16>
    %66 = vector.extract_strided_slice %40 {offsets = [0, 0, 8], sizes = [2, 16, 8], strides = [1, 1, 1]} : vector<2x16x32xf32> to vector<2x16x8xf32>
    %67 = arith.truncf %66 : vector<2x16x8xf32> to vector<2x16x8xbf16>
    %68 = vector.extract_strided_slice %41 {offsets = [0, 0, 8], sizes = [2, 16, 8], strides = [1, 1, 1]} : vector<2x16x32xf32> to vector<2x16x8xf32>
    %69 = arith.truncf %68 : vector<2x16x8xf32> to vector<2x16x8xbf16>
    "tpu.trace_start"() <{level = 10 : i32, message = "bqd,bkd->bqk"}> : () -> ()
    %cst_33 = arith.constant dense<0.000000e+00> : vector<2x16x16xf32>
    %70 = tpu.matmul %65, %67, %cst_33 {dimension_numbers = #tpu.dot_dimension_numbers<[2], [2], [1], [1], [0, 0, 0, 1, 1, 1], [0], [0]>} : vector<2x16x8xbf16>, vector<2x16x8xbf16>, vector<2x16x16xf32> -> vector<2x16x16xf32>
    "tpu.trace_stop"() : () -> ()
    %cst_34 = arith.constant dense<0xFF800000> : vector<2x16xf32>
    %71 = vector.multi_reduction <maximumf>, %70, %cst_34 [2] : vector<2x16x16xf32> to vector<2x16xf32>
    %72 = vector.shape_cast %71 : vector<2x16xf32> to vector<2x16x1xf32>
    %73 = vector.broadcast %72 : vector<2x16x1xf32> to vector<2x16x16xf32>
    %74 = arith.subf %70, %73 : vector<2x16x16xf32>
    %75 = math.exp %74 : vector<2x16x16xf32>
    %cst_35 = arith.constant dense<0.000000e+00> : vector<2x16xf32>
    %76 = vector.multi_reduction <add>, %75, %cst_35 [2] : vector<2x16x16xf32> to vector<2x16xf32>
    %77 = vector.shape_cast %76 : vector<2x16xf32> to vector<2x16x1xf32>
    %78 = vector.broadcast %77 : vector<2x16x1xf32> to vector<2x16x16xf32>
    %79 = arith.divf %75, %78 : vector<2x16x16xf32>
    %80 = arith.truncf %79 : vector<2x16x16xf32> to vector<2x16x16xbf16>
    "tpu.trace_start"() <{level = 10 : i32, message = "bqk,bkd->bqd"}> : () -> ()
    %cst_36 = arith.constant dense<0.000000e+00> : vector<2x16x8xf32>
    %81 = tpu.matmul %80, %69, %cst_36 {dimension_numbers = #tpu.dot_dimension_numbers<[2], [1], [1], [2], [0, 0, 0, 1, 1, 2], [0], [0]>} : vector<2x16x16xbf16>, vector<2x16x8xbf16>, vector<2x16x8xf32> -> vector<2x16x8xf32>
    "tpu.trace_stop"() : () -> ()
    %82 = vector.extract_strided_slice %39 {offsets = [0, 0, 16], sizes = [2, 16, 8], strides = [1, 1, 1]} : vector<2x16x32xf32> to vector<2x16x8xf32>
    %83 = arith.truncf %82 : vector<2x16x8xf32> to vector<2x16x8xbf16>
    %84 = vector.extract_strided_slice %40 {offsets = [0, 0, 16], sizes = [2, 16, 8], strides = [1, 1, 1]} : vector<2x16x32xf32> to vector<2x16x8xf32>
    %85 = arith.truncf %84 : vector<2x16x8xf32> to vector<2x16x8xbf16>
    %86 = vector.extract_strided_slice %41 {offsets = [0, 0, 16], sizes = [2, 16, 8], strides = [1, 1, 1]} : vector<2x16x32xf32> to vector<2x16x8xf32>
    %87 = arith.truncf %86 : vector<2x16x8xf32> to vector<2x16x8xbf16>
    "tpu.trace_start"() <{level = 10 : i32, message = "bqd,bkd->bqk"}> : () -> ()
    %cst_37 = arith.constant dense<0.000000e+00> : vector<2x16x16xf32>
    %88 = tpu.matmul %83, %85, %cst_37 {dimension_numbers = #tpu.dot_dimension_numbers<[2], [2], [1], [1], [0, 0, 0, 1, 1, 1], [0], [0]>} : vector<2x16x8xbf16>, vector<2x16x8xbf16>, vector<2x16x16xf32> -> vector<2x16x16xf32>
    "tpu.trace_stop"() : () -> ()
    %cst_38 = arith.constant dense<0xFF800000> : vector<2x16xf32>
    %89 = vector.multi_reduction <maximumf>, %88, %cst_38 [2] : vector<2x16x16xf32> to vector<2x16xf32>
    %90 = vector.shape_cast %89 : vector<2x16xf32> to vector<2x16x1xf32>
    %91 = vector.broadcast %90 : vector<2x16x1xf32> to vector<2x16x16xf32>
    %92 = arith.subf %88, %91 : vector<2x16x16xf32>
    %93 = math.exp %92 : vector<2x16x16xf32>
    %cst_39 = arith.constant dense<0.000000e+00> : vector<2x16xf32>
    %94 = vector.multi_reduction <add>, %93, %cst_39 [2] : vector<2x16x16xf32> to vector<2x16xf32>
    %95 = vector.shape_cast %94 : vector<2x16xf32> to vector<2x16x1xf32>
    %96 = vector.broadcast %95 : vector<2x16x1xf32> to vector<2x16x16xf32>
    %97 = arith.divf %93, %96 : vector<2x16x16xf32>
    %98 = arith.truncf %97 : vector<2x16x16xf32> to vector<2x16x16xbf16>
    "tpu.trace_start"() <{level = 10 : i32, message = "bqk,bkd->bqd"}> : () -> ()
    %cst_40 = arith.constant dense<0.000000e+00> : vector<2x16x8xf32>
    %99 = tpu.matmul %98, %87, %cst_40 {dimension_numbers = #tpu.dot_dimension_numbers<[2], [1], [1], [2], [0, 0, 0, 1, 1, 2], [0], [0]>} : vector<2x16x16xbf16>, vector<2x16x8xbf16>, vector<2x16x8xf32> -> vector<2x16x8xf32>
    "tpu.trace_stop"() : () -> ()
    %100 = vector.extract_strided_slice %39 {offsets = [0, 0, 24], sizes = [2, 16, 8], strides = [1, 1, 1]} : vector<2x16x32xf32> to vector<2x16x8xf32>
    %101 = arith.truncf %100 : vector<2x16x8xf32> to vector<2x16x8xbf16>
    %102 = vector.extract_strided_slice %40 {offsets = [0, 0, 24], sizes = [2, 16, 8], strides = [1, 1, 1]} : vector<2x16x32xf32> to vector<2x16x8xf32>
    %103 = arith.truncf %102 : vector<2x16x8xf32> to vector<2x16x8xbf16>
    %104 = vector.extract_strided_slice %41 {offsets = [0, 0, 24], sizes = [2, 16, 8], strides = [1, 1, 1]} : vector<2x16x32xf32> to vector<2x16x8xf32>
    %105 = arith.truncf %104 : vector<2x16x8xf32> to vector<2x16x8xbf16>
    "tpu.trace_start"() <{level = 10 : i32, message = "bqd,bkd->bqk"}> : () -> ()
    %cst_41 = arith.constant dense<0.000000e+00> : vector<2x16x16xf32>
    %106 = tpu.matmul %101, %103, %cst_41 {dimension_numbers = #tpu.dot_dimension_numbers<[2], [2], [1], [1], [0, 0, 0, 1, 1, 1], [0], [0]>} : vector<2x16x8xbf16>, vector<2x16x8xbf16>, vector<2x16x16xf32> -> vector<2x16x16xf32>
    "tpu.trace_stop"() : () -> ()
    %cst_42 = arith.constant dense<0xFF800000> : vector<2x16xf32>
    %107 = vector.multi_reduction <maximumf>, %106, %cst_42 [2] : vector<2x16x16xf32> to vector<2x16xf32>
    %108 = vector.shape_cast %107 : vector<2x16xf32> to vector<2x16x1xf32>
    %109 = vector.broadcast %108 : vector<2x16x1xf32> to vector<2x16x16xf32>
    %110 = arith.subf %106, %109 : vector<2x16x16xf32>
    %111 = math.exp %110 : vector<2x16x16xf32>
    %cst_43 = arith.constant dense<0.000000e+00> : vector<2x16xf32>
    %112 = vector.multi_reduction <add>, %111, %cst_43 [2] : vector<2x16x16xf32> to vector<2x16xf32>
    %113 = vector.shape_cast %112 : vector<2x16xf32> to vector<2x16x1xf32>
    %114 = vector.broadcast %113 : vector<2x16x1xf32> to vector<2x16x16xf32>
    %115 = arith.divf %111, %114 : vector<2x16x16xf32>
    %116 = arith.truncf %115 : vector<2x16x16xf32> to vector<2x16x16xbf16>
    "tpu.trace_start"() <{level = 10 : i32, message = "bqk,bkd->bqd"}> : () -> ()
    %cst_44 = arith.constant dense<0.000000e+00> : vector<2x16x8xf32>
    %117 = tpu.matmul %116, %105, %cst_44 {dimension_numbers = #tpu.dot_dimension_numbers<[2], [1], [1], [2], [0, 0, 0, 1, 1, 2], [0], [0]>} : vector<2x16x16xbf16>, vector<2x16x8xbf16>, vector<2x16x8xf32> -> vector<2x16x8xf32>
    "tpu.trace_stop"() : () -> ()
    %118 = tpu.concatenate %63, %81, %99, %117 in 2 : vector<2x16x8xf32>, vector<2x16x8xf32>, vector<2x16x8xf32>, vector<2x16x8xf32> -> vector<2x16x32xf32>
    %119 = vector.shape_cast %118 : vector<2x16x32xf32> to vector<32x32xf32>
    %120 = arith.truncf %119 : vector<32x32xf32> to vector<32x32xbf16>
    %cst_45 = arith.constant dense<0.000000e+00> : vector<32x32xf32>
    %121 = tpu.matmul %120, %43, %cst_45 {dimension_numbers = #tpu.dot_dimension_numbers<[1], [0], [0], [1], [0, 0, 1, 1], [], []>} : vector<32x32xbf16>, vector<32x32xbf16>, vector<32x32xf32> -> vector<32x32xf32>
    %122 = vector.broadcast %45 : vector<1x32xf32> to vector<32x32xf32>
    %123 = arith.addf %121, %122 : vector<32x32xf32>
    %124 = vector.shape_cast %123 : vector<32x32xf32> to vector<2x16x32xf32>
    %125 = arith.addf %0, %124 : vector<2x16x32xf32>
    %126 = vector.extract_strided_slice %125 {offsets = [0, 0, 0], sizes = [2, 8, 32], strides = [1, 1, 1]} : vector<2x16x32xf32> to vector<2x8x32xf32>
    %127 = vector.extract_strided_slice %125 {offsets = [0, 8, 0], sizes = [2, 8, 32], strides = [1, 1, 1]} : vector<2x16x32xf32> to vector<2x8x32xf32>
    %cst_46 = arith.constant dense<0.000000e+00> : vector<2x8xf32>
    %128 = vector.multi_reduction <add>, %126, %cst_46 [2] : vector<2x8x32xf32> to vector<2x8xf32>
    %129 = vector.shape_cast %128 : vector<2x8xf32> to vector<2x8x1xf32>
    %cst_47 = arith.constant 3.200000e+01 : f32
    %130 = vector.broadcast %cst_47 : f32 to vector<2x8x1xf32>
    %131 = arith.divf %129, %130 : vector<2x8x1xf32>
    %132 = vector.broadcast %131 : vector<2x8x1xf32> to vector<2x8x32xf32>
    %133 = arith.subf %126, %132 : vector<2x8x32xf32>
    %134 = arith.mulf %133, %133 : vector<2x8x32xf32>
    %cst_48 = arith.constant dense<0.000000e+00> : vector<2x8xf32>
    %135 = vector.multi_reduction <add>, %134, %cst_48 [2] : vector<2x8x32xf32> to vector<2x8xf32>
    %136 = vector.shape_cast %135 : vector<2x8xf32> to vector<2x8x1xf32>
    %cst_49 = arith.constant 3.200000e+01 : f32
    %137 = vector.broadcast %cst_49 : f32 to vector<2x8x1xf32>
    %138 = arith.divf %136, %137 : vector<2x8x1xf32>
    %139 = vector.broadcast %131 : vector<2x8x1xf32> to vector<2x8x32xf32>
    %140 = arith.subf %126, %139 : vector<2x8x32xf32>
    %cst_50 = arith.constant 9.99999997E-7 : f32
    %141 = vector.broadcast %cst_50 : f32 to vector<2x8x1xf32>
    %142 = arith.addf %138, %141 : vector<2x8x1xf32>
    %143 = math.rsqrt %142 : vector<2x8x1xf32>
    %144 = vector.broadcast %143 : vector<2x8x1xf32> to vector<2x8x32xf32>
    %145 = arith.mulf %140, %144 : vector<2x8x32xf32>
    %146 = vector.shape_cast %2 : vector<1x32xf32> to vector<1x1x32xf32>
    %147 = vector.broadcast %146 : vector<1x1x32xf32> to vector<2x8x32xf32>
    %148 = arith.mulf %145, %147 : vector<2x8x32xf32>
    %149 = vector.shape_cast %4 : vector<1x32xf32> to vector<1x1x32xf32>
    %150 = vector.broadcast %149 : vector<1x1x32xf32> to vector<2x8x32xf32>
    %151 = arith.addf %148, %150 : vector<2x8x32xf32>
    %cst_51 = arith.constant dense<0.000000e+00> : vector<2x8xf32>
    %152 = vector.multi_reduction <add>, %127, %cst_51 [2] : vector<2x8x32xf32> to vector<2x8xf32>
    %153 = vector.shape_cast %152 : vector<2x8xf32> to vector<2x8x1xf32>
    %cst_52 = arith.constant 3.200000e+01 : f32
    %154 = vector.broadcast %cst_52 : f32 to vector<2x8x1xf32>
    %155 = arith.divf %153, %154 : vector<2x8x1xf32>
    %156 = vector.broadcast %155 : vector<2x8x1xf32> to vector<2x8x32xf32>
    %157 = arith.subf %127, %156 : vector<2x8x32xf32>
    %158 = arith.mulf %157, %157 : vector<2x8x32xf32>
    %cst_53 = arith.constant dense<0.000000e+00> : vector<2x8xf32>
    %159 = vector.multi_reduction <add>, %158, %cst_53 [2] : vector<2x8x32xf32> to vector<2x8xf32>
    %160 = vector.shape_cast %159 : vector<2x8xf32> to vector<2x8x1xf32>
    %cst_54 = arith.constant 3.200000e+01 : f32
    %161 = vector.broadcast %cst_54 : f32 to vector<2x8x1xf32>
    %162 = arith.divf %160, %161 : vector<2x8x1xf32>
    %163 = vector.broadcast %155 : vector<2x8x1xf32> to vector<2x8x32xf32>
    %164 = arith.subf %127, %163 : vector<2x8x32xf32>
    %cst_55 = arith.constant 9.99999997E-7 : f32
    %165 = vector.broadcast %cst_55 : f32 to vector<2x8x1xf32>
    %166 = arith.addf %162, %165 : vector<2x8x1xf32>
    %167 = math.rsqrt %166 : vector<2x8x1xf32>
    %168 = vector.broadcast %167 : vector<2x8x1xf32> to vector<2x8x32xf32>
    %169 = arith.mulf %164, %168 : vector<2x8x32xf32>
    %170 = vector.shape_cast %2 : vector<1x32xf32> to vector<1x1x32xf32>
    %171 = vector.broadcast %170 : vector<1x1x32xf32> to vector<2x8x32xf32>
    %172 = arith.mulf %169, %171 : vector<2x8x32xf32>
    %173 = vector.shape_cast %4 : vector<1x32xf32> to vector<1x1x32xf32>
    %174 = vector.broadcast %173 : vector<1x1x32xf32> to vector<2x8x32xf32>
    %175 = arith.addf %172, %174 : vector<2x8x32xf32>
    %c0_56 = arith.constant 0 : index
    %c1 = arith.constant 1 : index
    %c0_57 = arith.constant 0 : index
    %c0_58 = arith.constant 0 : index
    %176 = vector.load %arg2[%c0_56, %c1, %c0_57, %c0_58] : memref<2x2x32x96xbf16, #tpu.memory_space<vmem>>, vector<1x1x32x96xbf16>
    %177 = vector.shape_cast %176 : vector<1x1x32x96xbf16> to vector<32x96xbf16>
    %c0_59 = arith.constant 0 : index
    %c1_60 = arith.constant 1 : index
    %c0_61 = arith.constant 0 : index
    %c0_62 = arith.constant 0 : index
    %178 = vector.load %arg3[%c0_59, %c1_60, %c0_61, %c0_62] : memref<2x2x1x96xf32, #tpu.memory_space<vmem>>, vector<1x1x1x96xf32>
    %179 = vector.shape_cast %178 : vector<1x1x1x96xf32> to vector<1x96xf32>
    %c0_63 = arith.constant 0 : index
    %c1_64 = arith.constant 1 : index
    %c0_65 = arith.constant 0 : index
    %c0_66 = arith.constant 0 : index
    %180 = vector.load %arg4[%c0_63, %c1_64, %c0_65, %c0_66] : memref<2x2x32x32xbf16, #tpu.memory_space<vmem>>, vector<1x1x32x32xbf16>
    %181 = vector.shape_cast %180 : vector<1x1x32x32xbf16> to vector<32x32xbf16>
    %c0_67 = arith.constant 0 : index
    %c1_68 = arith.constant 1 : index
    %c0_69 = arith.constant 0 : index
    %c0_70 = arith.constant 0 : index
    %182 = vector.load %arg5[%c0_67, %c1_68, %c0_69, %c0_70] : memref<2x2x1x32xf32, #tpu.memory_space<vmem>>, vector<1x1x1x32xf32>
    %183 = vector.shape_cast %182 : vector<1x1x1x32xf32> to vector<1x32xf32>
    %184 = vector.extract_strided_slice %177 {offsets = [0, 0], sizes = [32, 32], strides = [1, 1]} : vector<32x96xbf16> to vector<32x32xbf16>
    %185 = vector.extract_strided_slice %179 {offsets = [0, 0], sizes = [1, 32], strides = [1, 1]} : vector<1x96xf32> to vector<1x32xf32>
    %186 = vector.shape_cast %175 : vector<2x8x32xf32> to vector<16x32xf32>
    %187 = arith.truncf %186 : vector<16x32xf32> to vector<16x32xbf16>
    %cst_71 = arith.constant dense<0.000000e+00> : vector<16x32xf32>
    %188 = tpu.matmul %187, %184, %cst_71 {dimension_numbers = #tpu.dot_dimension_numbers<[1], [0], [0], [1], [0, 0, 1, 1], [], []>} : vector<16x32xbf16>, vector<32x32xbf16>, vector<16x32xf32> -> vector<16x32xf32>
    %189 = vector.broadcast %185 : vector<1x32xf32> to vector<16x32xf32>
    %190 = arith.addf %188, %189 : vector<16x32xf32>
    %191 = vector.shape_cast %190 : vector<16x32xf32> to vector<2x8x32xf32>
    %192 = vector.extract_strided_slice %177 {offsets = [0, 32], sizes = [32, 64], strides = [1, 1]} : vector<32x96xbf16> to vector<32x64xbf16>
    %193 = vector.extract_strided_slice %179 {offsets = [0, 32], sizes = [1, 64], strides = [1, 1]} : vector<1x96xf32> to vector<1x64xf32>
    %194 = vector.shape_cast %151 : vector<2x8x32xf32> to vector<16x32xf32>
    %195 = arith.truncf %194 : vector<16x32xf32> to vector<16x32xbf16>
    %cst_72 = arith.constant dense<0.000000e+00> : vector<16x64xf32>
    %196 = tpu.matmul %195, %192, %cst_72 {dimension_numbers = #tpu.dot_dimension_numbers<[1], [0], [0], [1], [0, 0, 1, 1], [], []>} : vector<16x32xbf16>, vector<32x64xbf16>, vector<16x64xf32> -> vector<16x64xf32>
    %197 = vector.broadcast %193 : vector<1x64xf32> to vector<16x64xf32>
    %198 = arith.addf %196, %197 : vector<16x64xf32>
    %199 = vector.shape_cast %198 : vector<16x64xf32> to vector<2x8x64xf32>
    %200 = vector.extract_strided_slice %199 {offsets = [0, 0, 0], sizes = [2, 8, 32], strides = [1, 1, 1]} : vector<2x8x64xf32> to vector<2x8x32xf32>
    %201 = vector.extract_strided_slice %199 {offsets = [0, 0, 32], sizes = [2, 8, 32], strides = [1, 1, 1]} : vector<2x8x64xf32> to vector<2x8x32xf32>
    %202 = vector.extract_strided_slice %191 {offsets = [0, 0, 0], sizes = [2, 8, 8], strides = [1, 1, 1]} : vector<2x8x32xf32> to vector<2x8x8xf32>
    %203 = arith.truncf %202 : vector<2x8x8xf32> to vector<2x8x8xbf16>
    %204 = vector.extract_strided_slice %200 {offsets = [0, 0, 0], sizes = [2, 8, 8], strides = [1, 1, 1]} : vector<2x8x32xf32> to vector<2x8x8xf32>
    %205 = arith.truncf %204 : vector<2x8x8xf32> to vector<2x8x8xbf16>
    %206 = vector.extract_strided_slice %201 {offsets = [0, 0, 0], sizes = [2, 8, 8], strides = [1, 1, 1]} : vector<2x8x32xf32> to vector<2x8x8xf32>
    %207 = arith.truncf %206 : vector<2x8x8xf32> to vector<2x8x8xbf16>
    "tpu.trace_start"() <{level = 10 : i32, message = "bqd,bkd->bqk"}> : () -> ()
    %cst_73 = arith.constant dense<0.000000e+00> : vector<2x8x8xf32>
    %208 = tpu.matmul %203, %205, %cst_73 {dimension_numbers = #tpu.dot_dimension_numbers<[2], [2], [1], [1], [0, 0, 0, 1, 1, 1], [0], [0]>} : vector<2x8x8xbf16>, vector<2x8x8xbf16>, vector<2x8x8xf32> -> vector<2x8x8xf32>
    "tpu.trace_stop"() : () -> ()
    %cst_74 = arith.constant dense<0xFF800000> : vector<2x8xf32>
    %209 = vector.multi_reduction <maximumf>, %208, %cst_74 [2] : vector<2x8x8xf32> to vector<2x8xf32>
    %210 = vector.shape_cast %209 : vector<2x8xf32> to vector<2x8x1xf32>
    %211 = vector.broadcast %210 : vector<2x8x1xf32> to vector<2x8x8xf32>
    %212 = arith.subf %208, %211 : vector<2x8x8xf32>
    %213 = math.exp %212 : vector<2x8x8xf32>
    %cst_75 = arith.constant dense<0.000000e+00> : vector<2x8xf32>
    %214 = vector.multi_reduction <add>, %213, %cst_75 [2] : vector<2x8x8xf32> to vector<2x8xf32>
    %215 = vector.shape_cast %214 : vector<2x8xf32> to vector<2x8x1xf32>
    %216 = vector.broadcast %215 : vector<2x8x1xf32> to vector<2x8x8xf32>
    %217 = arith.divf %213, %216 : vector<2x8x8xf32>
    %218 = arith.truncf %217 : vector<2x8x8xf32> to vector<2x8x8xbf16>
    "tpu.trace_start"() <{level = 10 : i32, message = "bqk,bkd->bqd"}> : () -> ()
    %cst_76 = arith.constant dense<0.000000e+00> : vector<2x8x8xf32>
    %219 = tpu.matmul %218, %207, %cst_76 {dimension_numbers = #tpu.dot_dimension_numbers<[2], [1], [1], [2], [0, 0, 0, 1, 1, 2], [0], [0]>} : vector<2x8x8xbf16>, vector<2x8x8xbf16>, vector<2x8x8xf32> -> vector<2x8x8xf32>
    "tpu.trace_stop"() : () -> ()
    %220 = vector.extract_strided_slice %191 {offsets = [0, 0, 8], sizes = [2, 8, 8], strides = [1, 1, 1]} : vector<2x8x32xf32> to vector<2x8x8xf32>
    %221 = arith.truncf %220 : vector<2x8x8xf32> to vector<2x8x8xbf16>
    %222 = vector.extract_strided_slice %200 {offsets = [0, 0, 8], sizes = [2, 8, 8], strides = [1, 1, 1]} : vector<2x8x32xf32> to vector<2x8x8xf32>
    %223 = arith.truncf %222 : vector<2x8x8xf32> to vector<2x8x8xbf16>
    %224 = vector.extract_strided_slice %201 {offsets = [0, 0, 8], sizes = [2, 8, 8], strides = [1, 1, 1]} : vector<2x8x32xf32> to vector<2x8x8xf32>
    %225 = arith.truncf %224 : vector<2x8x8xf32> to vector<2x8x8xbf16>
    "tpu.trace_start"() <{level = 10 : i32, message = "bqd,bkd->bqk"}> : () -> ()
    %cst_77 = arith.constant dense<0.000000e+00> : vector<2x8x8xf32>
    %226 = tpu.matmul %221, %223, %cst_77 {dimension_numbers = #tpu.dot_dimension_numbers<[2], [2], [1], [1], [0, 0, 0, 1, 1, 1], [0], [0]>} : vector<2x8x8xbf16>, vector<2x8x8xbf16>, vector<2x8x8xf32> -> vector<2x8x8xf32>
    "tpu.trace_stop"() : () -> ()
    %cst_78 = arith.constant dense<0xFF800000> : vector<2x8xf32>
    %227 = vector.multi_reduction <maximumf>, %226, %cst_78 [2] : vector<2x8x8xf32> to vector<2x8xf32>
    %228 = vector.shape_cast %227 : vector<2x8xf32> to vector<2x8x1xf32>
    %229 = vector.broadcast %228 : vector<2x8x1xf32> to vector<2x8x8xf32>
    %230 = arith.subf %226, %229 : vector<2x8x8xf32>
    %231 = math.exp %230 : vector<2x8x8xf32>
    %cst_79 = arith.constant dense<0.000000e+00> : vector<2x8xf32>
    %232 = vector.multi_reduction <add>, %231, %cst_79 [2] : vector<2x8x8xf32> to vector<2x8xf32>
    %233 = vector.shape_cast %232 : vector<2x8xf32> to vector<2x8x1xf32>
    %234 = vector.broadcast %233 : vector<2x8x1xf32> to vector<2x8x8xf32>
    %235 = arith.divf %231, %234 : vector<2x8x8xf32>
    %236 = arith.truncf %235 : vector<2x8x8xf32> to vector<2x8x8xbf16>
    "tpu.trace_start"() <{level = 10 : i32, message = "bqk,bkd->bqd"}> : () -> ()
    %cst_80 = arith.constant dense<0.000000e+00> : vector<2x8x8xf32>
    %237 = tpu.matmul %236, %225, %cst_80 {dimension_numbers = #tpu.dot_dimension_numbers<[2], [1], [1], [2], [0, 0, 0, 1, 1, 2], [0], [0]>} : vector<2x8x8xbf16>, vector<2x8x8xbf16>, vector<2x8x8xf32> -> vector<2x8x8xf32>
    "tpu.trace_stop"() : () -> ()
    %238 = vector.extract_strided_slice %191 {offsets = [0, 0, 16], sizes = [2, 8, 8], strides = [1, 1, 1]} : vector<2x8x32xf32> to vector<2x8x8xf32>
    %239 = arith.truncf %238 : vector<2x8x8xf32> to vector<2x8x8xbf16>
    %240 = vector.extract_strided_slice %200 {offsets = [0, 0, 16], sizes = [2, 8, 8], strides = [1, 1, 1]} : vector<2x8x32xf32> to vector<2x8x8xf32>
    %241 = arith.truncf %240 : vector<2x8x8xf32> to vector<2x8x8xbf16>
    %242 = vector.extract_strided_slice %201 {offsets = [0, 0, 16], sizes = [2, 8, 8], strides = [1, 1, 1]} : vector<2x8x32xf32> to vector<2x8x8xf32>
    %243 = arith.truncf %242 : vector<2x8x8xf32> to vector<2x8x8xbf16>
    "tpu.trace_start"() <{level = 10 : i32, message = "bqd,bkd->bqk"}> : () -> ()
    %cst_81 = arith.constant dense<0.000000e+00> : vector<2x8x8xf32>
    %244 = tpu.matmul %239, %241, %cst_81 {dimension_numbers = #tpu.dot_dimension_numbers<[2], [2], [1], [1], [0, 0, 0, 1, 1, 1], [0], [0]>} : vector<2x8x8xbf16>, vector<2x8x8xbf16>, vector<2x8x8xf32> -> vector<2x8x8xf32>
    "tpu.trace_stop"() : () -> ()
    %cst_82 = arith.constant dense<0xFF800000> : vector<2x8xf32>
    %245 = vector.multi_reduction <maximumf>, %244, %cst_82 [2] : vector<2x8x8xf32> to vector<2x8xf32>
    %246 = vector.shape_cast %245 : vector<2x8xf32> to vector<2x8x1xf32>
    %247 = vector.broadcast %246 : vector<2x8x1xf32> to vector<2x8x8xf32>
    %248 = arith.subf %244, %247 : vector<2x8x8xf32>
    %249 = math.exp %248 : vector<2x8x8xf32>
    %cst_83 = arith.constant dense<0.000000e+00> : vector<2x8xf32>
    %250 = vector.multi_reduction <add>, %249, %cst_83 [2] : vector<2x8x8xf32> to vector<2x8xf32>
    %251 = vector.shape_cast %250 : vector<2x8xf32> to vector<2x8x1xf32>
    %252 = vector.broadcast %251 : vector<2x8x1xf32> to vector<2x8x8xf32>
    %253 = arith.divf %249, %252 : vector<2x8x8xf32>
    %254 = arith.truncf %253 : vector<2x8x8xf32> to vector<2x8x8xbf16>
    "tpu.trace_start"() <{level = 10 : i32, message = "bqk,bkd->bqd"}> : () -> ()
    %cst_84 = arith.constant dense<0.000000e+00> : vector<2x8x8xf32>
    %255 = tpu.matmul %254, %243, %cst_84 {dimension_numbers = #tpu.dot_dimension_numbers<[2], [1], [1], [2], [0, 0, 0, 1, 1, 2], [0], [0]>} : vector<2x8x8xbf16>, vector<2x8x8xbf16>, vector<2x8x8xf32> -> vector<2x8x8xf32>
    "tpu.trace_stop"() : () -> ()
    %256 = vector.extract_strided_slice %191 {offsets = [0, 0, 24], sizes = [2, 8, 8], strides = [1, 1, 1]} : vector<2x8x32xf32> to vector<2x8x8xf32>
    %257 = arith.truncf %256 : vector<2x8x8xf32> to vector<2x8x8xbf16>
    %258 = vector.extract_strided_slice %200 {offsets = [0, 0, 24], sizes = [2, 8, 8], strides = [1, 1, 1]} : vector<2x8x32xf32> to vector<2x8x8xf32>
    %259 = arith.truncf %258 : vector<2x8x8xf32> to vector<2x8x8xbf16>
    %260 = vector.extract_strided_slice %201 {offsets = [0, 0, 24], sizes = [2, 8, 8], strides = [1, 1, 1]} : vector<2x8x32xf32> to vector<2x8x8xf32>
    %261 = arith.truncf %260 : vector<2x8x8xf32> to vector<2x8x8xbf16>
    "tpu.trace_start"() <{level = 10 : i32, message = "bqd,bkd->bqk"}> : () -> ()
    %cst_85 = arith.constant dense<0.000000e+00> : vector<2x8x8xf32>
    %262 = tpu.matmul %257, %259, %cst_85 {dimension_numbers = #tpu.dot_dimension_numbers<[2], [2], [1], [1], [0, 0, 0, 1, 1, 1], [0], [0]>} : vector<2x8x8xbf16>, vector<2x8x8xbf16>, vector<2x8x8xf32> -> vector<2x8x8xf32>
    "tpu.trace_stop"() : () -> ()
    %cst_86 = arith.constant dense<0xFF800000> : vector<2x8xf32>
    %263 = vector.multi_reduction <maximumf>, %262, %cst_86 [2] : vector<2x8x8xf32> to vector<2x8xf32>
    %264 = vector.shape_cast %263 : vector<2x8xf32> to vector<2x8x1xf32>
    %265 = vector.broadcast %264 : vector<2x8x1xf32> to vector<2x8x8xf32>
    %266 = arith.subf %262, %265 : vector<2x8x8xf32>
    %267 = math.exp %266 : vector<2x8x8xf32>
    %cst_87 = arith.constant dense<0.000000e+00> : vector<2x8xf32>
    %268 = vector.multi_reduction <add>, %267, %cst_87 [2] : vector<2x8x8xf32> to vector<2x8xf32>
    %269 = vector.shape_cast %268 : vector<2x8xf32> to vector<2x8x1xf32>
    %270 = vector.broadcast %269 : vector<2x8x1xf32> to vector<2x8x8xf32>
    %271 = arith.divf %267, %270 : vector<2x8x8xf32>
    %272 = arith.truncf %271 : vector<2x8x8xf32> to vector<2x8x8xbf16>
    "tpu.trace_start"() <{level = 10 : i32, message = "bqk,bkd->bqd"}> : () -> ()
    %cst_88 = arith.constant dense<0.000000e+00> : vector<2x8x8xf32>
    %273 = tpu.matmul %272, %261, %cst_88 {dimension_numbers = #tpu.dot_dimension_numbers<[2], [1], [1], [2], [0, 0, 0, 1, 1, 2], [0], [0]>} : vector<2x8x8xbf16>, vector<2x8x8xbf16>, vector<2x8x8xf32> -> vector<2x8x8xf32>
    "tpu.trace_stop"() : () -> ()
    %274 = tpu.concatenate %219, %237, %255, %273 in 2 : vector<2x8x8xf32>, vector<2x8x8xf32>, vector<2x8x8xf32>, vector<2x8x8xf32> -> vector<2x8x32xf32>
    %275 = vector.shape_cast %274 : vector<2x8x32xf32> to vector<16x32xf32>
    %276 = arith.truncf %275 : vector<16x32xf32> to vector<16x32xbf16>
    %cst_89 = arith.constant dense<0.000000e+00> : vector<16x32xf32>
    %277 = tpu.matmul %276, %181, %cst_89 {dimension_numbers = #tpu.dot_dimension_numbers<[1], [0], [0], [1], [0, 0, 1, 1], [], []>} : vector<16x32xbf16>, vector<32x32xbf16>, vector<16x32xf32> -> vector<16x32xf32>
    %278 = vector.broadcast %183 : vector<1x32xf32> to vector<16x32xf32>
    %279 = arith.addf %277, %278 : vector<16x32xf32>
    %280 = vector.shape_cast %279 : vector<16x32xf32> to vector<2x8x32xf32>
    %281 = arith.addf %127, %280 : vector<2x8x32xf32>
    %cst_90 = arith.constant dense<0.000000e+00> : vector<2x8xf32>
    %282 = vector.multi_reduction <add>, %281, %cst_90 [2] : vector<2x8x32xf32> to vector<2x8xf32>
    %283 = vector.shape_cast %282 : vector<2x8xf32> to vector<2x8x1xf32>
    %cst_91 = arith.constant 3.200000e+01 : f32
    %284 = vector.broadcast %cst_91 : f32 to vector<2x8x1xf32>
    %285 = arith.divf %283, %284 : vector<2x8x1xf32>
    %286 = vector.broadcast %285 : vector<2x8x1xf32> to vector<2x8x32xf32>
    %287 = arith.subf %281, %286 : vector<2x8x32xf32>
    %288 = arith.mulf %287, %287 : vector<2x8x32xf32>
    %cst_92 = arith.constant dense<0.000000e+00> : vector<2x8xf32>
    %289 = vector.multi_reduction <add>, %288, %cst_92 [2] : vector<2x8x32xf32> to vector<2x8xf32>
    %290 = vector.shape_cast %289 : vector<2x8xf32> to vector<2x8x1xf32>
    %cst_93 = arith.constant 3.200000e+01 : f32
    %291 = vector.broadcast %cst_93 : f32 to vector<2x8x1xf32>
    %292 = arith.divf %290, %291 : vector<2x8x1xf32>
    %293 = vector.broadcast %285 : vector<2x8x1xf32> to vector<2x8x32xf32>
    %294 = arith.subf %281, %293 : vector<2x8x32xf32>
    %cst_94 = arith.constant 9.99999997E-7 : f32
    %295 = vector.broadcast %cst_94 : f32 to vector<2x8x1xf32>
    %296 = arith.addf %292, %295 : vector<2x8x1xf32>
    %297 = math.rsqrt %296 : vector<2x8x1xf32>
    %298 = vector.broadcast %297 : vector<2x8x1xf32> to vector<2x8x32xf32>
    %299 = arith.mulf %294, %298 : vector<2x8x32xf32>
    %300 = vector.shape_cast %2 : vector<1x32xf32> to vector<1x1x32xf32>
    %301 = vector.broadcast %300 : vector<1x1x32xf32> to vector<2x8x32xf32>
    %302 = arith.mulf %299, %301 : vector<2x8x32xf32>
    %303 = vector.shape_cast %4 : vector<1x32xf32> to vector<1x1x32xf32>
    %304 = vector.broadcast %303 : vector<1x1x32xf32> to vector<2x8x32xf32>
    %305 = arith.addf %302, %304 : vector<2x8x32xf32>
    %306 = vector.extract_strided_slice %177 {offsets = [0, 0], sizes = [32, 32], strides = [1, 1]} : vector<32x96xbf16> to vector<32x32xbf16>
    %307 = vector.extract_strided_slice %179 {offsets = [0, 0], sizes = [1, 32], strides = [1, 1]} : vector<1x96xf32> to vector<1x32xf32>
    %308 = vector.shape_cast %151 : vector<2x8x32xf32> to vector<16x32xf32>
    %309 = arith.truncf %308 : vector<16x32xf32> to vector<16x32xbf16>
    %cst_95 = arith.constant dense<0.000000e+00> : vector<16x32xf32>
    %310 = tpu.matmul %309, %306, %cst_95 {dimension_numbers = #tpu.dot_dimension_numbers<[1], [0], [0], [1], [0, 0, 1, 1], [], []>} : vector<16x32xbf16>, vector<32x32xbf16>, vector<16x32xf32> -> vector<16x32xf32>
    %311 = vector.broadcast %307 : vector<1x32xf32> to vector<16x32xf32>
    %312 = arith.addf %310, %311 : vector<16x32xf32>
    %313 = vector.shape_cast %312 : vector<16x32xf32> to vector<2x8x32xf32>
    %314 = vector.extract_strided_slice %177 {offsets = [0, 32], sizes = [32, 64], strides = [1, 1]} : vector<32x96xbf16> to vector<32x64xbf16>
    %315 = vector.extract_strided_slice %179 {offsets = [0, 32], sizes = [1, 64], strides = [1, 1]} : vector<1x96xf32> to vector<1x64xf32>
    %316 = vector.shape_cast %305 : vector<2x8x32xf32> to vector<16x32xf32>
    %317 = arith.truncf %316 : vector<16x32xf32> to vector<16x32xbf16>
    %cst_96 = arith.constant dense<0.000000e+00> : vector<16x64xf32>
    %318 = tpu.matmul %317, %314, %cst_96 {dimension_numbers = #tpu.dot_dimension_numbers<[1], [0], [0], [1], [0, 0, 1, 1], [], []>} : vector<16x32xbf16>, vector<32x64xbf16>, vector<16x64xf32> -> vector<16x64xf32>
    %319 = vector.broadcast %315 : vector<1x64xf32> to vector<16x64xf32>
    %320 = arith.addf %318, %319 : vector<16x64xf32>
    %321 = vector.shape_cast %320 : vector<16x64xf32> to vector<2x8x64xf32>
    %322 = vector.extract_strided_slice %321 {offsets = [0, 0, 0], sizes = [2, 8, 32], strides = [1, 1, 1]} : vector<2x8x64xf32> to vector<2x8x32xf32>
    %323 = vector.extract_strided_slice %321 {offsets = [0, 0, 32], sizes = [2, 8, 32], strides = [1, 1, 1]} : vector<2x8x64xf32> to vector<2x8x32xf32>
    %324 = vector.extract_strided_slice %313 {offsets = [0, 0, 0], sizes = [2, 8, 8], strides = [1, 1, 1]} : vector<2x8x32xf32> to vector<2x8x8xf32>
    %325 = arith.truncf %324 : vector<2x8x8xf32> to vector<2x8x8xbf16>
    %326 = vector.extract_strided_slice %322 {offsets = [0, 0, 0], sizes = [2, 8, 8], strides = [1, 1, 1]} : vector<2x8x32xf32> to vector<2x8x8xf32>
    %327 = arith.truncf %326 : vector<2x8x8xf32> to vector<2x8x8xbf16>
    %328 = vector.extract_strided_slice %323 {offsets = [0, 0, 0], sizes = [2, 8, 8], strides = [1, 1, 1]} : vector<2x8x32xf32> to vector<2x8x8xf32>
    %329 = arith.truncf %328 : vector<2x8x8xf32> to vector<2x8x8xbf16>
    "tpu.trace_start"() <{level = 10 : i32, message = "bqd,bkd->bqk"}> : () -> ()
    %cst_97 = arith.constant dense<0.000000e+00> : vector<2x8x8xf32>
    %330 = tpu.matmul %325, %327, %cst_97 {dimension_numbers = #tpu.dot_dimension_numbers<[2], [2], [1], [1], [0, 0, 0, 1, 1, 1], [0], [0]>} : vector<2x8x8xbf16>, vector<2x8x8xbf16>, vector<2x8x8xf32> -> vector<2x8x8xf32>
    "tpu.trace_stop"() : () -> ()
    %cst_98 = arith.constant dense<0xFF800000> : vector<2x8xf32>
    %331 = vector.multi_reduction <maximumf>, %330, %cst_98 [2] : vector<2x8x8xf32> to vector<2x8xf32>
    %332 = vector.shape_cast %331 : vector<2x8xf32> to vector<2x8x1xf32>
    %333 = vector.broadcast %332 : vector<2x8x1xf32> to vector<2x8x8xf32>
    %334 = arith.subf %330, %333 : vector<2x8x8xf32>
    %335 = math.exp %334 : vector<2x8x8xf32>
    %cst_99 = arith.constant dense<0.000000e+00> : vector<2x8xf32>
    %336 = vector.multi_reduction <add>, %335, %cst_99 [2] : vector<2x8x8xf32> to vector<2x8xf32>
    %337 = vector.shape_cast %336 : vector<2x8xf32> to vector<2x8x1xf32>
    %338 = vector.broadcast %337 : vector<2x8x1xf32> to vector<2x8x8xf32>
    %339 = arith.divf %335, %338 : vector<2x8x8xf32>
    %340 = arith.truncf %339 : vector<2x8x8xf32> to vector<2x8x8xbf16>
    "tpu.trace_start"() <{level = 10 : i32, message = "bqk,bkd->bqd"}> : () -> ()
    %cst_100 = arith.constant dense<0.000000e+00> : vector<2x8x8xf32>
    %341 = tpu.matmul %340, %329, %cst_100 {dimension_numbers = #tpu.dot_dimension_numbers<[2], [1], [1], [2], [0, 0, 0, 1, 1, 2], [0], [0]>} : vector<2x8x8xbf16>, vector<2x8x8xbf16>, vector<2x8x8xf32> -> vector<2x8x8xf32>
    "tpu.trace_stop"() : () -> ()
    %342 = vector.extract_strided_slice %313 {offsets = [0, 0, 8], sizes = [2, 8, 8], strides = [1, 1, 1]} : vector<2x8x32xf32> to vector<2x8x8xf32>
    %343 = arith.truncf %342 : vector<2x8x8xf32> to vector<2x8x8xbf16>
    %344 = vector.extract_strided_slice %322 {offsets = [0, 0, 8], sizes = [2, 8, 8], strides = [1, 1, 1]} : vector<2x8x32xf32> to vector<2x8x8xf32>
    %345 = arith.truncf %344 : vector<2x8x8xf32> to vector<2x8x8xbf16>
    %346 = vector.extract_strided_slice %323 {offsets = [0, 0, 8], sizes = [2, 8, 8], strides = [1, 1, 1]} : vector<2x8x32xf32> to vector<2x8x8xf32>
    %347 = arith.truncf %346 : vector<2x8x8xf32> to vector<2x8x8xbf16>
    "tpu.trace_start"() <{level = 10 : i32, message = "bqd,bkd->bqk"}> : () -> ()
    %cst_101 = arith.constant dense<0.000000e+00> : vector<2x8x8xf32>
    %348 = tpu.matmul %343, %345, %cst_101 {dimension_numbers = #tpu.dot_dimension_numbers<[2], [2], [1], [1], [0, 0, 0, 1, 1, 1], [0], [0]>} : vector<2x8x8xbf16>, vector<2x8x8xbf16>, vector<2x8x8xf32> -> vector<2x8x8xf32>
    "tpu.trace_stop"() : () -> ()
    %cst_102 = arith.constant dense<0xFF800000> : vector<2x8xf32>
    %349 = vector.multi_reduction <maximumf>, %348, %cst_102 [2] : vector<2x8x8xf32> to vector<2x8xf32>
    %350 = vector.shape_cast %349 : vector<2x8xf32> to vector<2x8x1xf32>
    %351 = vector.broadcast %350 : vector<2x8x1xf32> to vector<2x8x8xf32>
    %352 = arith.subf %348, %351 : vector<2x8x8xf32>
    %353 = math.exp %352 : vector<2x8x8xf32>
    %cst_103 = arith.constant dense<0.000000e+00> : vector<2x8xf32>
    %354 = vector.multi_reduction <add>, %353, %cst_103 [2] : vector<2x8x8xf32> to vector<2x8xf32>
    %355 = vector.shape_cast %354 : vector<2x8xf32> to vector<2x8x1xf32>
    %356 = vector.broadcast %355 : vector<2x8x1xf32> to vector<2x8x8xf32>
    %357 = arith.divf %353, %356 : vector<2x8x8xf32>
    %358 = arith.truncf %357 : vector<2x8x8xf32> to vector<2x8x8xbf16>
    "tpu.trace_start"() <{level = 10 : i32, message = "bqk,bkd->bqd"}> : () -> ()
    %cst_104 = arith.constant dense<0.000000e+00> : vector<2x8x8xf32>
    %359 = tpu.matmul %358, %347, %cst_104 {dimension_numbers = #tpu.dot_dimension_numbers<[2], [1], [1], [2], [0, 0, 0, 1, 1, 2], [0], [0]>} : vector<2x8x8xbf16>, vector<2x8x8xbf16>, vector<2x8x8xf32> -> vector<2x8x8xf32>
    "tpu.trace_stop"() : () -> ()
    %360 = vector.extract_strided_slice %313 {offsets = [0, 0, 16], sizes = [2, 8, 8], strides = [1, 1, 1]} : vector<2x8x32xf32> to vector<2x8x8xf32>
    %361 = arith.truncf %360 : vector<2x8x8xf32> to vector<2x8x8xbf16>
    %362 = vector.extract_strided_slice %322 {offsets = [0, 0, 16], sizes = [2, 8, 8], strides = [1, 1, 1]} : vector<2x8x32xf32> to vector<2x8x8xf32>
    %363 = arith.truncf %362 : vector<2x8x8xf32> to vector<2x8x8xbf16>
    %364 = vector.extract_strided_slice %323 {offsets = [0, 0, 16], sizes = [2, 8, 8], strides = [1, 1, 1]} : vector<2x8x32xf32> to vector<2x8x8xf32>
    %365 = arith.truncf %364 : vector<2x8x8xf32> to vector<2x8x8xbf16>
    "tpu.trace_start"() <{level = 10 : i32, message = "bqd,bkd->bqk"}> : () -> ()
    %cst_105 = arith.constant dense<0.000000e+00> : vector<2x8x8xf32>
    %366 = tpu.matmul %361, %363, %cst_105 {dimension_numbers = #tpu.dot_dimension_numbers<[2], [2], [1], [1], [0, 0, 0, 1, 1, 1], [0], [0]>} : vector<2x8x8xbf16>, vector<2x8x8xbf16>, vector<2x8x8xf32> -> vector<2x8x8xf32>
    "tpu.trace_stop"() : () -> ()
    %cst_106 = arith.constant dense<0xFF800000> : vector<2x8xf32>
    %367 = vector.multi_reduction <maximumf>, %366, %cst_106 [2] : vector<2x8x8xf32> to vector<2x8xf32>
    %368 = vector.shape_cast %367 : vector<2x8xf32> to vector<2x8x1xf32>
    %369 = vector.broadcast %368 : vector<2x8x1xf32> to vector<2x8x8xf32>
    %370 = arith.subf %366, %369 : vector<2x8x8xf32>
    %371 = math.exp %370 : vector<2x8x8xf32>
    %cst_107 = arith.constant dense<0.000000e+00> : vector<2x8xf32>
    %372 = vector.multi_reduction <add>, %371, %cst_107 [2] : vector<2x8x8xf32> to vector<2x8xf32>
    %373 = vector.shape_cast %372 : vector<2x8xf32> to vector<2x8x1xf32>
    %374 = vector.broadcast %373 : vector<2x8x1xf32> to vector<2x8x8xf32>
    %375 = arith.divf %371, %374 : vector<2x8x8xf32>
    %376 = arith.truncf %375 : vector<2x8x8xf32> to vector<2x8x8xbf16>
    "tpu.trace_start"() <{level = 10 : i32, message = "bqk,bkd->bqd"}> : () -> ()
    %cst_108 = arith.constant dense<0.000000e+00> : vector<2x8x8xf32>
    %377 = tpu.matmul %376, %365, %cst_108 {dimension_numbers = #tpu.dot_dimension_numbers<[2], [1], [1], [2], [0, 0, 0, 1, 1, 2], [0], [0]>} : vector<2x8x8xbf16>, vector<2x8x8xbf16>, vector<2x8x8xf32> -> vector<2x8x8xf32>
    "tpu.trace_stop"() : () -> ()
    %378 = vector.extract_strided_slice %313 {offsets = [0, 0, 24], sizes = [2, 8, 8], strides = [1, 1, 1]} : vector<2x8x32xf32> to vector<2x8x8xf32>
    %379 = arith.truncf %378 : vector<2x8x8xf32> to vector<2x8x8xbf16>
    %380 = vector.extract_strided_slice %322 {offsets = [0, 0, 24], sizes = [2, 8, 8], strides = [1, 1, 1]} : vector<2x8x32xf32> to vector<2x8x8xf32>
    %381 = arith.truncf %380 : vector<2x8x8xf32> to vector<2x8x8xbf16>
    %382 = vector.extract_strided_slice %323 {offsets = [0, 0, 24], sizes = [2, 8, 8], strides = [1, 1, 1]} : vector<2x8x32xf32> to vector<2x8x8xf32>
    %383 = arith.truncf %382 : vector<2x8x8xf32> to vector<2x8x8xbf16>
    "tpu.trace_start"() <{level = 10 : i32, message = "bqd,bkd->bqk"}> : () -> ()
    %cst_109 = arith.constant dense<0.000000e+00> : vector<2x8x8xf32>
    %384 = tpu.matmul %379, %381, %cst_109 {dimension_numbers = #tpu.dot_dimension_numbers<[2], [2], [1], [1], [0, 0, 0, 1, 1, 1], [0], [0]>} : vector<2x8x8xbf16>, vector<2x8x8xbf16>, vector<2x8x8xf32> -> vector<2x8x8xf32>
    "tpu.trace_stop"() : () -> ()
    %cst_110 = arith.constant dense<0xFF800000> : vector<2x8xf32>
    %385 = vector.multi_reduction <maximumf>, %384, %cst_110 [2] : vector<2x8x8xf32> to vector<2x8xf32>
    %386 = vector.shape_cast %385 : vector<2x8xf32> to vector<2x8x1xf32>
    %387 = vector.broadcast %386 : vector<2x8x1xf32> to vector<2x8x8xf32>
    %388 = arith.subf %384, %387 : vector<2x8x8xf32>
    %389 = math.exp %388 : vector<2x8x8xf32>
    %cst_111 = arith.constant dense<0.000000e+00> : vector<2x8xf32>
    %390 = vector.multi_reduction <add>, %389, %cst_111 [2] : vector<2x8x8xf32> to vector<2x8xf32>
    %391 = vector.shape_cast %390 : vector<2x8xf32> to vector<2x8x1xf32>
    %392 = vector.broadcast %391 : vector<2x8x1xf32> to vector<2x8x8xf32>
    %393 = arith.divf %389, %392 : vector<2x8x8xf32>
    %394 = arith.truncf %393 : vector<2x8x8xf32> to vector<2x8x8xbf16>
    "tpu.trace_start"() <{level = 10 : i32, message = "bqk,bkd->bqd"}> : () -> ()
    %cst_112 = arith.constant dense<0.000000e+00> : vector<2x8x8xf32>
    %395 = tpu.matmul %394, %383, %cst_112 {dimension_numbers = #tpu.dot_dimension_numbers<[2], [1], [1], [2], [0, 0, 0, 1, 1, 2], [0], [0]>} : vector<2x8x8xbf16>, vector<2x8x8xbf16>, vector<2x8x8xf32> -> vector<2x8x8xf32>
    "tpu.trace_stop"() : () -> ()
    %396 = tpu.concatenate %341, %359, %377, %395 in 2 : vector<2x8x8xf32>, vector<2x8x8xf32>, vector<2x8x8xf32>, vector<2x8x8xf32> -> vector<2x8x32xf32>
    %397 = vector.shape_cast %396 : vector<2x8x32xf32> to vector<16x32xf32>
    %398 = arith.truncf %397 : vector<16x32xf32> to vector<16x32xbf16>
    %cst_113 = arith.constant dense<0.000000e+00> : vector<16x32xf32>
    %399 = tpu.matmul %398, %181, %cst_113 {dimension_numbers = #tpu.dot_dimension_numbers<[1], [0], [0], [1], [0, 0, 1, 1], [], []>} : vector<16x32xbf16>, vector<32x32xbf16>, vector<16x32xf32> -> vector<16x32xf32>
    %400 = vector.broadcast %183 : vector<1x32xf32> to vector<16x32xf32>
    %401 = arith.addf %399, %400 : vector<16x32xf32>
    %402 = vector.shape_cast %401 : vector<16x32xf32> to vector<2x8x32xf32>
    %403 = arith.addf %126, %402 : vector<2x8x32xf32>
    %c0_114 = arith.constant 0 : index
    %c0_115 = arith.constant 0 : index
    %c0_116 = arith.constant 0 : index
    %404 = vector.load %arg11[%c0_114, %c0_115, %c0_116] : memref<2x16x32xf32, #tpu.memory_space<vmem>>, vector<2x8x32xf32>
    tpu.vector_store %arg11[%c0_114, %c0_115, %c0_116], %403 {strides = array<i32>} : memref<2x16x32xf32, #tpu.memory_space<vmem>>, vector<2x8x32xf32>,
    %c0_117 = arith.constant 0 : index
    %c8 = arith.constant 8 : index
    %c0_118 = arith.constant 0 : index
    %405 = vector.load %arg11[%c0_117, %c8, %c0_118] : memref<2x16x32xf32, #tpu.memory_space<vmem>>, vector<2x8x32xf32>
    tpu.vector_store %arg11[%c0_117, %c8, %c0_118], %281 {strides = array<i32>} : memref<2x16x32xf32, #tpu.memory_space<vmem>>, vector<2x8x32xf32>,
    %c0_119 = arith.constant 0 : index
    %c0_120 = arith.constant 0 : index
    %c0_121 = arith.constant 0 : index
    %406 = vector.load %arg11[%c0_119, %c0_120, %c0_121] : memref<2x16x32xf32, #tpu.memory_space<vmem>>, vector<2x16x32xf32>
    %c1_122 = arith.constant 1 : index
    %c0_123 = arith.constant 0 : index
    %c0_124 = arith.constant 0 : index
    %407 = vector.load %arg6[%c1_122, %c0_123, %c0_124] : memref<2x1x32xf32, #tpu.memory_space<vmem>>, vector<1x1x32xf32>
    %408 = vector.shape_cast %407 : vector<1x1x32xf32> to vector<1x32xf32>
    %c1_125 = arith.constant 1 : index
    %c0_126 = arith.constant 0 : index
    %c0_127 = arith.constant 0 : index
    %409 = vector.load %arg7[%c1_125, %c0_126, %c0_127] : memref<2x1x32xf32, #tpu.memory_space<vmem>>, vector<1x1x32xf32>
    %410 = vector.shape_cast %409 : vector<1x1x32xf32> to vector<1x32xf32>
    %c1_128 = arith.constant 1 : index
    %c0_129 = arith.constant 0 : index
    %c0_130 = arith.constant 0 : index
    %c0_131 = arith.constant 0 : index
    %411 = vector.load %arg2[%c1_128, %c0_129, %c0_130, %c0_131] : memref<2x2x32x96xbf16, #tpu.memory_space<vmem>>, vector<1x1x32x96xbf16>
    %412 = vector.shape_cast %411 : vector<1x1x32x96xbf16> to vector<32x96xbf16>
    %c1_132 = arith.constant 1 : index
    %c0_133 = arith.constant 0 : index
    %c0_134 = arith.constant 0 : index
    %c0_135 = arith.constant 0 : index
    %413 = vector.load %arg3[%c1_132, %c0_133, %c0_134, %c0_135] : memref<2x2x1x96xf32, #tpu.memory_space<vmem>>, vector<1x1x1x96xf32>
    %414 = vector.shape_cast %413 : vector<1x1x1x96xf32> to vector<1x96xf32>
    %cst_136 = arith.constant dense<0.000000e+00> : vector<2x16xf32>
    %415 = vector.multi_reduction <add>, %406, %cst_136 [2] : vector<2x16x32xf32> to vector<2x16xf32>
    %416 = vector.shape_cast %415 : vector<2x16xf32> to vector<2x16x1xf32>
    %cst_137 = arith.constant 3.200000e+01 : f32
    %417 = vector.broadcast %cst_137 : f32 to vector<2x16x1xf32>
    %418 = arith.divf %416, %417 : vector<2x16x1xf32>
    %419 = vector.broadcast %418 : vector<2x16x1xf32> to vector<2x16x32xf32>
    %420 = arith.subf %406, %419 : vector<2x16x32xf32>
    %421 = arith.mulf %420, %420 : vector<2x16x32xf32>
    %cst_138 = arith.constant dense<0.000000e+00> : vector<2x16xf32>
    %422 = vector.multi_reduction <add>, %421, %cst_138 [2] : vector<2x16x32xf32> to vector<2x16xf32>
    %423 = vector.shape_cast %422 : vector<2x16xf32> to vector<2x16x1xf32>
    %cst_139 = arith.constant 3.200000e+01 : f32
    %424 = vector.broadcast %cst_139 : f32 to vector<2x16x1xf32>
    %425 = arith.divf %423, %424 : vector<2x16x1xf32>
    %426 = vector.broadcast %418 : vector<2x16x1xf32> to vector<2x16x32xf32>
    %427 = arith.subf %406, %426 : vector<2x16x32xf32>
    %cst_140 = arith.constant 9.99999997E-7 : f32
    %428 = vector.broadcast %cst_140 : f32 to vector<2x16x1xf32>
    %429 = arith.addf %425, %428 : vector<2x16x1xf32>
    %430 = math.rsqrt %429 : vector<2x16x1xf32>
    %431 = vector.broadcast %430 : vector<2x16x1xf32> to vector<2x16x32xf32>
    %432 = arith.mulf %427, %431 : vector<2x16x32xf32>
    %433 = vector.shape_cast %408 : vector<1x32xf32> to vector<1x1x32xf32>
    %434 = vector.broadcast %433 : vector<1x1x32xf32> to vector<2x16x32xf32>
    %435 = arith.mulf %432, %434 : vector<2x16x32xf32>
    %436 = vector.shape_cast %410 : vector<1x32xf32> to vector<1x1x32xf32>
    %437 = vector.broadcast %436 : vector<1x1x32xf32> to vector<2x16x32xf32>
    %438 = arith.addf %435, %437 : vector<2x16x32xf32>
    %439 = vector.shape_cast %438 : vector<2x16x32xf32> to vector<32x32xf32>
    %440 = arith.truncf %439 : vector<32x32xf32> to vector<32x32xbf16>
    %cst_141 = arith.constant dense<0.000000e+00> : vector<32x96xf32>
    %441 = tpu.matmul %440, %412, %cst_141 {dimension_numbers = #tpu.dot_dimension_numbers<[1], [0], [0], [1], [0, 0, 1, 1], [], []>} : vector<32x32xbf16>, vector<32x96xbf16>, vector<32x96xf32> -> vector<32x96xf32>
    %442 = vector.broadcast %414 : vector<1x96xf32> to vector<32x96xf32>
    %443 = arith.addf %441, %442 : vector<32x96xf32>
    %444 = vector.shape_cast %443 : vector<32x96xf32> to vector<2x16x96xf32>
    %445 = vector.extract_strided_slice %444 {offsets = [0, 0, 0], sizes = [2, 16, 32], strides = [1, 1, 1]} : vector<2x16x96xf32> to vector<2x16x32xf32>
    %446 = vector.extract_strided_slice %444 {offsets = [0, 0, 32], sizes = [2, 16, 32], strides = [1, 1, 1]} : vector<2x16x96xf32> to vector<2x16x32xf32>
    %447 = vector.extract_strided_slice %444 {offsets = [0, 0, 64], sizes = [2, 16, 32], strides = [1, 1, 1]} : vector<2x16x96xf32> to vector<2x16x32xf32>
    %c1_142 = arith.constant 1 : index
    %c0_143 = arith.constant 0 : index
    %c0_144 = arith.constant 0 : index
    %c0_145 = arith.constant 0 : index
    %448 = vector.load %arg4[%c1_142, %c0_143, %c0_144, %c0_145] : memref<2x2x32x32xbf16, #tpu.memory_space<vmem>>, vector<1x1x32x32xbf16>
    %449 = vector.shape_cast %448 : vector<1x1x32x32xbf16> to vector<32x32xbf16>
    %c1_146 = arith.constant 1 : index
    %c0_147 = arith.constant 0 : index
    %c0_148 = arith.constant 0 : index
    %c0_149 = arith.constant 0 : index
    %450 = vector.load %arg5[%c1_146, %c0_147, %c0_148, %c0_149] : memref<2x2x1x32xf32, #tpu.memory_space<vmem>>, vector<1x1x1x32xf32>
    %451 = vector.shape_cast %450 : vector<1x1x1x32xf32> to vector<1x32xf32>
    %452 = vector.extract_strided_slice %445 {offsets = [0, 0, 0], sizes = [2, 16, 8], strides = [1, 1, 1]} : vector<2x16x32xf32> to vector<2x16x8xf32>
    %453 = arith.truncf %452 : vector<2x16x8xf32> to vector<2x16x8xbf16>
    %454 = vector.extract_strided_slice %446 {offsets = [0, 0, 0], sizes = [2, 16, 8], strides = [1, 1, 1]} : vector<2x16x32xf32> to vector<2x16x8xf32>
    %455 = arith.truncf %454 : vector<2x16x8xf32> to vector<2x16x8xbf16>
    %456 = vector.extract_strided_slice %447 {offsets = [0, 0, 0], sizes = [2, 16, 8], strides = [1, 1, 1]} : vector<2x16x32xf32> to vector<2x16x8xf32>
    %457 = arith.truncf %456 : vector<2x16x8xf32> to vector<2x16x8xbf16>
    "tpu.trace_start"() <{level = 10 : i32, message = "bqd,bkd->bqk"}> : () -> ()
    %cst_150 = arith.constant dense<0.000000e+00> : vector<2x16x16xf32>
    %458 = tpu.matmul %453, %455, %cst_150 {dimension_numbers = #tpu.dot_dimension_numbers<[2], [2], [1], [1], [0, 0, 0, 1, 1, 1], [0], [0]>} : vector<2x16x8xbf16>, vector<2x16x8xbf16>, vector<2x16x16xf32> -> vector<2x16x16xf32>
    "tpu.trace_stop"() : () -> ()
    %cst_151 = arith.constant dense<0xFF800000> : vector<2x16xf32>
    %459 = vector.multi_reduction <maximumf>, %458, %cst_151 [2] : vector<2x16x16xf32> to vector<2x16xf32>
    %460 = vector.shape_cast %459 : vector<2x16xf32> to vector<2x16x1xf32>
    %461 = vector.broadcast %460 : vector<2x16x1xf32> to vector<2x16x16xf32>
    %462 = arith.subf %458, %461 : vector<2x16x16xf32>
    %463 = math.exp %462 : vector<2x16x16xf32>
    %cst_152 = arith.constant dense<0.000000e+00> : vector<2x16xf32>
    %464 = vector.multi_reduction <add>, %463, %cst_152 [2] : vector<2x16x16xf32> to vector<2x16xf32>
    %465 = vector.shape_cast %464 : vector<2x16xf32> to vector<2x16x1xf32>
    %466 = vector.broadcast %465 : vector<2x16x1xf32> to vector<2x16x16xf32>
    %467 = arith.divf %463, %466 : vector<2x16x16xf32>
    %468 = arith.truncf %467 : vector<2x16x16xf32> to vector<2x16x16xbf16>
    "tpu.trace_start"() <{level = 10 : i32, message = "bqk,bkd->bqd"}> : () -> ()
    %cst_153 = arith.constant dense<0.000000e+00> : vector<2x16x8xf32>
    %469 = tpu.matmul %468, %457, %cst_153 {dimension_numbers = #tpu.dot_dimension_numbers<[2], [1], [1], [2], [0, 0, 0, 1, 1, 2], [0], [0]>} : vector<2x16x16xbf16>, vector<2x16x8xbf16>, vector<2x16x8xf32> -> vector<2x16x8xf32>
    "tpu.trace_stop"() : () -> ()
    %470 = vector.extract_strided_slice %445 {offsets = [0, 0, 8], sizes = [2, 16, 8], strides = [1, 1, 1]} : vector<2x16x32xf32> to vector<2x16x8xf32>
    %471 = arith.truncf %470 : vector<2x16x8xf32> to vector<2x16x8xbf16>
    %472 = vector.extract_strided_slice %446 {offsets = [0, 0, 8], sizes = [2, 16, 8], strides = [1, 1, 1]} : vector<2x16x32xf32> to vector<2x16x8xf32>
    %473 = arith.truncf %472 : vector<2x16x8xf32> to vector<2x16x8xbf16>
    %474 = vector.extract_strided_slice %447 {offsets = [0, 0, 8], sizes = [2, 16, 8], strides = [1, 1, 1]} : vector<2x16x32xf32> to vector<2x16x8xf32>
    %475 = arith.truncf %474 : vector<2x16x8xf32> to vector<2x16x8xbf16>
    "tpu.trace_start"() <{level = 10 : i32, message = "bqd,bkd->bqk"}> : () -> ()
    %cst_154 = arith.constant dense<0.000000e+00> : vector<2x16x16xf32>
    %476 = tpu.matmul %471, %473, %cst_154 {dimension_numbers = #tpu.dot_dimension_numbers<[2], [2], [1], [1], [0, 0, 0, 1, 1, 1], [0], [0]>} : vector<2x16x8xbf16>, vector<2x16x8xbf16>, vector<2x16x16xf32> -> vector<2x16x16xf32>
    "tpu.trace_stop"() : () -> ()
    %cst_155 = arith.constant dense<0xFF800000> : vector<2x16xf32>
    %477 = vector.multi_reduction <maximumf>, %476, %cst_155 [2] : vector<2x16x16xf32> to vector<2x16xf32>
    %478 = vector.shape_cast %477 : vector<2x16xf32> to vector<2x16x1xf32>
    %479 = vector.broadcast %478 : vector<2x16x1xf32> to vector<2x16x16xf32>
    %480 = arith.subf %476, %479 : vector<2x16x16xf32>
    %481 = math.exp %480 : vector<2x16x16xf32>
    %cst_156 = arith.constant dense<0.000000e+00> : vector<2x16xf32>
    %482 = vector.multi_reduction <add>, %481, %cst_156 [2] : vector<2x16x16xf32> to vector<2x16xf32>
    %483 = vector.shape_cast %482 : vector<2x16xf32> to vector<2x16x1xf32>
    %484 = vector.broadcast %483 : vector<2x16x1xf32> to vector<2x16x16xf32>
    %485 = arith.divf %481, %484 : vector<2x16x16xf32>
    %486 = arith.truncf %485 : vector<2x16x16xf32> to vector<2x16x16xbf16>
    "tpu.trace_start"() <{level = 10 : i32, message = "bqk,bkd->bqd"}> : () -> ()
    %cst_157 = arith.constant dense<0.000000e+00> : vector<2x16x8xf32>
    %487 = tpu.matmul %486, %475, %cst_157 {dimension_numbers = #tpu.dot_dimension_numbers<[2], [1], [1], [2], [0, 0, 0, 1, 1, 2], [0], [0]>} : vector<2x16x16xbf16>, vector<2x16x8xbf16>, vector<2x16x8xf32> -> vector<2x16x8xf32>
    "tpu.trace_stop"() : () -> ()
    %488 = vector.extract_strided_slice %445 {offsets = [0, 0, 16], sizes = [2, 16, 8], strides = [1, 1, 1]} : vector<2x16x32xf32> to vector<2x16x8xf32>
    %489 = arith.truncf %488 : vector<2x16x8xf32> to vector<2x16x8xbf16>
    %490 = vector.extract_strided_slice %446 {offsets = [0, 0, 16], sizes = [2, 16, 8], strides = [1, 1, 1]} : vector<2x16x32xf32> to vector<2x16x8xf32>
    %491 = arith.truncf %490 : vector<2x16x8xf32> to vector<2x16x8xbf16>
    %492 = vector.extract_strided_slice %447 {offsets = [0, 0, 16], sizes = [2, 16, 8], strides = [1, 1, 1]} : vector<2x16x32xf32> to vector<2x16x8xf32>
    %493 = arith.truncf %492 : vector<2x16x8xf32> to vector<2x16x8xbf16>
    "tpu.trace_start"() <{level = 10 : i32, message = "bqd,bkd->bqk"}> : () -> ()
    %cst_158 = arith.constant dense<0.000000e+00> : vector<2x16x16xf32>
    %494 = tpu.matmul %489, %491, %cst_158 {dimension_numbers = #tpu.dot_dimension_numbers<[2], [2], [1], [1], [0, 0, 0, 1, 1, 1], [0], [0]>} : vector<2x16x8xbf16>, vector<2x16x8xbf16>, vector<2x16x16xf32> -> vector<2x16x16xf32>
    "tpu.trace_stop"() : () -> ()
    %cst_159 = arith.constant dense<0xFF800000> : vector<2x16xf32>
    %495 = vector.multi_reduction <maximumf>, %494, %cst_159 [2] : vector<2x16x16xf32> to vector<2x16xf32>
    %496 = vector.shape_cast %495 : vector<2x16xf32> to vector<2x16x1xf32>
    %497 = vector.broadcast %496 : vector<2x16x1xf32> to vector<2x16x16xf32>
    %498 = arith.subf %494, %497 : vector<2x16x16xf32>
    %499 = math.exp %498 : vector<2x16x16xf32>
    %cst_160 = arith.constant dense<0.000000e+00> : vector<2x16xf32>
    %500 = vector.multi_reduction <add>, %499, %cst_160 [2] : vector<2x16x16xf32> to vector<2x16xf32>
    %501 = vector.shape_cast %500 : vector<2x16xf32> to vector<2x16x1xf32>
    %502 = vector.broadcast %501 : vector<2x16x1xf32> to vector<2x16x16xf32>
    %503 = arith.divf %499, %502 : vector<2x16x16xf32>
    %504 = arith.truncf %503 : vector<2x16x16xf32> to vector<2x16x16xbf16>
    "tpu.trace_start"() <{level = 10 : i32, message = "bqk,bkd->bqd"}> : () -> ()
    %cst_161 = arith.constant dense<0.000000e+00> : vector<2x16x8xf32>
    %505 = tpu.matmul %504, %493, %cst_161 {dimension_numbers = #tpu.dot_dimension_numbers<[2], [1], [1], [2], [0, 0, 0, 1, 1, 2], [0], [0]>} : vector<2x16x16xbf16>, vector<2x16x8xbf16>, vector<2x16x8xf32> -> vector<2x16x8xf32>
    "tpu.trace_stop"() : () -> ()
    %506 = vector.extract_strided_slice %445 {offsets = [0, 0, 24], sizes = [2, 16, 8], strides = [1, 1, 1]} : vector<2x16x32xf32> to vector<2x16x8xf32>
    %507 = arith.truncf %506 : vector<2x16x8xf32> to vector<2x16x8xbf16>
    %508 = vector.extract_strided_slice %446 {offsets = [0, 0, 24], sizes = [2, 16, 8], strides = [1, 1, 1]} : vector<2x16x32xf32> to vector<2x16x8xf32>
    %509 = arith.truncf %508 : vector<2x16x8xf32> to vector<2x16x8xbf16>
    %510 = vector.extract_strided_slice %447 {offsets = [0, 0, 24], sizes = [2, 16, 8], strides = [1, 1, 1]} : vector<2x16x32xf32> to vector<2x16x8xf32>
    %511 = arith.truncf %510 : vector<2x16x8xf32> to vector<2x16x8xbf16>
    "tpu.trace_start"() <{level = 10 : i32, message = "bqd,bkd->bqk"}> : () -> ()
    %cst_162 = arith.constant dense<0.000000e+00> : vector<2x16x16xf32>
    %512 = tpu.matmul %507, %509, %cst_162 {dimension_numbers = #tpu.dot_dimension_numbers<[2], [2], [1], [1], [0, 0, 0, 1, 1, 1], [0], [0]>} : vector<2x16x8xbf16>, vector<2x16x8xbf16>, vector<2x16x16xf32> -> vector<2x16x16xf32>
    "tpu.trace_stop"() : () -> ()
    %cst_163 = arith.constant dense<0xFF800000> : vector<2x16xf32>
    %513 = vector.multi_reduction <maximumf>, %512, %cst_163 [2] : vector<2x16x16xf32> to vector<2x16xf32>
    %514 = vector.shape_cast %513 : vector<2x16xf32> to vector<2x16x1xf32>
    %515 = vector.broadcast %514 : vector<2x16x1xf32> to vector<2x16x16xf32>
    %516 = arith.subf %512, %515 : vector<2x16x16xf32>
    %517 = math.exp %516 : vector<2x16x16xf32>
    %cst_164 = arith.constant dense<0.000000e+00> : vector<2x16xf32>
    %518 = vector.multi_reduction <add>, %517, %cst_164 [2] : vector<2x16x16xf32> to vector<2x16xf32>
    %519 = vector.shape_cast %518 : vector<2x16xf32> to vector<2x16x1xf32>
    %520 = vector.broadcast %519 : vector<2x16x1xf32> to vector<2x16x16xf32>
    %521 = arith.divf %517, %520 : vector<2x16x16xf32>
    %522 = arith.truncf %521 : vector<2x16x16xf32> to vector<2x16x16xbf16>
    "tpu.trace_start"() <{level = 10 : i32, message = "bqk,bkd->bqd"}> : () -> ()
    %cst_165 = arith.constant dense<0.000000e+00> : vector<2x16x8xf32>
    %523 = tpu.matmul %522, %511, %cst_165 {dimension_numbers = #tpu.dot_dimension_numbers<[2], [1], [1], [2], [0, 0, 0, 1, 1, 2], [0], [0]>} : vector<2x16x16xbf16>, vector<2x16x8xbf16>, vector<2x16x8xf32> -> vector<2x16x8xf32>
    "tpu.trace_stop"() : () -> ()
    %524 = tpu.concatenate %469, %487, %505, %523 in 2 : vector<2x16x8xf32>, vector<2x16x8xf32>, vector<2x16x8xf32>, vector<2x16x8xf32> -> vector<2x16x32xf32>
    %525 = vector.shape_cast %524 : vector<2x16x32xf32> to vector<32x32xf32>
    %526 = arith.truncf %525 : vector<32x32xf32> to vector<32x32xbf16>
    %cst_166 = arith.constant dense<0.000000e+00> : vector<32x32xf32>
    %527 = tpu.matmul %526, %449, %cst_166 {dimension_numbers = #tpu.dot_dimension_numbers<[1], [0], [0], [1], [0, 0, 1, 1], [], []>} : vector<32x32xbf16>, vector<32x32xbf16>, vector<32x32xf32> -> vector<32x32xf32>
    %528 = vector.broadcast %451 : vector<1x32xf32> to vector<32x32xf32>
    %529 = arith.addf %527, %528 : vector<32x32xf32>
    %530 = vector.shape_cast %529 : vector<32x32xf32> to vector<2x16x32xf32>
    %531 = arith.addf %406, %530 : vector<2x16x32xf32>
    %532 = vector.extract_strided_slice %531 {offsets = [0, 0, 0], sizes = [2, 8, 32], strides = [1, 1, 1]} : vector<2x16x32xf32> to vector<2x8x32xf32>
    %533 = vector.extract_strided_slice %531 {offsets = [0, 8, 0], sizes = [2, 8, 32], strides = [1, 1, 1]} : vector<2x16x32xf32> to vector<2x8x32xf32>
    %cst_167 = arith.constant dense<0.000000e+00> : vector<2x8xf32>
    %534 = vector.multi_reduction <add>, %532, %cst_167 [2] : vector<2x8x32xf32> to vector<2x8xf32>
    %535 = vector.shape_cast %534 : vector<2x8xf32> to vector<2x8x1xf32>
    %cst_168 = arith.constant 3.200000e+01 : f32
    %536 = vector.broadcast %cst_168 : f32 to vector<2x8x1xf32>
    %537 = arith.divf %535, %536 : vector<2x8x1xf32>
    %538 = vector.broadcast %537 : vector<2x8x1xf32> to vector<2x8x32xf32>
    %539 = arith.subf %532, %538 : vector<2x8x32xf32>
    %540 = arith.mulf %539, %539 : vector<2x8x32xf32>
    %cst_169 = arith.constant dense<0.000000e+00> : vector<2x8xf32>
    %541 = vector.multi_reduction <add>, %540, %cst_169 [2] : vector<2x8x32xf32> to vector<2x8xf32>
    %542 = vector.shape_cast %541 : vector<2x8xf32> to vector<2x8x1xf32>
    %cst_170 = arith.constant 3.200000e+01 : f32
    %543 = vector.broadcast %cst_170 : f32 to vector<2x8x1xf32>
    %544 = arith.divf %542, %543 : vector<2x8x1xf32>
    %545 = vector.broadcast %537 : vector<2x8x1xf32> to vector<2x8x32xf32>
    %546 = arith.subf %532, %545 : vector<2x8x32xf32>
    %cst_171 = arith.constant 9.99999997E-7 : f32
    %547 = vector.broadcast %cst_171 : f32 to vector<2x8x1xf32>
    %548 = arith.addf %544, %547 : vector<2x8x1xf32>
    %549 = math.rsqrt %548 : vector<2x8x1xf32>
    %550 = vector.broadcast %549 : vector<2x8x1xf32> to vector<2x8x32xf32>
    %551 = arith.mulf %546, %550 : vector<2x8x32xf32>
    %552 = vector.shape_cast %408 : vector<1x32xf32> to vector<1x1x32xf32>
    %553 = vector.broadcast %552 : vector<1x1x32xf32> to vector<2x8x32xf32>
    %554 = arith.mulf %551, %553 : vector<2x8x32xf32>
    %555 = vector.shape_cast %410 : vector<1x32xf32> to vector<1x1x32xf32>
    %556 = vector.broadcast %555 : vector<1x1x32xf32> to vector<2x8x32xf32>
    %557 = arith.addf %554, %556 : vector<2x8x32xf32>
    %cst_172 = arith.constant dense<0.000000e+00> : vector<2x8xf32>
    %558 = vector.multi_reduction <add>, %533, %cst_172 [2] : vector<2x8x32xf32> to vector<2x8xf32>
    %559 = vector.shape_cast %558 : vector<2x8xf32> to vector<2x8x1xf32>
    %cst_173 = arith.constant 3.200000e+01 : f32
    %560 = vector.broadcast %cst_173 : f32 to vector<2x8x1xf32>
    %561 = arith.divf %559, %560 : vector<2x8x1xf32>
    %562 = vector.broadcast %561 : vector<2x8x1xf32> to vector<2x8x32xf32>
    %563 = arith.subf %533, %562 : vector<2x8x32xf32>
    %564 = arith.mulf %563, %563 : vector<2x8x32xf32>
    %cst_174 = arith.constant dense<0.000000e+00> : vector<2x8xf32>
    %565 = vector.multi_reduction <add>, %564, %cst_174 [2] : vector<2x8x32xf32> to vector<2x8xf32>
    %566 = vector.shape_cast %565 : vector<2x8xf32> to vector<2x8x1xf32>
    %cst_175 = arith.constant 3.200000e+01 : f32
    %567 = vector.broadcast %cst_175 : f32 to vector<2x8x1xf32>
    %568 = arith.divf %566, %567 : vector<2x8x1xf32>
    %569 = vector.broadcast %561 : vector<2x8x1xf32> to vector<2x8x32xf32>
    %570 = arith.subf %533, %569 : vector<2x8x32xf32>
    %cst_176 = arith.constant 9.99999997E-7 : f32
    %571 = vector.broadcast %cst_176 : f32 to vector<2x8x1xf32>
    %572 = arith.addf %568, %571 : vector<2x8x1xf32>
    %573 = math.rsqrt %572 : vector<2x8x1xf32>
    %574 = vector.broadcast %573 : vector<2x8x1xf32> to vector<2x8x32xf32>
    %575 = arith.mulf %570, %574 : vector<2x8x32xf32>
    %576 = vector.shape_cast %408 : vector<1x32xf32> to vector<1x1x32xf32>
    %577 = vector.broadcast %576 : vector<1x1x32xf32> to vector<2x8x32xf32>
    %578 = arith.mulf %575, %577 : vector<2x8x32xf32>
    %579 = vector.shape_cast %410 : vector<1x32xf32> to vector<1x1x32xf32>
    %580 = vector.broadcast %579 : vector<1x1x32xf32> to vector<2x8x32xf32>
    %581 = arith.addf %578, %580 : vector<2x8x32xf32>
    %c1_177 = arith.constant 1 : index
    %c1_178 = arith.constant 1 : index
    %c0_179 = arith.constant 0 : index
    %c0_180 = arith.constant 0 : index
    %582 = vector.load %arg2[%c1_177, %c1_178, %c0_179, %c0_180] : memref<2x2x32x96xbf16, #tpu.memory_space<vmem>>, vector<1x1x32x96xbf16>
    %583 = vector.shape_cast %582 : vector<1x1x32x96xbf16> to vector<32x96xbf16>
    %c1_181 = arith.constant 1 : index
    %c1_182 = arith.constant 1 : index
    %c0_183 = arith.constant 0 : index
    %c0_184 = arith.constant 0 : index
    %584 = vector.load %arg3[%c1_181, %c1_182, %c0_183, %c0_184] : memref<2x2x1x96xf32, #tpu.memory_space<vmem>>, vector<1x1x1x96xf32>
    %585 = vector.shape_cast %584 : vector<1x1x1x96xf32> to vector<1x96xf32>
    %c1_185 = arith.constant 1 : index
    %c1_186 = arith.constant 1 : index
    %c0_187 = arith.constant 0 : index
    %c0_188 = arith.constant 0 : index
    %586 = vector.load %arg4[%c1_185, %c1_186, %c0_187, %c0_188] : memref<2x2x32x32xbf16, #tpu.memory_space<vmem>>, vector<1x1x32x32xbf16>
    %587 = vector.shape_cast %586 : vector<1x1x32x32xbf16> to vector<32x32xbf16>
    %c1_189 = arith.constant 1 : index
    %c1_190 = arith.constant 1 : index
    %c0_191 = arith.constant 0 : index
    %c0_192 = arith.constant 0 : index
    %588 = vector.load %arg5[%c1_189, %c1_190, %c0_191, %c0_192] : memref<2x2x1x32xf32, #tpu.memory_space<vmem>>, vector<1x1x1x32xf32>
    %589 = vector.shape_cast %588 : vector<1x1x1x32xf32> to vector<1x32xf32>
    %590 = vector.extract_strided_slice %583 {offsets = [0, 0], sizes = [32, 32], strides = [1, 1]} : vector<32x96xbf16> to vector<32x32xbf16>
    %591 = vector.extract_strided_slice %585 {offsets = [0, 0], sizes = [1, 32], strides = [1, 1]} : vector<1x96xf32> to vector<1x32xf32>
    %592 = vector.shape_cast %581 : vector<2x8x32xf32> to vector<16x32xf32>
    %593 = arith.truncf %592 : vector<16x32xf32> to vector<16x32xbf16>
    %cst_193 = arith.constant dense<0.000000e+00> : vector<16x32xf32>
    %594 = tpu.matmul %593, %590, %cst_193 {dimension_numbers = #tpu.dot_dimension_numbers<[1], [0], [0], [1], [0, 0, 1, 1], [], []>} : vector<16x32xbf16>, vector<32x32xbf16>, vector<16x32xf32> -> vector<16x32xf32>
    %595 = vector.broadcast %591 : vector<1x32xf32> to vector<16x32xf32>
    %596 = arith.addf %594, %595 : vector<16x32xf32>
    %597 = vector.shape_cast %596 : vector<16x32xf32> to vector<2x8x32xf32>
    %598 = vector.extract_strided_slice %583 {offsets = [0, 32], sizes = [32, 64], strides = [1, 1]} : vector<32x96xbf16> to vector<32x64xbf16>
    %599 = vector.extract_strided_slice %585 {offsets = [0, 32], sizes = [1, 64], strides = [1, 1]} : vector<1x96xf32> to vector<1x64xf32>
    %600 = vector.shape_cast %557 : vector<2x8x32xf32> to vector<16x32xf32>
    %601 = arith.truncf %600 : vector<16x32xf32> to vector<16x32xbf16>
    %cst_194 = arith.constant dense<0.000000e+00> : vector<16x64xf32>
    %602 = tpu.matmul %601, %598, %cst_194 {dimension_numbers = #tpu.dot_dimension_numbers<[1], [0], [0], [1], [0, 0, 1, 1], [], []>} : vector<16x32xbf16>, vector<32x64xbf16>, vector<16x64xf32> -> vector<16x64xf32>
    %603 = vector.broadcast %599 : vector<1x64xf32> to vector<16x64xf32>
    %604 = arith.addf %602, %603 : vector<16x64xf32>
    %605 = vector.shape_cast %604 : vector<16x64xf32> to vector<2x8x64xf32>
    %606 = vector.extract_strided_slice %605 {offsets = [0, 0, 0], sizes = [2, 8, 32], strides = [1, 1, 1]} : vector<2x8x64xf32> to vector<2x8x32xf32>
    %607 = vector.extract_strided_slice %605 {offsets = [0, 0, 32], sizes = [2, 8, 32], strides = [1, 1, 1]} : vector<2x8x64xf32> to vector<2x8x32xf32>
    %608 = vector.extract_strided_slice %597 {offsets = [0, 0, 0], sizes = [2, 8, 8], strides = [1, 1, 1]} : vector<2x8x32xf32> to vector<2x8x8xf32>
    %609 = arith.truncf %608 : vector<2x8x8xf32> to vector<2x8x8xbf16>
    %610 = vector.extract_strided_slice %606 {offsets = [0, 0, 0], sizes = [2, 8, 8], strides = [1, 1, 1]} : vector<2x8x32xf32> to vector<2x8x8xf32>
    %611 = arith.truncf %610 : vector<2x8x8xf32> to vector<2x8x8xbf16>
    %612 = vector.extract_strided_slice %607 {offsets = [0, 0, 0], sizes = [2, 8, 8], strides = [1, 1, 1]} : vector<2x8x32xf32> to vector<2x8x8xf32>
    %613 = arith.truncf %612 : vector<2x8x8xf32> to vector<2x8x8xbf16>
    "tpu.trace_start"() <{level = 10 : i32, message = "bqd,bkd->bqk"}> : () -> ()
    %cst_195 = arith.constant dense<0.000000e+00> : vector<2x8x8xf32>
    %614 = tpu.matmul %609, %611, %cst_195 {dimension_numbers = #tpu.dot_dimension_numbers<[2], [2], [1], [1], [0, 0, 0, 1, 1, 1], [0], [0]>} : vector<2x8x8xbf16>, vector<2x8x8xbf16>, vector<2x8x8xf32> -> vector<2x8x8xf32>
    "tpu.trace_stop"() : () -> ()
    %cst_196 = arith.constant dense<0xFF800000> : vector<2x8xf32>
    %615 = vector.multi_reduction <maximumf>, %614, %cst_196 [2] : vector<2x8x8xf32> to vector<2x8xf32>
    %616 = vector.shape_cast %615 : vector<2x8xf32> to vector<2x8x1xf32>
    %617 = vector.broadcast %616 : vector<2x8x1xf32> to vector<2x8x8xf32>
    %618 = arith.subf %614, %617 : vector<2x8x8xf32>
    %619 = math.exp %618 : vector<2x8x8xf32>
    %cst_197 = arith.constant dense<0.000000e+00> : vector<2x8xf32>
    %620 = vector.multi_reduction <add>, %619, %cst_197 [2] : vector<2x8x8xf32> to vector<2x8xf32>
    %621 = vector.shape_cast %620 : vector<2x8xf32> to vector<2x8x1xf32>
    %622 = vector.broadcast %621 : vector<2x8x1xf32> to vector<2x8x8xf32>
    %623 = arith.divf %619, %622 : vector<2x8x8xf32>
    %624 = arith.truncf %623 : vector<2x8x8xf32> to vector<2x8x8xbf16>
    "tpu.trace_start"() <{level = 10 : i32, message = "bqk,bkd->bqd"}> : () -> ()
    %cst_198 = arith.constant dense<0.000000e+00> : vector<2x8x8xf32>
    %625 = tpu.matmul %624, %613, %cst_198 {dimension_numbers = #tpu.dot_dimension_numbers<[2], [1], [1], [2], [0, 0, 0, 1, 1, 2], [0], [0]>} : vector<2x8x8xbf16>, vector<2x8x8xbf16>, vector<2x8x8xf32> -> vector<2x8x8xf32>
    "tpu.trace_stop"() : () -> ()
    %626 = vector.extract_strided_slice %597 {offsets = [0, 0, 8], sizes = [2, 8, 8], strides = [1, 1, 1]} : vector<2x8x32xf32> to vector<2x8x8xf32>
    %627 = arith.truncf %626 : vector<2x8x8xf32> to vector<2x8x8xbf16>
    %628 = vector.extract_strided_slice %606 {offsets = [0, 0, 8], sizes = [2, 8, 8], strides = [1, 1, 1]} : vector<2x8x32xf32> to vector<2x8x8xf32>
    %629 = arith.truncf %628 : vector<2x8x8xf32> to vector<2x8x8xbf16>
    %630 = vector.extract_strided_slice %607 {offsets = [0, 0, 8], sizes = [2, 8, 8], strides = [1, 1, 1]} : vector<2x8x32xf32> to vector<2x8x8xf32>
    %631 = arith.truncf %630 : vector<2x8x8xf32> to vector<2x8x8xbf16>
    "tpu.trace_start"() <{level = 10 : i32, message = "bqd,bkd->bqk"}> : () -> ()
    %cst_199 = arith.constant dense<0.000000e+00> : vector<2x8x8xf32>
    %632 = tpu.matmul %627, %629, %cst_199 {dimension_numbers = #tpu.dot_dimension_numbers<[2], [2], [1], [1], [0, 0, 0, 1, 1, 1], [0], [0]>} : vector<2x8x8xbf16>, vector<2x8x8xbf16>, vector<2x8x8xf32> -> vector<2x8x8xf32>
    "tpu.trace_stop"() : () -> ()
    %cst_200 = arith.constant dense<0xFF800000> : vector<2x8xf32>
    %633 = vector.multi_reduction <maximumf>, %632, %cst_200 [2] : vector<2x8x8xf32> to vector<2x8xf32>
    %634 = vector.shape_cast %633 : vector<2x8xf32> to vector<2x8x1xf32>
    %635 = vector.broadcast %634 : vector<2x8x1xf32> to vector<2x8x8xf32>
    %636 = arith.subf %632, %635 : vector<2x8x8xf32>
    %637 = math.exp %636 : vector<2x8x8xf32>
    %cst_201 = arith.constant dense<0.000000e+00> : vector<2x8xf32>
    %638 = vector.multi_reduction <add>, %637, %cst_201 [2] : vector<2x8x8xf32> to vector<2x8xf32>
    %639 = vector.shape_cast %638 : vector<2x8xf32> to vector<2x8x1xf32>
    %640 = vector.broadcast %639 : vector<2x8x1xf32> to vector<2x8x8xf32>
    %641 = arith.divf %637, %640 : vector<2x8x8xf32>
    %642 = arith.truncf %641 : vector<2x8x8xf32> to vector<2x8x8xbf16>
    "tpu.trace_start"() <{level = 10 : i32, message = "bqk,bkd->bqd"}> : () -> ()
    %cst_202 = arith.constant dense<0.000000e+00> : vector<2x8x8xf32>
    %643 = tpu.matmul %642, %631, %cst_202 {dimension_numbers = #tpu.dot_dimension_numbers<[2], [1], [1], [2], [0, 0, 0, 1, 1, 2], [0], [0]>} : vector<2x8x8xbf16>, vector<2x8x8xbf16>, vector<2x8x8xf32> -> vector<2x8x8xf32>
    "tpu.trace_stop"() : () -> ()
    %644 = vector.extract_strided_slice %597 {offsets = [0, 0, 16], sizes = [2, 8, 8], strides = [1, 1, 1]} : vector<2x8x32xf32> to vector<2x8x8xf32>
    %645 = arith.truncf %644 : vector<2x8x8xf32> to vector<2x8x8xbf16>
    %646 = vector.extract_strided_slice %606 {offsets = [0, 0, 16], sizes = [2, 8, 8], strides = [1, 1, 1]} : vector<2x8x32xf32> to vector<2x8x8xf32>
    %647 = arith.truncf %646 : vector<2x8x8xf32> to vector<2x8x8xbf16>
    %648 = vector.extract_strided_slice %607 {offsets = [0, 0, 16], sizes = [2, 8, 8], strides = [1, 1, 1]} : vector<2x8x32xf32> to vector<2x8x8xf32>
    %649 = arith.truncf %648 : vector<2x8x8xf32> to vector<2x8x8xbf16>
    "tpu.trace_start"() <{level = 10 : i32, message = "bqd,bkd->bqk"}> : () -> ()
    %cst_203 = arith.constant dense<0.000000e+00> : vector<2x8x8xf32>
    %650 = tpu.matmul %645, %647, %cst_203 {dimension_numbers = #tpu.dot_dimension_numbers<[2], [2], [1], [1], [0, 0, 0, 1, 1, 1], [0], [0]>} : vector<2x8x8xbf16>, vector<2x8x8xbf16>, vector<2x8x8xf32> -> vector<2x8x8xf32>
    "tpu.trace_stop"() : () -> ()
    %cst_204 = arith.constant dense<0xFF800000> : vector<2x8xf32>
    %651 = vector.multi_reduction <maximumf>, %650, %cst_204 [2] : vector<2x8x8xf32> to vector<2x8xf32>
    %652 = vector.shape_cast %651 : vector<2x8xf32> to vector<2x8x1xf32>
    %653 = vector.broadcast %652 : vector<2x8x1xf32> to vector<2x8x8xf32>
    %654 = arith.subf %650, %653 : vector<2x8x8xf32>
    %655 = math.exp %654 : vector<2x8x8xf32>
    %cst_205 = arith.constant dense<0.000000e+00> : vector<2x8xf32>
    %656 = vector.multi_reduction <add>, %655, %cst_205 [2] : vector<2x8x8xf32> to vector<2x8xf32>
    %657 = vector.shape_cast %656 : vector<2x8xf32> to vector<2x8x1xf32>
    %658 = vector.broadcast %657 : vector<2x8x1xf32> to vector<2x8x8xf32>
    %659 = arith.divf %655, %658 : vector<2x8x8xf32>
    %660 = arith.truncf %659 : vector<2x8x8xf32> to vector<2x8x8xbf16>
    "tpu.trace_start"() <{level = 10 : i32, message = "bqk,bkd->bqd"}> : () -> ()
    %cst_206 = arith.constant dense<0.000000e+00> : vector<2x8x8xf32>
    %661 = tpu.matmul %660, %649, %cst_206 {dimension_numbers = #tpu.dot_dimension_numbers<[2], [1], [1], [2], [0, 0, 0, 1, 1, 2], [0], [0]>} : vector<2x8x8xbf16>, vector<2x8x8xbf16>, vector<2x8x8xf32> -> vector<2x8x8xf32>
    "tpu.trace_stop"() : () -> ()
    %662 = vector.extract_strided_slice %597 {offsets = [0, 0, 24], sizes = [2, 8, 8], strides = [1, 1, 1]} : vector<2x8x32xf32> to vector<2x8x8xf32>
    %663 = arith.truncf %662 : vector<2x8x8xf32> to vector<2x8x8xbf16>
    %664 = vector.extract_strided_slice %606 {offsets = [0, 0, 24], sizes = [2, 8, 8], strides = [1, 1, 1]} : vector<2x8x32xf32> to vector<2x8x8xf32>
    %665 = arith.truncf %664 : vector<2x8x8xf32> to vector<2x8x8xbf16>
    %666 = vector.extract_strided_slice %607 {offsets = [0, 0, 24], sizes = [2, 8, 8], strides = [1, 1, 1]} : vector<2x8x32xf32> to vector<2x8x8xf32>
    %667 = arith.truncf %666 : vector<2x8x8xf32> to vector<2x8x8xbf16>
    "tpu.trace_start"() <{level = 10 : i32, message = "bqd,bkd->bqk"}> : () -> ()
    %cst_207 = arith.constant dense<0.000000e+00> : vector<2x8x8xf32>
    %668 = tpu.matmul %663, %665, %cst_207 {dimension_numbers = #tpu.dot_dimension_numbers<[2], [2], [1], [1], [0, 0, 0, 1, 1, 1], [0], [0]>} : vector<2x8x8xbf16>, vector<2x8x8xbf16>, vector<2x8x8xf32> -> vector<2x8x8xf32>
    "tpu.trace_stop"() : () -> ()
    %cst_208 = arith.constant dense<0xFF800000> : vector<2x8xf32>
    %669 = vector.multi_reduction <maximumf>, %668, %cst_208 [2] : vector<2x8x8xf32> to vector<2x8xf32>
    %670 = vector.shape_cast %669 : vector<2x8xf32> to vector<2x8x1xf32>
    %671 = vector.broadcast %670 : vector<2x8x1xf32> to vector<2x8x8xf32>
    %672 = arith.subf %668, %671 : vector<2x8x8xf32>
    %673 = math.exp %672 : vector<2x8x8xf32>
    %cst_209 = arith.constant dense<0.000000e+00> : vector<2x8xf32>
    %674 = vector.multi_reduction <add>, %673, %cst_209 [2] : vector<2x8x8xf32> to vector<2x8xf32>
    %675 = vector.shape_cast %674 : vector<2x8xf32> to vector<2x8x1xf32>
    %676 = vector.broadcast %675 : vector<2x8x1xf32> to vector<2x8x8xf32>
    %677 = arith.divf %673, %676 : vector<2x8x8xf32>
    %678 = arith.truncf %677 : vector<2x8x8xf32> to vector<2x8x8xbf16>
    "tpu.trace_start"() <{level = 10 : i32, message = "bqk,bkd->bqd"}> : () -> ()
    %cst_210 = arith.constant dense<0.000000e+00> : vector<2x8x8xf32>
    %679 = tpu.matmul %678, %667, %cst_210 {dimension_numbers = #tpu.dot_dimension_numbers<[2], [1], [1], [2], [0, 0, 0, 1, 1, 2], [0], [0]>} : vector<2x8x8xbf16>, vector<2x8x8xbf16>, vector<2x8x8xf32> -> vector<2x8x8xf32>
    "tpu.trace_stop"() : () -> ()
    %680 = tpu.concatenate %625, %643, %661, %679 in 2 : vector<2x8x8xf32>, vector<2x8x8xf32>, vector<2x8x8xf32>, vector<2x8x8xf32> -> vector<2x8x32xf32>
    %681 = vector.shape_cast %680 : vector<2x8x32xf32> to vector<16x32xf32>
    %682 = arith.truncf %681 : vector<16x32xf32> to vector<16x32xbf16>
    %cst_211 = arith.constant dense<0.000000e+00> : vector<16x32xf32>
    %683 = tpu.matmul %682, %587, %cst_211 {dimension_numbers = #tpu.dot_dimension_numbers<[1], [0], [0], [1], [0, 0, 1, 1], [], []>} : vector<16x32xbf16>, vector<32x32xbf16>, vector<16x32xf32> -> vector<16x32xf32>
    %684 = vector.broadcast %589 : vector<1x32xf32> to vector<16x32xf32>
    %685 = arith.addf %683, %684 : vector<16x32xf32>
    %686 = vector.shape_cast %685 : vector<16x32xf32> to vector<2x8x32xf32>
    %687 = arith.addf %533, %686 : vector<2x8x32xf32>
    %cst_212 = arith.constant dense<0.000000e+00> : vector<2x8xf32>
    %688 = vector.multi_reduction <add>, %687, %cst_212 [2] : vector<2x8x32xf32> to vector<2x8xf32>
    %689 = vector.shape_cast %688 : vector<2x8xf32> to vector<2x8x1xf32>
    %cst_213 = arith.constant 3.200000e+01 : f32
    %690 = vector.broadcast %cst_213 : f32 to vector<2x8x1xf32>
    %691 = arith.divf %689, %690 : vector<2x8x1xf32>
    %692 = vector.broadcast %691 : vector<2x8x1xf32> to vector<2x8x32xf32>
    %693 = arith.subf %687, %692 : vector<2x8x32xf32>
    %694 = arith.mulf %693, %693 : vector<2x8x32xf32>
    %cst_214 = arith.constant dense<0.000000e+00> : vector<2x8xf32>
    %695 = vector.multi_reduction <add>, %694, %cst_214 [2] : vector<2x8x32xf32> to vector<2x8xf32>
    %696 = vector.shape_cast %695 : vector<2x8xf32> to vector<2x8x1xf32>
    %cst_215 = arith.constant 3.200000e+01 : f32
    %697 = vector.broadcast %cst_215 : f32 to vector<2x8x1xf32>
    %698 = arith.divf %696, %697 : vector<2x8x1xf32>
    %699 = vector.broadcast %691 : vector<2x8x1xf32> to vector<2x8x32xf32>
    %700 = arith.subf %687, %699 : vector<2x8x32xf32>
    %cst_216 = arith.constant 9.99999997E-7 : f32
    %701 = vector.broadcast %cst_216 : f32 to vector<2x8x1xf32>
    %702 = arith.addf %698, %701 : vector<2x8x1xf32>
    %703 = math.rsqrt %702 : vector<2x8x1xf32>
    %704 = vector.broadcast %703 : vector<2x8x1xf32> to vector<2x8x32xf32>
    %705 = arith.mulf %700, %704 : vector<2x8x32xf32>
    %706 = vector.shape_cast %408 : vector<1x32xf32> to vector<1x1x32xf32>
    %707 = vector.broadcast %706 : vector<1x1x32xf32> to vector<2x8x32xf32>
    %708 = arith.mulf %705, %707 : vector<2x8x32xf32>
    %709 = vector.shape_cast %410 : vector<1x32xf32> to vector<1x1x32xf32>
    %710 = vector.broadcast %709 : vector<1x1x32xf32> to vector<2x8x32xf32>
    %711 = arith.addf %708, %710 : vector<2x8x32xf32>
    %712 = vector.extract_strided_slice %583 {offsets = [0, 0], sizes = [32, 32], strides = [1, 1]} : vector<32x96xbf16> to vector<32x32xbf16>
    %713 = vector.extract_strided_slice %585 {offsets = [0, 0], sizes = [1, 32], strides = [1, 1]} : vector<1x96xf32> to vector<1x32xf32>
    %714 = vector.shape_cast %557 : vector<2x8x32xf32> to vector<16x32xf32>
    %715 = arith.truncf %714 : vector<16x32xf32> to vector<16x32xbf16>
    %cst_217 = arith.constant dense<0.000000e+00> : vector<16x32xf32>
    %716 = tpu.matmul %715, %712, %cst_217 {dimension_numbers = #tpu.dot_dimension_numbers<[1], [0], [0], [1], [0, 0, 1, 1], [], []>} : vector<16x32xbf16>, vector<32x32xbf16>, vector<16x32xf32> -> vector<16x32xf32>
    %717 = vector.broadcast %713 : vector<1x32xf32> to vector<16x32xf32>
    %718 = arith.addf %716, %717 : vector<16x32xf32>
    %719 = vector.shape_cast %718 : vector<16x32xf32> to vector<2x8x32xf32>
    %720 = vector.extract_strided_slice %583 {offsets = [0, 32], sizes = [32, 64], strides = [1, 1]} : vector<32x96xbf16> to vector<32x64xbf16>
    %721 = vector.extract_strided_slice %585 {offsets = [0, 32], sizes = [1, 64], strides = [1, 1]} : vector<1x96xf32> to vector<1x64xf32>
    %722 = vector.shape_cast %711 : vector<2x8x32xf32> to vector<16x32xf32>
    %723 = arith.truncf %722 : vector<16x32xf32> to vector<16x32xbf16>
    %cst_218 = arith.constant dense<0.000000e+00> : vector<16x64xf32>
    %724 = tpu.matmul %723, %720, %cst_218 {dimension_numbers = #tpu.dot_dimension_numbers<[1], [0], [0], [1], [0, 0, 1, 1], [], []>} : vector<16x32xbf16>, vector<32x64xbf16>, vector<16x64xf32> -> vector<16x64xf32>
    %725 = vector.broadcast %721 : vector<1x64xf32> to vector<16x64xf32>
    %726 = arith.addf %724, %725 : vector<16x64xf32>
    %727 = vector.shape_cast %726 : vector<16x64xf32> to vector<2x8x64xf32>
    %728 = vector.extract_strided_slice %727 {offsets = [0, 0, 0], sizes = [2, 8, 32], strides = [1, 1, 1]} : vector<2x8x64xf32> to vector<2x8x32xf32>
    %729 = vector.extract_strided_slice %727 {offsets = [0, 0, 32], sizes = [2, 8, 32], strides = [1, 1, 1]} : vector<2x8x64xf32> to vector<2x8x32xf32>
    %730 = vector.extract_strided_slice %719 {offsets = [0, 0, 0], sizes = [2, 8, 8], strides = [1, 1, 1]} : vector<2x8x32xf32> to vector<2x8x8xf32>
    %731 = arith.truncf %730 : vector<2x8x8xf32> to vector<2x8x8xbf16>
    %732 = vector.extract_strided_slice %728 {offsets = [0, 0, 0], sizes = [2, 8, 8], strides = [1, 1, 1]} : vector<2x8x32xf32> to vector<2x8x8xf32>
    %733 = arith.truncf %732 : vector<2x8x8xf32> to vector<2x8x8xbf16>
    %734 = vector.extract_strided_slice %729 {offsets = [0, 0, 0], sizes = [2, 8, 8], strides = [1, 1, 1]} : vector<2x8x32xf32> to vector<2x8x8xf32>
    %735 = arith.truncf %734 : vector<2x8x8xf32> to vector<2x8x8xbf16>
    "tpu.trace_start"() <{level = 10 : i32, message = "bqd,bkd->bqk"}> : () -> ()
    %cst_219 = arith.constant dense<0.000000e+00> : vector<2x8x8xf32>
    %736 = tpu.matmul %731, %733, %cst_219 {dimension_numbers = #tpu.dot_dimension_numbers<[2], [2], [1], [1], [0, 0, 0, 1, 1, 1], [0], [0]>} : vector<2x8x8xbf16>, vector<2x8x8xbf16>, vector<2x8x8xf32> -> vector<2x8x8xf32>
    "tpu.trace_stop"() : () -> ()
    %cst_220 = arith.constant dense<0xFF800000> : vector<2x8xf32>
    %737 = vector.multi_reduction <maximumf>, %736, %cst_220 [2] : vector<2x8x8xf32> to vector<2x8xf32>
    %738 = vector.shape_cast %737 : vector<2x8xf32> to vector<2x8x1xf32>
    %739 = vector.broadcast %738 : vector<2x8x1xf32> to vector<2x8x8xf32>
    %740 = arith.subf %736, %739 : vector<2x8x8xf32>
    %741 = math.exp %740 : vector<2x8x8xf32>
    %cst_221 = arith.constant dense<0.000000e+00> : vector<2x8xf32>
    %742 = vector.multi_reduction <add>, %741, %cst_221 [2] : vector<2x8x8xf32> to vector<2x8xf32>
    %743 = vector.shape_cast %742 : vector<2x8xf32> to vector<2x8x1xf32>
    %744 = vector.broadcast %743 : vector<2x8x1xf32> to vector<2x8x8xf32>
    %745 = arith.divf %741, %744 : vector<2x8x8xf32>
    %746 = arith.truncf %745 : vector<2x8x8xf32> to vector<2x8x8xbf16>
    "tpu.trace_start"() <{level = 10 : i32, message = "bqk,bkd->bqd"}> : () -> ()
    %cst_222 = arith.constant dense<0.000000e+00> : vector<2x8x8xf32>
    %747 = tpu.matmul %746, %735, %cst_222 {dimension_numbers = #tpu.dot_dimension_numbers<[2], [1], [1], [2], [0, 0, 0, 1, 1, 2], [0], [0]>} : vector<2x8x8xbf16>, vector<2x8x8xbf16>, vector<2x8x8xf32> -> vector<2x8x8xf32>
    "tpu.trace_stop"() : () -> ()
    %748 = vector.extract_strided_slice %719 {offsets = [0, 0, 8], sizes = [2, 8, 8], strides = [1, 1, 1]} : vector<2x8x32xf32> to vector<2x8x8xf32>
    %749 = arith.truncf %748 : vector<2x8x8xf32> to vector<2x8x8xbf16>
    %750 = vector.extract_strided_slice %728 {offsets = [0, 0, 8], sizes = [2, 8, 8], strides = [1, 1, 1]} : vector<2x8x32xf32> to vector<2x8x8xf32>
    %751 = arith.truncf %750 : vector<2x8x8xf32> to vector<2x8x8xbf16>
    %752 = vector.extract_strided_slice %729 {offsets = [0, 0, 8], sizes = [2, 8, 8], strides = [1, 1, 1]} : vector<2x8x32xf32> to vector<2x8x8xf32>
    %753 = arith.truncf %752 : vector<2x8x8xf32> to vector<2x8x8xbf16>
    "tpu.trace_start"() <{level = 10 : i32, message = "bqd,bkd->bqk"}> : () -> ()
    %cst_223 = arith.constant dense<0.000000e+00> : vector<2x8x8xf32>
    %754 = tpu.matmul %749, %751, %cst_223 {dimension_numbers = #tpu.dot_dimension_numbers<[2], [2], [1], [1], [0, 0, 0, 1, 1, 1], [0], [0]>} : vector<2x8x8xbf16>, vector<2x8x8xbf16>, vector<2x8x8xf32> -> vector<2x8x8xf32>
    "tpu.trace_stop"() : () -> ()
    %cst_224 = arith.constant dense<0xFF800000> : vector<2x8xf32>
    %755 = vector.multi_reduction <maximumf>, %754, %cst_224 [2] : vector<2x8x8xf32> to vector<2x8xf32>
    %756 = vector.shape_cast %755 : vector<2x8xf32> to vector<2x8x1xf32>
    %757 = vector.broadcast %756 : vector<2x8x1xf32> to vector<2x8x8xf32>
    %758 = arith.subf %754, %757 : vector<2x8x8xf32>
    %759 = math.exp %758 : vector<2x8x8xf32>
    %cst_225 = arith.constant dense<0.000000e+00> : vector<2x8xf32>
    %760 = vector.multi_reduction <add>, %759, %cst_225 [2] : vector<2x8x8xf32> to vector<2x8xf32>
    %761 = vector.shape_cast %760 : vector<2x8xf32> to vector<2x8x1xf32>
    %762 = vector.broadcast %761 : vector<2x8x1xf32> to vector<2x8x8xf32>
    %763 = arith.divf %759, %762 : vector<2x8x8xf32>
    %764 = arith.truncf %763 : vector<2x8x8xf32> to vector<2x8x8xbf16>
    "tpu.trace_start"() <{level = 10 : i32, message = "bqk,bkd->bqd"}> : () -> ()
    %cst_226 = arith.constant dense<0.000000e+00> : vector<2x8x8xf32>
    %765 = tpu.matmul %764, %753, %cst_226 {dimension_numbers = #tpu.dot_dimension_numbers<[2], [1], [1], [2], [0, 0, 0, 1, 1, 2], [0], [0]>} : vector<2x8x8xbf16>, vector<2x8x8xbf16>, vector<2x8x8xf32> -> vector<2x8x8xf32>
    "tpu.trace_stop"() : () -> ()
    %766 = vector.extract_strided_slice %719 {offsets = [0, 0, 16], sizes = [2, 8, 8], strides = [1, 1, 1]} : vector<2x8x32xf32> to vector<2x8x8xf32>
    %767 = arith.truncf %766 : vector<2x8x8xf32> to vector<2x8x8xbf16>
    %768 = vector.extract_strided_slice %728 {offsets = [0, 0, 16], sizes = [2, 8, 8], strides = [1, 1, 1]} : vector<2x8x32xf32> to vector<2x8x8xf32>
    %769 = arith.truncf %768 : vector<2x8x8xf32> to vector<2x8x8xbf16>
    %770 = vector.extract_strided_slice %729 {offsets = [0, 0, 16], sizes = [2, 8, 8], strides = [1, 1, 1]} : vector<2x8x32xf32> to vector<2x8x8xf32>
    %771 = arith.truncf %770 : vector<2x8x8xf32> to vector<2x8x8xbf16>
    "tpu.trace_start"() <{level = 10 : i32, message = "bqd,bkd->bqk"}> : () -> ()
    %cst_227 = arith.constant dense<0.000000e+00> : vector<2x8x8xf32>
    %772 = tpu.matmul %767, %769, %cst_227 {dimension_numbers = #tpu.dot_dimension_numbers<[2], [2], [1], [1], [0, 0, 0, 1, 1, 1], [0], [0]>} : vector<2x8x8xbf16>, vector<2x8x8xbf16>, vector<2x8x8xf32> -> vector<2x8x8xf32>
    "tpu.trace_stop"() : () -> ()
    %cst_228 = arith.constant dense<0xFF800000> : vector<2x8xf32>
    %773 = vector.multi_reduction <maximumf>, %772, %cst_228 [2] : vector<2x8x8xf32> to vector<2x8xf32>
    %774 = vector.shape_cast %773 : vector<2x8xf32> to vector<2x8x1xf32>
    %775 = vector.broadcast %774 : vector<2x8x1xf32> to vector<2x8x8xf32>
    %776 = arith.subf %772, %775 : vector<2x8x8xf32>
    %777 = math.exp %776 : vector<2x8x8xf32>
    %cst_229 = arith.constant dense<0.000000e+00> : vector<2x8xf32>
    %778 = vector.multi_reduction <add>, %777, %cst_229 [2] : vector<2x8x8xf32> to vector<2x8xf32>
    %779 = vector.shape_cast %778 : vector<2x8xf32> to vector<2x8x1xf32>
    %780 = vector.broadcast %779 : vector<2x8x1xf32> to vector<2x8x8xf32>
    %781 = arith.divf %777, %780 : vector<2x8x8xf32>
    %782 = arith.truncf %781 : vector<2x8x8xf32> to vector<2x8x8xbf16>
    "tpu.trace_start"() <{level = 10 : i32, message = "bqk,bkd->bqd"}> : () -> ()
    %cst_230 = arith.constant dense<0.000000e+00> : vector<2x8x8xf32>
    %783 = tpu.matmul %782, %771, %cst_230 {dimension_numbers = #tpu.dot_dimension_numbers<[2], [1], [1], [2], [0, 0, 0, 1, 1, 2], [0], [0]>} : vector<2x8x8xbf16>, vector<2x8x8xbf16>, vector<2x8x8xf32> -> vector<2x8x8xf32>
    "tpu.trace_stop"() : () -> ()
    %784 = vector.extract_strided_slice %719 {offsets = [0, 0, 24], sizes = [2, 8, 8], strides = [1, 1, 1]} : vector<2x8x32xf32> to vector<2x8x8xf32>
    %785 = arith.truncf %784 : vector<2x8x8xf32> to vector<2x8x8xbf16>
    %786 = vector.extract_strided_slice %728 {offsets = [0, 0, 24], sizes = [2, 8, 8], strides = [1, 1, 1]} : vector<2x8x32xf32> to vector<2x8x8xf32>
    %787 = arith.truncf %786 : vector<2x8x8xf32> to vector<2x8x8xbf16>
    %788 = vector.extract_strided_slice %729 {offsets = [0, 0, 24], sizes = [2, 8, 8], strides = [1, 1, 1]} : vector<2x8x32xf32> to vector<2x8x8xf32>
    %789 = arith.truncf %788 : vector<2x8x8xf32> to vector<2x8x8xbf16>
    "tpu.trace_start"() <{level = 10 : i32, message = "bqd,bkd->bqk"}> : () -> ()
    %cst_231 = arith.constant dense<0.000000e+00> : vector<2x8x8xf32>
    %790 = tpu.matmul %785, %787, %cst_231 {dimension_numbers = #tpu.dot_dimension_numbers<[2], [2], [1], [1], [0, 0, 0, 1, 1, 1], [0], [0]>} : vector<2x8x8xbf16>, vector<2x8x8xbf16>, vector<2x8x8xf32> -> vector<2x8x8xf32>
    "tpu.trace_stop"() : () -> ()
    %cst_232 = arith.constant dense<0xFF800000> : vector<2x8xf32>
    %791 = vector.multi_reduction <maximumf>, %790, %cst_232 [2] : vector<2x8x8xf32> to vector<2x8xf32>
    %792 = vector.shape_cast %791 : vector<2x8xf32> to vector<2x8x1xf32>
    %793 = vector.broadcast %792 : vector<2x8x1xf32> to vector<2x8x8xf32>
    %794 = arith.subf %790, %793 : vector<2x8x8xf32>
    %795 = math.exp %794 : vector<2x8x8xf32>
    %cst_233 = arith.constant dense<0.000000e+00> : vector<2x8xf32>
    %796 = vector.multi_reduction <add>, %795, %cst_233 [2] : vector<2x8x8xf32> to vector<2x8xf32>
    %797 = vector.shape_cast %796 : vector<2x8xf32> to vector<2x8x1xf32>
    %798 = vector.broadcast %797 : vector<2x8x1xf32> to vector<2x8x8xf32>
    %799 = arith.divf %795, %798 : vector<2x8x8xf32>
    %800 = arith.truncf %799 : vector<2x8x8xf32> to vector<2x8x8xbf16>
    "tpu.trace_start"() <{level = 10 : i32, message = "bqk,bkd->bqd"}> : () -> ()
    %cst_234 = arith.constant dense<0.000000e+00> : vector<2x8x8xf32>
    %801 = tpu.matmul %800, %789, %cst_234 {dimension_numbers = #tpu.dot_dimension_numbers<[2], [1], [1], [2], [0, 0, 0, 1, 1, 2], [0], [0]>} : vector<2x8x8xbf16>, vector<2x8x8xbf16>, vector<2x8x8xf32> -> vector<2x8x8xf32>
    "tpu.trace_stop"() : () -> ()
    %802 = tpu.concatenate %747, %765, %783, %801 in 2 : vector<2x8x8xf32>, vector<2x8x8xf32>, vector<2x8x8xf32>, vector<2x8x8xf32> -> vector<2x8x32xf32>
    %803 = vector.shape_cast %802 : vector<2x8x32xf32> to vector<16x32xf32>
    %804 = arith.truncf %803 : vector<16x32xf32> to vector<16x32xbf16>
    %cst_235 = arith.constant dense<0.000000e+00> : vector<16x32xf32>
    %805 = tpu.matmul %804, %587, %cst_235 {dimension_numbers = #tpu.dot_dimension_numbers<[1], [0], [0], [1], [0, 0, 1, 1], [], []>} : vector<16x32xbf16>, vector<32x32xbf16>, vector<16x32xf32> -> vector<16x32xf32>
    %806 = vector.broadcast %589 : vector<1x32xf32> to vector<16x32xf32>
    %807 = arith.addf %805, %806 : vector<16x32xf32>
    %808 = vector.shape_cast %807 : vector<16x32xf32> to vector<2x8x32xf32>
    %809 = arith.addf %532, %808 : vector<2x8x32xf32>
    %c0_236 = arith.constant 0 : index
    %c0_237 = arith.constant 0 : index
    %c0_238 = arith.constant 0 : index
    %810 = vector.load %arg11[%c0_236, %c0_237, %c0_238] : memref<2x16x32xf32, #tpu.memory_space<vmem>>, vector<2x8x32xf32>
    tpu.vector_store %arg11[%c0_236, %c0_237, %c0_238], %809 {strides = array<i32>} : memref<2x16x32xf32, #tpu.memory_space<vmem>>, vector<2x8x32xf32>,
    %c0_239 = arith.constant 0 : index
    %c8_240 = arith.constant 8 : index
    %c0_241 = arith.constant 0 : index
    %811 = vector.load %arg11[%c0_239, %c8_240, %c0_241] : memref<2x16x32xf32, #tpu.memory_space<vmem>>, vector<2x8x32xf32>
    tpu.vector_store %arg11[%c0_239, %c8_240, %c0_241], %687 {strides = array<i32>} : memref<2x16x32xf32, #tpu.memory_space<vmem>>, vector<2x8x32xf32>,
    %c0_242 = arith.constant 0 : index
    %c0_243 = arith.constant 0 : index
    %c0_244 = arith.constant 0 : index
    %812 = vector.load %arg11[%c0_242, %c0_243, %c0_244] : memref<2x16x32xf32, #tpu.memory_space<vmem>>, vector<2x16x32xf32>
    %c0_245 = arith.constant 0 : index
    %c0_246 = arith.constant 0 : index
    %813 = vector.load %arg8[%c0_245, %c0_246] : memref<1x32xf32, #tpu.memory_space<vmem>>, vector<1x32xf32>
    %c0_247 = arith.constant 0 : index
    %c0_248 = arith.constant 0 : index
    %814 = vector.load %arg9[%c0_247, %c0_248] : memref<1x32xf32, #tpu.memory_space<vmem>>, vector<1x32xf32>
    %cst_249 = arith.constant dense<0.000000e+00> : vector<2x16xf32>
    %815 = vector.multi_reduction <add>, %812, %cst_249 [2] : vector<2x16x32xf32> to vector<2x16xf32>
    %816 = vector.shape_cast %815 : vector<2x16xf32> to vector<2x16x1xf32>
    %cst_250 = arith.constant 3.200000e+01 : f32
    %817 = vector.broadcast %cst_250 : f32 to vector<2x16x1xf32>
    %818 = arith.divf %816, %817 : vector<2x16x1xf32>
    %819 = vector.broadcast %818 : vector<2x16x1xf32> to vector<2x16x32xf32>
    %820 = arith.subf %812, %819 : vector<2x16x32xf32>
    %821 = arith.mulf %820, %820 : vector<2x16x32xf32>
    %cst_251 = arith.constant dense<0.000000e+00> : vector<2x16xf32>
    %822 = vector.multi_reduction <add>, %821, %cst_251 [2] : vector<2x16x32xf32> to vector<2x16xf32>
    %823 = vector.shape_cast %822 : vector<2x16xf32> to vector<2x16x1xf32>
    %cst_252 = arith.constant 3.200000e+01 : f32
    %824 = vector.broadcast %cst_252 : f32 to vector<2x16x1xf32>
    %825 = arith.divf %823, %824 : vector<2x16x1xf32>
    %826 = vector.broadcast %818 : vector<2x16x1xf32> to vector<2x16x32xf32>
    %827 = arith.subf %812, %826 : vector<2x16x32xf32>
    %cst_253 = arith.constant 9.99999997E-7 : f32
    %828 = vector.broadcast %cst_253 : f32 to vector<2x16x1xf32>
    %829 = arith.addf %825, %828 : vector<2x16x1xf32>
    %830 = math.rsqrt %829 : vector<2x16x1xf32>
    %831 = vector.broadcast %830 : vector<2x16x1xf32> to vector<2x16x32xf32>
    %832 = arith.mulf %827, %831 : vector<2x16x32xf32>
    %833 = vector.shape_cast %813 : vector<1x32xf32> to vector<1x1x32xf32>
    %834 = vector.broadcast %833 : vector<1x1x32xf32> to vector<2x16x32xf32>
    %835 = arith.mulf %832, %834 : vector<2x16x32xf32>
    %836 = vector.shape_cast %814 : vector<1x32xf32> to vector<1x1x32xf32>
    %837 = vector.broadcast %836 : vector<1x1x32xf32> to vector<2x16x32xf32>
    %838 = arith.addf %835, %837 : vector<2x16x32xf32>
    %c0_254 = arith.constant 0 : index
    %c0_255 = arith.constant 0 : index
    %c0_256 = arith.constant 0 : index
    %839 = vector.load %arg10[%c0_254, %c0_255, %c0_256] : memref<2x16x32xf32, #tpu.memory_space<vmem>>, vector<2x16x32xf32>
    tpu.vector_store %arg10[%c0_254, %c0_255, %c0_256], %838 {strides = array<i32>} : memref<2x16x32xf32, #tpu.memory_space<vmem>>, vector<2x16x32xf32>,
    return
  }
  func.func @transform_0(%arg0: i32) -> (i32, i32, i32) {
    %c0_i32 = arith.constant 0 : i32
    %c0_i32_0 = arith.constant 0 : i32
    %c0_i32_1 = arith.constant 0 : i32
    return %arg0, %c0_i32, %c0_i32_0 : i32, i32, i32
  }
  func.func @transform_1(%arg0: i32) -> (i32, i32, i32, i32) {
    %c0_i32 = arith.constant 0 : i32
    %c0_i32_0 = arith.constant 0 : i32
    %c0_i32_1 = arith.constant 0 : i32
    %c0_i32_2 = arith.constant 0 : i32
    %c0_i32_3 = arith.constant 0 : i32
    return %c0_i32, %c0_i32_0, %c0_i32_1, %c0_i32_2 : i32, i32, i32, i32
  }
  func.func @transform_2(%arg0: i32) -> (i32, i32, i32, i32) {
    %c0_i32 = arith.constant 0 : i32
    %c0_i32_0 = arith.constant 0 : i32
    %c0_i32_1 = arith.constant 0 : i32
    %c0_i32_2 = arith.constant 0 : i32
    %c0_i32_3 = arith.constant 0 : i32
    return %c0_i32, %c0_i32_0, %c0_i32_1, %c0_i32_2 : i32, i32, i32, i32
  }
  func.func @transform_3(%arg0: i32) -> (i32, i32, i32, i32) {
    %c0_i32 = arith.constant 0 : i32
    %c0_i32_0 = arith.constant 0 : i32
    %c0_i32_1 = arith.constant 0 : i32
    %c0_i32_2 = arith.constant 0 : i32
    %c0_i32_3 = arith.constant 0 : i32
    return %c0_i32, %c0_i32_0, %c0_i32_1, %c0_i32_2 : i32, i32, i32, i32
  }
  func.func @transform_4(%arg0: i32) -> (i32, i32, i32, i32) {
    %c0_i32 = arith.constant 0 : i32
    %c0_i32_0 = arith.constant 0 : i32
    %c0_i32_1 = arith.constant 0 : i32
    %c0_i32_2 = arith.constant 0 : i32
    %c0_i32_3 = arith.constant 0 : i32
    return %c0_i32, %c0_i32_0, %c0_i32_1, %c0_i32_2 : i32, i32, i32, i32
  }
  func.func @transform_5(%arg0: i32) -> (i32, i32, i32) {
    %c0_i32 = arith.constant 0 : i32
    %c0_i32_0 = arith.constant 0 : i32
    %c0_i32_1 = arith.constant 0 : i32
    %c0_i32_2 = arith.constant 0 : i32
    return %c0_i32, %c0_i32_0, %c0_i32_1 : i32, i32, i32
  }
  func.func @transform_6(%arg0: i32) -> (i32, i32, i32) {
    %c0_i32 = arith.constant 0 : i32
    %c0_i32_0 = arith.constant 0 : i32
    %c0_i32_1 = arith.constant 0 : i32
    %c0_i32_2 = arith.constant 0 : i32
    return %c0_i32, %c0_i32_0, %c0_i32_1 : i32, i32, i32
  }
  func.func @transform_7(%arg0: i32) -> (i32, i32) {
    %c0_i32 = arith.constant 0 : i32
    %c0_i32_0 = arith.constant 0 : i32
    %c0_i32_1 = arith.constant 0 : i32
    return %c0_i32, %c0_i32_0 : i32, i32
  }
  func.func @transform_8(%arg0: i32) -> (i32, i32) {
    %c0_i32 = arith.constant 0 : i32
    %c0_i32_0 = arith.constant 0 : i32
    %c0_i32_1 = arith.constant 0 : i32
    return %c0_i32, %c0_i32_0 : i32, i32
  }
  func.func @transform_9(%arg0: i32) -> (i32, i32, i32) {
    %c0_i32 = arith.constant 0 : i32
    %c0_i32_0 = arith.constant 0 : i32
    %c0_i32_1 = arith.constant 0 : i32
    return %arg0, %c0_i32, %c0_i32_0 : i32, i32, i32
  }
}

</mosaic_0001>

<llo_original>
// kernel: _lambda_.1
$region0: #{_lambda_.1}
  #allocation0 [shape = 'u32[]', space=smem, size = 0x4, offset = 0x4, fixed_abs, tag = 'smem constant byte address 0x4 - core index']
  #allocation1 [shape = 'u32[72,128]{1,0:T(1,128)}', space=vmem, size = 0x9000, scoped, tag = 'internal scratch']
  #allocation2 [shape = 'f32[2,16,32]{2,1,0:T(8,128)}', space=vmem, size = 0x4000, scoped, tag = 'scratch operand']
  %s0 = inlined_call_operand.hbm [shape: f32[4,16,32], index: 0, kind: input, shape index: {}]
  %s1 = inlined_call_operand.hbm [shape: bf16[2,2,32,96], index: 1, kind: input, shape index: {}]
  %s2 = inlined_call_operand.hbm [shape: f32[2,2,1,96], index: 2, kind: input, shape index: {}]
  %s3 = inlined_call_operand.hbm [shape: bf16[2,2,32,32], index: 3, kind: input, shape index: {}]
  %s4 = inlined_call_operand.hbm [shape: f32[2,2,1,32], index: 4, kind: input, shape index: {}]
  %s5 = inlined_call_operand.vmem [shape: f32[2,1,32], index: 5, kind: input, shape index: {}]
  %s6 = inlined_call_operand.vmem [shape: f32[2,1,32], index: 6, kind: input, shape index: {}]
  %s7 = inlined_call_operand.hbm [shape: f32[1,32], index: 7, kind: input, shape index: {}]
  %s8 = inlined_call_operand.hbm [shape: f32[1,32], index: 8, kind: input, shape index: {}]
  %s9 = inlined_call_operand.hbm [shape: f32[4,16,32], index: 9, kind: output, shape index: {}]
  %s10 = sld [smem:[#allocation0]]
  $region97: #{_lambda_.1} parent=0
    _
  %s12 = ssub.s32 1, %s10
  %s13 = scalar_select 0, %s12, %s10
  $region1: #{_lambda_.1} parent=0
    #allocation3 [shape = 'u8[32768]{0}', space=vmem, size = 0x8000, scoped, tag = 'input window, operand 0']
    #allocation4 [shape = 's32[2]{0}', space=sflag, size = 0x8, scoped, tag = 'scoped memory for _lambda_.1']
    #allocation5 [shape = 's32[2]{0}', space=sflag, size = 0x8, scoped, tag = 'scoped memory for _lambda_.1']
    #allocation6 [shape = 'u8[32768]{0}', space=vmem, size = 0x8000, scoped, tag = 'input window, operand 1, single buffered']
    #allocation7 [shape = 's32[1]{0}', space=sflag, size = 0x4, scoped, tag = 'scoped memory for _lambda_.1']
    #allocation8 [shape = 'u8[2048]{0}', space=vmem, size = 0x800, scoped, tag = 'input window, operand 2, single buffered']
    #allocation9 [shape = 'u8[32768]{0}', space=vmem, size = 0x8000, scoped, tag = 'input window, operand 3, single buffered']
    #allocation10 [shape = 's32[1]{0}', space=sflag, size = 0x4, scoped, tag = 'scoped memory for _lambda_.1']
    #allocation11 [shape = 'u8[2048]{0}', space=vmem, size = 0x800, scoped, tag = 'input window, operand 4, single buffered']
    #allocation12 [shape = 'u8[512]{0}', space=vmem, size = 0x400, scoped, tag = 'input window, operand 7, single buffered']
    #allocation13 [shape = 's32[1]{0}', space=sflag, size = 0x4, scoped, tag = 'scoped memory for _lambda_.1']
    #allocation14 [shape = 'u8[512]{0}', space=vmem, size = 0x400, scoped, tag = 'input window, operand 8, single buffered']
    #allocation15 [shape = 'u8[32768]{0}', space=vmem, size = 0x8000, scoped, tag = 'output window, operand 0']
    %14 = vsyncpa [#allocation4], 0
    %s15 = scalar_lea.sflag [#allocation4], 1
    %16 = vsyncpa %s15, 0
    %17 = vsyncpa [#allocation7], 0
    %18 = vsyncpa [#allocation10], 0
    %19 = vsyncpa [#allocation13], 0
    %20 = vsyncpa [#allocation5], 0
    %s21 = scalar_lea.sflag [#allocation5], 1
    %22 = vsyncpa %s21, 0
    loop: start=0, step=1, limit=4
    $region2: #{_lambda_.1} parent=1 // loop_pre_header
      _
    $region3: #{_lambda_.1} parent=1 // loop_header
      %s24 = sphi 0, %s28
      %p25 = scmp.ge.s32.totalorder %s24, 4
      %s34 = sphi 0, %s36
      %s37 = sphi 0, %s34
      %s38 = sphi 0, %s37
      %s54 = sphi 0, %s38
      %s58 = sphi 0, %s58
      %s60 = sphi 0, %s58
      %s61 = sphi 0, %s60
      %s75 = sphi 0, %s61
      %s79 = sphi 0, %s79
      %s81 = sphi 0, %s79
      %s82 = sphi 0, %s81
      %s96 = sphi 0, %s82
      %s100 = sphi 0, %s100
      %s102 = sphi 0, %s100
      %s103 = sphi 0, %s102
      %s117 = sphi 0, %s103
      %s121 = sphi 0, %s121
      %s123 = sphi 0, %s121
      %s124 = sphi 0, %s123
      %s138 = sphi 0, %s124
      %s142 = sphi 0, %s142
      %s144 = sphi 0, %s142
      %s145 = sphi 0, %s144
      %s159 = sphi 0, %s145
      %s163 = sphi 0, %s163
      %s165 = sphi 0, %s163
      %s166 = sphi 0, %s165
      %s180 = sphi 0, %s166
      %s184 = sphi 0, %s184
      %s186 = sphi 0, %s184
      %s187 = sphi 0, %s186
      %s201 = sphi 0, %s187
      %s205 = sphi 0, %s205
      %s207 = sphi 0, %s205
      %s208 = sphi 0, %s207
      %s222 = sphi 0, %s208
      %s228 = sphi 0, %s230
      %s231 = sphi 0, %s228
      %s232 = sphi 0, %s231
      %s248 = sphi 0, %s232
    $region4: #{_lambda_.1} parent=1 // loop_header_branch
      %27 = sbr.rel (%p25) target = $region8
    $region5: #{_lambda_.1} parent=1 // loop_body
      %s29 = ssub.s32 %s24, 1
      %s30 = ssub.s32 %s24, 2
      %s31 = sadd.s32 %s24, 1
      %s32 = ssub.s32 %s24, %s31
      %p33 = scmp.eq.s32.totalorder %s32, 0
      %s35 = sadd.s32 %s34, 1
      %s36 = scalar_select %p33, %s34, %s35
      %p39 = pneg %p33
      %p40 = scmp.eq.s32.totalorder %s24, 1
      %p41 = por %p39, %p40
      %p42 = scmp.ne.s32.totalorder %s34, %s37
      %p43 = scmp.eq.s32.totalorder %s24, 0
      %p44 = por %p42, %p43
      %p45 = scmp.ne.s32.totalorder %s34, %s37
      %p46 = scmp.eq.s32.totalorder %s29, 1
      %p47 = por %p45, %p46
      %p48 = scmp.ne.s32.totalorder %s37, %s38
      %p49 = scmp.eq.s32.totalorder %s29, 0
      %p50 = por %p48, %p49
      %p51 = scmp.ne.s32.totalorder %s37, %s38
      %p52 = scmp.eq.s32.totalorder %s30, 1
      %p53 = por %p51, %p52
      %p55 = scmp.ne.s32.totalorder %s38, %s54
      %p56 = scmp.eq.s32.totalorder %s30, 0
      %p57 = por %p55, %p56
      %s59 = sadd.s32 %s58, 1
      %p62 = scmp.eq.s32.totalorder %s24, 1
      %p63 = scmp.ne.s32.totalorder %s58, %s60
      %p64 = scmp.eq.s32.totalorder %s24, 0
      %p65 = por %p63, %p64
      %p66 = scmp.ne.s32.totalorder %s58, %s60
      %p67 = scmp.eq.s32.totalorder %s29, 1
      %p68 = por %p66, %p67
      %p69 = scmp.ne.s32.totalorder %s60, %s61
      %p70 = scmp.eq.s32.totalorder %s29, 0
      %p71 = por %p69, %p70
      %p72 = scmp.ne.s32.totalorder %s60, %s61
      %p73 = scmp.eq.s32.totalorder %s30, 1
      %p74 = por %p72, %p73
      %p76 = scmp.ne.s32.totalorder %s61, %s75
      %p77 = scmp.eq.s32.totalorder %s30, 0
      %p78 = por %p76, %p77
      %s80 = sadd.s32 %s79, 1
      %p83 = scmp.eq.s32.totalorder %s24, 1
      %p84 = scmp.ne.s32.totalorder %s79, %s81
      %p85 = scmp.eq.s32.totalorder %s24, 0
      %p86 = por %p84, %p85
      %p87 = scmp.ne.s32.totalorder %s79, %s81
      %p88 = scmp.eq.s32.totalorder %s29, 1
      %p89 = por %p87, %p88
      %p90 = scmp.ne.s32.totalorder %s81, %s82
      %p91 = scmp.eq.s32.totalorder %s29, 0
      %p92 = por %p90, %p91
      %p93 = scmp.ne.s32.totalorder %s81, %s82
      %p94 = scmp.eq.s32.totalorder %s30, 1
      %p95 = por %p93, %p94
      %p97 = scmp.ne.s32.totalorder %s82, %s96
      %p98 = scmp.eq.s32.totalorder %s30, 0
      %p99 = por %p97, %p98
      %s101 = sadd.s32 %s100, 1
      %p104 = scmp.eq.s32.totalorder %s24, 1
      %p105 = scmp.ne.s32.totalorder %s100, %s102
      %p106 = scmp.eq.s32.totalorder %s24, 0
      %p107 = por %p105, %p106
      %p108 = scmp.ne.s32.totalorder %s100, %s102
      %p109 = scmp.eq.s32.totalorder %s29, 1
      %p110 = por %p108, %p109
      %p111 = scmp.ne.s32.totalorder %s102, %s103
      %p112 = scmp.eq.s32.totalorder %s29, 0
      %p113 = por %p111, %p112
      %p114 = scmp.ne.s32.totalorder %s102, %s103
      %p115 = scmp.eq.s32.totalorder %s30, 1
      %p116 = por %p114, %p115
      %p118 = scmp.ne.s32.totalorder %s103, %s117
      %p119 = scmp.eq.s32.totalorder %s30, 0
      %p120 = por %p118, %p119
      %s122 = sadd.s32 %s121, 1
      %p125 = scmp.eq.s32.totalorder %s24, 1
      %p126 = scmp.ne.s32.totalorder %s121, %s123
      %p127 = scmp.eq.s32.totalorder %s24, 0
      %p128 = por %p126, %p127
      %p129 = scmp.ne.s32.totalorder %s121, %s123
      %p130 = scmp.eq.s32.totalorder %s29, 1
      %p131 = por %p129, %p130
      %p132 = scmp.ne.s32.totalorder %s123, %s124
      %p133 = scmp.eq.s32.totalorder %s29, 0
      %p134 = por %p132, %p133
      %p135 = scmp.ne.s32.totalorder %s123, %s124
      %p136 = scmp.eq.s32.totalorder %s30, 1
      %p137 = por %p135, %p136
      %p139 = scmp.ne.s32.totalorder %s124, %s138
      %p140 = scmp.eq.s32.totalorder %s30, 0
      %p141 = por %p139, %p140
      %s143 = sadd.s32 %s142, 1
      %p146 = scmp.eq.s32.totalorder %s24, 1
      %p147 = scmp.ne.s32.totalorder %s142, %s144
      %p148 = scmp.eq.s32.totalorder %s24, 0
      %p149 = por %p147, %p148
      %p150 = scmp.ne.s32.totalorder %s142, %s144
      %p151 = scmp.eq.s32.totalorder %s29, 1
      %p152 = por %p150, %p151
      %p153 = scmp.ne.s32.totalorder %s144, %s145
      %p154 = scmp.eq.s32.totalorder %s29, 0
      %p155 = por %p153, %p154
      %p156 = scmp.ne.s32.totalorder %s144, %s145
      %p157 = scmp.eq.s32.totalorder %s30, 1
      %p158 = por %p156, %p157
      %p160 = scmp.ne.s32.totalorder %s145, %s159
      %p161 = scmp.eq.s32.totalorder %s30, 0
      %p162 = por %p160, %p161
      %s164 = sadd.s32 %s163, 1
      %p167 = scmp.eq.s32.totalorder %s24, 1
      %p168 = scmp.ne.s32.totalorder %s163, %s165
      %p169 = scmp.eq.s32.totalorder %s24, 0
      %p170 = por %p168, %p169
      %p171 = scmp.ne.s32.totalorder %s163, %s165
      %p172 = scmp.eq.s32.totalorder %s29, 1
      %p173 = por %p171, %p172
      %p174 = scmp.ne.s32.totalorder %s165, %s166
      %p175 = scmp.eq.s32.totalorder %s29, 0
      %p176 = por %p174, %p175
      %p177 = scmp.ne.s32.totalorder %s165, %s166
      %p178 = scmp.eq.s32.totalorder %s30, 1
      %p179 = por %p177, %p178
      %p181 = scmp.ne.s32.totalorder %s166, %s180
      %p182 = scmp.eq.s32.totalorder %s30, 0
      %p183 = por %p181, %p182
      %s185 = sadd.s32 %s184, 1
      %p188 = scmp.eq.s32.totalorder %s24, 1
      %p189 = scmp.ne.s32.totalorder %s184, %s186
      %p190 = scmp.eq.s32.totalorder %s24, 0
      %p191 = por %p189, %p190
      %p192 = scmp.ne.s32.totalorder %s184, %s186
      %p193 = scmp.eq.s32.totalorder %s29, 1
      %p194 = por %p192, %p193
      %p195 = scmp.ne.s32.totalorder %s186, %s187
      %p196 = scmp.eq.s32.totalorder %s29, 0
      %p197 = por %p195, %p196
      %p198 = scmp.ne.s32.totalorder %s186, %s187
      %p199 = scmp.eq.s32.totalorder %s30, 1
      %p200 = por %p198, %p199
      %p202 = scmp.ne.s32.totalorder %s187, %s201
      %p203 = scmp.eq.s32.totalorder %s30, 0
      %p204 = por %p202, %p203
      %s206 = sadd.s32 %s205, 1
      %p209 = scmp.eq.s32.totalorder %s24, 1
      %p210 = scmp.ne.s32.totalorder %s205, %s207
      %p211 = scmp.eq.s32.totalorder %s24, 0
      %p212 = por %p210, %p211
      %p213 = scmp.ne.s32.totalorder %s205, %s207
      %p214 = scmp.eq.s32.totalorder %s29, 1
      %p215 = por %p213, %p214
      %p216 = scmp.ne.s32.totalorder %s207, %s208
      %p217 = scmp.eq.s32.totalorder %s29, 0
      %p218 = por %p216, %p217
      %p219 = scmp.ne.s32.totalorder %s207, %s208
      %p220 = scmp.eq.s32.totalorder %s30, 1
      %p221 = por %p219, %p220
      %p223 = scmp.ne.s32.totalorder %s208, %s222
      %p224 = scmp.eq.s32.totalorder %s30, 0
      %p225 = por %p223, %p224
      %s226 = ssub.s32 %s24, %s31
      %p227 = scmp.eq.s32.totalorder %s226, 0
      %s229 = sadd.s32 %s228, 1
      %s230 = scalar_select %p227, %s228, %s229
      %p233 = pneg %p227
      %p234 = scmp.eq.s32.totalorder %s24, 1
      %p235 = por %p233, %p234
      %p236 = scmp.ne.s32.totalorder %s228, %s231
      %p237 = scmp.eq.s32.totalorder %s24, 0
      %p238 = por %p236, %p237
      %p239 = scmp.ne.s32.totalorder %s228, %s231
      %p240 = scmp.eq.s32.totalorder %s29, 1
      %p241 = por %p239, %p240
      %p242 = scmp.ne.s32.totalorder %s231, %s232
      %p243 = scmp.eq.s32.totalorder %s29, 0
      %p244 = por %p242, %p243
      %p245 = scmp.ne.s32.totalorder %s231, %s232
      %p246 = scmp.eq.s32.totalorder %s30, 1
      %p247 = por %p245, %p246
      %p249 = scmp.ne.s32.totalorder %s232, %s248
      %p250 = scmp.eq.s32.totalorder %s30, 0
      %p251 = por %p249, %p250
      %p252 = scmp.le.s32.totalorder 1, %s24
      %p253 = scmp.lt.s32.totalorder %s24, 3
      %p254 = pnand %p252, %p253
      %p255 = pneg %p254
      // Predicated region
      $region9: #{_lambda_.1} parent=5 // pred_check
        _
      $region10: #{_lambda_.1} parent=5 // pred_check_branch
        %257 = sbr.rel (%p254) target = $region12
      $region11: #{_lambda_.1} parent=5 // pred_region
        %s258 = ssub.s32 %s24, 1
        // Predicated region
        $region13: #{_lambda_.1} parent=11 // pred_check
          %p259 = pneg %p71
        $region14: #{_lambda_.1} parent=11 // pred_check_branch
          %261 = sbr.rel (%p259) target = $region16
        $region15: #{_lambda_.1} parent=11 // pred_region
          %263 = vsyncadd [#allocation7], 0
          %s264 = sshll.u32 %s1, 4
          %s265 = int_to_ptr.hbm [resolvable:$true] %s264
          %s266 = sshll.u32 [#allocation6], 4
          %s267 = int_to_ptr.vmem [resolvable:$true] %s266
          %272 = dma.hbm_to_vmem [thread:$0]  %s265, 1024, %s267, [#allocation7], 64, 64, 4
        $region16: #{_lambda_.1} parent=11 // pred_fallthru
          _
        // Predicated region
        $region17: #{_lambda_.1} parent=11 // pred_check
          %p273 = pneg %p92
        $region18: #{_lambda_.1} parent=11 // pred_check_branch
          %275 = sbr.rel (%p273) target = $region20
        $region19: #{_lambda_.1} parent=11 // pred_region
          %277 = vsyncadd [#allocation7], 0
          %s278 = sshll.u32 %s2, 4
          %s279 = int_to_ptr.hbm [resolvable:$true] %s278
          %s280 = sshll.u32 [#allocation8], 4
          %s281 = int_to_ptr.vmem [resolvable:$true] %s280
          %286 = dma.hbm_to_vmem [thread:$0]  %s279, 64, %s281, [#allocation7], 16, 16, 1
        $region20: #{_lambda_.1} parent=11 // pred_fallthru
          _
        // Predicated region
        $region21: #{_lambda_.1} parent=11 // pred_check
          %p287 = pneg %p113
        $region22: #{_lambda_.1} parent=11 // pred_check_branch
          %289 = sbr.rel (%p287) target = $region24
        $region23: #{_lambda_.1} parent=11 // pred_region
          %291 = vsyncadd [#allocation10], 0
          %s292 = sshll.u32 %s3, 4
          %s293 = int_to_ptr.hbm [resolvable:$true] %s292
          %s294 = sshll.u32 [#allocation9], 4
          %s295 = int_to_ptr.vmem [resolvable:$true] %s294
          %300 = dma.hbm_to_vmem [thread:$0]  %s293, 1024, %s295, [#allocation10], 64, 64, 4
        $region24: #{_lambda_.1} parent=11 // pred_fallthru
          _
        // Predicated region
        $region25: #{_lambda_.1} parent=11 // pred_check
          %p301 = pneg %p134
        $region26: #{_lambda_.1} parent=11 // pred_check_branch
          %303 = sbr.rel (%p301) target = $region28
        $region27: #{_lambda_.1} parent=11 // pred_region
          %305 = vsyncadd [#allocation10], 0
          %s306 = sshll.u32 %s4, 4
          %s307 = int_to_ptr.hbm [resolvable:$true] %s306
          %s308 = sshll.u32 [#allocation11], 4
          %s309 = int_to_ptr.vmem [resolvable:$true] %s308
          %314 = dma.hbm_to_vmem [thread:$0]  %s307, 64, %s309, [#allocation10], 16, 16, 1
        $region28: #{_lambda_.1} parent=11 // pred_fallthru
          _
        // Predicated region
        $region29: #{_lambda_.1} parent=11 // pred_check
          %p315 = pneg %p155
        $region30: #{_lambda_.1} parent=11 // pred_check_branch
          %317 = sbr.rel (%p315) target = $region32
        $region31: #{_lambda_.1} parent=11 // pred_region
          _
        $region32: #{_lambda_.1} parent=11 // pred_fallthru
          _
        // Predicated region
        $region33: #{_lambda_.1} parent=11 // pred_check
          %p318 = pneg %p176
        $region34: #{_lambda_.1} parent=11 // pred_check_branch
          %320 = sbr.rel (%p318) target = $region36
        $region35: #{_lambda_.1} parent=11 // pred_region
          _
        $region36: #{_lambda_.1} parent=11 // pred_fallthru
          _
        // Predicated region
        $region37: #{_lambda_.1} parent=11 // pred_check
          %p321 = pneg %p197
        $region38: #{_lambda_.1} parent=11 // pred_check_branch
          %323 = sbr.rel (%p321) target = $region40
        $region39: #{_lambda_.1} parent=11 // pred_region
          %325 = vsyncadd [#allocation13], 0
          %s327 = sshll.u32 %s7, 4
          %s328 = int_to_ptr.hbm [resolvable:$true] %s327
          %s329 = sshll.u32 [#allocation12], 4
          %s330 = int_to_ptr.vmem [resolvable:$true] %s329
          %332 = dma.hbm_to_vmem [thread:$0]  %s328, 16, %s330, [#allocation13]
        $region40: #{_lambda_.1} parent=11 // pred_fallthru
          _
        // Predicated region
        $region41: #{_lambda_.1} parent=11 // pred_check
          %p333 = pneg %p218
        $region42: #{_lambda_.1} parent=11 // pred_check_branch
          %335 = sbr.rel (%p333) target = $region44
        $region43: #{_lambda_.1} parent=11 // pred_region
          %337 = vsyncadd [#allocation13], 0
          %s339 = sshll.u32 %s8, 4
          %s340 = int_to_ptr.hbm [resolvable:$true] %s339
          %s341 = sshll.u32 [#allocation14], 4
          %s342 = int_to_ptr.vmem [resolvable:$true] %s341
          %344 = dma.hbm_to_vmem [thread:$0]  %s340, 16, %s342, [#allocation13]
        $region44: #{_lambda_.1} parent=11 // pred_fallthru
          _
      $region12: #{_lambda_.1} parent=5 // pred_fallthru
        _
      %p345 = scmp.lt.s32.totalorder %s24, 2
      // Predicated region
      $region45: #{_lambda_.1} parent=5 // pred_check
        %p346 = pneg %p345
      $region46: #{_lambda_.1} parent=5 // pred_check_branch
        %348 = sbr.rel (%p346) target = $region48
      $region47: #{_lambda_.1} parent=5 // pred_region
        // Predicated region
        $region49: #{_lambda_.1} parent=47 // pred_check
          %p349 = pneg %p44
        $region50: #{_lambda_.1} parent=47 // pred_check_branch
          %351 = sbr.rel (%p349) target = $region52
        $region51: #{_lambda_.1} parent=47 // pred_region
          %s352 = sand.u32 %s34, 1
          %s353 = scalar_lea.sflag [#allocation4], %s352
          %s354 = sand.u32 %s34, 1
          %s355 = smul.addr %s354, 32
          %s356 = scalar_lea.vmem [#allocation3], %s355
          %s357 = smul.u32 2, %s24
          %359 = vsyncadd %s353, 0
          %s360 = smul.addr %s357, 2
          %s361 = smul.addr %s360, 8
          %s362 = scalar_lea.hbm %s0, %s361
          %s363 = sshll.u32 %s362, 4
          %s364 = int_to_ptr.hbm [resolvable:$true] %s363
          %s365 = sshll.u32 %s356, 4
          %s366 = int_to_ptr.vmem [resolvable:$true] %s365
          %371 = dma.hbm_to_vmem [thread:$0]  %s364, 512, %s366, %s353, 128, 128, 8
        $region52: #{_lambda_.1} parent=47 // pred_fallthru
          _
      $region48: #{_lambda_.1} parent=5 // pred_fallthru
        _
      %p372 = scmp.le.s32.totalorder 1, %s24
      %p373 = scmp.lt.s32.totalorder %s24, 3
      %p374 = pnand %p372, %p373
      %p375 = pneg %p374
      // Predicated region
      $region53: #{_lambda_.1} parent=5 // pred_check
        _
      $region54: #{_lambda_.1} parent=5 // pred_check_branch
        %377 = sbr.rel (%p374) target = $region56
      $region55: #{_lambda_.1} parent=5 // pred_region
        %s378 = ssub.s32 %s24, 1
        %s379 = sand.u32 %s37, 1
        %s380 = scalar_lea.sflag [#allocation4], %s379
        %s381 = sand.u32 %s37, 1
        %s382 = smul.addr %s381, 32
        %s383 = scalar_lea.vmem [#allocation3], %s382
        // Predicated region
        $region57: #{_lambda_.1} parent=55 // pred_check
          %p384 = pneg %p50
        $region58: #{_lambda_.1} parent=55 // pred_check_branch
          %386 = sbr.rel (%p384) target = $region60
        $region59: #{_lambda_.1} parent=55 // pred_region
          %388 = dma.done %s380, 512
        $region60: #{_lambda_.1} parent=55 // pred_fallthru
          _
        // Predicated region
        $region61: #{_lambda_.1} parent=55 // pred_check
          %p389 = pneg %p71
        $region62: #{_lambda_.1} parent=55 // pred_check_branch
          %391 = sbr.rel (%p389) target = $region64
        $region63: #{_lambda_.1} parent=55 // pred_region
          %393 = dma.done [#allocation7], 1024
        $region64: #{_lambda_.1} parent=55 // pred_fallthru
          _
        // Predicated region
        $region65: #{_lambda_.1} parent=55 // pred_check
          %p394 = pneg %p92
        $region66: #{_lambda_.1} parent=55 // pred_check_branch
          %396 = sbr.rel (%p394) target = $region68
        $region67: #{_lambda_.1} parent=55 // pred_region
          %398 = dma.done [#allocation7], 64
        $region68: #{_lambda_.1} parent=55 // pred_fallthru
          _
        // Predicated region
        $region69: #{_lambda_.1} parent=55 // pred_check
          %p399 = pneg %p113
        $region70: #{_lambda_.1} parent=55 // pred_check_branch
          %401 = sbr.rel (%p399) target = $region72
        $region71: #{_lambda_.1} parent=55 // pred_region
          %403 = dma.done [#allocation10], 1024
        $region72: #{_lambda_.1} parent=55 // pred_fallthru
          _
        // Predicated region
        $region73: #{_lambda_.1} parent=55 // pred_check
          %p404 = pneg %p134
        $region74: #{_lambda_.1} parent=55 // pred_check_branch
          %406 = sbr.rel (%p404) target = $region76
        $region75: #{_lambda_.1} parent=55 // pred_region
          %408 = dma.done [#allocation10], 64
        $region76: #{_lambda_.1} parent=55 // pred_fallthru
          _
        // Predicated region
        $region77: #{_lambda_.1} parent=55 // pred_check
          %p409 = pneg %p197
        $region78: #{_lambda_.1} parent=55 // pred_check_branch
          %411 = sbr.rel (%p409) target = $region80
        $region79: #{_lambda_.1} parent=55 // pred_region
          %413 = dma.done [#allocation13], 16
        $region80: #{_lambda_.1} parent=55 // pred_fallthru
          _
        // Predicated region
        $region81: #{_lambda_.1} parent=55 // pred_check
          %p414 = pneg %p218
        $region82: #{_lambda_.1} parent=55 // pred_check_branch
          %416 = sbr.rel (%p414) target = $region84
        $region83: #{_lambda_.1} parent=55 // pred_region
          %418 = dma.done [#allocation13], 16
        $region84: #{_lambda_.1} parent=55 // pred_fallthru
          _
        %s419 = sand.u32 %s37, 1
        %s420 = scalar_lea.sflag [#allocation4], %s419
        %s421 = sand.u32 %s37, 1
        %s422 = smul.addr %s421, 32
        %s423 = scalar_lea.vmem [#allocation3], %s422
        %p424 = pneg %p50
        %p425 = pneg %p47
        %p426 = pneg %p71
        %p427 = pneg %p68
        %p428 = pneg %p92
        %p429 = pneg %p89
        %p430 = pneg %p113
        %p431 = pneg %p110
        %p432 = pneg %p134
        %p433 = pneg %p131
        %p434 = pneg %p155
        %p435 = pneg %p152
        %p436 = pneg %p176
        %p437 = pneg %p173
        %p438 = pneg %p197
        %p439 = pneg %p194
        %p440 = pneg %p218
        %p441 = pneg %p215
        %p442 = pneg %p244
        %p443 = pneg %p241
        %s444 = sand.u32 %s231, 1
        %s445 = scalar_lea.sflag [#allocation5], %s444
        %s446 = sand.u32 %s231, 1
        %s447 = smul.addr %s446, 32
        %s448 = scalar_lea.vmem [#allocation15], %s447
        %s449 = smul.u32 2, %s29
        %s450 = smul.u32 2, %s29
        %v452 = vld [vmem:[%s383] sm:$0xff]
        %v453 = vld [vmem:[%s383 + $0x8] sm:$0xff]
        %v454 = vld [vmem:[%s383 + $0x10] sm:$0xff]
        %v455 = vld [vmem:[%s383 + $0x18] sm:$0xff]
        %v456 = vld [vmem:[%s5] sm:$0x1]
        %v457 = vld [vmem:[%s6] sm:$0x1]
        %v458 = vld [vmem:[#allocation6] sm:$0xf]
        %v459 = vld [vmem:[#allocation6 + $0x4] sm:$0xf]
        %v460 = vld [vmem:[#allocation6 + $0x8] sm:$0xf]
        %v461 = vld [vmem:[#allocation6 + $0xc] sm:$0xf]
        %v462 = vld [vmem:[#allocation8] sm:$0x1]
        %vm463 = vcmask 261120
        %v464 = vsel %vm463, %v452, 0.0
        %465 = vadd.xlane.f32.xlu0 %v464
        %v466 = vpop.xlane.xlu0 %465
        %v467 = vsel %vm463, %v453, 0.0
        %468 = vadd.xlane.f32.xlu0 %v467
        %v469 = vpop.xlane.xlu0 %468
        %v470 = vsel %vm463, %v454, 0.0
        %471 = vadd.xlane.f32.xlu0 %v470
        %v472 = vpop.xlane.xlu0 %471
        %v473 = vsel %vm463, %v455, 0.0
        %474 = vadd.xlane.f32.xlu0 %v473
        %v475 = vpop.xlane.xlu0 %474
        %v476 = vrcp.pop 32.0
        %v477 = vmul.f32 32.0, %v476
        %v478 = vsub.f32 1.0, %v477
        %v479 = vmul.f32 %v476, %v478
        %v480 = vadd.f32 %v476, %v479
        %vm481 = vweird.f32 %v476
        %v482 = vsel %vm481, %v476, %v480
        %v483 = vmul.f32 %v466, %v482
        %v484 = vmul.f32 %v469, %v482
        %v485 = vmul.f32 %v472, %v482
        %v486 = vmul.f32 %v475, %v482
        %v487 = vsub.f32 %v452, %v483
        %v488 = vsub.f32 %v453, %v484
        %v489 = vsub.f32 %v454, %v485
        %v490 = vsub.f32 %v455, %v486
        %v491 = vmul.f32 %v487, %v487
        %v492 = vmul.f32 %v488, %v488
        %v493 = vmul.f32 %v489, %v489
        %v494 = vmul.f32 %v490, %v490
        %v495 = vsel %vm463, %v491, 0.0
        %496 = vadd.xlane.f32.xlu0 %v495
        %v497 = vpop.xlane.xlu0 %496
        %v498 = vsel %vm463, %v492, 0.0
        %499 = vadd.xlane.f32.xlu0 %v498
        %v500 = vpop.xlane.xlu0 %499
        %v501 = vsel %vm463, %v493, 0.0
        %502 = vadd.xlane.f32.xlu0 %v501
        %v503 = vpop.xlane.xlu0 %502
        %v504 = vsel %vm463, %v494, 0.0
        %505 = vadd.xlane.f32.xlu0 %v504
        %v506 = vpop.xlane.xlu0 %505
        %v507 = vmul.f32 %v497, %v482
        %v508 = vmul.f32 %v500, %v482
        %v509 = vmul.f32 %v503, %v482
        %v510 = vmul.f32 %v506, %v482
        %v511 = vadd.f32 %v507, 1e-06
        %v512 = vadd.f32 %v508, 1e-06
        %v513 = vadd.f32 %v509, 1e-06
        %v514 = vadd.f32 %v510, 1e-06
        %v515 = vrsqrt.pop %v511
        %v516 = vmul.f32 %v515, %v511
        %v517 = vmul.f32 %v516, %v515
        %v518 = vmul.f32 0.5, %v517
        %v519 = vsub.f32 1.5, %v518
        %v520 = vmul.f32 %v515, %v519
        %vm521 = vweird.f32 %v511
        %vm522 = vweird.f32 %v515
        %vm523 = vmor %vm521, %vm522
        %v524 = vsel %vm523, %v515, %v520
        %v525 = vrsqrt.pop %v512
        %v526 = vmul.f32 %v525, %v512
        %v527 = vmul.f32 %v526, %v525
        %v528 = vmul.f32 0.5, %v527
        %v529 = vsub.f32 1.5, %v528
        %v530 = vmul.f32 %v525, %v529
        %vm531 = vweird.f32 %v512
        %vm532 = vweird.f32 %v525
        %vm533 = vmor %vm531, %vm532
        %v534 = vsel %vm533, %v525, %v530
        %v535 = vrsqrt.pop %v513
        %v536 = vmul.f32 %v535, %v513
        %v537 = vmul.f32 %v536, %v535
        %v538 = vmul.f32 0.5, %v537
        %v539 = vsub.f32 1.5, %v538
        %v540 = vmul.f32 %v535, %v539
        %vm541 = vweird.f32 %v513
        %vm542 = vweird.f32 %v535
        %vm543 = vmor %vm541, %vm542
        %v544 = vsel %vm543, %v535, %v540
        %v545 = vrsqrt.pop %v514
        %v546 = vmul.f32 %v545, %v514
        %v547 = vmul.f32 %v546, %v545
        %v548 = vmul.f32 0.5, %v547
        %v549 = vsub.f32 1.5, %v548
        %v550 = vmul.f32 %v545, %v549
        %vm551 = vweird.f32 %v514
        %vm552 = vweird.f32 %v545
        %vm553 = vmor %vm551, %vm552
        %v554 = vsel %vm553, %v545, %v550
        %v555 = vmul.f32 %v487, %v524
        %v556 = vmul.f32 %v488, %v534
        %v557 = vmul.f32 %v489, %v544
        %v558 = vmul.f32 %v490, %v554
        %v560 = vperm.slane %v456, 0
        %v562 = vmul.f32 %v555, %v560
        %v563 = vmul.f32 %v556, %v560
        %v564 = vmul.f32 %v557, %v560
        %v565 = vmul.f32 %v558, %v560
        %v567 = vperm.slane %v457, 0
        %v569 = vadd.f32 %v562, %v567
        %v570 = vadd.f32 %v563, %v567
        %v571 = vadd.f32 %v564, %v567
        %v572 = vadd.f32 %v565, %v567
        %v573 = vpack.c.bf16 %v570, %v569
        %v574 = vpack.c.bf16 %v572, %v571
        %v576 = vperm.slane %v462, 0
        %v582 = vunpack.c.l.b16 %v458
        %v583 = vunpack.c.l.b16 %v459
        %v584 = vunpack.c.l.b16 %v460
        %v585 = vunpack.c.l.b16 %v461
        %v586 = vpack.c.b16 %v583, %v582
        %v587 = vpack.c.b16 %v585, %v584
        %v591 = vsel %vm463, %v573, 0
        %v594 = vsel %vm463, %v574, 0
        %596 = vmatpush.bf16.msra.mxu0 0
        %597 = vmatpush.bf16.msra.mxu0 0
        %598 = vmatpush.bf16.msra.mxu0 0
        %599 = vmatpush.bf16.msra.mxu0 0
        %600 = vmatpush.bf16.msra.mxu0 0
        %601 = vmatpush.bf16.msra.mxu0 0
        %602 = vmatpush.bf16.msra.mxu0 %v587
        %603 = vmatpush.bf16.msra.mxu0 %v586
        %604 = vmatmul.bf16.gmra.mxu0 %v591
        %v605 = vpop.f32.mrf.mxu0
        %v606 = vadd.f32 %v576, %v605
        %v607 = vpop.f32.mrf.mxu0
        %v608 = vadd.f32 %v576, %v607
        %609 = vmatmul.bf16.gmra.mxu0 %v594
        %v610 = vpop.f32.mrf.mxu0
        %v611 = vadd.f32 %v576, %v610
        %v612 = vpop.f32.mrf.mxu0
        %v613 = vadd.f32 %v576, %v612
        %614 = vdwg.mxu0
        %v615 = vld [vmem:[#allocation9] sm:$0xf]
        %v616 = vld [vmem:[#allocation9 + $0x4] sm:$0xf]
        %v617 = vld [vmem:[#allocation9 + $0x8] sm:$0xf]
        %v618 = vld [vmem:[#allocation9 + $0xc] sm:$0xf]
        %v619 = vld [vmem:[#allocation11] sm:$0x1]
        %v620 = vpack.c.bf16 %v606, %v606
        %v621 = vpack.c.bf16 %v608, %v608
        %v622 = vpack.c.bf16 %v611, %v611
        %v623 = vpack.c.bf16 %v613, %v613
        %v626 = vunpack.c.l.b16 %v620
        %v627 = vunpack.c.l.b16 %v621
        %v628 = vpack.c.b16 %v627, %v626
        %629 = vrot.lane.b32.xlu0 %v628, 96
        %v630 = vpop.permute.xlu0 %629
        %vm631 = vcmask 64512
        %v633 = vsel %vm631, %v628, 0
        %v636 = vsel %vm631, %v630, 0
        %638 = vmatpush.bf16.xpose.msra.mxu0 0
        %639 = vmatpush.bf16.xpose.msra.mxu0 0
        %640 = vmatpush.bf16.xpose.msra.mxu0 0
        %641 = vmatpush.bf16.xpose.msra.mxu0 0
        %642 = vmatpush.bf16.xpose.msra.mxu0 0
        %643 = vmatpush.bf16.xpose.msra.mxu0 0
        %644 = vmatpush.bf16.xpose.msra.mxu0 0
        %645 = vmatpush.bf16.xpose.msra.mxu0 %v636
        %646 = vmatmul.bf16.gmra.mxu0 %v633
        %v647 = vpop.f32.mrf.mxu0
        %v648 = vadd.f32 0.0, %v647
        %v649 = vpop.f32.mrf.mxu0
        %v650 = vadd.f32 0.0, %v649
        %651 = vdwg.mxu0
        %v654 = vunpack.c.l.b16 %v622
        %v655 = vunpack.c.l.b16 %v623
        %v656 = vpack.c.b16 %v655, %v654
        %657 = vrot.lane.b32.xlu0 %v656, 96
        %v658 = vpop.permute.xlu0 %657
        %v660 = vsel %vm631, %v656, 0
        %v663 = vsel %vm631, %v658, 0
        %665 = vmatpush.bf16.xpose.msra.mxu0 0
        %666 = vmatpush.bf16.xpose.msra.mxu0 0
        %667 = vmatpush.bf16.xpose.msra.mxu0 0
        %668 = vmatpush.bf16.xpose.msra.mxu0 0
        %669 = vmatpush.bf16.xpose.msra.mxu0 0
        %670 = vmatpush.bf16.xpose.msra.mxu0 0
        %671 = vmatpush.bf16.xpose.msra.mxu0 0
        %672 = vmatpush.bf16.xpose.msra.mxu0 %v663
        %673 = vmatmul.bf16.gmra.mxu0 %v660
        %v674 = vpop.f32.mrf.mxu0
        %v675 = vadd.f32 0.0, %v674
        %v676 = vpop.f32.mrf.mxu0
        %v677 = vadd.f32 0.0, %v676
        %678 = vdwg.mxu0
        %vm679 = vcmask 130048
        %v680 = vsel %vm679, %v648, -inf
        %681 = vmax.xlane.f32.xlu0 %v680
        %v682 = vpop.xlane.xlu0 %681
        %v683 = vsel %vm679, %v650, -inf
        %684 = vmax.xlane.f32.xlu0 %v683
        %v685 = vpop.xlane.xlu0 %684
        %v686 = vsel %vm679, %v675, -inf
        %687 = vmax.xlane.f32.xlu0 %v686
        %v688 = vpop.xlane.xlu0 %687
        %v689 = vsel %vm679, %v677, -inf
        %690 = vmax.xlane.f32.xlu0 %v689
        %v691 = vpop.xlane.xlu0 %690
        %v692 = vsub.f32 %v648, %v682
        %v693 = vsub.f32 %v650, %v685
        %v694 = vsub.f32 %v675, %v688
        %v695 = vsub.f32 %v677, %v691
        %v696 = vmul.f32 %v692, 1.442695
        %v697 = vpow.pop %v696
        %v698 = vmul.f32 %v693, 1.442695
        %v699 = vpow.pop %v698
        %v700 = vmul.f32 %v694, 1.442695
        %v701 = vpow.pop %v700
        %v702 = vmul.f32 %v695, 1.442695
        %v703 = vpow.pop %v702
        %v704 = vsel %vm679, %v697, 0.0
        %705 = vadd.xlane.f32.xlu0 %v704
        %v706 = vpop.xlane.xlu0 %705
        %v707 = vsel %vm679, %v699, 0.0
        %708 = vadd.xlane.f32.xlu0 %v707
        %v709 = vpop.xlane.xlu0 %708
        %v710 = vsel %vm679, %v701, 0.0
        %711 = vadd.xlane.f32.xlu0 %v710
        %v712 = vpop.xlane.xlu0 %711
        %v713 = vsel %vm679, %v703, 0.0
        %714 = vadd.xlane.f32.xlu0 %v713
        %v715 = vpop.xlane.xlu0 %714
        %v716 = vrcp.pop %v706
        %v717 = vmul.f32 %v706, %v716
        %v718 = vsub.f32 1.0, %v717
        %v719 = vmul.f32 %v716, %v718
        %v720 = vadd.f32 %v716, %v719
        %vm721 = vweird.f32 %v706
        %vm722 = vweird.f32 %v716
        %vm723 = vmor %vm721, %vm722
        %v724 = vsel %vm723, %v716, %v720
        %v725 = vand.u32 2147483647, %v706
        %vm726 = vcmp.eq.f32.partialorder %v725, 8.507059e+37
        %v727 = vand.u32 %v706, 2147483648
        %v728 = vor.u32 1.1754944e-38, %v727
        %v729 = vsel %vm726, %v728, %v724
        %v730 = vmul.f32 %v697, %v729
        %v731 = vrcp.pop %v709
        %v732 = vmul.f32 %v709, %v731
        %v733 = vsub.f32 1.0, %v732
        %v734 = vmul.f32 %v731, %v733
        %v735 = vadd.f32 %v731, %v734
        %vm736 = vweird.f32 %v709
        %vm737 = vweird.f32 %v731
        %vm738 = vmor %vm736, %vm737
        %v739 = vsel %vm738, %v731, %v735
        %v740 = vand.u32 2147483647, %v709
        %vm741 = vcmp.eq.f32.partialorder %v740, 8.507059e+37
        %v742 = vand.u32 %v709, 2147483648
        %v743 = vor.u32 1.1754944e-38, %v742
        %v744 = vsel %vm741, %v743, %v739
        %v745 = vmul.f32 %v699, %v744
        %v746 = vrcp.pop %v712
        %v747 = vmul.f32 %v712, %v746
        %v748 = vsub.f32 1.0, %v747
        %v749 = vmul.f32 %v746, %v748
        %v750 = vadd.f32 %v746, %v749
        %vm751 = vweird.f32 %v712
        %vm752 = vweird.f32 %v746
        %vm753 = vmor %vm751, %vm752
        %v754 = vsel %vm753, %v746, %v750
        %v755 = vand.u32 2147483647, %v712
        %vm756 = vcmp.eq.f32.partialorder %v755, 8.507059e+37
        %v757 = vand.u32 %v712, 2147483648
        %v758 = vor.u32 1.1754944e-38, %v757
        %v759 = vsel %vm756, %v758, %v754
        %v760 = vmul.f32 %v701, %v759
        %v761 = vrcp.pop %v715
        %v762 = vmul.f32 %v715, %v761
        %v763 = vsub.f32 1.0, %v762
        %v764 = vmul.f32 %v761, %v763
        %v765 = vadd.f32 %v761, %v764
        %vm766 = vweird.f32 %v715
        %vm767 = vweird.f32 %v761
        %vm768 = vmor %vm766, %vm767
        %v769 = vsel %vm768, %v761, %v765
        %v770 = vand.u32 2147483647, %v715
        %vm771 = vcmp.eq.f32.partialorder %v770, 8.507059e+37
        %v772 = vand.u32 %v715, 2147483648
        %v773 = vor.u32 1.1754944e-38, %v772
        %v774 = vsel %vm771, %v773, %v769
        %v775 = vmul.f32 %v703, %v774
        %v776 = vpack.c.bf16 %v730, %v730
        %v777 = vpack.c.bf16 %v745, %v745
        %v778 = vpack.c.bf16 %v760, %v760
        %v779 = vpack.c.bf16 %v775, %v775
        %v782 = vunpack.c.l.b16 %v776
        %v783 = vunpack.c.l.b16 %v777
        %v784 = vpack.c.b16 %v783, %v782
        %785 = vrot.lane.b32.xlu0 %v628, 64
        %v786 = vpop.permute.xlu0 %785
        %v789 = vsel %vm679, %v784, 0
        %791 = vmatpush.bf16.msra.mxu0 0
        %792 = vmatpush.bf16.msra.mxu0 0
        %793 = vmatpush.bf16.msra.mxu0 0
        %794 = vmatpush.bf16.msra.mxu0 0
        %795 = vmatpush.bf16.msra.mxu0 0
        %796 = vmatpush.bf16.msra.mxu0 0
        %797 = vmatpush.bf16.msra.mxu0 0
        %798 = vmatpush.bf16.msra.mxu0 %v786
        %799 = vmatmul.bf16.gmra.mxu0 %v789
        %v800 = vpop.f32.mrf.mxu0
        %v801 = vadd.f32 0.0, %v800
        %v802 = vpop.f32.mrf.mxu0
        %v803 = vadd.f32 0.0, %v802
        %804 = vdwg.mxu0
        %v807 = vunpack.c.l.b16 %v778
        %v808 = vunpack.c.l.b16 %v779
        %v809 = vpack.c.b16 %v808, %v807
        %810 = vrot.lane.b32.xlu0 %v656, 64
        %v811 = vpop.permute.xlu0 %810
        %v814 = vsel %vm679, %v809, 0
        %816 = vmatpush.bf16.msra.mxu0 0
        %817 = vmatpush.bf16.msra.mxu0 0
        %818 = vmatpush.bf16.msra.mxu0 0
        %819 = vmatpush.bf16.msra.mxu0 0
        %820 = vmatpush.bf16.msra.mxu0 0
        %821 = vmatpush.bf16.msra.mxu0 0
        %822 = vmatpush.bf16.msra.mxu0 0
        %823 = vmatpush.bf16.msra.mxu0 %v811
        %824 = vmatmul.bf16.gmra.mxu0 %v814
        %v825 = vpop.f32.mrf.mxu0
        %v826 = vadd.f32 0.0, %v825
        %v827 = vpop.f32.mrf.mxu0
        %v828 = vadd.f32 0.0, %v827
        %829 = vdwg.mxu0
        %830 = vrot.lane.b32.xlu0 %v628, 120
        %v831 = vpop.permute.xlu0 %830
        %832 = vrot.lane.b32.xlu0 %v628, 88
        %v833 = vpop.permute.xlu0 %832
        %v835 = vsel %vm631, %v831, 0
        %v838 = vsel %vm631, %v833, 0
        %840 = vmatpush.bf16.xpose.msra.mxu0 0
        %841 = vmatpush.bf16.xpose.msra.mxu0 0
        %842 = vmatpush.bf16.xpose.msra.mxu0 0
        %843 = vmatpush.bf16.xpose.msra.mxu0 0
        %844 = vmatpush.bf16.xpose.msra.mxu0 0
        %845 = vmatpush.bf16.xpose.msra.mxu0 0
        %846 = vmatpush.bf16.xpose.msra.mxu0 0
        %847 = vmatpush.bf16.xpose.msra.mxu0 %v838
        %848 = vmatmul.bf16.gmra.mxu0 %v835
        %v849 = vpop.f32.mrf.mxu0
        %v850 = vadd.f32 0.0, %v849
        %v851 = vpop.f32.mrf.mxu0
        %v852 = vadd.f32 0.0, %v851
        %853 = vdwg.mxu0
        %854 = vrot.lane.b32.xlu0 %v656, 120
        %v855 = vpop.permute.xlu0 %854
        %856 = vrot.lane.b32.xlu0 %v656, 88
        %v857 = vpop.permute.xlu0 %856
        %v859 = vsel %vm631, %v855, 0
        %v862 = vsel %vm631, %v857, 0
        %864 = vmatpush.bf16.xpose.msra.mxu0 0
        %865 = vmatpush.bf16.xpose.msra.mxu0 0
        %866 = vmatpush.bf16.xpose.msra.mxu0 0
        %867 = vmatpush.bf16.xpose.msra.mxu0 0
        %868 = vmatpush.bf16.xpose.msra.mxu0 0
        %869 = vmatpush.bf16.xpose.msra.mxu0 0
        %870 = vmatpush.bf16.xpose.msra.mxu0 0
        %871 = vmatpush.bf16.xpose.msra.mxu0 %v862
        %872 = vmatmul.bf16.gmra.mxu0 %v859
        %v873 = vpop.f32.mrf.mxu0
        %v874 = vadd.f32 0.0, %v873
        %v875 = vpop.f32.mrf.mxu0
        %v876 = vadd.f32 0.0, %v875
        %877 = vdwg.mxu0
        %v878 = vsel %vm679, %v850, -inf
        %879 = vmax.xlane.f32.xlu0 %v878
        %v880 = vpop.xlane.xlu0 %879
        %v881 = vsel %vm679, %v852, -inf
        %882 = vmax.xlane.f32.xlu0 %v881
        %v883 = vpop.xlane.xlu0 %882
        %v884 = vsel %vm679, %v874, -inf
        %885 = vmax.xlane.f32.xlu0 %v884
        %v886 = vpop.xlane.xlu0 %885
        %v887 = vsel %vm679, %v876, -inf
        %888 = vmax.xlane.f32.xlu0 %v887
        %v889 = vpop.xlane.xlu0 %888
        %v890 = vsub.f32 %v850, %v880
        %v891 = vsub.f32 %v852, %v883
        %v892 = vsub.f32 %v874, %v886
        %v893 = vsub.f32 %v876, %v889
        %v894 = vmul.f32 %v890, 1.442695
        %v895 = vpow.pop %v894
        %v896 = vmul.f32 %v891, 1.442695
        %v897 = vpow.pop %v896
        %v898 = vmul.f32 %v892, 1.442695
        %v899 = vpow.pop %v898
        %v900 = vmul.f32 %v893, 1.442695
        %v901 = vpow.pop %v900
        %v902 = vsel %vm679, %v895, 0.0
        %903 = vadd.xlane.f32.xlu0 %v902
        %v904 = vpop.xlane.xlu0 %903
        %v905 = vsel %vm679, %v897, 0.0
        %906 = vadd.xlane.f32.xlu0 %v905
        %v907 = vpop.xlane.xlu0 %906
        %v908 = vsel %vm679, %v899, 0.0
        %909 = vadd.xlane.f32.xlu0 %v908
        %v910 = vpop.xlane.xlu0 %909
        %v911 = vsel %vm679, %v901, 0.0
        %912 = vadd.xlane.f32.xlu0 %v911
        %v913 = vpop.xlane.xlu0 %912
        %v914 = vrcp.pop %v904
        %v915 = vmul.f32 %v904, %v914
        %v916 = vsub.f32 1.0, %v915
        %v917 = vmul.f32 %v914, %v916
        %v918 = vadd.f32 %v914, %v917
        %vm919 = vweird.f32 %v904
        %vm920 = vweird.f32 %v914
        %vm921 = vmor %vm919, %vm920
        %v922 = vsel %vm921, %v914, %v918
        %v923 = vand.u32 2147483647, %v904
        %vm924 = vcmp.eq.f32.partialorder %v923, 8.507059e+37
        %v925 = vand.u32 %v904, 2147483648
        %v926 = vor.u32 1.1754944e-38, %v925
        %v927 = vsel %vm924, %v926, %v922
        %v928 = vmul.f32 %v895, %v927
        %v929 = vrcp.pop %v907
        %v930 = vmul.f32 %v907, %v929
        %v931 = vsub.f32 1.0, %v930
        %v932 = vmul.f32 %v929, %v931
        %v933 = vadd.f32 %v929, %v932
        %vm934 = vweird.f32 %v907
        %vm935 = vweird.f32 %v929
        %vm936 = vmor %vm934, %vm935
        %v937 = vsel %vm936, %v929, %v933
        %v938 = vand.u32 2147483647, %v907
        %vm939 = vcmp.eq.f32.partialorder %v938, 8.507059e+37
        %v940 = vand.u32 %v907, 2147483648
        %v941 = vor.u32 1.1754944e-38, %v940
        %v942 = vsel %vm939, %v941, %v937
        %v943 = vmul.f32 %v897, %v942
        %v944 = vrcp.pop %v910
        %v945 = vmul.f32 %v910, %v944
        %v946 = vsub.f32 1.0, %v945
        %v947 = vmul.f32 %v944, %v946
        %v948 = vadd.f32 %v944, %v947
        %vm949 = vweird.f32 %v910
        %vm950 = vweird.f32 %v944
        %vm951 = vmor %vm949, %vm950
        %v952 = vsel %vm951, %v944, %v948
        %v953 = vand.u32 2147483647, %v910
        %vm954 = vcmp.eq.f32.partialorder %v953, 8.507059e+37
        %v955 = vand.u32 %v910, 2147483648
        %v956 = vor.u32 1.1754944e-38, %v955
        %v957 = vsel %vm954, %v956, %v952
        %v958 = vmul.f32 %v899, %v957
        %v959 = vrcp.pop %v913
        %v960 = vmul.f32 %v913, %v959
        %v961 = vsub.f32 1.0, %v960
        %v962 = vmul.f32 %v959, %v961
        %v963 = vadd.f32 %v959, %v962
        %vm964 = vweird.f32 %v913
        %vm965 = vweird.f32 %v959
        %vm966 = vmor %vm964, %vm965
        %v967 = vsel %vm966, %v959, %v963
        %v968 = vand.u32 2147483647, %v913
        %vm969 = vcmp.eq.f32.partialorder %v968, 8.507059e+37
        %v970 = vand.u32 %v913, 2147483648
        %v971 = vor.u32 1.1754944e-38, %v970
        %v972 = vsel %vm969, %v971, %v967
        %v973 = vmul.f32 %v901, %v972
        %v974 = vpack.c.bf16 %v928, %v928
        %v975 = vpack.c.bf16 %v943, %v943
        %v976 = vpack.c.bf16 %v958, %v958
        %v977 = vpack.c.bf16 %v973, %v973
        %v980 = vunpack.c.l.b16 %v974
        %v981 = vunpack.c.l.b16 %v975
        %v982 = vpack.c.b16 %v981, %v980
        %983 = vrot.lane.b32.xlu0 %v628, 56
        %v984 = vpop.permute.xlu0 %983
        %v987 = vsel %vm679, %v982, 0
        %989 = vmatpush.bf16.msra.mxu0 0
        %990 = vmatpush.bf16.msra.mxu0 0
        %991 = vmatpush.bf16.msra.mxu0 0
        %992 = vmatpush.bf16.msra.mxu0 0
        %993 = vmatpush.bf16.msra.mxu0 0
        %994 = vmatpush.bf16.msra.mxu0 0
        %995 = vmatpush.bf16.msra.mxu0 0
        %996 = vmatpush.bf16.msra.mxu0 %v984
        %997 = vmatmul.bf16.gmra.mxu0 %v987
        %v998 = vpop.f32.mrf.mxu0
        %v999 = vadd.f32 0.0, %v998
        %v1000 = vpop.f32.mrf.mxu0
        %v1001 = vadd.f32 0.0, %v1000
        %1002 = vdwg.mxu0
        %v1005 = vunpack.c.l.b16 %v976
        %v1006 = vunpack.c.l.b16 %v977
        %v1007 = vpack.c.b16 %v1006, %v1005
        %1008 = vrot.lane.b32.xlu0 %v656, 56
        %v1009 = vpop.permute.xlu0 %1008
        %v1012 = vsel %vm679, %v1007, 0
        %1014 = vmatpush.bf16.msra.mxu0 0
        %1015 = vmatpush.bf16.msra.mxu0 0
        %1016 = vmatpush.bf16.msra.mxu0 0
        %1017 = vmatpush.bf16.msra.mxu0 0
        %1018 = vmatpush.bf16.msra.mxu0 0
        %1019 = vmatpush.bf16.msra.mxu0 0
        %1020 = vmatpush.bf16.msra.mxu0 0
        %1021 = vmatpush.bf16.msra.mxu0 %v1009
        %1022 = vmatmul.bf16.gmra.mxu0 %v1012
        %v1023 = vpop.f32.mrf.mxu0
        %v1024 = vadd.f32 0.0, %v1023
        %v1025 = vpop.f32.mrf.mxu0
        %v1026 = vadd.f32 0.0, %v1025
        %1027 = vdwg.mxu0
        %1028 = vrot.lane.b32.xlu0 %v628, 112
        %v1029 = vpop.permute.xlu0 %1028
        %1030 = vrot.lane.b32.xlu0 %v628, 80
        %v1031 = vpop.permute.xlu0 %1030
        %v1033 = vsel %vm631, %v1029, 0
        %v1036 = vsel %vm631, %v1031, 0
        %1038 = vmatpush.bf16.xpose.msra.mxu0 0
        %1039 = vmatpush.bf16.xpose.msra.mxu0 0
        %1040 = vmatpush.bf16.xpose.msra.mxu0 0
        %1041 = vmatpush.bf16.xpose.msra.mxu0 0
        %1042 = vmatpush.bf16.xpose.msra.mxu0 0
        %1043 = vmatpush.bf16.xpose.msra.mxu0 0
        %1044 = vmatpush.bf16.xpose.msra.mxu0 0
        %1045 = vmatpush.bf16.xpose.msra.mxu0 %v1036
        %1046 = vmatmul.bf16.gmra.mxu0 %v1033
        %v1047 = vpop.f32.mrf.mxu0
        %v1048 = vadd.f32 0.0, %v1047
        %v1049 = vpop.f32.mrf.mxu0
        %v1050 = vadd.f32 0.0, %v1049
        %1051 = vdwg.mxu0
        %1052 = vrot.lane.b32.xlu0 %v656, 112
        %v1053 = vpop.permute.xlu0 %1052
        %1054 = vrot.lane.b32.xlu0 %v656, 80
        %v1055 = vpop.permute.xlu0 %1054
        %v1057 = vsel %vm631, %v1053, 0
        %v1060 = vsel %vm631, %v1055, 0
        %1062 = vmatpush.bf16.xpose.msra.mxu0 0
        %1063 = vmatpush.bf16.xpose.msra.mxu0 0
        %1064 = vmatpush.bf16.xpose.msra.mxu0 0
        %1065 = vmatpush.bf16.xpose.msra.mxu0 0
        %1066 = vmatpush.bf16.xpose.msra.mxu0 0
        %1067 = vmatpush.bf16.xpose.msra.mxu0 0
        %1068 = vmatpush.bf16.xpose.msra.mxu0 0
        %1069 = vmatpush.bf16.xpose.msra.mxu0 %v1060
        %1070 = vmatmul.bf16.gmra.mxu0 %v1057
        %v1071 = vpop.f32.mrf.mxu0
        %v1072 = vadd.f32 0.0, %v1071
        %v1073 = vpop.f32.mrf.mxu0
        %v1074 = vadd.f32 0.0, %v1073
        %1075 = vdwg.mxu0
        %v1076 = vsel %vm679, %v1048, -inf
        %1077 = vmax.xlane.f32.xlu0 %v1076
        %v1078 = vpop.xlane.xlu0 %1077
        %v1079 = vsel %vm679, %v1050, -inf
        %1080 = vmax.xlane.f32.xlu0 %v1079
        %v1081 = vpop.xlane.xlu0 %1080
        %v1082 = vsel %vm679, %v1072, -inf
        %1083 = vmax.xlane.f32.xlu0 %v1082
        %v1084 = vpop.xlane.xlu0 %1083
        %v1085 = vsel %vm679, %v1074, -inf
        %1086 = vmax.xlane.f32.xlu0 %v1085
        %v1087 = vpop.xlane.xlu0 %1086
        %v1088 = vsub.f32 %v1048, %v1078
        %v1089 = vsub.f32 %v1050, %v1081
        %v1090 = vsub.f32 %v1072, %v1084
        %v1091 = vsub.f32 %v1074, %v1087
        %v1092 = vmul.f32 %v1088, 1.442695
        %v1093 = vpow.pop %v1092
        %v1094 = vmul.f32 %v1089, 1.442695
        %v1095 = vpow.pop %v1094
        %v1096 = vmul.f32 %v1090, 1.442695
        %v1097 = vpow.pop %v1096
        %v1098 = vmul.f32 %v1091, 1.442695
        %v1099 = vpow.pop %v1098
        %v1100 = vsel %vm679, %v1093, 0.0
        %1101 = vadd.xlane.f32.xlu0 %v1100
        %v1102 = vpop.xlane.xlu0 %1101
        %v1103 = vsel %vm679, %v1095, 0.0
        %1104 = vadd.xlane.f32.xlu0 %v1103
        %v1105 = vpop.xlane.xlu0 %1104
        %v1106 = vsel %vm679, %v1097, 0.0
        %1107 = vadd.xlane.f32.xlu0 %v1106
        %v1108 = vpop.xlane.xlu0 %1107
        %v1109 = vsel %vm679, %v1099, 0.0
        %1110 = vadd.xlane.f32.xlu0 %v1109
        %v1111 = vpop.xlane.xlu0 %1110
        %v1112 = vrcp.pop %v1102
        %v1113 = vmul.f32 %v1102, %v1112
        %v1114 = vsub.f32 1.0, %v1113
        %v1115 = vmul.f32 %v1112, %v1114
        %v1116 = vadd.f32 %v1112, %v1115
        %vm1117 = vweird.f32 %v1102
        %vm1118 = vweird.f32 %v1112
        %vm1119 = vmor %vm1117, %vm1118
        %v1120 = vsel %vm1119, %v1112, %v1116
        %v1121 = vand.u32 2147483647, %v1102
        %vm1122 = vcmp.eq.f32.partialorder %v1121, 8.507059e+37
        %v1123 = vand.u32 %v1102, 2147483648
        %v1124 = vor.u32 1.1754944e-38, %v1123
        %v1125 = vsel %vm1122, %v1124, %v1120
        %v1126 = vmul.f32 %v1093, %v1125
        %v1127 = vrcp.pop %v1105
        %v1128 = vmul.f32 %v1105, %v1127
        %v1129 = vsub.f32 1.0, %v1128
        %v1130 = vmul.f32 %v1127, %v1129
        %v1131 = vadd.f32 %v1127, %v1130
        %vm1132 = vweird.f32 %v1105
        %vm1133 = vweird.f32 %v1127
        %vm1134 = vmor %vm1132, %vm1133
        %v1135 = vsel %vm1134, %v1127, %v1131
        %v1136 = vand.u32 2147483647, %v1105
        %vm1137 = vcmp.eq.f32.partialorder %v1136, 8.507059e+37
        %v1138 = vand.u32 %v1105, 2147483648
        %v1139 = vor.u32 1.1754944e-38, %v1138
        %v1140 = vsel %vm1137, %v1139, %v1135
        %v1141 = vmul.f32 %v1095, %v1140
        %v1142 = vrcp.pop %v1108
        %v1143 = vmul.f32 %v1108, %v1142
        %v1144 = vsub.f32 1.0, %v1143
        %v1145 = vmul.f32 %v1142, %v1144
        %v1146 = vadd.f32 %v1142, %v1145
        %vm1147 = vweird.f32 %v1108
        %vm1148 = vweird.f32 %v1142
        %vm1149 = vmor %vm1147, %vm1148
        %v1150 = vsel %vm1149, %v1142, %v1146
        %v1151 = vand.u32 2147483647, %v1108
        %vm1152 = vcmp.eq.f32.partialorder %v1151, 8.507059e+37
        %v1153 = vand.u32 %v1108, 2147483648
        %v1154 = vor.u32 1.1754944e-38, %v1153
        %v1155 = vsel %vm1152, %v1154, %v1150
        %v1156 = vmul.f32 %v1097, %v1155
        %v1157 = vrcp.pop %v1111
        %v1158 = vmul.f32 %v1111, %v1157
        %v1159 = vsub.f32 1.0, %v1158
        %v1160 = vmul.f32 %v1157, %v1159
        %v1161 = vadd.f32 %v1157, %v1160
        %vm1162 = vweird.f32 %v1111
        %vm1163 = vweird.f32 %v1157
        %vm1164 = vmor %vm1162, %vm1163
        %v1165 = vsel %vm1164, %v1157, %v1161
        %v1166 = vand.u32 2147483647, %v1111
        %vm1167 = vcmp.eq.f32.partialorder %v1166, 8.507059e+37
        %v1168 = vand.u32 %v1111, 2147483648
        %v1169 = vor.u32 1.1754944e-38, %v1168
        %v1170 = vsel %vm1167, %v1169, %v1165
        %v1171 = vmul.f32 %v1099, %v1170
        %v1172 = vpack.c.bf16 %v1126, %v1126
        %v1173 = vpack.c.bf16 %v1141, %v1141
        %v1174 = vpack.c.bf16 %v1156, %v1156
        %v1175 = vpack.c.bf16 %v1171, %v1171
        %v1178 = vunpack.c.l.b16 %v1172
        %v1179 = vunpack.c.l.b16 %v1173
        %v1180 = vpack.c.b16 %v1179, %v1178
        %1181 = vrot.lane.b32.xlu0 %v628, 48
        %v1182 = vpop.permute.xlu0 %1181
        %v1185 = vsel %vm679, %v1180, 0
        %1187 = vmatpush.bf16.msra.mxu0 0
        %1188 = vmatpush.bf16.msra.mxu0 0
        %1189 = vmatpush.bf16.msra.mxu0 0
        %1190 = vmatpush.bf16.msra.mxu0 0
        %1191 = vmatpush.bf16.msra.mxu0 0
        %1192 = vmatpush.bf16.msra.mxu0 0
        %1193 = vmatpush.bf16.msra.mxu0 0
        %1194 = vmatpush.bf16.msra.mxu0 %v1182
        %1195 = vmatmul.bf16.gmra.mxu0 %v1185
        %v1196 = vpop.f32.mrf.mxu0
        %v1197 = vadd.f32 0.0, %v1196
        %v1198 = vpop.f32.mrf.mxu0
        %v1199 = vadd.f32 0.0, %v1198
        %1200 = vdwg.mxu0
        %v1203 = vunpack.c.l.b16 %v1174
        %v1204 = vunpack.c.l.b16 %v1175
        %v1205 = vpack.c.b16 %v1204, %v1203
        %1206 = vrot.lane.b32.xlu0 %v656, 48
        %v1207 = vpop.permute.xlu0 %1206
        %v1210 = vsel %vm679, %v1205, 0
        %1212 = vmatpush.bf16.msra.mxu0 0
        %1213 = vmatpush.bf16.msra.mxu0 0
        %1214 = vmatpush.bf16.msra.mxu0 0
        %1215 = vmatpush.bf16.msra.mxu0 0
        %1216 = vmatpush.bf16.msra.mxu0 0
        %1217 = vmatpush.bf16.msra.mxu0 0
        %1218 = vmatpush.bf16.msra.mxu0 0
        %1219 = vmatpush.bf16.msra.mxu0 %v1207
        %1220 = vmatmul.bf16.gmra.mxu0 %v1210
        %v1221 = vpop.f32.mrf.mxu0
        %v1222 = vadd.f32 0.0, %v1221
        %v1223 = vpop.f32.mrf.mxu0
        %v1224 = vadd.f32 0.0, %v1223
        %1225 = vdwg.mxu0
        %1226 = vrot.lane.b32.xlu0 %v628, 104
        %v1227 = vpop.permute.xlu0 %1226
        %1228 = vrot.lane.b32.xlu0 %v628, 72
        %v1229 = vpop.permute.xlu0 %1228
        %v1231 = vsel %vm631, %v1227, 0
        %v1234 = vsel %vm631, %v1229, 0
        %1236 = vmatpush.bf16.xpose.msra.mxu0 0
        %1237 = vmatpush.bf16.xpose.msra.mxu0 0
        %1238 = vmatpush.bf16.xpose.msra.mxu0 0
        %1239 = vmatpush.bf16.xpose.msra.mxu0 0
        %1240 = vmatpush.bf16.xpose.msra.mxu0 0
        %1241 = vmatpush.bf16.xpose.msra.mxu0 0
        %1242 = vmatpush.bf16.xpose.msra.mxu0 0
        %1243 = vmatpush.bf16.xpose.msra.mxu0 %v1234
        %1244 = vmatmul.bf16.gmra.mxu0 %v1231
        %v1245 = vpop.f32.mrf.mxu0
        %v1246 = vadd.f32 0.0, %v1245
        %v1247 = vpop.f32.mrf.mxu0
        %v1248 = vadd.f32 0.0, %v1247
        %1249 = vdwg.mxu0
        %1250 = vrot.lane.b32.xlu0 %v656, 104
        %v1251 = vpop.permute.xlu0 %1250
        %1252 = vrot.lane.b32.xlu0 %v656, 72
        %v1253 = vpop.permute.xlu0 %1252
        %v1255 = vsel %vm631, %v1251, 0
        %v1258 = vsel %vm631, %v1253, 0
        %1260 = vmatpush.bf16.xpose.msra.mxu0 0
        %1261 = vmatpush.bf16.xpose.msra.mxu0 0
        %1262 = vmatpush.bf16.xpose.msra.mxu0 0
        %1263 = vmatpush.bf16.xpose.msra.mxu0 0
        %1264 = vmatpush.bf16.xpose.msra.mxu0 0
        %1265 = vmatpush.bf16.xpose.msra.mxu0 0
        %1266 = vmatpush.bf16.xpose.msra.mxu0 0
        %1267 = vmatpush.bf16.xpose.msra.mxu0 %v1258
        %1268 = vmatmul.bf16.gmra.mxu0 %v1255
        %v1269 = vpop.f32.mrf.mxu0
        %v1270 = vadd.f32 0.0, %v1269
        %v1271 = vpop.f32.mrf.mxu0
        %v1272 = vadd.f32 0.0, %v1271
        %1273 = vdwg.mxu0
        %v1274 = vsel %vm679, %v1246, -inf
        %1275 = vmax.xlane.f32.xlu0 %v1274
        %v1276 = vpop.xlane.xlu0 %1275
        %v1277 = vsel %vm679, %v1248, -inf
        %1278 = vmax.xlane.f32.xlu0 %v1277
        %v1279 = vpop.xlane.xlu0 %1278
        %v1280 = vsel %vm679, %v1270, -inf
        %1281 = vmax.xlane.f32.xlu0 %v1280
        %v1282 = vpop.xlane.xlu0 %1281
        %v1283 = vsel %vm679, %v1272, -inf
        %1284 = vmax.xlane.f32.xlu0 %v1283
        %v1285 = vpop.xlane.xlu0 %1284
        %v1286 = vsub.f32 %v1246, %v1276
        %v1287 = vsub.f32 %v1248, %v1279
        %v1288 = vsub.f32 %v1270, %v1282
        %v1289 = vsub.f32 %v1272, %v1285
        %v1290 = vmul.f32 %v1286, 1.442695
        %v1291 = vpow.pop %v1290
        %v1292 = vmul.f32 %v1287, 1.442695
        %v1293 = vpow.pop %v1292
        %v1294 = vmul.f32 %v1288, 1.442695
        %v1295 = vpow.pop %v1294
        %v1296 = vmul.f32 %v1289, 1.442695
        %v1297 = vpow.pop %v1296
        %v1298 = vsel %vm679, %v1291, 0.0
        %1299 = vadd.xlane.f32.xlu0 %v1298
        %v1300 = vpop.xlane.xlu0 %1299
        %v1301 = vsel %vm679, %v1293, 0.0
        %1302 = vadd.xlane.f32.xlu0 %v1301
        %v1303 = vpop.xlane.xlu0 %1302
        %v1304 = vsel %vm679, %v1295, 0.0
        %1305 = vadd.xlane.f32.xlu0 %v1304
        %v1306 = vpop.xlane.xlu0 %1305
        %v1307 = vsel %vm679, %v1297, 0.0
        %1308 = vadd.xlane.f32.xlu0 %v1307
        %v1309 = vpop.xlane.xlu0 %1308
        %v1310 = vrcp.pop %v1300
        %v1311 = vmul.f32 %v1300, %v1310
        %v1312 = vsub.f32 1.0, %v1311
        %v1313 = vmul.f32 %v1310, %v1312
        %v1314 = vadd.f32 %v1310, %v1313
        %vm1315 = vweird.f32 %v1300
        %vm1316 = vweird.f32 %v1310
        %vm1317 = vmor %vm1315, %vm1316
        %v1318 = vsel %vm1317, %v1310, %v1314
        %v1319 = vand.u32 2147483647, %v1300
        %vm1320 = vcmp.eq.f32.partialorder %v1319, 8.507059e+37
        %v1321 = vand.u32 %v1300, 2147483648
        %v1322 = vor.u32 1.1754944e-38, %v1321
        %v1323 = vsel %vm1320, %v1322, %v1318
        %v1324 = vmul.f32 %v1291, %v1323
        %v1325 = vrcp.pop %v1303
        %v1326 = vmul.f32 %v1303, %v1325
        %v1327 = vsub.f32 1.0, %v1326
        %v1328 = vmul.f32 %v1325, %v1327
        %v1329 = vadd.f32 %v1325, %v1328
        %vm1330 = vweird.f32 %v1303
        %vm1331 = vweird.f32 %v1325
        %vm1332 = vmor %vm1330, %vm1331
        %v1333 = vsel %vm1332, %v1325, %v1329
        %v1334 = vand.u32 2147483647, %v1303
        %vm1335 = vcmp.eq.f32.partialorder %v1334, 8.507059e+37
        %v1336 = vand.u32 %v1303, 2147483648
        %v1337 = vor.u32 1.1754944e-38, %v1336
        %v1338 = vsel %vm1335, %v1337, %v1333
        %v1339 = vmul.f32 %v1293, %v1338
        %v1340 = vrcp.pop %v1306
        %v1341 = vmul.f32 %v1306, %v1340
        %v1342 = vsub.f32 1.0, %v1341
        %v1343 = vmul.f32 %v1340, %v1342
        %v1344 = vadd.f32 %v1340, %v1343
        %vm1345 = vweird.f32 %v1306
        %vm1346 = vweird.f32 %v1340
        %vm1347 = vmor %vm1345, %vm1346
        %v1348 = vsel %vm1347, %v1340, %v1344
        %v1349 = vand.u32 2147483647, %v1306
        %vm1350 = vcmp.eq.f32.partialorder %v1349, 8.507059e+37
        %v1351 = vand.u32 %v1306, 2147483648
        %v1352 = vor.u32 1.1754944e-38, %v1351
        %v1353 = vsel %vm1350, %v1352, %v1348
        %v1354 = vmul.f32 %v1295, %v1353
        %v1355 = vrcp.pop %v1309
        %v1356 = vmul.f32 %v1309, %v1355
        %v1357 = vsub.f32 1.0, %v1356
        %v1358 = vmul.f32 %v1355, %v1357
        %v1359 = vadd.f32 %v1355, %v1358
        %vm1360 = vweird.f32 %v1309
        %vm1361 = vweird.f32 %v1355
        %vm1362 = vmor %vm1360, %vm1361
        %v1363 = vsel %vm1362, %v1355, %v1359
        %v1364 = vand.u32 2147483647, %v1309
        %vm1365 = vcmp.eq.f32.partialorder %v1364, 8.507059e+37
        %v1366 = vand.u32 %v1309, 2147483648
        %v1367 = vor.u32 1.1754944e-38, %v1366
        %v1368 = vsel %vm1365, %v1367, %v1363
        %v1369 = vmul.f32 %v1297, %v1368
        %v1370 = vpack.c.bf16 %v1324, %v1324
        %v1371 = vpack.c.bf16 %v1339, %v1339
        %v1372 = vpack.c.bf16 %v1354, %v1354
        %v1373 = vpack.c.bf16 %v1369, %v1369
        %v1376 = vunpack.c.l.b16 %v1370
        %v1377 = vunpack.c.l.b16 %v1371
        %v1378 = vpack.c.b16 %v1377, %v1376
        %1379 = vrot.lane.b32.xlu0 %v628, 40
        %v1380 = vpop.permute.xlu0 %1379
        %v1383 = vsel %vm679, %v1378, 0
        %1385 = vmatpush.bf16.msra.mxu0 0
        %1386 = vmatpush.bf16.msra.mxu0 0
        %1387 = vmatpush.bf16.msra.mxu0 0
        %1388 = vmatpush.bf16.msra.mxu0 0
        %1389 = vmatpush.bf16.msra.mxu0 0
        %1390 = vmatpush.bf16.msra.mxu0 0
        %1391 = vmatpush.bf16.msra.mxu0 0
        %1392 = vmatpush.bf16.msra.mxu0 %v1380
        %1393 = vmatmul.bf16.gmra.mxu0 %v1383
        %v1394 = vpop.f32.mrf.mxu0
        %v1395 = vadd.f32 0.0, %v1394
        %v1396 = vpop.f32.mrf.mxu0
        %v1397 = vadd.f32 0.0, %v1396
        %1398 = vdwg.mxu0
        %v1401 = vunpack.c.l.b16 %v1372
        %v1402 = vunpack.c.l.b16 %v1373
        %v1403 = vpack.c.b16 %v1402, %v1401
        %1404 = vrot.lane.b32.xlu0 %v656, 40
        %v1405 = vpop.permute.xlu0 %1404
        %v1408 = vsel %vm679, %v1403, 0
        %1410 = vmatpush.bf16.msra.mxu0 0
        %1411 = vmatpush.bf16.msra.mxu0 0
        %1412 = vmatpush.bf16.msra.mxu0 0
        %1413 = vmatpush.bf16.msra.mxu0 0
        %1414 = vmatpush.bf16.msra.mxu0 0
        %1415 = vmatpush.bf16.msra.mxu0 0
        %1416 = vmatpush.bf16.msra.mxu0 0
        %1417 = vmatpush.bf16.msra.mxu0 %v1405
        %1418 = vmatmul.bf16.gmra.mxu0 %v1408
        %v1419 = vpop.f32.mrf.mxu0
        %v1420 = vadd.f32 0.0, %v1419
        %v1421 = vpop.f32.mrf.mxu0
        %v1422 = vadd.f32 0.0, %v1421
        %1423 = vdwg.mxu0
        %1428 = vrot.lane.b32.xlu0 %v999, 8
        %v1429 = vpop.permute.xlu0 %1428
        %1430 = vrot.lane.b32.xlu0 %v1001, 8
        %v1431 = vpop.permute.xlu0 %1430
        %1432 = vrot.lane.b32.xlu0 %v1024, 8
        %v1433 = vpop.permute.xlu0 %1432
        %1434 = vrot.lane.b32.xlu0 %v1026, 8
        %v1435 = vpop.permute.xlu0 %1434
        %1444 = vrot.lane.b32.xlu0 %v1197, 16
        %v1445 = vpop.permute.xlu0 %1444
        %1446 = vrot.lane.b32.xlu0 %v1199, 16
        %v1447 = vpop.permute.xlu0 %1446
        %1448 = vrot.lane.b32.xlu0 %v1222, 16
        %v1449 = vpop.permute.xlu0 %1448
        %1450 = vrot.lane.b32.xlu0 %v1224, 16
        %v1451 = vpop.permute.xlu0 %1450
        %1460 = vrot.lane.b32.xlu0 %v1395, 24
        %v1461 = vpop.permute.xlu0 %1460
        %1462 = vrot.lane.b32.xlu0 %v1397, 24
        %v1463 = vpop.permute.xlu0 %1462
        %1464 = vrot.lane.b32.xlu0 %v1420, 24
        %v1465 = vpop.permute.xlu0 %1464
        %1466 = vrot.lane.b32.xlu0 %v1422, 24
        %v1467 = vpop.permute.xlu0 %1466
        %v1472 = vsel %vm631, %v801, %v1429
        %v1473 = vsel %vm631, %v803, %v1431
        %v1474 = vsel %vm631, %v826, %v1433
        %v1475 = vsel %vm631, %v828, %v1435
        %v1476 = vsel %vm679, %v1472, %v1445
        %v1477 = vsel %vm679, %v1473, %v1447
        %v1478 = vsel %vm679, %v1474, %v1449
        %v1479 = vsel %vm679, %v1475, %v1451
        %vm1480 = vcmask 195584
        %v1481 = vsel %vm1480, %v1476, %v1461
        %v1482 = vsel %vm1480, %v1477, %v1463
        %v1483 = vsel %vm1480, %v1478, %v1465
        %v1484 = vsel %vm1480, %v1479, %v1467
        %v1485 = vpack.c.bf16 %v1482, %v1481
        %v1486 = vpack.c.bf16 %v1484, %v1483
        %v1488 = vperm.slane %v619, 0
        %v1494 = vunpack.c.l.b16 %v615
        %v1495 = vunpack.c.l.b16 %v616
        %v1496 = vunpack.c.l.b16 %v617
        %v1497 = vunpack.c.l.b16 %v618
        %v1498 = vpack.c.b16 %v1495, %v1494
        %v1499 = vpack.c.b16 %v1497, %v1496
        %v1503 = vsel %vm463, %v1485, 0
        %v1506 = vsel %vm463, %v1486, 0
        %1508 = vmatpush.bf16.msra.mxu0 0
        %1509 = vmatpush.bf16.msra.mxu0 0
        %1510 = vmatpush.bf16.msra.mxu0 0
        %1511 = vmatpush.bf16.msra.mxu0 0
        %1512 = vmatpush.bf16.msra.mxu0 0
        %1513 = vmatpush.bf16.msra.mxu0 0
        %1514 = vmatpush.bf16.msra.mxu0 %v1499
        %1515 = vmatpush.bf16.msra.mxu0 %v1498
        %1516 = vmatmul.bf16.gmra.mxu0 %v1503
        %v1517 = vpop.f32.mrf.mxu0
        %v1518 = vadd.f32 %v1488, %v1517
        %v1519 = vpop.f32.mrf.mxu0
        %v1520 = vadd.f32 %v1488, %v1519
        %1521 = vmatmul.bf16.gmra.mxu0 %v1506
        %v1522 = vpop.f32.mrf.mxu0
        %v1523 = vadd.f32 %v1488, %v1522
        %v1524 = vpop.f32.mrf.mxu0
        %v1525 = vadd.f32 %v1488, %v1524
        %1526 = vdwg.mxu0
        %v1527 = vadd.f32 %v452, %v1518
        %v1528 = vadd.f32 %v453, %v1520
        %v1529 = vadd.f32 %v454, %v1523
        %v1530 = vadd.f32 %v455, %v1525
        %v1531 = vsel %vm463, %v1527, 0.0
        %1532 = vadd.xlane.f32.xlu0 %v1531
        %v1533 = vpop.xlane.xlu0 %1532
        %v1534 = vsel %vm463, %v1529, 0.0
        %1535 = vadd.xlane.f32.xlu0 %v1534
        %v1536 = vpop.xlane.xlu0 %1535
        %v1537 = vmul.f32 %v1533, %v482
        %v1538 = vmul.f32 %v1536, %v482
        %v1539 = vsub.f32 %v1527, %v1537
        %v1540 = vsub.f32 %v1529, %v1538
        %v1541 = vmul.f32 %v1539, %v1539
        %v1542 = vmul.f32 %v1540, %v1540
        %v1543 = vsel %vm463, %v1541, 0.0
        %1544 = vadd.xlane.f32.xlu0 %v1543
        %v1545 = vpop.xlane.xlu0 %1544
        %v1546 = vsel %vm463, %v1542, 0.0
        %1547 = vadd.xlane.f32.xlu0 %v1546
        %v1548 = vpop.xlane.xlu0 %1547
        %v1549 = vmul.f32 %v1545, %v482
        %v1550 = vmul.f32 %v1548, %v482
        %v1551 = vadd.f32 %v1549, 1e-06
        %v1552 = vadd.f32 %v1550, 1e-06
        %v1553 = vrsqrt.pop %v1551
        %v1554 = vmul.f32 %v1553, %v1551
        %v1555 = vmul.f32 %v1554, %v1553
        %v1556 = vmul.f32 0.5, %v1555
        %v1557 = vsub.f32 1.5, %v1556
        %v1558 = vmul.f32 %v1553, %v1557
        %vm1559 = vweird.f32 %v1551
        %vm1560 = vweird.f32 %v1553
        %vm1561 = vmor %vm1559, %vm1560
        %v1562 = vsel %vm1561, %v1553, %v1558
        %v1563 = vrsqrt.pop %v1552
        %v1564 = vmul.f32 %v1563, %v1552
        %v1565 = vmul.f32 %v1564, %v1563
        %v1566 = vmul.f32 0.5, %v1565
        %v1567 = vsub.f32 1.5, %v1566
        %v1568 = vmul.f32 %v1563, %v1567
        %vm1569 = vweird.f32 %v1552
        %vm1570 = vweird.f32 %v1563
        %vm1571 = vmor %vm1569, %vm1570
        %v1572 = vsel %vm1571, %v1563, %v1568
        %v1573 = vmul.f32 %v1539, %v1562
        %v1574 = vmul.f32 %v1540, %v1572
        %v1575 = vmul.f32 %v1573, %v560
        %v1576 = vmul.f32 %v1574, %v560
        %v1577 = vadd.f32 %v1575, %v567
        %v1578 = vadd.f32 %v1576, %v567
        %v1579 = vsel %vm463, %v1528, 0.0
        %1580 = vadd.xlane.f32.xlu0 %v1579
        %v1581 = vpop.xlane.xlu0 %1580
        %v1582 = vsel %vm463, %v1530, 0.0
        %1583 = vadd.xlane.f32.xlu0 %v1582
        %v1584 = vpop.xlane.xlu0 %1583
        %v1585 = vmul.f32 %v1581, %v482
        %v1586 = vmul.f32 %v1584, %v482
        %v1587 = vsub.f32 %v1528, %v1585
        %v1588 = vsub.f32 %v1530, %v1586
        %v1589 = vmul.f32 %v1587, %v1587
        %v1590 = vmul.f32 %v1588, %v1588
        %v1591 = vsel %vm463, %v1589, 0.0
        %1592 = vadd.xlane.f32.xlu0 %v1591
        %v1593 = vpop.xlane.xlu0 %1592
        %v1594 = vsel %vm463, %v1590, 0.0
        %1595 = vadd.xlane.f32.xlu0 %v1594
        %v1596 = vpop.xlane.xlu0 %1595
        %v1597 = vmul.f32 %v1593, %v482
        %v1598 = vmul.f32 %v1596, %v482
        %v1599 = vadd.f32 %v1597, 1e-06
        %v1600 = vadd.f32 %v1598, 1e-06
        %v1601 = vrsqrt.pop %v1599
        %v1602 = vmul.f32 %v1601, %v1599
        %v1603 = vmul.f32 %v1602, %v1601
        %v1604 = vmul.f32 0.5, %v1603
        %v1605 = vsub.f32 1.5, %v1604
        %v1606 = vmul.f32 %v1601, %v1605
        %vm1607 = vweird.f32 %v1599
        %vm1608 = vweird.f32 %v1601
        %vm1609 = vmor %vm1607, %vm1608
        %v1610 = vsel %vm1609, %v1601, %v1606
        %v1611 = vrsqrt.pop %v1600
        %v1612 = vmul.f32 %v1611, %v1600
        %v1613 = vmul.f32 %v1612, %v1611
        %v1614 = vmul.f32 0.5, %v1613
        %v1615 = vsub.f32 1.5, %v1614
        %v1616 = vmul.f32 %v1611, %v1615
        %vm1617 = vweird.f32 %v1600
        %vm1618 = vweird.f32 %v1611
        %vm1619 = vmor %vm1617, %vm1618
        %v1620 = vsel %vm1619, %v1611, %v1616
        %v1621 = vmul.f32 %v1587, %v1610
        %v1622 = vmul.f32 %v1588, %v1620
        %v1623 = vmul.f32 %v1621, %v560
        %v1624 = vmul.f32 %v1622, %v560
        %v1625 = vadd.f32 %v1623, %v567
        %v1626 = vadd.f32 %v1624, %v567
        %s1627 = scalar_lea.vmem [#allocation6], 16
        %v1628 = vld [vmem:[%s1627] sm:$0xf]
        %v1629 = vld [vmem:[%s1627 + $0x4] sm:$0xf]
        %v1630 = vld [vmem:[%s1627 + $0x8] sm:$0xf]
        %v1631 = vld [vmem:[%s1627 + $0xc] sm:$0xf]
        %s1632 = scalar_lea.vmem [#allocation8], 1
        %v1633 = vld [vmem:[%s1632] sm:$0x1]
        %s1634 = scalar_lea.vmem [#allocation9], 16
        %v1635 = vld [vmem:[%s1634] sm:$0xf]
        %v1636 = vld [vmem:[%s1634 + $0x4] sm:$0xf]
        %v1637 = vld [vmem:[%s1634 + $0x8] sm:$0xf]
        %v1638 = vld [vmem:[%s1634 + $0xc] sm:$0xf]
        %s1639 = scalar_lea.vmem [#allocation11], 1
        %v1640 = vld [vmem:[%s1639] sm:$0x1]
        %v1641 = vpack.c.bf16 %v1626, %v1625
        %v1643 = vperm.slane %v1633, 0
        %v1649 = vunpack.c.l.b16 %v1628
        %v1650 = vunpack.c.l.b16 %v1629
        %v1651 = vunpack.c.l.b16 %v1630
        %v1652 = vunpack.c.l.b16 %v1631
        %v1653 = vpack.c.b16 %v1650, %v1649
        %v1654 = vpack.c.b16 %v1652, %v1651
        %v1658 = vsel %vm463, %v1641, 0
        %1660 = vmatpush.bf16.msra.mxu0 0
        %1661 = vmatpush.bf16.msra.mxu0 0
        %1662 = vmatpush.bf16.msra.mxu0 0
        %1663 = vmatpush.bf16.msra.mxu0 0
        %1664 = vmatpush.bf16.msra.mxu0 0
        %1665 = vmatpush.bf16.msra.mxu0 0
        %1666 = vmatpush.bf16.msra.mxu0 %v1654
        %1667 = vmatpush.bf16.msra.mxu0 %v1653
        %1668 = vmatmul.bf16.gmra.mxu0 %v1658
        %v1669 = vpop.f32.mrf.mxu0
        %v1670 = vadd.f32 %v1643, %v1669
        %v1671 = vpop.f32.mrf.mxu0
        %v1672 = vadd.f32 %v1643, %v1671
        %1673 = vdwg.mxu0
        %v1674 = vpack.c.bf16 %v1578, %v1577
        %1675 = vrot.lane.b32.xlu0 %v1653, 96
        %v1676 = vpop.permute.xlu0 %1675
        %1677 = vrot.lane.b32.xlu0 %v1654, 96
        %v1678 = vpop.permute.xlu0 %1677
        %1681 = vrot.lane.b32.xlu0 %v1643, 96
        %v1682 = vpop.permute.xlu0 %1681
        %v1685 = vsel %vm463, %v1674, 0
        %1687 = vmatpush.bf16.msra.mxu0 0
        %1688 = vmatpush.bf16.msra.mxu0 0
        %1689 = vmatpush.bf16.msra.mxu0 0
        %1690 = vmatpush.bf16.msra.mxu0 0
        %1691 = vmatpush.bf16.msra.mxu0 0
        %1692 = vmatpush.bf16.msra.mxu0 0
        %1693 = vmatpush.bf16.msra.mxu0 %v1678
        %1694 = vmatpush.bf16.msra.mxu0 %v1676
        %1695 = vmatmul.bf16.gmra.mxu0 %v1685
        %v1696 = vpop.f32.mrf.mxu0
        %v1697 = vadd.f32 %v1682, %v1696
        %v1698 = vpop.f32.mrf.mxu0
        %v1699 = vadd.f32 %v1682, %v1698
        %1700 = vdwg.mxu0
        %v1701 = vpack.c.bf16 %v1670, %v1670
        %v1702 = vpack.c.bf16 %v1672, %v1672
        %v1703 = vpack.c.bf16 %v1697, %v1697
        %v1704 = vpack.c.bf16 %v1699, %v1699
        %v1706 = vsel %vm631, %v1701, 0
        %v1709 = vsel %vm631, %v1703, 0
        %1711 = vmatpush.bf16.xpose.msra.mxu0 0
        %1712 = vmatpush.bf16.xpose.msra.mxu0 0
        %1713 = vmatpush.bf16.xpose.msra.mxu0 0
        %1714 = vmatpush.bf16.xpose.msra.mxu0 0
        %1715 = vmatpush.bf16.xpose.msra.mxu0 0
        %1716 = vmatpush.bf16.xpose.msra.mxu0 0
        %1717 = vmatpush.bf16.xpose.msra.mxu0 0
        %1718 = vmatpush.bf16.xpose.msra.mxu0 %v1709
        %1719 = vmatmul.bf16.gmra.mxu0 %v1706
        %v1720 = vpop.f32.mrf.mxu0
        %v1721 = vadd.f32 0.0, %v1720
        %v1722 = vpop.f32.mrf.mxu0
        %1723 = vdwg.mxu0
        %v1725 = vsel %vm631, %v1702, 0
        %v1728 = vsel %vm631, %v1704, 0
        %1730 = vmatpush.bf16.xpose.msra.mxu0 0
        %1731 = vmatpush.bf16.xpose.msra.mxu0 0
        %1732 = vmatpush.bf16.xpose.msra.mxu0 0
        %1733 = vmatpush.bf16.xpose.msra.mxu0 0
        %1734 = vmatpush.bf16.xpose.msra.mxu0 0
        %1735 = vmatpush.bf16.xpose.msra.mxu0 0
        %1736 = vmatpush.bf16.xpose.msra.mxu0 0
        %1737 = vmatpush.bf16.xpose.msra.mxu0 %v1728
        %1738 = vmatmul.bf16.gmra.mxu0 %v1725
        %v1739 = vpop.f32.mrf.mxu0
        %v1740 = vadd.f32 0.0, %v1739
        %v1741 = vpop.f32.mrf.mxu0
        %1742 = vdwg.mxu0
        %v1743 = vsel %vm631, %v1721, -inf
        %1744 = vmax.xlane.f32.xlu0 %v1743
        %v1745 = vpop.xlane.xlu0 %1744
        %v1746 = vsel %vm631, %v1740, -inf
        %1747 = vmax.xlane.f32.xlu0 %v1746
        %v1748 = vpop.xlane.xlu0 %1747
        %v1749 = vsub.f32 %v1721, %v1745
        %v1750 = vsub.f32 %v1740, %v1748
        %v1751 = vmul.f32 %v1749, 1.442695
        %v1752 = vpow.pop %v1751
        %v1753 = vmul.f32 %v1750, 1.442695
        %v1754 = vpow.pop %v1753
        %v1755 = vsel %vm631, %v1752, 0.0
        %1756 = vadd.xlane.f32.xlu0 %v1755
        %v1757 = vpop.xlane.xlu0 %1756
        %v1758 = vsel %vm631, %v1754, 0.0
        %1759 = vadd.xlane.f32.xlu0 %v1758
        %v1760 = vpop.xlane.xlu0 %1759
        %v1761 = vrcp.pop %v1757
        %v1762 = vmul.f32 %v1757, %v1761
        %v1763 = vsub.f32 1.0, %v1762
        %v1764 = vmul.f32 %v1761, %v1763
        %v1765 = vadd.f32 %v1761, %v1764
        %vm1766 = vweird.f32 %v1757
        %vm1767 = vweird.f32 %v1761
        %vm1768 = vmor %vm1766, %vm1767
        %v1769 = vsel %vm1768, %v1761, %v1765
        %v1770 = vand.u32 2147483647, %v1757
        %vm1771 = vcmp.eq.f32.partialorder %v1770, 8.507059e+37
        %v1772 = vand.u32 %v1757, 2147483648
        %v1773 = vor.u32 1.1754944e-38, %v1772
        %v1774 = vsel %vm1771, %v1773, %v1769
        %v1775 = vmul.f32 %v1752, %v1774
        %v1776 = vrcp.pop %v1760
        %v1777 = vmul.f32 %v1760, %v1776
        %v1778 = vsub.f32 1.0, %v1777
        %v1779 = vmul.f32 %v1776, %v1778
        %v1780 = vadd.f32 %v1776, %v1779
        %vm1781 = vweird.f32 %v1760
        %vm1782 = vweird.f32 %v1776
        %vm1783 = vmor %vm1781, %vm1782
        %v1784 = vsel %vm1783, %v1776, %v1780
        %v1785 = vand.u32 2147483647, %v1760
        %vm1786 = vcmp.eq.f32.partialorder %v1785, 8.507059e+37
        %v1787 = vand.u32 %v1760, 2147483648
        %v1788 = vor.u32 1.1754944e-38, %v1787
        %v1789 = vsel %vm1786, %v1788, %v1784
        %v1790 = vmul.f32 %v1754, %v1789
        %v1791 = vpack.c.bf16 %v1775, %v1775
        %v1792 = vpack.c.bf16 %v1790, %v1790
        %v1794 = vunpack.c.l.b16 %v1703
        %v1795 = vpack.c.b16 %v1794, %v1794
        %1796 = vrot.lane.b32.xlu0 %v1795, 96
        %v1797 = vpop.permute.xlu0 %1796
        %v1799 = vsel %vm631, %v1791, 0
        %vm1801 = vcmask 1043456
        %v1803 = vsel %vm1801, %v1797, 0
        %1805 = vmatpush.bf16.msra.mxu0 0
        %1806 = vmatpush.bf16.msra.mxu0 0
        %1807 = vmatpush.bf16.msra.mxu0 0
        %1808 = vmatpush.bf16.msra.mxu0 0
        %1809 = vmatpush.bf16.msra.mxu0 0
        %1810 = vmatpush.bf16.msra.mxu0 0
        %1811 = vmatpush.bf16.msra.mxu0 0
        %1812 = vmatpush.bf16.msra.mxu0 %v1803
        %1813 = vmatmul.bf16.gmra.mxu0 %v1799
        %v1814 = vpop.f32.mrf.mxu0
        %v1815 = vadd.f32 0.0, %v1814
        %v1816 = vpop.f32.mrf.mxu0
        %1817 = vdwg.mxu0
        %v1819 = vunpack.c.l.b16 %v1704
        %v1820 = vpack.c.b16 %v1819, %v1819
        %1821 = vrot.lane.b32.xlu0 %v1820, 96
        %v1822 = vpop.permute.xlu0 %1821
        %v1824 = vsel %vm631, %v1792, 0
        %v1827 = vsel %vm1801, %v1822, 0
        %1829 = vmatpush.bf16.msra.mxu0 0
        %1830 = vmatpush.bf16.msra.mxu0 0
        %1831 = vmatpush.bf16.msra.mxu0 0
        %1832 = vmatpush.bf16.msra.mxu0 0
        %1833 = vmatpush.bf16.msra.mxu0 0
        %1834 = vmatpush.bf16.msra.mxu0 0
        %1835 = vmatpush.bf16.msra.mxu0 0
        %1836 = vmatpush.bf16.msra.mxu0 %v1827
        %1837 = vmatmul.bf16.gmra.mxu0 %v1824
        %v1838 = vpop.f32.mrf.mxu0
        %v1839 = vadd.f32 0.0, %v1838
        %v1840 = vpop.f32.mrf.mxu0
        %1841 = vdwg.mxu0
        %v1843 = vunpack.c.l.b16 %v1701
        %v1844 = vpack.c.b16 %v1843, %v1843
        %1845 = vrot.lane.b32.xlu0 %v1844, 120
        %v1846 = vpop.permute.xlu0 %1845
        %1847 = vrot.lane.b32.xlu0 %v1795, 120
        %v1848 = vpop.permute.xlu0 %1847
        %v1850 = vsel %vm631, %v1846, 0
        %v1853 = vsel %vm631, %v1848, 0
        %1855 = vmatpush.bf16.xpose.msra.mxu0 0
        %1856 = vmatpush.bf16.xpose.msra.mxu0 0
        %1857 = vmatpush.bf16.xpose.msra.mxu0 0
        %1858 = vmatpush.bf16.xpose.msra.mxu0 0
        %1859 = vmatpush.bf16.xpose.msra.mxu0 0
        %1860 = vmatpush.bf16.xpose.msra.mxu0 0
        %1861 = vmatpush.bf16.xpose.msra.mxu0 0
        %1862 = vmatpush.bf16.xpose.msra.mxu0 %v1853
        %1863 = vmatmul.bf16.gmra.mxu0 %v1850
        %v1864 = vpop.f32.mrf.mxu0
        %v1865 = vadd.f32 0.0, %v1864
        %v1866 = vpop.f32.mrf.mxu0
        %1867 = vdwg.mxu0
        %v1869 = vunpack.c.l.b16 %v1702
        %v1870 = vpack.c.b16 %v1869, %v1869
        %1871 = vrot.lane.b32.xlu0 %v1870, 120
        %v1872 = vpop.permute.xlu0 %1871
        %1873 = vrot.lane.b32.xlu0 %v1820, 120
        %v1874 = vpop.permute.xlu0 %1873
        %v1876 = vsel %vm631, %v1872, 0
        %v1879 = vsel %vm631, %v1874, 0
        %1881 = vmatpush.bf16.xpose.msra.mxu0 0
        %1882 = vmatpush.bf16.xpose.msra.mxu0 0
        %1883 = vmatpush.bf16.xpose.msra.mxu0 0
        %1884 = vmatpush.bf16.xpose.msra.mxu0 0
        %1885 = vmatpush.bf16.xpose.msra.mxu0 0
        %1886 = vmatpush.bf16.xpose.msra.mxu0 0
        %1887 = vmatpush.bf16.xpose.msra.mxu0 0
        %1888 = vmatpush.bf16.xpose.msra.mxu0 %v1879
        %1889 = vmatmul.bf16.gmra.mxu0 %v1876
        %v1890 = vpop.f32.mrf.mxu0
        %v1891 = vadd.f32 0.0, %v1890
        %v1892 = vpop.f32.mrf.mxu0
        %1893 = vdwg.mxu0
        %v1894 = vsel %vm631, %v1865, -inf
        %1895 = vmax.xlane.f32.xlu0 %v1894
        %v1896 = vpop.xlane.xlu0 %1895
        %v1897 = vsel %vm631, %v1891, -inf
        %1898 = vmax.xlane.f32.xlu0 %v1897
        %v1899 = vpop.xlane.xlu0 %1898
        %v1900 = vsub.f32 %v1865, %v1896
        %v1901 = vsub.f32 %v1891, %v1899
        %v1902 = vmul.f32 %v1900, 1.442695
        %v1903 = vpow.pop %v1902
        %v1904 = vmul.f32 %v1901, 1.442695
        %v1905 = vpow.pop %v1904
        %v1906 = vsel %vm631, %v1903, 0.0
        %1907 = vadd.xlane.f32.xlu0 %v1906
        %v1908 = vpop.xlane.xlu0 %1907
        %v1909 = vsel %vm631, %v1905, 0.0
        %1910 = vadd.xlane.f32.xlu0 %v1909
        %v1911 = vpop.xlane.xlu0 %1910
        %v1912 = vrcp.pop %v1908
        %v1913 = vmul.f32 %v1908, %v1912
        %v1914 = vsub.f32 1.0, %v1913
        %v1915 = vmul.f32 %v1912, %v1914
        %v1916 = vadd.f32 %v1912, %v1915
        %vm1917 = vweird.f32 %v1908
        %vm1918 = vweird.f32 %v1912
        %vm1919 = vmor %vm1917, %vm1918
        %v1920 = vsel %vm1919, %v1912, %v1916
        %v1921 = vand.u32 2147483647, %v1908
        %vm1922 = vcmp.eq.f32.partialorder %v1921, 8.507059e+37
        %v1923 = vand.u32 %v1908, 2147483648
        %v1924 = vor.u32 1.1754944e-38, %v1923
        %v1925 = vsel %vm1922, %v1924, %v1920
        %v1926 = vmul.f32 %v1903, %v1925
        %v1927 = vrcp.pop %v1911
        %v1928 = vmul.f32 %v1911, %v1927
        %v1929 = vsub.f32 1.0, %v1928
        %v1930 = vmul.f32 %v1927, %v1929
        %v1931 = vadd.f32 %v1927, %v1930
        %vm1932 = vweird.f32 %v1911
        %vm1933 = vweird.f32 %v1927
        %vm1934 = vmor %vm1932, %vm1933
        %v1935 = vsel %vm1934, %v1927, %v1931
        %v1936 = vand.u32 2147483647, %v1911
        %vm1937 = vcmp.eq.f32.partialorder %v1936, 8.507059e+37
        %v1938 = vand.u32 %v1911, 2147483648
        %v1939 = vor.u32 1.1754944e-38, %v1938
        %v1940 = vsel %vm1937, %v1939, %v1935
        %v1941 = vmul.f32 %v1905, %v1940
        %v1942 = vpack.c.bf16 %v1926, %v1926
        %v1943 = vpack.c.bf16 %v1941, %v1941
        %1944 = vrot.lane.b32.xlu0 %v1795, 88
        %v1945 = vpop.permute.xlu0 %1944
        %v1947 = vsel %vm631, %v1942, 0
        %v1950 = vsel %vm1801, %v1945, 0
        %1952 = vmatpush.bf16.msra.mxu0 0
        %1953 = vmatpush.bf16.msra.mxu0 0
        %1954 = vmatpush.bf16.msra.mxu0 0
        %1955 = vmatpush.bf16.msra.mxu0 0
        %1956 = vmatpush.bf16.msra.mxu0 0
        %1957 = vmatpush.bf16.msra.mxu0 0
        %1958 = vmatpush.bf16.msra.mxu0 0
        %1959 = vmatpush.bf16.msra.mxu0 %v1950
        %1960 = vmatmul.bf16.gmra.mxu0 %v1947
        %v1961 = vpop.f32.mrf.mxu0
        %v1962 = vadd.f32 0.0, %v1961
        %v1963 = vpop.f32.mrf.mxu0
        %1964 = vdwg.mxu0
        %1965 = vrot.lane.b32.xlu0 %v1820, 88
        %v1966 = vpop.permute.xlu0 %1965
        %v1968 = vsel %vm631, %v1943, 0
        %v1971 = vsel %vm1801, %v1966, 0
        %1973 = vmatpush.bf16.msra.mxu0 0
        %1974 = vmatpush.bf16.msra.mxu0 0
        %1975 = vmatpush.bf16.msra.mxu0 0
        %1976 = vmatpush.bf16.msra.mxu0 0
        %1977 = vmatpush.bf16.msra.mxu0 0
        %1978 = vmatpush.bf16.msra.mxu0 0
        %1979 = vmatpush.bf16.msra.mxu0 0
        %1980 = vmatpush.bf16.msra.mxu0 %v1971
        %1981 = vmatmul.bf16.gmra.mxu0 %v1968
        %v1982 = vpop.f32.mrf.mxu0
        %v1983 = vadd.f32 0.0, %v1982
        %v1984 = vpop.f32.mrf.mxu0
        %1985 = vdwg.mxu0
        %1986 = vrot.lane.b32.xlu0 %v1844, 112
        %v1987 = vpop.permute.xlu0 %1986
        %1988 = vrot.lane.b32.xlu0 %v1795, 112
        %v1989 = vpop.permute.xlu0 %1988
        %v1991 = vsel %vm631, %v1987, 0
        %v1994 = vsel %vm631, %v1989, 0
        %1996 = vmatpush.bf16.xpose.msra.mxu0 0
        %1997 = vmatpush.bf16.xpose.msra.mxu0 0
        %1998 = vmatpush.bf16.xpose.msra.mxu0 0
        %1999 = vmatpush.bf16.xpose.msra.mxu0 0
        %2000 = vmatpush.bf16.xpose.msra.mxu0 0
        %2001 = vmatpush.bf16.xpose.msra.mxu0 0
        %2002 = vmatpush.bf16.xpose.msra.mxu0 0
        %2003 = vmatpush.bf16.xpose.msra.mxu0 %v1994
        %2004 = vmatmul.bf16.gmra.mxu0 %v1991
        %v2005 = vpop.f32.mrf.mxu0
        %v2006 = vadd.f32 0.0, %v2005
        %v2007 = vpop.f32.mrf.mxu0
        %2008 = vdwg.mxu0
        %2009 = vrot.lane.b32.xlu0 %v1870, 112
        %v2010 = vpop.permute.xlu0 %2009
        %2011 = vrot.lane.b32.xlu0 %v1820, 112
        %v2012 = vpop.permute.xlu0 %2011
        %v2014 = vsel %vm631, %v2010, 0
        %v2017 = vsel %vm631, %v2012, 0
        %2019 = vmatpush.bf16.xpose.msra.mxu0 0
        %2020 = vmatpush.bf16.xpose.msra.mxu0 0
        %2021 = vmatpush.bf16.xpose.msra.mxu0 0
        %2022 = vmatpush.bf16.xpose.msra.mxu0 0
        %2023 = vmatpush.bf16.xpose.msra.mxu0 0
        %2024 = vmatpush.bf16.xpose.msra.mxu0 0
        %2025 = vmatpush.bf16.xpose.msra.mxu0 0
        %2026 = vmatpush.bf16.xpose.msra.mxu0 %v2017
        %2027 = vmatmul.bf16.gmra.mxu0 %v2014
        %v2028 = vpop.f32.mrf.mxu0
        %v2029 = vadd.f32 0.0, %v2028
        %v2030 = vpop.f32.mrf.mxu0
        %2031 = vdwg.mxu0
        %v2032 = vsel %vm631, %v2006, -inf
        %2033 = vmax.xlane.f32.xlu0 %v2032
        %v2034 = vpop.xlane.xlu0 %2033
        %v2035 = vsel %vm631, %v2029, -inf
        %2036 = vmax.xlane.f32.xlu0 %v2035
        %v2037 = vpop.xlane.xlu0 %2036
        %v2038 = vsub.f32 %v2006, %v2034
        %v2039 = vsub.f32 %v2029, %v2037
        %v2040 = vmul.f32 %v2038, 1.442695
        %v2041 = vpow.pop %v2040
        %v2042 = vmul.f32 %v2039, 1.442695
        %v2043 = vpow.pop %v2042
        %v2044 = vsel %vm631, %v2041, 0.0
        %2045 = vadd.xlane.f32.xlu0 %v2044
        %v2046 = vpop.xlane.xlu0 %2045
        %v2047 = vsel %vm631, %v2043, 0.0
        %2048 = vadd.xlane.f32.xlu0 %v2047
        %v2049 = vpop.xlane.xlu0 %2048
        %v2050 = vrcp.pop %v2046
        %v2051 = vmul.f32 %v2046, %v2050
        %v2052 = vsub.f32 1.0, %v2051
        %v2053 = vmul.f32 %v2050, %v2052
        %v2054 = vadd.f32 %v2050, %v2053
        %vm2055 = vweird.f32 %v2046
        %vm2056 = vweird.f32 %v2050
        %vm2057 = vmor %vm2055, %vm2056
        %v2058 = vsel %vm2057, %v2050, %v2054
        %v2059 = vand.u32 2147483647, %v2046
        %vm2060 = vcmp.eq.f32.partialorder %v2059, 8.507059e+37
        %v2061 = vand.u32 %v2046, 2147483648
        %v2062 = vor.u32 1.1754944e-38, %v2061
        %v2063 = vsel %vm2060, %v2062, %v2058
        %v2064 = vmul.f32 %v2041, %v2063
        %v2065 = vrcp.pop %v2049
        %v2066 = vmul.f32 %v2049, %v2065
        %v2067 = vsub.f32 1.0, %v2066
        %v2068 = vmul.f32 %v2065, %v2067
        %v2069 = vadd.f32 %v2065, %v2068
        %vm2070 = vweird.f32 %v2049
        %vm2071 = vweird.f32 %v2065
        %vm2072 = vmor %vm2070, %vm2071
        %v2073 = vsel %vm2072, %v2065, %v2069
        %v2074 = vand.u32 2147483647, %v2049
        %vm2075 = vcmp.eq.f32.partialorder %v2074, 8.507059e+37
        %v2076 = vand.u32 %v2049, 2147483648
        %v2077 = vor.u32 1.1754944e-38, %v2076
        %v2078 = vsel %vm2075, %v2077, %v2073
        %v2079 = vmul.f32 %v2043, %v2078
        %v2080 = vpack.c.bf16 %v2064, %v2064
        %v2081 = vpack.c.bf16 %v2079, %v2079
        %2082 = vrot.lane.b32.xlu0 %v1795, 80
        %v2083 = vpop.permute.xlu0 %2082
        %v2085 = vsel %vm631, %v2080, 0
        %v2088 = vsel %vm1801, %v2083, 0
        %2090 = vmatpush.bf16.msra.mxu0 0
        %2091 = vmatpush.bf16.msra.mxu0 0
        %2092 = vmatpush.bf16.msra.mxu0 0
        %2093 = vmatpush.bf16.msra.mxu0 0
        %2094 = vmatpush.bf16.msra.mxu0 0
        %2095 = vmatpush.bf16.msra.mxu0 0
        %2096 = vmatpush.bf16.msra.mxu0 0
        %2097 = vmatpush.bf16.msra.mxu0 %v2088
        %2098 = vmatmul.bf16.gmra.mxu0 %v2085
        %v2099 = vpop.f32.mrf.mxu0
        %v2100 = vadd.f32 0.0, %v2099
        %v2101 = vpop.f32.mrf.mxu0
        %2102 = vdwg.mxu0
        %2103 = vrot.lane.b32.xlu0 %v1820, 80
        %v2104 = vpop.permute.xlu0 %2103
        %v2106 = vsel %vm631, %v2081, 0
        %v2109 = vsel %vm1801, %v2104, 0
        %2111 = vmatpush.bf16.msra.mxu0 0
        %2112 = vmatpush.bf16.msra.mxu0 0
        %2113 = vmatpush.bf16.msra.mxu0 0
        %2114 = vmatpush.bf16.msra.mxu0 0
        %2115 = vmatpush.bf16.msra.mxu0 0
        %2116 = vmatpush.bf16.msra.mxu0 0
        %2117 = vmatpush.bf16.msra.mxu0 0
        %2118 = vmatpush.bf16.msra.mxu0 %v2109
        %2119 = vmatmul.bf16.gmra.mxu0 %v2106
        %v2120 = vpop.f32.mrf.mxu0
        %v2121 = vadd.f32 0.0, %v2120
        %v2122 = vpop.f32.mrf.mxu0
        %2123 = vdwg.mxu0
        %2124 = vrot.lane.b32.xlu0 %v1844, 104
        %v2125 = vpop.permute.xlu0 %2124
        %2126 = vrot.lane.b32.xlu0 %v1795, 104
        %v2127 = vpop.permute.xlu0 %2126
        %v2129 = vsel %vm631, %v2125, 0
        %v2132 = vsel %vm631, %v2127, 0
        %2134 = vmatpush.bf16.xpose.msra.mxu0 0
        %2135 = vmatpush.bf16.xpose.msra.mxu0 0
        %2136 = vmatpush.bf16.xpose.msra.mxu0 0
        %2137 = vmatpush.bf16.xpose.msra.mxu0 0
        %2138 = vmatpush.bf16.xpose.msra.mxu0 0
        %2139 = vmatpush.bf16.xpose.msra.mxu0 0
        %2140 = vmatpush.bf16.xpose.msra.mxu0 0
        %2141 = vmatpush.bf16.xpose.msra.mxu0 %v2132
        %2142 = vmatmul.bf16.gmra.mxu0 %v2129
        %v2143 = vpop.f32.mrf.mxu0
        %v2144 = vadd.f32 0.0, %v2143
        %v2145 = vpop.f32.mrf.mxu0
        %2146 = vdwg.mxu0
        %2147 = vrot.lane.b32.xlu0 %v1870, 104
        %v2148 = vpop.permute.xlu0 %2147
        %2149 = vrot.lane.b32.xlu0 %v1820, 104
        %v2150 = vpop.permute.xlu0 %2149
        %v2152 = vsel %vm631, %v2148, 0
        %v2155 = vsel %vm631, %v2150, 0
        %2157 = vmatpush.bf16.xpose.msra.mxu0 0
        %2158 = vmatpush.bf16.xpose.msra.mxu0 0
        %2159 = vmatpush.bf16.xpose.msra.mxu0 0
        %2160 = vmatpush.bf16.xpose.msra.mxu0 0
        %2161 = vmatpush.bf16.xpose.msra.mxu0 0
        %2162 = vmatpush.bf16.xpose.msra.mxu0 0
        %2163 = vmatpush.bf16.xpose.msra.mxu0 0
        %2164 = vmatpush.bf16.xpose.msra.mxu0 %v2155
        %2165 = vmatmul.bf16.gmra.mxu0 %v2152
        %v2166 = vpop.f32.mrf.mxu0
        %v2167 = vadd.f32 0.0, %v2166
        %v2168 = vpop.f32.mrf.mxu0
        %2169 = vdwg.mxu0
        %v2170 = vsel %vm631, %v2144, -inf
        %2171 = vmax.xlane.f32.xlu0 %v2170
        %v2172 = vpop.xlane.xlu0 %2171
        %v2173 = vsel %vm631, %v2167, -inf
        %2174 = vmax.xlane.f32.xlu0 %v2173
        %v2175 = vpop.xlane.xlu0 %2174
        %v2176 = vsub.f32 %v2144, %v2172
        %v2177 = vsub.f32 %v2167, %v2175
        %v2178 = vmul.f32 %v2176, 1.442695
        %v2179 = vpow.pop %v2178
        %v2180 = vmul.f32 %v2177, 1.442695
        %v2181 = vpow.pop %v2180
        %v2182 = vsel %vm631, %v2179, 0.0
        %2183 = vadd.xlane.f32.xlu0 %v2182
        %v2184 = vpop.xlane.xlu0 %2183
        %v2185 = vsel %vm631, %v2181, 0.0
        %2186 = vadd.xlane.f32.xlu0 %v2185
        %v2187 = vpop.xlane.xlu0 %2186
        %v2188 = vrcp.pop %v2184
        %v2189 = vmul.f32 %v2184, %v2188
        %v2190 = vsub.f32 1.0, %v2189
        %v2191 = vmul.f32 %v2188, %v2190
        %v2192 = vadd.f32 %v2188, %v2191
        %vm2193 = vweird.f32 %v2184
        %vm2194 = vweird.f32 %v2188
        %vm2195 = vmor %vm2193, %vm2194
        %v2196 = vsel %vm2195, %v2188, %v2192
        %v2197 = vand.u32 2147483647, %v2184
        %vm2198 = vcmp.eq.f32.partialorder %v2197, 8.507059e+37
        %v2199 = vand.u32 %v2184, 2147483648
        %v2200 = vor.u32 1.1754944e-38, %v2199
        %v2201 = vsel %vm2198, %v2200, %v2196
        %v2202 = vmul.f32 %v2179, %v2201
        %v2203 = vrcp.pop %v2187
        %v2204 = vmul.f32 %v2187, %v2203
        %v2205 = vsub.f32 1.0, %v2204
        %v2206 = vmul.f32 %v2203, %v2205
        %v2207 = vadd.f32 %v2203, %v2206
        %vm2208 = vweird.f32 %v2187
        %vm2209 = vweird.f32 %v2203
        %vm2210 = vmor %vm2208, %vm2209
        %v2211 = vsel %vm2210, %v2203, %v2207
        %v2212 = vand.u32 2147483647, %v2187
        %vm2213 = vcmp.eq.f32.partialorder %v2212, 8.507059e+37
        %v2214 = vand.u32 %v2187, 2147483648
        %v2215 = vor.u32 1.1754944e-38, %v2214
        %v2216 = vsel %vm2213, %v2215, %v2211
        %v2217 = vmul.f32 %v2181, %v2216
        %v2218 = vpack.c.bf16 %v2202, %v2202
        %v2219 = vpack.c.bf16 %v2217, %v2217
        %2220 = vrot.lane.b32.xlu0 %v1795, 72
        %v2221 = vpop.permute.xlu0 %2220
        %v2223 = vsel %vm631, %v2218, 0
        %v2226 = vsel %vm1801, %v2221, 0
        %2228 = vmatpush.bf16.msra.mxu0 0
        %2229 = vmatpush.bf16.msra.mxu0 0
        %2230 = vmatpush.bf16.msra.mxu0 0
        %2231 = vmatpush.bf16.msra.mxu0 0
        %2232 = vmatpush.bf16.msra.mxu0 0
        %2233 = vmatpush.bf16.msra.mxu0 0
        %2234 = vmatpush.bf16.msra.mxu0 0
        %2235 = vmatpush.bf16.msra.mxu0 %v2226
        %2236 = vmatmul.bf16.gmra.mxu0 %v2223
        %v2237 = vpop.f32.mrf.mxu0
        %v2238 = vadd.f32 0.0, %v2237
        %v2239 = vpop.f32.mrf.mxu0
        %2240 = vdwg.mxu0
        %2241 = vrot.lane.b32.xlu0 %v1820, 72
        %v2242 = vpop.permute.xlu0 %2241
        %v2244 = vsel %vm631, %v2219, 0
        %v2247 = vsel %vm1801, %v2242, 0
        %2249 = vmatpush.bf16.msra.mxu0 0
        %2250 = vmatpush.bf16.msra.mxu0 0
        %2251 = vmatpush.bf16.msra.mxu0 0
        %2252 = vmatpush.bf16.msra.mxu0 0
        %2253 = vmatpush.bf16.msra.mxu0 0
        %2254 = vmatpush.bf16.msra.mxu0 0
        %2255 = vmatpush.bf16.msra.mxu0 0
        %2256 = vmatpush.bf16.msra.mxu0 %v2247
        %2257 = vmatmul.bf16.gmra.mxu0 %v2244
        %v2258 = vpop.f32.mrf.mxu0
        %v2259 = vadd.f32 0.0, %v2258
        %v2260 = vpop.f32.mrf.mxu0
        %2261 = vdwg.mxu0
        %2264 = vrot.lane.b32.xlu0 %v1962, 8
        %v2265 = vpop.permute.xlu0 %2264
        %2266 = vrot.lane.b32.xlu0 %v1983, 8
        %v2267 = vpop.permute.xlu0 %2266
        %2272 = vrot.lane.b32.xlu0 %v2100, 16
        %v2273 = vpop.permute.xlu0 %2272
        %2274 = vrot.lane.b32.xlu0 %v2121, 16
        %v2275 = vpop.permute.xlu0 %2274
        %2280 = vrot.lane.b32.xlu0 %v2238, 24
        %v2281 = vpop.permute.xlu0 %2280
        %2282 = vrot.lane.b32.xlu0 %v2259, 24
        %v2283 = vpop.permute.xlu0 %2282
        %v2286 = vsel %vm631, %v1815, %v2265
        %v2287 = vsel %vm631, %v1839, %v2267
        %v2288 = vsel %vm679, %v2286, %v2273
        %v2289 = vsel %vm679, %v2287, %v2275
        %v2290 = vsel %vm1480, %v2288, %v2281
        %v2291 = vsel %vm1480, %v2289, %v2283
        %v2292 = vpack.c.bf16 %v2291, %v2290
        %v2294 = vperm.slane %v1640, 0
        %v2300 = vunpack.c.l.b16 %v1635
        %v2301 = vunpack.c.l.b16 %v1636
        %v2302 = vunpack.c.l.b16 %v1637
        %v2303 = vunpack.c.l.b16 %v1638
        %v2304 = vpack.c.b16 %v2301, %v2300
        %v2305 = vpack.c.b16 %v2303, %v2302
        %v2309 = vsel %vm463, %v2292, 0
        %2311 = vmatpush.bf16.msra.mxu0 0
        %2312 = vmatpush.bf16.msra.mxu0 0
        %2313 = vmatpush.bf16.msra.mxu0 0
        %2314 = vmatpush.bf16.msra.mxu0 0
        %2315 = vmatpush.bf16.msra.mxu0 0
        %2316 = vmatpush.bf16.msra.mxu0 0
        %2317 = vmatpush.bf16.msra.mxu0 %v2305
        %2318 = vmatpush.bf16.msra.mxu0 %v2304
        %2319 = vmatmul.bf16.gmra.mxu0 %v2309
        %v2320 = vpop.f32.mrf.mxu0
        %v2321 = vadd.f32 %v2294, %v2320
        %v2322 = vpop.f32.mrf.mxu0
        %v2323 = vadd.f32 %v2294, %v2322
        %2324 = vdwg.mxu0
        %v2325 = vadd.f32 %v1528, %v2321
        %v2326 = vadd.f32 %v1530, %v2323
        %v2327 = vsel %vm463, %v2325, 0.0
        %2328 = vadd.xlane.f32.xlu0 %v2327
        %v2329 = vpop.xlane.xlu0 %2328
        %v2330 = vsel %vm463, %v2326, 0.0
        %2331 = vadd.xlane.f32.xlu0 %v2330
        %v2332 = vpop.xlane.xlu0 %2331
        %v2333 = vmul.f32 %v2329, %v482
        %v2334 = vmul.f32 %v2332, %v482
        %v2335 = vsub.f32 %v2325, %v2333
        %v2336 = vsub.f32 %v2326, %v2334
        %v2337 = vmul.f32 %v2335, %v2335
        %v2338 = vmul.f32 %v2336, %v2336
        %v2339 = vsel %vm463, %v2337, 0.0
        %2340 = vadd.xlane.f32.xlu0 %v2339
        %v2341 = vpop.xlane.xlu0 %2340
        %v2342 = vsel %vm463, %v2338, 0.0
        %2343 = vadd.xlane.f32.xlu0 %v2342
        %v2344 = vpop.xlane.xlu0 %2343
        %v2345 = vmul.f32 %v2341, %v482
        %v2346 = vmul.f32 %v2344, %v482
        %v2347 = vadd.f32 %v2345, 1e-06
        %v2348 = vadd.f32 %v2346, 1e-06
        %v2349 = vrsqrt.pop %v2347
        %v2350 = vmul.f32 %v2349, %v2347
        %v2351 = vmul.f32 %v2350, %v2349
        %v2352 = vmul.f32 0.5, %v2351
        %v2353 = vsub.f32 1.5, %v2352
        %v2354 = vmul.f32 %v2349, %v2353
        %vm2355 = vweird.f32 %v2347
        %vm2356 = vweird.f32 %v2349
        %vm2357 = vmor %vm2355, %vm2356
        %v2358 = vsel %vm2357, %v2349, %v2354
        %v2359 = vrsqrt.pop %v2348
        %v2360 = vmul.f32 %v2359, %v2348
        %v2361 = vmul.f32 %v2360, %v2359
        %v2362 = vmul.f32 0.5, %v2361
        %v2363 = vsub.f32 1.5, %v2362
        %v2364 = vmul.f32 %v2359, %v2363
        %vm2365 = vweird.f32 %v2348
        %vm2366 = vweird.f32 %v2359
        %vm2367 = vmor %vm2365, %vm2366
        %v2368 = vsel %vm2367, %v2359, %v2364
        %v2369 = vmul.f32 %v2335, %v2358
        %v2370 = vmul.f32 %v2336, %v2368
        %v2371 = vmul.f32 %v2369, %v560
        %v2372 = vmul.f32 %v2370, %v560
        %v2373 = vadd.f32 %v2371, %v567
        %v2374 = vadd.f32 %v2372, %v567
        %2375 = vmatpush.bf16.msra.mxu0 0
        %2376 = vmatpush.bf16.msra.mxu0 0
        %2377 = vmatpush.bf16.msra.mxu0 0
        %2378 = vmatpush.bf16.msra.mxu0 0
        %2379 = vmatpush.bf16.msra.mxu0 0
        %2380 = vmatpush.bf16.msra.mxu0 0
        %2381 = vmatpush.bf16.msra.mxu0 %v1654
        %2382 = vmatpush.bf16.msra.mxu0 %v1653
        %2383 = vmatmul.bf16.gmra.mxu0 %v1685
        %v2384 = vpop.f32.mrf.mxu0
        %v2385 = vadd.f32 %v1643, %v2384
        %v2386 = vpop.f32.mrf.mxu0
        %v2387 = vadd.f32 %v1643, %v2386
        %2388 = vdwg.mxu0
        %v2389 = vpack.c.bf16 %v2374, %v2373
        %v2391 = vsel %vm463, %v2389, 0
        %2393 = vmatpush.bf16.msra.mxu0 0
        %2394 = vmatpush.bf16.msra.mxu0 0
        %2395 = vmatpush.bf16.msra.mxu0 0
        %2396 = vmatpush.bf16.msra.mxu0 0
        %2397 = vmatpush.bf16.msra.mxu0 0
        %2398 = vmatpush.bf16.msra.mxu0 0
        %2399 = vmatpush.bf16.msra.mxu0 %v1678
        %2400 = vmatpush.bf16.msra.mxu0 %v1676
        %2401 = vmatmul.bf16.gmra.mxu0 %v2391
        %v2402 = vpop.f32.mrf.mxu0
        %v2403 = vadd.f32 %v1682, %v2402
        %v2404 = vpop.f32.mrf.mxu0
        %v2405 = vadd.f32 %v1682, %v2404
        %2406 = vdwg.mxu0
        %v2407 = vpack.c.bf16 %v2385, %v2385
        %v2408 = vpack.c.bf16 %v2387, %v2387
        %v2409 = vpack.c.bf16 %v2403, %v2403
        %v2410 = vpack.c.bf16 %v2405, %v2405
        %v2412 = vsel %vm631, %v2407, 0
        %v2415 = vsel %vm631, %v2409, 0
        %2417 = vmatpush.bf16.xpose.msra.mxu0 0
        %2418 = vmatpush.bf16.xpose.msra.mxu0 0
        %2419 = vmatpush.bf16.xpose.msra.mxu0 0
        %2420 = vmatpush.bf16.xpose.msra.mxu0 0
        %2421 = vmatpush.bf16.xpose.msra.mxu0 0
        %2422 = vmatpush.bf16.xpose.msra.mxu0 0
        %2423 = vmatpush.bf16.xpose.msra.mxu0 0
        %2424 = vmatpush.bf16.xpose.msra.mxu0 %v2415
        %2425 = vmatmul.bf16.gmra.mxu0 %v2412
        %v2426 = vpop.f32.mrf.mxu0
        %v2427 = vadd.f32 0.0, %v2426
        %v2428 = vpop.f32.mrf.mxu0
        %2429 = vdwg.mxu0
        %v2431 = vsel %vm631, %v2408, 0
        %v2434 = vsel %vm631, %v2410, 0
        %2436 = vmatpush.bf16.xpose.msra.mxu0 0
        %2437 = vmatpush.bf16.xpose.msra.mxu0 0
        %2438 = vmatpush.bf16.xpose.msra.mxu0 0
        %2439 = vmatpush.bf16.xpose.msra.mxu0 0
        %2440 = vmatpush.bf16.xpose.msra.mxu0 0
        %2441 = vmatpush.bf16.xpose.msra.mxu0 0
        %2442 = vmatpush.bf16.xpose.msra.mxu0 0
        %2443 = vmatpush.bf16.xpose.msra.mxu0 %v2434
        %2444 = vmatmul.bf16.gmra.mxu0 %v2431
        %v2445 = vpop.f32.mrf.mxu0
        %v2446 = vadd.f32 0.0, %v2445
        %v2447 = vpop.f32.mrf.mxu0
        %2448 = vdwg.mxu0
        %v2449 = vsel %vm631, %v2427, -inf
        %2450 = vmax.xlane.f32.xlu0 %v2449
        %v2451 = vpop.xlane.xlu0 %2450
        %v2452 = vsel %vm631, %v2446, -inf
        %2453 = vmax.xlane.f32.xlu0 %v2452
        %v2454 = vpop.xlane.xlu0 %2453
        %v2455 = vsub.f32 %v2427, %v2451
        %v2456 = vsub.f32 %v2446, %v2454
        %v2457 = vmul.f32 %v2455, 1.442695
        %v2458 = vpow.pop %v2457
        %v2459 = vmul.f32 %v2456, 1.442695
        %v2460 = vpow.pop %v2459
        %v2461 = vsel %vm631, %v2458, 0.0
        %2462 = vadd.xlane.f32.xlu0 %v2461
        %v2463 = vpop.xlane.xlu0 %2462
        %v2464 = vsel %vm631, %v2460, 0.0
        %2465 = vadd.xlane.f32.xlu0 %v2464
        %v2466 = vpop.xlane.xlu0 %2465
        %v2467 = vrcp.pop %v2463
        %v2468 = vmul.f32 %v2463, %v2467
        %v2469 = vsub.f32 1.0, %v2468
        %v2470 = vmul.f32 %v2467, %v2469
        %v2471 = vadd.f32 %v2467, %v2470
        %vm2472 = vweird.f32 %v2463
        %vm2473 = vweird.f32 %v2467
        %vm2474 = vmor %vm2472, %vm2473
        %v2475 = vsel %vm2474, %v2467, %v2471
        %v2476 = vand.u32 2147483647, %v2463
        %vm2477 = vcmp.eq.f32.partialorder %v2476, 8.507059e+37
        %v2478 = vand.u32 %v2463, 2147483648
        %v2479 = vor.u32 1.1754944e-38, %v2478
        %v2480 = vsel %vm2477, %v2479, %v2475
        %v2481 = vmul.f32 %v2458, %v2480
        %v2482 = vrcp.pop %v2466
        %v2483 = vmul.f32 %v2466, %v2482
        %v2484 = vsub.f32 1.0, %v2483
        %v2485 = vmul.f32 %v2482, %v2484
        %v2486 = vadd.f32 %v2482, %v2485
        %vm2487 = vweird.f32 %v2466
        %vm2488 = vweird.f32 %v2482
        %vm2489 = vmor %vm2487, %vm2488
        %v2490 = vsel %vm2489, %v2482, %v2486
        %v2491 = vand.u32 2147483647, %v2466
        %vm2492 = vcmp.eq.f32.partialorder %v2491, 8.507059e+37
        %v2493 = vand.u32 %v2466, 2147483648
        %v2494 = vor.u32 1.1754944e-38, %v2493
        %v2495 = vsel %vm2492, %v2494, %v2490
        %v2496 = vmul.f32 %v2460, %v2495
        %v2497 = vpack.c.bf16 %v2481, %v2481
        %v2498 = vpack.c.bf16 %v2496, %v2496
        %v2500 = vunpack.c.l.b16 %v2409
        %v2501 = vpack.c.b16 %v2500, %v2500
        %2502 = vrot.lane.b32.xlu0 %v2501, 96
        %v2503 = vpop.permute.xlu0 %2502
        %v2505 = vsel %vm631, %v2497, 0
        %v2508 = vsel %vm1801, %v2503, 0
        %2510 = vmatpush.bf16.msra.mxu0 0
        %2511 = vmatpush.bf16.msra.mxu0 0
        %2512 = vmatpush.bf16.msra.mxu0 0
        %2513 = vmatpush.bf16.msra.mxu0 0
        %2514 = vmatpush.bf16.msra.mxu0 0
        %2515 = vmatpush.bf16.msra.mxu0 0
        %2516 = vmatpush.bf16.msra.mxu0 0
        %2517 = vmatpush.bf16.msra.mxu0 %v2508
        %2518 = vmatmul.bf16.gmra.mxu0 %v2505
        %v2519 = vpop.f32.mrf.mxu0
        %v2520 = vadd.f32 0.0, %v2519
        %v2521 = vpop.f32.mrf.mxu0
        %2522 = vdwg.mxu0
        %v2524 = vunpack.c.l.b16 %v2410
        %v2525 = vpack.c.b16 %v2524, %v2524
        %2526 = vrot.lane.b32.xlu0 %v2525, 96
        %v2527 = vpop.permute.xlu0 %2526
        %v2529 = vsel %vm631, %v2498, 0
        %v2532 = vsel %vm1801, %v2527, 0
        %2534 = vmatpush.bf16.msra.mxu0 0
        %2535 = vmatpush.bf16.msra.mxu0 0
        %2536 = vmatpush.bf16.msra.mxu0 0
        %2537 = vmatpush.bf16.msra.mxu0 0
        %2538 = vmatpush.bf16.msra.mxu0 0
        %2539 = vmatpush.bf16.msra.mxu0 0
        %2540 = vmatpush.bf16.msra.mxu0 0
        %2541 = vmatpush.bf16.msra.mxu0 %v2532
        %2542 = vmatmul.bf16.gmra.mxu0 %v2529
        %v2543 = vpop.f32.mrf.mxu0
        %v2544 = vadd.f32 0.0, %v2543
        %v2545 = vpop.f32.mrf.mxu0
        %2546 = vdwg.mxu0
        %v2548 = vunpack.c.l.b16 %v2407
        %v2549 = vpack.c.b16 %v2548, %v2548
        %2550 = vrot.lane.b32.xlu0 %v2549, 120
        %v2551 = vpop.permute.xlu0 %2550
        %2552 = vrot.lane.b32.xlu0 %v2501, 120
        %v2553 = vpop.permute.xlu0 %2552
        %v2555 = vsel %vm631, %v2551, 0
        %v2558 = vsel %vm631, %v2553, 0
        %2560 = vmatpush.bf16.xpose.msra.mxu0 0
        %2561 = vmatpush.bf16.xpose.msra.mxu0 0
        %2562 = vmatpush.bf16.xpose.msra.mxu0 0
        %2563 = vmatpush.bf16.xpose.msra.mxu0 0
        %2564 = vmatpush.bf16.xpose.msra.mxu0 0
        %2565 = vmatpush.bf16.xpose.msra.mxu0 0
        %2566 = vmatpush.bf16.xpose.msra.mxu0 0
        %2567 = vmatpush.bf16.xpose.msra.mxu0 %v2558
        %2568 = vmatmul.bf16.gmra.mxu0 %v2555
        %v2569 = vpop.f32.mrf.mxu0
        %v2570 = vadd.f32 0.0, %v2569
        %v2571 = vpop.f32.mrf.mxu0
        %2572 = vdwg.mxu0
        %v2574 = vunpack.c.l.b16 %v2408
        %v2575 = vpack.c.b16 %v2574, %v2574
        %2576 = vrot.lane.b32.xlu0 %v2575, 120
        %v2577 = vpop.permute.xlu0 %2576
        %2578 = vrot.lane.b32.xlu0 %v2525, 120
        %v2579 = vpop.permute.xlu0 %2578
        %v2581 = vsel %vm631, %v2577, 0
        %v2584 = vsel %vm631, %v2579, 0
        %2586 = vmatpush.bf16.xpose.msra.mxu0 0
        %2587 = vmatpush.bf16.xpose.msra.mxu0 0
        %2588 = vmatpush.bf16.xpose.msra.mxu0 0
        %2589 = vmatpush.bf16.xpose.msra.mxu0 0
        %2590 = vmatpush.bf16.xpose.msra.mxu0 0
        %2591 = vmatpush.bf16.xpose.msra.mxu0 0
        %2592 = vmatpush.bf16.xpose.msra.mxu0 0
        %2593 = vmatpush.bf16.xpose.msra.mxu0 %v2584
        %2594 = vmatmul.bf16.gmra.mxu0 %v2581
        %v2595 = vpop.f32.mrf.mxu0
        %v2596 = vadd.f32 0.0, %v2595
        %v2597 = vpop.f32.mrf.mxu0
        %2598 = vdwg.mxu0
        %v2599 = vsel %vm631, %v2570, -inf
        %2600 = vmax.xlane.f32.xlu0 %v2599
        %v2601 = vpop.xlane.xlu0 %2600
        %v2602 = vsel %vm631, %v2596, -inf
        %2603 = vmax.xlane.f32.xlu0 %v2602
        %v2604 = vpop.xlane.xlu0 %2603
        %v2605 = vsub.f32 %v2570, %v2601
        %v2606 = vsub.f32 %v2596, %v2604
        %v2607 = vmul.f32 %v2605, 1.442695
        %v2608 = vpow.pop %v2607
        %v2609 = vmul.f32 %v2606, 1.442695
        %v2610 = vpow.pop %v2609
        %v2611 = vsel %vm631, %v2608, 0.0
        %2612 = vadd.xlane.f32.xlu0 %v2611
        %v2613 = vpop.xlane.xlu0 %2612
        %v2614 = vsel %vm631, %v2610, 0.0
        %2615 = vadd.xlane.f32.xlu0 %v2614
        %v2616 = vpop.xlane.xlu0 %2615
        %v2617 = vrcp.pop %v2613
        %v2618 = vmul.f32 %v2613, %v2617
        %v2619 = vsub.f32 1.0, %v2618
        %v2620 = vmul.f32 %v2617, %v2619
        %v2621 = vadd.f32 %v2617, %v2620
        %vm2622 = vweird.f32 %v2613
        %vm2623 = vweird.f32 %v2617
        %vm2624 = vmor %vm2622, %vm2623
        %v2625 = vsel %vm2624, %v2617, %v2621
        %v2626 = vand.u32 2147483647, %v2613
        %vm2627 = vcmp.eq.f32.partialorder %v2626, 8.507059e+37
        %v2628 = vand.u32 %v2613, 2147483648
        %v2629 = vor.u32 1.1754944e-38, %v2628
        %v2630 = vsel %vm2627, %v2629, %v2625
        %v2631 = vmul.f32 %v2608, %v2630
        %v2632 = vrcp.pop %v2616
        %v2633 = vmul.f32 %v2616, %v2632
        %v2634 = vsub.f32 1.0, %v2633
        %v2635 = vmul.f32 %v2632, %v2634
        %v2636 = vadd.f32 %v2632, %v2635
        %vm2637 = vweird.f32 %v2616
        %vm2638 = vweird.f32 %v2632
        %vm2639 = vmor %vm2637, %vm2638
        %v2640 = vsel %vm2639, %v2632, %v2636
        %v2641 = vand.u32 2147483647, %v2616
        %vm2642 = vcmp.eq.f32.partialorder %v2641, 8.507059e+37
        %v2643 = vand.u32 %v2616, 2147483648
        %v2644 = vor.u32 1.1754944e-38, %v2643
        %v2645 = vsel %vm2642, %v2644, %v2640
        %v2646 = vmul.f32 %v2610, %v2645
        %v2647 = vpack.c.bf16 %v2631, %v2631
        %v2648 = vpack.c.bf16 %v2646, %v2646
        %2649 = vrot.lane.b32.xlu0 %v2501, 88
        %v2650 = vpop.permute.xlu0 %2649
        %v2652 = vsel %vm631, %v2647, 0
        %v2655 = vsel %vm1801, %v2650, 0
        %2657 = vmatpush.bf16.msra.mxu0 0
        %2658 = vmatpush.bf16.msra.mxu0 0
        %2659 = vmatpush.bf16.msra.mxu0 0
        %2660 = vmatpush.bf16.msra.mxu0 0
        %2661 = vmatpush.bf16.msra.mxu0 0
        %2662 = vmatpush.bf16.msra.mxu0 0
        %2663 = vmatpush.bf16.msra.mxu0 0
        %2664 = vmatpush.bf16.msra.mxu0 %v2655
        %2665 = vmatmul.bf16.gmra.mxu0 %v2652
        %v2666 = vpop.f32.mrf.mxu0
        %v2667 = vadd.f32 0.0, %v2666
        %v2668 = vpop.f32.mrf.mxu0
        %2669 = vdwg.mxu0
        %2670 = vrot.lane.b32.xlu0 %v2525, 88
        %v2671 = vpop.permute.xlu0 %2670
        %v2673 = vsel %vm631, %v2648, 0
        %v2676 = vsel %vm1801, %v2671, 0
        %2678 = vmatpush.bf16.msra.mxu0 0
        %2679 = vmatpush.bf16.msra.mxu0 0
        %2680 = vmatpush.bf16.msra.mxu0 0
        %2681 = vmatpush.bf16.msra.mxu0 0
        %2682 = vmatpush.bf16.msra.mxu0 0
        %2683 = vmatpush.bf16.msra.mxu0 0
        %2684 = vmatpush.bf16.msra.mxu0 0
        %2685 = vmatpush.bf16.msra.mxu0 %v2676
        %2686 = vmatmul.bf16.gmra.mxu0 %v2673
        %v2687 = vpop.f32.mrf.mxu0
        %v2688 = vadd.f32 0.0, %v2687
        %v2689 = vpop.f32.mrf.mxu0
        %2690 = vdwg.mxu0
        %2691 = vrot.lane.b32.xlu0 %v2549, 112
        %v2692 = vpop.permute.xlu0 %2691
        %2693 = vrot.lane.b32.xlu0 %v2501, 112
        %v2694 = vpop.permute.xlu0 %2693
        %v2696 = vsel %vm631, %v2692, 0
        %v2699 = vsel %vm631, %v2694, 0
        %2701 = vmatpush.bf16.xpose.msra.mxu0 0
        %2702 = vmatpush.bf16.xpose.msra.mxu0 0
        %2703 = vmatpush.bf16.xpose.msra.mxu0 0
        %2704 = vmatpush.bf16.xpose.msra.mxu0 0
        %2705 = vmatpush.bf16.xpose.msra.mxu0 0
        %2706 = vmatpush.bf16.xpose.msra.mxu0 0
        %2707 = vmatpush.bf16.xpose.msra.mxu0 0
        %2708 = vmatpush.bf16.xpose.msra.mxu0 %v2699
        %2709 = vmatmul.bf16.gmra.mxu0 %v2696
        %v2710 = vpop.f32.mrf.mxu0
        %v2711 = vadd.f32 0.0, %v2710
        %v2712 = vpop.f32.mrf.mxu0
        %2713 = vdwg.mxu0
        %2714 = vrot.lane.b32.xlu0 %v2575, 112
        %v2715 = vpop.permute.xlu0 %2714
        %2716 = vrot.lane.b32.xlu0 %v2525, 112
        %v2717 = vpop.permute.xlu0 %2716
        %v2719 = vsel %vm631, %v2715, 0
        %v2722 = vsel %vm631, %v2717, 0
        %2724 = vmatpush.bf16.xpose.msra.mxu0 0
        %2725 = vmatpush.bf16.xpose.msra.mxu0 0
        %2726 = vmatpush.bf16.xpose.msra.mxu0 0
        %2727 = vmatpush.bf16.xpose.msra.mxu0 0
        %2728 = vmatpush.bf16.xpose.msra.mxu0 0
        %2729 = vmatpush.bf16.xpose.msra.mxu0 0
        %2730 = vmatpush.bf16.xpose.msra.mxu0 0
        %2731 = vmatpush.bf16.xpose.msra.mxu0 %v2722
        %2732 = vmatmul.bf16.gmra.mxu0 %v2719
        %v2733 = vpop.f32.mrf.mxu0
        %v2734 = vadd.f32 0.0, %v2733
        %v2735 = vpop.f32.mrf.mxu0
        %2736 = vdwg.mxu0
        %v2737 = vsel %vm631, %v2711, -inf
        %2738 = vmax.xlane.f32.xlu0 %v2737
        %v2739 = vpop.xlane.xlu0 %2738
        %v2740 = vsel %vm631, %v2734, -inf
        %2741 = vmax.xlane.f32.xlu0 %v2740
        %v2742 = vpop.xlane.xlu0 %2741
        %v2743 = vsub.f32 %v2711, %v2739
        %v2744 = vsub.f32 %v2734, %v2742
        %v2745 = vmul.f32 %v2743, 1.442695
        %v2746 = vpow.pop %v2745
        %v2747 = vmul.f32 %v2744, 1.442695
        %v2748 = vpow.pop %v2747
        %v2749 = vsel %vm631, %v2746, 0.0
        %2750 = vadd.xlane.f32.xlu0 %v2749
        %v2751 = vpop.xlane.xlu0 %2750
        %v2752 = vsel %vm631, %v2748, 0.0
        %2753 = vadd.xlane.f32.xlu0 %v2752
        %v2754 = vpop.xlane.xlu0 %2753
        %v2755 = vrcp.pop %v2751
        %v2756 = vmul.f32 %v2751, %v2755
        %v2757 = vsub.f32 1.0, %v2756
        %v2758 = vmul.f32 %v2755, %v2757
        %v2759 = vadd.f32 %v2755, %v2758
        %vm2760 = vweird.f32 %v2751
        %vm2761 = vweird.f32 %v2755
        %vm2762 = vmor %vm2760, %vm2761
        %v2763 = vsel %vm2762, %v2755, %v2759
        %v2764 = vand.u32 2147483647, %v2751
        %vm2765 = vcmp.eq.f32.partialorder %v2764, 8.507059e+37
        %v2766 = vand.u32 %v2751, 2147483648
        %v2767 = vor.u32 1.1754944e-38, %v2766
        %v2768 = vsel %vm2765, %v2767, %v2763
        %v2769 = vmul.f32 %v2746, %v2768
        %v2770 = vrcp.pop %v2754
        %v2771 = vmul.f32 %v2754, %v2770
        %v2772 = vsub.f32 1.0, %v2771
        %v2773 = vmul.f32 %v2770, %v2772
        %v2774 = vadd.f32 %v2770, %v2773
        %vm2775 = vweird.f32 %v2754
        %vm2776 = vweird.f32 %v2770
        %vm2777 = vmor %vm2775, %vm2776
        %v2778 = vsel %vm2777, %v2770, %v2774
        %v2779 = vand.u32 2147483647, %v2754
        %vm2780 = vcmp.eq.f32.partialorder %v2779, 8.507059e+37
        %v2781 = vand.u32 %v2754, 2147483648
        %v2782 = vor.u32 1.1754944e-38, %v2781
        %v2783 = vsel %vm2780, %v2782, %v2778
        %v2784 = vmul.f32 %v2748, %v2783
        %v2785 = vpack.c.bf16 %v2769, %v2769
        %v2786 = vpack.c.bf16 %v2784, %v2784
        %2787 = vrot.lane.b32.xlu0 %v2501, 80
        %v2788 = vpop.permute.xlu0 %2787
        %v2790 = vsel %vm631, %v2785, 0
        %v2793 = vsel %vm1801, %v2788, 0
        %2795 = vmatpush.bf16.msra.mxu0 0
        %2796 = vmatpush.bf16.msra.mxu0 0
        %2797 = vmatpush.bf16.msra.mxu0 0
        %2798 = vmatpush.bf16.msra.mxu0 0
        %2799 = vmatpush.bf16.msra.mxu0 0
        %2800 = vmatpush.bf16.msra.mxu0 0
        %2801 = vmatpush.bf16.msra.mxu0 0
        %2802 = vmatpush.bf16.msra.mxu0 %v2793
        %2803 = vmatmul.bf16.gmra.mxu0 %v2790
        %v2804 = vpop.f32.mrf.mxu0
        %v2805 = vadd.f32 0.0, %v2804
        %v2806 = vpop.f32.mrf.mxu0
        %2807 = vdwg.mxu0
        %2808 = vrot.lane.b32.xlu0 %v2525, 80
        %v2809 = vpop.permute.xlu0 %2808
        %v2811 = vsel %vm631, %v2786, 0
        %v2814 = vsel %vm1801, %v2809, 0
        %2816 = vmatpush.bf16.msra.mxu0 0
        %2817 = vmatpush.bf16.msra.mxu0 0
        %2818 = vmatpush.bf16.msra.mxu0 0
        %2819 = vmatpush.bf16.msra.mxu0 0
        %2820 = vmatpush.bf16.msra.mxu0 0
        %2821 = vmatpush.bf16.msra.mxu0 0
        %2822 = vmatpush.bf16.msra.mxu0 0
        %2823 = vmatpush.bf16.msra.mxu0 %v2814
        %2824 = vmatmul.bf16.gmra.mxu0 %v2811
        %v2825 = vpop.f32.mrf.mxu0
        %v2826 = vadd.f32 0.0, %v2825
        %v2827 = vpop.f32.mrf.mxu0
        %2828 = vdwg.mxu0
        %2829 = vrot.lane.b32.xlu0 %v2549, 104
        %v2830 = vpop.permute.xlu0 %2829
        %2831 = vrot.lane.b32.xlu0 %v2501, 104
        %v2832 = vpop.permute.xlu0 %2831
        %v2834 = vsel %vm631, %v2830, 0
        %v2837 = vsel %vm631, %v2832, 0
        %2839 = vmatpush.bf16.xpose.msra.mxu0 0
        %2840 = vmatpush.bf16.xpose.msra.mxu0 0
        %2841 = vmatpush.bf16.xpose.msra.mxu0 0
        %2842 = vmatpush.bf16.xpose.msra.mxu0 0
        %2843 = vmatpush.bf16.xpose.msra.mxu0 0
        %2844 = vmatpush.bf16.xpose.msra.mxu0 0
        %2845 = vmatpush.bf16.xpose.msra.mxu0 0
        %2846 = vmatpush.bf16.xpose.msra.mxu0 %v2837
        %2847 = vmatmul.bf16.gmra.mxu0 %v2834
        %v2848 = vpop.f32.mrf.mxu0
        %v2849 = vadd.f32 0.0, %v2848
        %v2850 = vpop.f32.mrf.mxu0
        %2851 = vdwg.mxu0
        %2852 = vrot.lane.b32.xlu0 %v2575, 104
        %v2853 = vpop.permute.xlu0 %2852
        %2854 = vrot.lane.b32.xlu0 %v2525, 104
        %v2855 = vpop.permute.xlu0 %2854
        %v2857 = vsel %vm631, %v2853, 0
        %v2860 = vsel %vm631, %v2855, 0
        %2862 = vmatpush.bf16.xpose.msra.mxu0 0
        %2863 = vmatpush.bf16.xpose.msra.mxu0 0
        %2864 = vmatpush.bf16.xpose.msra.mxu0 0
        %2865 = vmatpush.bf16.xpose.msra.mxu0 0
        %2866 = vmatpush.bf16.xpose.msra.mxu0 0
        %2867 = vmatpush.bf16.xpose.msra.mxu0 0
        %2868 = vmatpush.bf16.xpose.msra.mxu0 0
        %2869 = vmatpush.bf16.xpose.msra.mxu0 %v2860
        %2870 = vmatmul.bf16.gmra.mxu0 %v2857
        %v2871 = vpop.f32.mrf.mxu0
        %v2872 = vadd.f32 0.0, %v2871
        %v2873 = vpop.f32.mrf.mxu0
        %2874 = vdwg.mxu0
        %v2875 = vsel %vm631, %v2849, -inf
        %2876 = vmax.xlane.f32.xlu0 %v2875
        %v2877 = vpop.xlane.xlu0 %2876
        %v2878 = vsel %vm631, %v2872, -inf
        %2879 = vmax.xlane.f32.xlu0 %v2878
        %v2880 = vpop.xlane.xlu0 %2879
        %v2881 = vsub.f32 %v2849, %v2877
        %v2882 = vsub.f32 %v2872, %v2880
        %v2883 = vmul.f32 %v2881, 1.442695
        %v2884 = vpow.pop %v2883
        %v2885 = vmul.f32 %v2882, 1.442695
        %v2886 = vpow.pop %v2885
        %v2887 = vsel %vm631, %v2884, 0.0
        %2888 = vadd.xlane.f32.xlu0 %v2887
        %v2889 = vpop.xlane.xlu0 %2888
        %v2890 = vsel %vm631, %v2886, 0.0
        %2891 = vadd.xlane.f32.xlu0 %v2890
        %v2892 = vpop.xlane.xlu0 %2891
        %v2893 = vrcp.pop %v2889
        %v2894 = vmul.f32 %v2889, %v2893
        %v2895 = vsub.f32 1.0, %v2894
        %v2896 = vmul.f32 %v2893, %v2895
        %v2897 = vadd.f32 %v2893, %v2896
        %vm2898 = vweird.f32 %v2889
        %vm2899 = vweird.f32 %v2893
        %vm2900 = vmor %vm2898, %vm2899
        %v2901 = vsel %vm2900, %v2893, %v2897
        %v2902 = vand.u32 2147483647, %v2889
        %vm2903 = vcmp.eq.f32.partialorder %v2902, 8.507059e+37
        %v2904 = vand.u32 %v2889, 2147483648
        %v2905 = vor.u32 1.1754944e-38, %v2904
        %v2906 = vsel %vm2903, %v2905, %v2901
        %v2907 = vmul.f32 %v2884, %v2906
        %v2908 = vrcp.pop %v2892
        %v2909 = vmul.f32 %v2892, %v2908
        %v2910 = vsub.f32 1.0, %v2909
        %v2911 = vmul.f32 %v2908, %v2910
        %v2912 = vadd.f32 %v2908, %v2911
        %vm2913 = vweird.f32 %v2892
        %vm2914 = vweird.f32 %v2908
        %vm2915 = vmor %vm2913, %vm2914
        %v2916 = vsel %vm2915, %v2908, %v2912
        %v2917 = vand.u32 2147483647, %v2892
        %vm2918 = vcmp.eq.f32.partialorder %v2917, 8.507059e+37
        %v2919 = vand.u32 %v2892, 2147483648
        %v2920 = vor.u32 1.1754944e-38, %v2919
        %v2921 = vsel %vm2918, %v2920, %v2916
        %v2922 = vmul.f32 %v2886, %v2921
        %v2923 = vpack.c.bf16 %v2907, %v2907
        %v2924 = vpack.c.bf16 %v2922, %v2922
        %2925 = vrot.lane.b32.xlu0 %v2501, 72
        %v2926 = vpop.permute.xlu0 %2925
        %v2928 = vsel %vm631, %v2923, 0
        %v2931 = vsel %vm1801, %v2926, 0
        %2933 = vmatpush.bf16.msra.mxu0 0
        %2934 = vmatpush.bf16.msra.mxu0 0
        %2935 = vmatpush.bf16.msra.mxu0 0
        %2936 = vmatpush.bf16.msra.mxu0 0
        %2937 = vmatpush.bf16.msra.mxu0 0
        %2938 = vmatpush.bf16.msra.mxu0 0
        %2939 = vmatpush.bf16.msra.mxu0 0
        %2940 = vmatpush.bf16.msra.mxu0 %v2931
        %2941 = vmatmul.bf16.gmra.mxu0 %v2928
        %v2942 = vpop.f32.mrf.mxu0
        %v2943 = vadd.f32 0.0, %v2942
        %v2944 = vpop.f32.mrf.mxu0
        %2945 = vdwg.mxu0
        %2946 = vrot.lane.b32.xlu0 %v2525, 72
        %v2947 = vpop.permute.xlu0 %2946
        %v2949 = vsel %vm631, %v2924, 0
        %v2952 = vsel %vm1801, %v2947, 0
        %2954 = vmatpush.bf16.msra.mxu0 0
        %2955 = vmatpush.bf16.msra.mxu0 0
        %2956 = vmatpush.bf16.msra.mxu0 0
        %2957 = vmatpush.bf16.msra.mxu0 0
        %2958 = vmatpush.bf16.msra.mxu0 0
        %2959 = vmatpush.bf16.msra.mxu0 0
        %2960 = vmatpush.bf16.msra.mxu0 0
        %2961 = vmatpush.bf16.msra.mxu0 %v2952
        %2962 = vmatmul.bf16.gmra.mxu0 %v2949
        %v2963 = vpop.f32.mrf.mxu0
        %v2964 = vadd.f32 0.0, %v2963
        %v2965 = vpop.f32.mrf.mxu0
        %2966 = vdwg.mxu0
        %2969 = vrot.lane.b32.xlu0 %v2667, 8
        %v2970 = vpop.permute.xlu0 %2969
        %2971 = vrot.lane.b32.xlu0 %v2688, 8
        %v2972 = vpop.permute.xlu0 %2971
        %2977 = vrot.lane.b32.xlu0 %v2805, 16
        %v2978 = vpop.permute.xlu0 %2977
        %2979 = vrot.lane.b32.xlu0 %v2826, 16
        %v2980 = vpop.permute.xlu0 %2979
        %2985 = vrot.lane.b32.xlu0 %v2943, 24
        %v2986 = vpop.permute.xlu0 %2985
        %2987 = vrot.lane.b32.xlu0 %v2964, 24
        %v2988 = vpop.permute.xlu0 %2987
        %v2991 = vsel %vm631, %v2520, %v2970
        %v2992 = vsel %vm631, %v2544, %v2972
        %v2993 = vsel %vm679, %v2991, %v2978
        %v2994 = vsel %vm679, %v2992, %v2980
        %v2995 = vsel %vm1480, %v2993, %v2986
        %v2996 = vsel %vm1480, %v2994, %v2988
        %v2997 = vpack.c.bf16 %v2996, %v2995
        %v2999 = vsel %vm463, %v2997, 0
        %3001 = vmatpush.bf16.msra.mxu0 0
        %3002 = vmatpush.bf16.msra.mxu0 0
        %3003 = vmatpush.bf16.msra.mxu0 0
        %3004 = vmatpush.bf16.msra.mxu0 0
        %3005 = vmatpush.bf16.msra.mxu0 0
        %3006 = vmatpush.bf16.msra.mxu0 0
        %3007 = vmatpush.bf16.msra.mxu0 %v2305
        %3008 = vmatpush.bf16.msra.mxu0 %v2304
        %3009 = vmatmul.bf16.gmra.mxu0 %v2999
        %v3010 = vpop.f32.mrf.mxu0
        %v3011 = vadd.f32 %v2294, %v3010
        %v3012 = vpop.f32.mrf.mxu0
        %v3013 = vadd.f32 %v2294, %v3012
        %3014 = vdwg.mxu0
        %v3015 = vadd.f32 %v1527, %v3011
        %v3016 = vadd.f32 %v1529, %v3013
        %3017 = vst.msk [vmem:[#allocation2] sm:$0xff] %vm463, %v3015
        %3018 = vst.msk [vmem:[#allocation2 + $0x10] sm:$0xff] %vm463, %v3016
        %3019 = vst.msk [vmem:[#allocation2 + $0x8] sm:$0xff] %vm463, %v2325
        %3020 = vst.msk [vmem:[#allocation2 + $0x18] sm:$0xff] %vm463, %v2326
        %v3021 = vld [vmem:[#allocation2] sm:$0xff]
        %v3022 = vld [vmem:[#allocation2 + $0x8] sm:$0xff]
        %v3023 = vld [vmem:[#allocation2 + $0x10] sm:$0xff]
        %v3024 = vld [vmem:[#allocation2 + $0x18] sm:$0xff]
        %s3025 = scalar_lea.vmem %s5, 1
        %v3026 = vld [vmem:[%s3025] sm:$0x1]
        %s3027 = scalar_lea.vmem %s6, 1
        %v3028 = vld [vmem:[%s3027] sm:$0x1]
        %s3029 = scalar_lea.vmem [#allocation6], 32
        %v3030 = vld [vmem:[%s3029] sm:$0xf]
        %v3031 = vld [vmem:[%s3029 + $0x4] sm:$0xf]
        %v3032 = vld [vmem:[%s3029 + $0x8] sm:$0xf]
        %v3033 = vld [vmem:[%s3029 + $0xc] sm:$0xf]
        %s3034 = scalar_lea.vmem [#allocation8], 2
        %v3035 = vld [vmem:[%s3034] sm:$0x1]
        %v3036 = vsel %vm463, %v3021, 0.0
        %3037 = vadd.xlane.f32.xlu0 %v3036
        %v3038 = vpop.xlane.xlu0 %3037
        %v3039 = vsel %vm463, %v3022, 0.0
        %3040 = vadd.xlane.f32.xlu0 %v3039
        %v3041 = vpop.xlane.xlu0 %3040
        %v3042 = vsel %vm463, %v3023, 0.0
        %3043 = vadd.xlane.f32.xlu0 %v3042
        %v3044 = vpop.xlane.xlu0 %3043
        %v3045 = vsel %vm463, %v3024, 0.0
        %3046 = vadd.xlane.f32.xlu0 %v3045
        %v3047 = vpop.xlane.xlu0 %3046
        %v3048 = vmul.f32 %v3038, %v482
        %v3049 = vmul.f32 %v3041, %v482
        %v3050 = vmul.f32 %v3044, %v482
        %v3051 = vmul.f32 %v3047, %v482
        %v3052 = vsub.f32 %v3021, %v3048
        %v3053 = vsub.f32 %v3022, %v3049
        %v3054 = vsub.f32 %v3023, %v3050
        %v3055 = vsub.f32 %v3024, %v3051
        %v3056 = vmul.f32 %v3052, %v3052
        %v3057 = vmul.f32 %v3053, %v3053
        %v3058 = vmul.f32 %v3054, %v3054
        %v3059 = vmul.f32 %v3055, %v3055
        %v3060 = vsel %vm463, %v3056, 0.0
        %3061 = vadd.xlane.f32.xlu0 %v3060
        %v3062 = vpop.xlane.xlu0 %3061
        %v3063 = vsel %vm463, %v3057, 0.0
        %3064 = vadd.xlane.f32.xlu0 %v3063
        %v3065 = vpop.xlane.xlu0 %3064
        %v3066 = vsel %vm463, %v3058, 0.0
        %3067 = vadd.xlane.f32.xlu0 %v3066
        %v3068 = vpop.xlane.xlu0 %3067
        %v3069 = vsel %vm463, %v3059, 0.0
        %3070 = vadd.xlane.f32.xlu0 %v3069
        %v3071 = vpop.xlane.xlu0 %3070
        %v3072 = vmul.f32 %v3062, %v482
        %v3073 = vmul.f32 %v3065, %v482
        %v3074 = vmul.f32 %v3068, %v482
        %v3075 = vmul.f32 %v3071, %v482
        %v3076 = vadd.f32 %v3072, 1e-06
        %v3077 = vadd.f32 %v3073, 1e-06
        %v3078 = vadd.f32 %v3074, 1e-06
        %v3079 = vadd.f32 %v3075, 1e-06
        %v3080 = vrsqrt.pop %v3076
        %v3081 = vmul.f32 %v3080, %v3076
        %v3082 = vmul.f32 %v3081, %v3080
        %v3083 = vmul.f32 0.5, %v3082
        %v3084 = vsub.f32 1.5, %v3083
        %v3085 = vmul.f32 %v3080, %v3084
        %vm3086 = vweird.f32 %v3076
        %vm3087 = vweird.f32 %v3080
        %vm3088 = vmor %vm3086, %vm3087
        %v3089 = vsel %vm3088, %v3080, %v3085
        %v3090 = vrsqrt.pop %v3077
        %v3091 = vmul.f32 %v3090, %v3077
        %v3092 = vmul.f32 %v3091, %v3090
        %v3093 = vmul.f32 0.5, %v3092
        %v3094 = vsub.f32 1.5, %v3093
        %v3095 = vmul.f32 %v3090, %v3094
        %vm3096 = vweird.f32 %v3077
        %vm3097 = vweird.f32 %v3090
        %vm3098 = vmor %vm3096, %vm3097
        %v3099 = vsel %vm3098, %v3090, %v3095
        %v3100 = vrsqrt.pop %v3078
        %v3101 = vmul.f32 %v3100, %v3078
        %v3102 = vmul.f32 %v3101, %v3100
        %v3103 = vmul.f32 0.5, %v3102
        %v3104 = vsub.f32 1.5, %v3103
        %v3105 = vmul.f32 %v3100, %v3104
        %vm3106 = vweird.f32 %v3078
        %vm3107 = vweird.f32 %v3100
        %vm3108 = vmor %vm3106, %vm3107
        %v3109 = vsel %vm3108, %v3100, %v3105
        %v3110 = vrsqrt.pop %v3079
        %v3111 = vmul.f32 %v3110, %v3079
        %v3112 = vmul.f32 %v3111, %v3110
        %v3113 = vmul.f32 0.5, %v3112
        %v3114 = vsub.f32 1.5, %v3113
        %v3115 = vmul.f32 %v3110, %v3114
        %vm3116 = vweird.f32 %v3079
        %vm3117 = vweird.f32 %v3110
        %vm3118 = vmor %vm3116, %vm3117
        %v3119 = vsel %vm3118, %v3110, %v3115
        %v3120 = vmul.f32 %v3052, %v3089
        %v3121 = vmul.f32 %v3053, %v3099
        %v3122 = vmul.f32 %v3054, %v3109
        %v3123 = vmul.f32 %v3055, %v3119
        %v3125 = vperm.slane %v3026, 0
        %v3127 = vmul.f32 %v3120, %v3125
        %v3128 = vmul.f32 %v3121, %v3125
        %v3129 = vmul.f32 %v3122, %v3125
        %v3130 = vmul.f32 %v3123, %v3125
        %v3132 = vperm.slane %v3028, 0
        %v3134 = vadd.f32 %v3127, %v3132
        %v3135 = vadd.f32 %v3128, %v3132
        %v3136 = vadd.f32 %v3129, %v3132
        %v3137 = vadd.f32 %v3130, %v3132
        %v3138 = vpack.c.bf16 %v3135, %v3134
        %v3139 = vpack.c.bf16 %v3137, %v3136
        %v3141 = vperm.slane %v3035, 0
        %v3147 = vunpack.c.l.b16 %v3030
        %v3148 = vunpack.c.l.b16 %v3031
        %v3149 = vunpack.c.l.b16 %v3032
        %v3150 = vunpack.c.l.b16 %v3033
        %v3151 = vpack.c.b16 %v3148, %v3147
        %v3152 = vpack.c.b16 %v3150, %v3149
        %v3156 = vsel %vm463, %v3138, 0
        %v3159 = vsel %vm463, %v3139, 0
        %3161 = vmatpush.bf16.msra.mxu0 0
        %3162 = vmatpush.bf16.msra.mxu0 0
        %3163 = vmatpush.bf16.msra.mxu0 0
        %3164 = vmatpush.bf16.msra.mxu0 0
        %3165 = vmatpush.bf16.msra.mxu0 0
        %3166 = vmatpush.bf16.msra.mxu0 0
        %3167 = vmatpush.bf16.msra.mxu0 %v3152
        %3168 = vmatpush.bf16.msra.mxu0 %v3151
        %3169 = vmatmul.bf16.gmra.mxu0 %v3156
        %v3170 = vpop.f32.mrf.mxu0
        %v3171 = vadd.f32 %v3141, %v3170
        %v3172 = vpop.f32.mrf.mxu0
        %v3173 = vadd.f32 %v3141, %v3172
        %3174 = vmatmul.bf16.gmra.mxu0 %v3159
        %v3175 = vpop.f32.mrf.mxu0
        %v3176 = vadd.f32 %v3141, %v3175
        %v3177 = vpop.f32.mrf.mxu0
        %v3178 = vadd.f32 %v3141, %v3177
        %3179 = vdwg.mxu0
        %s3180 = scalar_lea.vmem [#allocation9], 32
        %v3181 = vld [vmem:[%s3180] sm:$0xf]
        %v3182 = vld [vmem:[%s3180 + $0x4] sm:$0xf]
        %v3183 = vld [vmem:[%s3180 + $0x8] sm:$0xf]
        %v3184 = vld [vmem:[%s3180 + $0xc] sm:$0xf]
        %s3185 = scalar_lea.vmem [#allocation11], 2
        %v3186 = vld [vmem:[%s3185] sm:$0x1]
        %v3187 = vpack.c.bf16 %v3171, %v3171
        %v3188 = vpack.c.bf16 %v3173, %v3173
        %v3189 = vpack.c.bf16 %v3176, %v3176
        %v3190 = vpack.c.bf16 %v3178, %v3178
        %v3193 = vunpack.c.l.b16 %v3187
        %v3194 = vunpack.c.l.b16 %v3188
        %v3195 = vpack.c.b16 %v3194, %v3193
        %3196 = vrot.lane.b32.xlu0 %v3195, 96
        %v3197 = vpop.permute.xlu0 %3196
        %v3199 = vsel %vm631, %v3195, 0
        %v3202 = vsel %vm631, %v3197, 0
        %3204 = vmatpush.bf16.xpose.msra.mxu0 0
        %3205 = vmatpush.bf16.xpose.msra.mxu0 0
        %3206 = vmatpush.bf16.xpose.msra.mxu0 0
        %3207 = vmatpush.bf16.xpose.msra.mxu0 0
        %3208 = vmatpush.bf16.xpose.msra.mxu0 0
        %3209 = vmatpush.bf16.xpose.msra.mxu0 0
        %3210 = vmatpush.bf16.xpose.msra.mxu0 0
        %3211 = vmatpush.bf16.xpose.msra.mxu0 %v3202
        %3212 = vmatmul.bf16.gmra.mxu0 %v3199
        %v3213 = vpop.f32.mrf.mxu0
        %v3214 = vadd.f32 0.0, %v3213
        %v3215 = vpop.f32.mrf.mxu0
        %v3216 = vadd.f32 0.0, %v3215
        %3217 = vdwg.mxu0
        %v3220 = vunpack.c.l.b16 %v3189
        %v3221 = vunpack.c.l.b16 %v3190
        %v3222 = vpack.c.b16 %v3221, %v3220
        %3223 = vrot.lane.b32.xlu0 %v3222, 96
        %v3224 = vpop.permute.xlu0 %3223
        %v3226 = vsel %vm631, %v3222, 0
        %v3229 = vsel %vm631, %v3224, 0
        %3231 = vmatpush.bf16.xpose.msra.mxu0 0
        %3232 = vmatpush.bf16.xpose.msra.mxu0 0
        %3233 = vmatpush.bf16.xpose.msra.mxu0 0
        %3234 = vmatpush.bf16.xpose.msra.mxu0 0
        %3235 = vmatpush.bf16.xpose.msra.mxu0 0
        %3236 = vmatpush.bf16.xpose.msra.mxu0 0
        %3237 = vmatpush.bf16.xpose.msra.mxu0 0
        %3238 = vmatpush.bf16.xpose.msra.mxu0 %v3229
        %3239 = vmatmul.bf16.gmra.mxu0 %v3226
        %v3240 = vpop.f32.mrf.mxu0
        %v3241 = vadd.f32 0.0, %v3240
        %v3242 = vpop.f32.mrf.mxu0
        %v3243 = vadd.f32 0.0, %v3242
        %3244 = vdwg.mxu0
        %v3245 = vsel %vm679, %v3214, -inf
        %3246 = vmax.xlane.f32.xlu0 %v3245
        %v3247 = vpop.xlane.xlu0 %3246
        %v3248 = vsel %vm679, %v3216, -inf
        %3249 = vmax.xlane.f32.xlu0 %v3248
        %v3250 = vpop.xlane.xlu0 %3249
        %v3251 = vsel %vm679, %v3241, -inf
        %3252 = vmax.xlane.f32.xlu0 %v3251
        %v3253 = vpop.xlane.xlu0 %3252
        %v3254 = vsel %vm679, %v3243, -inf
        %3255 = vmax.xlane.f32.xlu0 %v3254
        %v3256 = vpop.xlane.xlu0 %3255
        %v3257 = vsub.f32 %v3214, %v3247
        %v3258 = vsub.f32 %v3216, %v3250
        %v3259 = vsub.f32 %v3241, %v3253
        %v3260 = vsub.f32 %v3243, %v3256
        %v3261 = vmul.f32 %v3257, 1.442695
        %v3262 = vpow.pop %v3261
        %v3263 = vmul.f32 %v3258, 1.442695
        %v3264 = vpow.pop %v3263
        %v3265 = vmul.f32 %v3259, 1.442695
        %v3266 = vpow.pop %v3265
        %v3267 = vmul.f32 %v3260, 1.442695
        %v3268 = vpow.pop %v3267
        %v3269 = vsel %vm679, %v3262, 0.0
        %3270 = vadd.xlane.f32.xlu0 %v3269
        %v3271 = vpop.xlane.xlu0 %3270
        %v3272 = vsel %vm679, %v3264, 0.0
        %3273 = vadd.xlane.f32.xlu0 %v3272
        %v3274 = vpop.xlane.xlu0 %3273
        %v3275 = vsel %vm679, %v3266, 0.0
        %3276 = vadd.xlane.f32.xlu0 %v3275
        %v3277 = vpop.xlane.xlu0 %3276
        %v3278 = vsel %vm679, %v3268, 0.0
        %3279 = vadd.xlane.f32.xlu0 %v3278
        %v3280 = vpop.xlane.xlu0 %3279
        %v3281 = vrcp.pop %v3271
        %v3282 = vmul.f32 %v3271, %v3281
        %v3283 = vsub.f32 1.0, %v3282
        %v3284 = vmul.f32 %v3281, %v3283
        %v3285 = vadd.f32 %v3281, %v3284
        %vm3286 = vweird.f32 %v3271
        %vm3287 = vweird.f32 %v3281
        %vm3288 = vmor %vm3286, %vm3287
        %v3289 = vsel %vm3288, %v3281, %v3285
        %v3290 = vand.u32 2147483647, %v3271
        %vm3291 = vcmp.eq.f32.partialorder %v3290, 8.507059e+37
        %v3292 = vand.u32 %v3271, 2147483648
        %v3293 = vor.u32 1.1754944e-38, %v3292
        %v3294 = vsel %vm3291, %v3293, %v3289
        %v3295 = vmul.f32 %v3262, %v3294
        %v3296 = vrcp.pop %v3274
        %v3297 = vmul.f32 %v3274, %v3296
        %v3298 = vsub.f32 1.0, %v3297
        %v3299 = vmul.f32 %v3296, %v3298
        %v3300 = vadd.f32 %v3296, %v3299
        %vm3301 = vweird.f32 %v3274
        %vm3302 = vweird.f32 %v3296
        %vm3303 = vmor %vm3301, %vm3302
        %v3304 = vsel %vm3303, %v3296, %v3300
        %v3305 = vand.u32 2147483647, %v3274
        %vm3306 = vcmp.eq.f32.partialorder %v3305, 8.507059e+37
        %v3307 = vand.u32 %v3274, 2147483648
        %v3308 = vor.u32 1.1754944e-38, %v3307
        %v3309 = vsel %vm3306, %v3308, %v3304
        %v3310 = vmul.f32 %v3264, %v3309
        %v3311 = vrcp.pop %v3277
        %v3312 = vmul.f32 %v3277, %v3311
        %v3313 = vsub.f32 1.0, %v3312
        %v3314 = vmul.f32 %v3311, %v3313
        %v3315 = vadd.f32 %v3311, %v3314
        %vm3316 = vweird.f32 %v3277
        %vm3317 = vweird.f32 %v3311
        %vm3318 = vmor %vm3316, %vm3317
        %v3319 = vsel %vm3318, %v3311, %v3315
        %v3320 = vand.u32 2147483647, %v3277
        %vm3321 = vcmp.eq.f32.partialorder %v3320, 8.507059e+37
        %v3322 = vand.u32 %v3277, 2147483648
        %v3323 = vor.u32 1.1754944e-38, %v3322
        %v3324 = vsel %vm3321, %v3323, %v3319
        %v3325 = vmul.f32 %v3266, %v3324
        %v3326 = vrcp.pop %v3280
        %v3327 = vmul.f32 %v3280, %v3326
        %v3328 = vsub.f32 1.0, %v3327
        %v3329 = vmul.f32 %v3326, %v3328
        %v3330 = vadd.f32 %v3326, %v3329
        %vm3331 = vweird.f32 %v3280
        %vm3332 = vweird.f32 %v3326
        %vm3333 = vmor %vm3331, %vm3332
        %v3334 = vsel %vm3333, %v3326, %v3330
        %v3335 = vand.u32 2147483647, %v3280
        %vm3336 = vcmp.eq.f32.partialorder %v3335, 8.507059e+37
        %v3337 = vand.u32 %v3280, 2147483648
        %v3338 = vor.u32 1.1754944e-38, %v3337
        %v3339 = vsel %vm3336, %v3338, %v3334
        %v3340 = vmul.f32 %v3268, %v3339
        %v3341 = vpack.c.bf16 %v3295, %v3295
        %v3342 = vpack.c.bf16 %v3310, %v3310
        %v3343 = vpack.c.bf16 %v3325, %v3325
        %v3344 = vpack.c.bf16 %v3340, %v3340
        %v3347 = vunpack.c.l.b16 %v3341
        %v3348 = vunpack.c.l.b16 %v3342
        %v3349 = vpack.c.b16 %v3348, %v3347
        %3350 = vrot.lane.b32.xlu0 %v3195, 64
        %v3351 = vpop.permute.xlu0 %3350
        %v3354 = vsel %vm679, %v3349, 0
        %3356 = vmatpush.bf16.msra.mxu0 0
        %3357 = vmatpush.bf16.msra.mxu0 0
        %3358 = vmatpush.bf16.msra.mxu0 0
        %3359 = vmatpush.bf16.msra.mxu0 0
        %3360 = vmatpush.bf16.msra.mxu0 0
        %3361 = vmatpush.bf16.msra.mxu0 0
        %3362 = vmatpush.bf16.msra.mxu0 0
        %3363 = vmatpush.bf16.msra.mxu0 %v3351
        %3364 = vmatmul.bf16.gmra.mxu0 %v3354
        %v3365 = vpop.f32.mrf.mxu0
        %v3366 = vadd.f32 0.0, %v3365
        %v3367 = vpop.f32.mrf.mxu0
        %v3368 = vadd.f32 0.0, %v3367
        %3369 = vdwg.mxu0
        %v3372 = vunpack.c.l.b16 %v3343
        %v3373 = vunpack.c.l.b16 %v3344
        %v3374 = vpack.c.b16 %v3373, %v3372
        %3375 = vrot.lane.b32.xlu0 %v3222, 64
        %v3376 = vpop.permute.xlu0 %3375
        %v3379 = vsel %vm679, %v3374, 0
        %3381 = vmatpush.bf16.msra.mxu0 0
        %3382 = vmatpush.bf16.msra.mxu0 0
        %3383 = vmatpush.bf16.msra.mxu0 0
        %3384 = vmatpush.bf16.msra.mxu0 0
        %3385 = vmatpush.bf16.msra.mxu0 0
        %3386 = vmatpush.bf16.msra.mxu0 0
        %3387 = vmatpush.bf16.msra.mxu0 0
        %3388 = vmatpush.bf16.msra.mxu0 %v3376
        %3389 = vmatmul.bf16.gmra.mxu0 %v3379
        %v3390 = vpop.f32.mrf.mxu0
        %v3391 = vadd.f32 0.0, %v3390
        %v3392 = vpop.f32.mrf.mxu0
        %v3393 = vadd.f32 0.0, %v3392
        %3394 = vdwg.mxu0
        %3395 = vrot.lane.b32.xlu0 %v3195, 120
        %v3396 = vpop.permute.xlu0 %3395
        %3397 = vrot.lane.b32.xlu0 %v3195, 88
        %v3398 = vpop.permute.xlu0 %3397
        %v3400 = vsel %vm631, %v3396, 0
        %v3403 = vsel %vm631, %v3398, 0
        %3405 = vmatpush.bf16.xpose.msra.mxu0 0
        %3406 = vmatpush.bf16.xpose.msra.mxu0 0
        %3407 = vmatpush.bf16.xpose.msra.mxu0 0
        %3408 = vmatpush.bf16.xpose.msra.mxu0 0
        %3409 = vmatpush.bf16.xpose.msra.mxu0 0
        %3410 = vmatpush.bf16.xpose.msra.mxu0 0
        %3411 = vmatpush.bf16.xpose.msra.mxu0 0
        %3412 = vmatpush.bf16.xpose.msra.mxu0 %v3403
        %3413 = vmatmul.bf16.gmra.mxu0 %v3400
        %v3414 = vpop.f32.mrf.mxu0
        %v3415 = vadd.f32 0.0, %v3414
        %v3416 = vpop.f32.mrf.mxu0
        %v3417 = vadd.f32 0.0, %v3416
        %3418 = vdwg.mxu0
        %3419 = vrot.lane.b32.xlu0 %v3222, 120
        %v3420 = vpop.permute.xlu0 %3419
        %3421 = vrot.lane.b32.xlu0 %v3222, 88
        %v3422 = vpop.permute.xlu0 %3421
        %v3424 = vsel %vm631, %v3420, 0
        %v3427 = vsel %vm631, %v3422, 0
        %3429 = vmatpush.bf16.xpose.msra.mxu0 0
        %3430 = vmatpush.bf16.xpose.msra.mxu0 0
        %3431 = vmatpush.bf16.xpose.msra.mxu0 0
        %3432 = vmatpush.bf16.xpose.msra.mxu0 0
        %3433 = vmatpush.bf16.xpose.msra.mxu0 0
        %3434 = vmatpush.bf16.xpose.msra.mxu0 0
        %3435 = vmatpush.bf16.xpose.msra.mxu0 0
        %3436 = vmatpush.bf16.xpose.msra.mxu0 %v3427
        %3437 = vmatmul.bf16.gmra.mxu0 %v3424
        %v3438 = vpop.f32.mrf.mxu0
        %v3439 = vadd.f32 0.0, %v3438
        %v3440 = vpop.f32.mrf.mxu0
        %v3441 = vadd.f32 0.0, %v3440
        %3442 = vdwg.mxu0
        %v3443 = vsel %vm679, %v3415, -inf
        %3444 = vmax.xlane.f32.xlu0 %v3443
        %v3445 = vpop.xlane.xlu0 %3444
        %v3446 = vsel %vm679, %v3417, -inf
        %3447 = vmax.xlane.f32.xlu0 %v3446
        %v3448 = vpop.xlane.xlu0 %3447
        %v3449 = vsel %vm679, %v3439, -inf
        %3450 = vmax.xlane.f32.xlu0 %v3449
        %v3451 = vpop.xlane.xlu0 %3450
        %v3452 = vsel %vm679, %v3441, -inf
        %3453 = vmax.xlane.f32.xlu0 %v3452
        %v3454 = vpop.xlane.xlu0 %3453
        %v3455 = vsub.f32 %v3415, %v3445
        %v3456 = vsub.f32 %v3417, %v3448
        %v3457 = vsub.f32 %v3439, %v3451
        %v3458 = vsub.f32 %v3441, %v3454
        %v3459 = vmul.f32 %v3455, 1.442695
        %v3460 = vpow.pop %v3459
        %v3461 = vmul.f32 %v3456, 1.442695
        %v3462 = vpow.pop %v3461
        %v3463 = vmul.f32 %v3457, 1.442695
        %v3464 = vpow.pop %v3463
        %v3465 = vmul.f32 %v3458, 1.442695
        %v3466 = vpow.pop %v3465
        %v3467 = vsel %vm679, %v3460, 0.0
        %3468 = vadd.xlane.f32.xlu0 %v3467
        %v3469 = vpop.xlane.xlu0 %3468
        %v3470 = vsel %vm679, %v3462, 0.0
        %3471 = vadd.xlane.f32.xlu0 %v3470
        %v3472 = vpop.xlane.xlu0 %3471
        %v3473 = vsel %vm679, %v3464, 0.0
        %3474 = vadd.xlane.f32.xlu0 %v3473
        %v3475 = vpop.xlane.xlu0 %3474
        %v3476 = vsel %vm679, %v3466, 0.0
        %3477 = vadd.xlane.f32.xlu0 %v3476
        %v3478 = vpop.xlane.xlu0 %3477
        %v3479 = vrcp.pop %v3469
        %v3480 = vmul.f32 %v3469, %v3479
        %v3481 = vsub.f32 1.0, %v3480
        %v3482 = vmul.f32 %v3479, %v3481
        %v3483 = vadd.f32 %v3479, %v3482
        %vm3484 = vweird.f32 %v3469
        %vm3485 = vweird.f32 %v3479
        %vm3486 = vmor %vm3484, %vm3485
        %v3487 = vsel %vm3486, %v3479, %v3483
        %v3488 = vand.u32 2147483647, %v3469
        %vm3489 = vcmp.eq.f32.partialorder %v3488, 8.507059e+37
        %v3490 = vand.u32 %v3469, 2147483648
        %v3491 = vor.u32 1.1754944e-38, %v3490
        %v3492 = vsel %vm3489, %v3491, %v3487
        %v3493 = vmul.f32 %v3460, %v3492
        %v3494 = vrcp.pop %v3472
        %v3495 = vmul.f32 %v3472, %v3494
        %v3496 = vsub.f32 1.0, %v3495
        %v3497 = vmul.f32 %v3494, %v3496
        %v3498 = vadd.f32 %v3494, %v3497
        %vm3499 = vweird.f32 %v3472
        %vm3500 = vweird.f32 %v3494
        %vm3501 = vmor %vm3499, %vm3500
        %v3502 = vsel %vm3501, %v3494, %v3498
        %v3503 = vand.u32 2147483647, %v3472
        %vm3504 = vcmp.eq.f32.partialorder %v3503, 8.507059e+37
        %v3505 = vand.u32 %v3472, 2147483648
        %v3506 = vor.u32 1.1754944e-38, %v3505
        %v3507 = vsel %vm3504, %v3506, %v3502
        %v3508 = vmul.f32 %v3462, %v3507
        %v3509 = vrcp.pop %v3475
        %v3510 = vmul.f32 %v3475, %v3509
        %v3511 = vsub.f32 1.0, %v3510
        %v3512 = vmul.f32 %v3509, %v3511
        %v3513 = vadd.f32 %v3509, %v3512
        %vm3514 = vweird.f32 %v3475
        %vm3515 = vweird.f32 %v3509
        %vm3516 = vmor %vm3514, %vm3515
        %v3517 = vsel %vm3516, %v3509, %v3513
        %v3518 = vand.u32 2147483647, %v3475
        %vm3519 = vcmp.eq.f32.partialorder %v3518, 8.507059e+37
        %v3520 = vand.u32 %v3475, 2147483648
        %v3521 = vor.u32 1.1754944e-38, %v3520
        %v3522 = vsel %vm3519, %v3521, %v3517
        %v3523 = vmul.f32 %v3464, %v3522
        %v3524 = vrcp.pop %v3478
        %v3525 = vmul.f32 %v3478, %v3524
        %v3526 = vsub.f32 1.0, %v3525
        %v3527 = vmul.f32 %v3524, %v3526
        %v3528 = vadd.f32 %v3524, %v3527
        %vm3529 = vweird.f32 %v3478
        %vm3530 = vweird.f32 %v3524
        %vm3531 = vmor %vm3529, %vm3530
        %v3532 = vsel %vm3531, %v3524, %v3528
        %v3533 = vand.u32 2147483647, %v3478
        %vm3534 = vcmp.eq.f32.partialorder %v3533, 8.507059e+37
        %v3535 = vand.u32 %v3478, 2147483648
        %v3536 = vor.u32 1.1754944e-38, %v3535
        %v3537 = vsel %vm3534, %v3536, %v3532
        %v3538 = vmul.f32 %v3466, %v3537
        %v3539 = vpack.c.bf16 %v3493, %v3493
        %v3540 = vpack.c.bf16 %v3508, %v3508
        %v3541 = vpack.c.bf16 %v3523, %v3523
        %v3542 = vpack.c.bf16 %v3538, %v3538
        %v3545 = vunpack.c.l.b16 %v3539
        %v3546 = vunpack.c.l.b16 %v3540
        %v3547 = vpack.c.b16 %v3546, %v3545
        %3548 = vrot.lane.b32.xlu0 %v3195, 56
        %v3549 = vpop.permute.xlu0 %3548
        %v3552 = vsel %vm679, %v3547, 0
        %3554 = vmatpush.bf16.msra.mxu0 0
        %3555 = vmatpush.bf16.msra.mxu0 0
        %3556 = vmatpush.bf16.msra.mxu0 0
        %3557 = vmatpush.bf16.msra.mxu0 0
        %3558 = vmatpush.bf16.msra.mxu0 0
        %3559 = vmatpush.bf16.msra.mxu0 0
        %3560 = vmatpush.bf16.msra.mxu0 0
        %3561 = vmatpush.bf16.msra.mxu0 %v3549
        %3562 = vmatmul.bf16.gmra.mxu0 %v3552
        %v3563 = vpop.f32.mrf.mxu0
        %v3564 = vadd.f32 0.0, %v3563
        %v3565 = vpop.f32.mrf.mxu0
        %v3566 = vadd.f32 0.0, %v3565
        %3567 = vdwg.mxu0
        %v3570 = vunpack.c.l.b16 %v3541
        %v3571 = vunpack.c.l.b16 %v3542
        %v3572 = vpack.c.b16 %v3571, %v3570
        %3573 = vrot.lane.b32.xlu0 %v3222, 56
        %v3574 = vpop.permute.xlu0 %3573
        %v3577 = vsel %vm679, %v3572, 0
        %3579 = vmatpush.bf16.msra.mxu0 0
        %3580 = vmatpush.bf16.msra.mxu0 0
        %3581 = vmatpush.bf16.msra.mxu0 0
        %3582 = vmatpush.bf16.msra.mxu0 0
        %3583 = vmatpush.bf16.msra.mxu0 0
        %3584 = vmatpush.bf16.msra.mxu0 0
        %3585 = vmatpush.bf16.msra.mxu0 0
        %3586 = vmatpush.bf16.msra.mxu0 %v3574
        %3587 = vmatmul.bf16.gmra.mxu0 %v3577
        %v3588 = vpop.f32.mrf.mxu0
        %v3589 = vadd.f32 0.0, %v3588
        %v3590 = vpop.f32.mrf.mxu0
        %v3591 = vadd.f32 0.0, %v3590
        %3592 = vdwg.mxu0
        %3593 = vrot.lane.b32.xlu0 %v3195, 112
        %v3594 = vpop.permute.xlu0 %3593
        %3595 = vrot.lane.b32.xlu0 %v3195, 80
        %v3596 = vpop.permute.xlu0 %3595
        %v3598 = vsel %vm631, %v3594, 0
        %v3601 = vsel %vm631, %v3596, 0
        %3603 = vmatpush.bf16.xpose.msra.mxu0 0
        %3604 = vmatpush.bf16.xpose.msra.mxu0 0
        %3605 = vmatpush.bf16.xpose.msra.mxu0 0
        %3606 = vmatpush.bf16.xpose.msra.mxu0 0
        %3607 = vmatpush.bf16.xpose.msra.mxu0 0
        %3608 = vmatpush.bf16.xpose.msra.mxu0 0
        %3609 = vmatpush.bf16.xpose.msra.mxu0 0
        %3610 = vmatpush.bf16.xpose.msra.mxu0 %v3601
        %3611 = vmatmul.bf16.gmra.mxu0 %v3598
        %v3612 = vpop.f32.mrf.mxu0
        %v3613 = vadd.f32 0.0, %v3612
        %v3614 = vpop.f32.mrf.mxu0
        %v3615 = vadd.f32 0.0, %v3614
        %3616 = vdwg.mxu0
        %3617 = vrot.lane.b32.xlu0 %v3222, 112
        %v3618 = vpop.permute.xlu0 %3617
        %3619 = vrot.lane.b32.xlu0 %v3222, 80
        %v3620 = vpop.permute.xlu0 %3619
        %v3622 = vsel %vm631, %v3618, 0
        %v3625 = vsel %vm631, %v3620, 0
        %3627 = vmatpush.bf16.xpose.msra.mxu0 0
        %3628 = vmatpush.bf16.xpose.msra.mxu0 0
        %3629 = vmatpush.bf16.xpose.msra.mxu0 0
        %3630 = vmatpush.bf16.xpose.msra.mxu0 0
        %3631 = vmatpush.bf16.xpose.msra.mxu0 0
        %3632 = vmatpush.bf16.xpose.msra.mxu0 0
        %3633 = vmatpush.bf16.xpose.msra.mxu0 0
        %3634 = vmatpush.bf16.xpose.msra.mxu0 %v3625
        %3635 = vmatmul.bf16.gmra.mxu0 %v3622
        %v3636 = vpop.f32.mrf.mxu0
        %v3637 = vadd.f32 0.0, %v3636
        %v3638 = vpop.f32.mrf.mxu0
        %v3639 = vadd.f32 0.0, %v3638
        %3640 = vdwg.mxu0
        %v3641 = vsel %vm679, %v3613, -inf
        %3642 = vmax.xlane.f32.xlu0 %v3641
        %v3643 = vpop.xlane.xlu0 %3642
        %v3644 = vsel %vm679, %v3615, -inf
        %3645 = vmax.xlane.f32.xlu0 %v3644
        %v3646 = vpop.xlane.xlu0 %3645
        %v3647 = vsel %vm679, %v3637, -inf
        %3648 = vmax.xlane.f32.xlu0 %v3647
        %v3649 = vpop.xlane.xlu0 %3648
        %v3650 = vsel %vm679, %v3639, -inf
        %3651 = vmax.xlane.f32.xlu0 %v3650
        %v3652 = vpop.xlane.xlu0 %3651
        %v3653 = vsub.f32 %v3613, %v3643
        %v3654 = vsub.f32 %v3615, %v3646
        %v3655 = vsub.f32 %v3637, %v3649
        %v3656 = vsub.f32 %v3639, %v3652
        %v3657 = vmul.f32 %v3653, 1.442695
        %v3658 = vpow.pop %v3657
        %v3659 = vmul.f32 %v3654, 1.442695
        %v3660 = vpow.pop %v3659
        %v3661 = vmul.f32 %v3655, 1.442695
        %v3662 = vpow.pop %v3661
        %v3663 = vmul.f32 %v3656, 1.442695
        %v3664 = vpow.pop %v3663
        %v3665 = vsel %vm679, %v3658, 0.0
        %3666 = vadd.xlane.f32.xlu0 %v3665
        %v3667 = vpop.xlane.xlu0 %3666
        %v3668 = vsel %vm679, %v3660, 0.0
        %3669 = vadd.xlane.f32.xlu0 %v3668
        %v3670 = vpop.xlane.xlu0 %3669
        %v3671 = vsel %vm679, %v3662, 0.0
        %3672 = vadd.xlane.f32.xlu0 %v3671
        %v3673 = vpop.xlane.xlu0 %3672
        %v3674 = vsel %vm679, %v3664, 0.0
        %3675 = vadd.xlane.f32.xlu0 %v3674
        %v3676 = vpop.xlane.xlu0 %3675
        %v3677 = vrcp.pop %v3667
        %v3678 = vmul.f32 %v3667, %v3677
        %v3679 = vsub.f32 1.0, %v3678
        %v3680 = vmul.f32 %v3677, %v3679
        %v3681 = vadd.f32 %v3677, %v3680
        %vm3682 = vweird.f32 %v3667
        %vm3683 = vweird.f32 %v3677
        %vm3684 = vmor %vm3682, %vm3683
        %v3685 = vsel %vm3684, %v3677, %v3681
        %v3686 = vand.u32 2147483647, %v3667
        %vm3687 = vcmp.eq.f32.partialorder %v3686, 8.507059e+37
        %v3688 = vand.u32 %v3667, 2147483648
        %v3689 = vor.u32 1.1754944e-38, %v3688
        %v3690 = vsel %vm3687, %v3689, %v3685
        %v3691 = vmul.f32 %v3658, %v3690
        %v3692 = vrcp.pop %v3670
        %v3693 = vmul.f32 %v3670, %v3692
        %v3694 = vsub.f32 1.0, %v3693
        %v3695 = vmul.f32 %v3692, %v3694
        %v3696 = vadd.f32 %v3692, %v3695
        %vm3697 = vweird.f32 %v3670
        %vm3698 = vweird.f32 %v3692
        %vm3699 = vmor %vm3697, %vm3698
        %v3700 = vsel %vm3699, %v3692, %v3696
        %v3701 = vand.u32 2147483647, %v3670
        %vm3702 = vcmp.eq.f32.partialorder %v3701, 8.507059e+37
        %v3703 = vand.u32 %v3670, 2147483648
        %v3704 = vor.u32 1.1754944e-38, %v3703
        %v3705 = vsel %vm3702, %v3704, %v3700
        %v3706 = vmul.f32 %v3660, %v3705
        %v3707 = vrcp.pop %v3673
        %v3708 = vmul.f32 %v3673, %v3707
        %v3709 = vsub.f32 1.0, %v3708
        %v3710 = vmul.f32 %v3707, %v3709
        %v3711 = vadd.f32 %v3707, %v3710
        %vm3712 = vweird.f32 %v3673
        %vm3713 = vweird.f32 %v3707
        %vm3714 = vmor %vm3712, %vm3713
        %v3715 = vsel %vm3714, %v3707, %v3711
        %v3716 = vand.u32 2147483647, %v3673
        %vm3717 = vcmp.eq.f32.partialorder %v3716, 8.507059e+37
        %v3718 = vand.u32 %v3673, 2147483648
        %v3719 = vor.u32 1.1754944e-38, %v3718
        %v3720 = vsel %vm3717, %v3719, %v3715
        %v3721 = vmul.f32 %v3662, %v3720
        %v3722 = vrcp.pop %v3676
        %v3723 = vmul.f32 %v3676, %v3722
        %v3724 = vsub.f32 1.0, %v3723
        %v3725 = vmul.f32 %v3722, %v3724
        %v3726 = vadd.f32 %v3722, %v3725
        %vm3727 = vweird.f32 %v3676
        %vm3728 = vweird.f32 %v3722
        %vm3729 = vmor %vm3727, %vm3728
        %v3730 = vsel %vm3729, %v3722, %v3726
        %v3731 = vand.u32 2147483647, %v3676
        %vm3732 = vcmp.eq.f32.partialorder %v3731, 8.507059e+37
        %v3733 = vand.u32 %v3676, 2147483648
        %v3734 = vor.u32 1.1754944e-38, %v3733
        %v3735 = vsel %vm3732, %v3734, %v3730
        %v3736 = vmul.f32 %v3664, %v3735
        %v3737 = vpack.c.bf16 %v3691, %v3691
        %v3738 = vpack.c.bf16 %v3706, %v3706
        %v3739 = vpack.c.bf16 %v3721, %v3721
        %v3740 = vpack.c.bf16 %v3736, %v3736
        %v3743 = vunpack.c.l.b16 %v3737
        %v3744 = vunpack.c.l.b16 %v3738
        %v3745 = vpack.c.b16 %v3744, %v3743
        %3746 = vrot.lane.b32.xlu0 %v3195, 48
        %v3747 = vpop.permute.xlu0 %3746
        %v3750 = vsel %vm679, %v3745, 0
        %3752 = vmatpush.bf16.msra.mxu0 0
        %3753 = vmatpush.bf16.msra.mxu0 0
        %3754 = vmatpush.bf16.msra.mxu0 0
        %3755 = vmatpush.bf16.msra.mxu0 0
        %3756 = vmatpush.bf16.msra.mxu0 0
        %3757 = vmatpush.bf16.msra.mxu0 0
        %3758 = vmatpush.bf16.msra.mxu0 0
        %3759 = vmatpush.bf16.msra.mxu0 %v3747
        %3760 = vmatmul.bf16.gmra.mxu0 %v3750
        %v3761 = vpop.f32.mrf.mxu0
        %v3762 = vadd.f32 0.0, %v3761
        %v3763 = vpop.f32.mrf.mxu0
        %v3764 = vadd.f32 0.0, %v3763
        %3765 = vdwg.mxu0
        %v3768 = vunpack.c.l.b16 %v3739
        %v3769 = vunpack.c.l.b16 %v3740
        %v3770 = vpack.c.b16 %v3769, %v3768
        %3771 = vrot.lane.b32.xlu0 %v3222, 48
        %v3772 = vpop.permute.xlu0 %3771
        %v3775 = vsel %vm679, %v3770, 0
        %3777 = vmatpush.bf16.msra.mxu0 0
        %3778 = vmatpush.bf16.msra.mxu0 0
        %3779 = vmatpush.bf16.msra.mxu0 0
        %3780 = vmatpush.bf16.msra.mxu0 0
        %3781 = vmatpush.bf16.msra.mxu0 0
        %3782 = vmatpush.bf16.msra.mxu0 0
        %3783 = vmatpush.bf16.msra.mxu0 0
        %3784 = vmatpush.bf16.msra.mxu0 %v3772
        %3785 = vmatmul.bf16.gmra.mxu0 %v3775
        %v3786 = vpop.f32.mrf.mxu0
        %v3787 = vadd.f32 0.0, %v3786
        %v3788 = vpop.f32.mrf.mxu0
        %v3789 = vadd.f32 0.0, %v3788
        %3790 = vdwg.mxu0
        %3791 = vrot.lane.b32.xlu0 %v3195, 104
        %v3792 = vpop.permute.xlu0 %3791
        %3793 = vrot.lane.b32.xlu0 %v3195, 72
        %v3794 = vpop.permute.xlu0 %3793
        %v3796 = vsel %vm631, %v3792, 0
        %v3799 = vsel %vm631, %v3794, 0
        %3801 = vmatpush.bf16.xpose.msra.mxu0 0
        %3802 = vmatpush.bf16.xpose.msra.mxu0 0
        %3803 = vmatpush.bf16.xpose.msra.mxu0 0
        %3804 = vmatpush.bf16.xpose.msra.mxu0 0
        %3805 = vmatpush.bf16.xpose.msra.mxu0 0
        %3806 = vmatpush.bf16.xpose.msra.mxu0 0
        %3807 = vmatpush.bf16.xpose.msra.mxu0 0
        %3808 = vmatpush.bf16.xpose.msra.mxu0 %v3799
        %3809 = vmatmul.bf16.gmra.mxu0 %v3796
        %v3810 = vpop.f32.mrf.mxu0
        %v3811 = vadd.f32 0.0, %v3810
        %v3812 = vpop.f32.mrf.mxu0
        %v3813 = vadd.f32 0.0, %v3812
        %3814 = vdwg.mxu0
        %3815 = vrot.lane.b32.xlu0 %v3222, 104
        %v3816 = vpop.permute.xlu0 %3815
        %3817 = vrot.lane.b32.xlu0 %v3222, 72
        %v3818 = vpop.permute.xlu0 %3817
        %v3820 = vsel %vm631, %v3816, 0
        %v3823 = vsel %vm631, %v3818, 0
        %3825 = vmatpush.bf16.xpose.msra.mxu0 0
        %3826 = vmatpush.bf16.xpose.msra.mxu0 0
        %3827 = vmatpush.bf16.xpose.msra.mxu0 0
        %3828 = vmatpush.bf16.xpose.msra.mxu0 0
        %3829 = vmatpush.bf16.xpose.msra.mxu0 0
        %3830 = vmatpush.bf16.xpose.msra.mxu0 0
        %3831 = vmatpush.bf16.xpose.msra.mxu0 0
        %3832 = vmatpush.bf16.xpose.msra.mxu0 %v3823
        %3833 = vmatmul.bf16.gmra.mxu0 %v3820
        %v3834 = vpop.f32.mrf.mxu0
        %v3835 = vadd.f32 0.0, %v3834
        %v3836 = vpop.f32.mrf.mxu0
        %v3837 = vadd.f32 0.0, %v3836
        %3838 = vdwg.mxu0
        %v3839 = vsel %vm679, %v3811, -inf
        %3840 = vmax.xlane.f32.xlu0 %v3839
        %v3841 = vpop.xlane.xlu0 %3840
        %v3842 = vsel %vm679, %v3813, -inf
        %3843 = vmax.xlane.f32.xlu0 %v3842
        %v3844 = vpop.xlane.xlu0 %3843
        %v3845 = vsel %vm679, %v3835, -inf
        %3846 = vmax.xlane.f32.xlu0 %v3845
        %v3847 = vpop.xlane.xlu0 %3846
        %v3848 = vsel %vm679, %v3837, -inf
        %3849 = vmax.xlane.f32.xlu0 %v3848
        %v3850 = vpop.xlane.xlu0 %3849
        %v3851 = vsub.f32 %v3811, %v3841
        %v3852 = vsub.f32 %v3813, %v3844
        %v3853 = vsub.f32 %v3835, %v3847
        %v3854 = vsub.f32 %v3837, %v3850
        %v3855 = vmul.f32 %v3851, 1.442695
        %v3856 = vpow.pop %v3855
        %v3857 = vmul.f32 %v3852, 1.442695
        %v3858 = vpow.pop %v3857
        %v3859 = vmul.f32 %v3853, 1.442695
        %v3860 = vpow.pop %v3859
        %v3861 = vmul.f32 %v3854, 1.442695
        %v3862 = vpow.pop %v3861
        %v3863 = vsel %vm679, %v3856, 0.0
        %3864 = vadd.xlane.f32.xlu0 %v3863
        %v3865 = vpop.xlane.xlu0 %3864
        %v3866 = vsel %vm679, %v3858, 0.0
        %3867 = vadd.xlane.f32.xlu0 %v3866
        %v3868 = vpop.xlane.xlu0 %3867
        %v3869 = vsel %vm679, %v3860, 0.0
        %3870 = vadd.xlane.f32.xlu0 %v3869
        %v3871 = vpop.xlane.xlu0 %3870
        %v3872 = vsel %vm679, %v3862, 0.0
        %3873 = vadd.xlane.f32.xlu0 %v3872
        %v3874 = vpop.xlane.xlu0 %3873
        %v3875 = vrcp.pop %v3865
        %v3876 = vmul.f32 %v3865, %v3875
        %v3877 = vsub.f32 1.0, %v3876
        %v3878 = vmul.f32 %v3875, %v3877
        %v3879 = vadd.f32 %v3875, %v3878
        %vm3880 = vweird.f32 %v3865
        %vm3881 = vweird.f32 %v3875
        %vm3882 = vmor %vm3880, %vm3881
        %v3883 = vsel %vm3882, %v3875, %v3879
        %v3884 = vand.u32 2147483647, %v3865
        %vm3885 = vcmp.eq.f32.partialorder %v3884, 8.507059e+37
        %v3886 = vand.u32 %v3865, 2147483648
        %v3887 = vor.u32 1.1754944e-38, %v3886
        %v3888 = vsel %vm3885, %v3887, %v3883
        %v3889 = vmul.f32 %v3856, %v3888
        %v3890 = vrcp.pop %v3868
        %v3891 = vmul.f32 %v3868, %v3890
        %v3892 = vsub.f32 1.0, %v3891
        %v3893 = vmul.f32 %v3890, %v3892
        %v3894 = vadd.f32 %v3890, %v3893
        %vm3895 = vweird.f32 %v3868
        %vm3896 = vweird.f32 %v3890
        %vm3897 = vmor %vm3895, %vm3896
        %v3898 = vsel %vm3897, %v3890, %v3894
        %v3899 = vand.u32 2147483647, %v3868
        %vm3900 = vcmp.eq.f32.partialorder %v3899, 8.507059e+37
        %v3901 = vand.u32 %v3868, 2147483648
        %v3902 = vor.u32 1.1754944e-38, %v3901
        %v3903 = vsel %vm3900, %v3902, %v3898
        %v3904 = vmul.f32 %v3858, %v3903
        %v3905 = vrcp.pop %v3871
        %v3906 = vmul.f32 %v3871, %v3905
        %v3907 = vsub.f32 1.0, %v3906
        %v3908 = vmul.f32 %v3905, %v3907
        %v3909 = vadd.f32 %v3905, %v3908
        %vm3910 = vweird.f32 %v3871
        %vm3911 = vweird.f32 %v3905
        %vm3912 = vmor %vm3910, %vm3911
        %v3913 = vsel %vm3912, %v3905, %v3909
        %v3914 = vand.u32 2147483647, %v3871
        %vm3915 = vcmp.eq.f32.partialorder %v3914, 8.507059e+37
        %v3916 = vand.u32 %v3871, 2147483648
        %v3917 = vor.u32 1.1754944e-38, %v3916
        %v3918 = vsel %vm3915, %v3917, %v3913
        %v3919 = vmul.f32 %v3860, %v3918
        %v3920 = vrcp.pop %v3874
        %v3921 = vmul.f32 %v3874, %v3920
        %v3922 = vsub.f32 1.0, %v3921
        %v3923 = vmul.f32 %v3920, %v3922
        %v3924 = vadd.f32 %v3920, %v3923
        %vm3925 = vweird.f32 %v3874
        %vm3926 = vweird.f32 %v3920
        %vm3927 = vmor %vm3925, %vm3926
        %v3928 = vsel %vm3927, %v3920, %v3924
        %v3929 = vand.u32 2147483647, %v3874
        %vm3930 = vcmp.eq.f32.partialorder %v3929, 8.507059e+37
        %v3931 = vand.u32 %v3874, 2147483648
        %v3932 = vor.u32 1.1754944e-38, %v3931
        %v3933 = vsel %vm3930, %v3932, %v3928
        %v3934 = vmul.f32 %v3862, %v3933
        %v3935 = vpack.c.bf16 %v3889, %v3889
        %v3936 = vpack.c.bf16 %v3904, %v3904
        %v3937 = vpack.c.bf16 %v3919, %v3919
        %v3938 = vpack.c.bf16 %v3934, %v3934
        %v3941 = vunpack.c.l.b16 %v3935
        %v3942 = vunpack.c.l.b16 %v3936
        %v3943 = vpack.c.b16 %v3942, %v3941
        %3944 = vrot.lane.b32.xlu0 %v3195, 40
        %v3945 = vpop.permute.xlu0 %3944
        %v3948 = vsel %vm679, %v3943, 0
        %3950 = vmatpush.bf16.msra.mxu0 0
        %3951 = vmatpush.bf16.msra.mxu0 0
        %3952 = vmatpush.bf16.msra.mxu0 0
        %3953 = vmatpush.bf16.msra.mxu0 0
        %3954 = vmatpush.bf16.msra.mxu0 0
        %3955 = vmatpush.bf16.msra.mxu0 0
        %3956 = vmatpush.bf16.msra.mxu0 0
        %3957 = vmatpush.bf16.msra.mxu0 %v3945
        %3958 = vmatmul.bf16.gmra.mxu0 %v3948
        %v3959 = vpop.f32.mrf.mxu0
        %v3960 = vadd.f32 0.0, %v3959
        %v3961 = vpop.f32.mrf.mxu0
        %v3962 = vadd.f32 0.0, %v3961
        %3963 = vdwg.mxu0
        %v3966 = vunpack.c.l.b16 %v3937
        %v3967 = vunpack.c.l.b16 %v3938
        %v3968 = vpack.c.b16 %v3967, %v3966
        %3969 = vrot.lane.b32.xlu0 %v3222, 40
        %v3970 = vpop.permute.xlu0 %3969
        %v3973 = vsel %vm679, %v3968, 0
        %3975 = vmatpush.bf16.msra.mxu0 0
        %3976 = vmatpush.bf16.msra.mxu0 0
        %3977 = vmatpush.bf16.msra.mxu0 0
        %3978 = vmatpush.bf16.msra.mxu0 0
        %3979 = vmatpush.bf16.msra.mxu0 0
        %3980 = vmatpush.bf16.msra.mxu0 0
        %3981 = vmatpush.bf16.msra.mxu0 0
        %3982 = vmatpush.bf16.msra.mxu0 %v3970
        %3983 = vmatmul.bf16.gmra.mxu0 %v3973
        %v3984 = vpop.f32.mrf.mxu0
        %v3985 = vadd.f32 0.0, %v3984
        %v3986 = vpop.f32.mrf.mxu0
        %v3987 = vadd.f32 0.0, %v3986
        %3988 = vdwg.mxu0
        %3993 = vrot.lane.b32.xlu0 %v3564, 8
        %v3994 = vpop.permute.xlu0 %3993
        %3995 = vrot.lane.b32.xlu0 %v3566, 8
        %v3996 = vpop.permute.xlu0 %3995
        %3997 = vrot.lane.b32.xlu0 %v3589, 8
        %v3998 = vpop.permute.xlu0 %3997
        %3999 = vrot.lane.b32.xlu0 %v3591, 8
        %v4000 = vpop.permute.xlu0 %3999
        %4009 = vrot.lane.b32.xlu0 %v3762, 16
        %v4010 = vpop.permute.xlu0 %4009
        %4011 = vrot.lane.b32.xlu0 %v3764, 16
        %v4012 = vpop.permute.xlu0 %4011
        %4013 = vrot.lane.b32.xlu0 %v3787, 16
        %v4014 = vpop.permute.xlu0 %4013
        %4015 = vrot.lane.b32.xlu0 %v3789, 16
        %v4016 = vpop.permute.xlu0 %4015
        %4025 = vrot.lane.b32.xlu0 %v3960, 24
        %v4026 = vpop.permute.xlu0 %4025
        %4027 = vrot.lane.b32.xlu0 %v3962, 24
        %v4028 = vpop.permute.xlu0 %4027
        %4029 = vrot.lane.b32.xlu0 %v3985, 24
        %v4030 = vpop.permute.xlu0 %4029
        %4031 = vrot.lane.b32.xlu0 %v3987, 24
        %v4032 = vpop.permute.xlu0 %4031
        %v4037 = vsel %vm631, %v3366, %v3994
        %v4038 = vsel %vm631, %v3368, %v3996
        %v4039 = vsel %vm631, %v3391, %v3998
        %v4040 = vsel %vm631, %v3393, %v4000
        %v4041 = vsel %vm679, %v4037, %v4010
        %v4042 = vsel %vm679, %v4038, %v4012
        %v4043 = vsel %vm679, %v4039, %v4014
        %v4044 = vsel %vm679, %v4040, %v4016
        %v4045 = vsel %vm1480, %v4041, %v4026
        %v4046 = vsel %vm1480, %v4042, %v4028
        %v4047 = vsel %vm1480, %v4043, %v4030
        %v4048 = vsel %vm1480, %v4044, %v4032
        %v4049 = vpack.c.bf16 %v4046, %v4045
        %v4050 = vpack.c.bf16 %v4048, %v4047
        %v4052 = vperm.slane %v3186, 0
        %v4058 = vunpack.c.l.b16 %v3181
        %v4059 = vunpack.c.l.b16 %v3182
        %v4060 = vunpack.c.l.b16 %v3183
        %v4061 = vunpack.c.l.b16 %v3184
        %v4062 = vpack.c.b16 %v4059, %v4058
        %v4063 = vpack.c.b16 %v4061, %v4060
        %v4067 = vsel %vm463, %v4049, 0
        %v4070 = vsel %vm463, %v4050, 0
        %4072 = vmatpush.bf16.msra.mxu0 0
        %4073 = vmatpush.bf16.msra.mxu0 0
        %4074 = vmatpush.bf16.msra.mxu0 0
        %4075 = vmatpush.bf16.msra.mxu0 0
        %4076 = vmatpush.bf16.msra.mxu0 0
        %4077 = vmatpush.bf16.msra.mxu0 0
        %4078 = vmatpush.bf16.msra.mxu0 %v4063
        %4079 = vmatpush.bf16.msra.mxu0 %v4062
        %4080 = vmatmul.bf16.gmra.mxu0 %v4067
        %v4081 = vpop.f32.mrf.mxu0
        %v4082 = vadd.f32 %v4052, %v4081
        %v4083 = vpop.f32.mrf.mxu0
        %v4084 = vadd.f32 %v4052, %v4083
        %4085 = vmatmul.bf16.gmra.mxu0 %v4070
        %v4086 = vpop.f32.mrf.mxu0
        %v4087 = vadd.f32 %v4052, %v4086
        %v4088 = vpop.f32.mrf.mxu0
        %v4089 = vadd.f32 %v4052, %v4088
        %4090 = vdwg.mxu0
        %v4091 = vadd.f32 %v3021, %v4082
        %v4092 = vadd.f32 %v3022, %v4084
        %v4093 = vadd.f32 %v3023, %v4087
        %v4094 = vadd.f32 %v3024, %v4089
        %v4095 = vsel %vm463, %v4091, 0.0
        %4096 = vadd.xlane.f32.xlu0 %v4095
        %v4097 = vpop.xlane.xlu0 %4096
        %v4098 = vsel %vm463, %v4093, 0.0
        %4099 = vadd.xlane.f32.xlu0 %v4098
        %v4100 = vpop.xlane.xlu0 %4099
        %v4101 = vmul.f32 %v4097, %v482
        %v4102 = vmul.f32 %v4100, %v482
        %v4103 = vsub.f32 %v4091, %v4101
        %v4104 = vsub.f32 %v4093, %v4102
        %v4105 = vmul.f32 %v4103, %v4103
        %v4106 = vmul.f32 %v4104, %v4104
        %v4107 = vsel %vm463, %v4105, 0.0
        %4108 = vadd.xlane.f32.xlu0 %v4107
        %v4109 = vpop.xlane.xlu0 %4108
        %v4110 = vsel %vm463, %v4106, 0.0
        %4111 = vadd.xlane.f32.xlu0 %v4110
        %v4112 = vpop.xlane.xlu0 %4111
        %v4113 = vmul.f32 %v4109, %v482
        %v4114 = vmul.f32 %v4112, %v482
        %v4115 = vadd.f32 %v4113, 1e-06
        %v4116 = vadd.f32 %v4114, 1e-06
        %v4117 = vrsqrt.pop %v4115
        %v4118 = vmul.f32 %v4117, %v4115
        %v4119 = vmul.f32 %v4118, %v4117
        %v4120 = vmul.f32 0.5, %v4119
        %v4121 = vsub.f32 1.5, %v4120
        %v4122 = vmul.f32 %v4117, %v4121
        %vm4123 = vweird.f32 %v4115
        %vm4124 = vweird.f32 %v4117
        %vm4125 = vmor %vm4123, %vm4124
        %v4126 = vsel %vm4125, %v4117, %v4122
        %v4127 = vrsqrt.pop %v4116
        %v4128 = vmul.f32 %v4127, %v4116
        %v4129 = vmul.f32 %v4128, %v4127
        %v4130 = vmul.f32 0.5, %v4129
        %v4131 = vsub.f32 1.5, %v4130
        %v4132 = vmul.f32 %v4127, %v4131
        %vm4133 = vweird.f32 %v4116
        %vm4134 = vweird.f32 %v4127
        %vm4135 = vmor %vm4133, %vm4134
        %v4136 = vsel %vm4135, %v4127, %v4132
        %v4137 = vmul.f32 %v4103, %v4126
        %v4138 = vmul.f32 %v4104, %v4136
        %v4139 = vmul.f32 %v4137, %v3125
        %v4140 = vmul.f32 %v4138, %v3125
        %v4141 = vadd.f32 %v4139, %v3132
        %v4142 = vadd.f32 %v4140, %v3132
        %v4143 = vsel %vm463, %v4092, 0.0
        %4144 = vadd.xlane.f32.xlu0 %v4143
        %v4145 = vpop.xlane.xlu0 %4144
        %v4146 = vsel %vm463, %v4094, 0.0
        %4147 = vadd.xlane.f32.xlu0 %v4146
        %v4148 = vpop.xlane.xlu0 %4147
        %v4149 = vmul.f32 %v4145, %v482
        %v4150 = vmul.f32 %v4148, %v482
        %v4151 = vsub.f32 %v4092, %v4149
        %v4152 = vsub.f32 %v4094, %v4150
        %v4153 = vmul.f32 %v4151, %v4151
        %v4154 = vmul.f32 %v4152, %v4152
        %v4155 = vsel %vm463, %v4153, 0.0
        %4156 = vadd.xlane.f32.xlu0 %v4155
        %v4157 = vpop.xlane.xlu0 %4156
        %v4158 = vsel %vm463, %v4154, 0.0
        %4159 = vadd.xlane.f32.xlu0 %v4158
        %v4160 = vpop.xlane.xlu0 %4159
        %v4161 = vmul.f32 %v4157, %v482
        %v4162 = vmul.f32 %v4160, %v482
        %v4163 = vadd.f32 %v4161, 1e-06
        %v4164 = vadd.f32 %v4162, 1e-06
        %v4165 = vrsqrt.pop %v4163
        %v4166 = vmul.f32 %v4165, %v4163
        %v4167 = vmul.f32 %v4166, %v4165
        %v4168 = vmul.f32 0.5, %v4167
        %v4169 = vsub.f32 1.5, %v4168
        %v4170 = vmul.f32 %v4165, %v4169
        %vm4171 = vweird.f32 %v4163
        %vm4172 = vweird.f32 %v4165
        %vm4173 = vmor %vm4171, %vm4172
        %v4174 = vsel %vm4173, %v4165, %v4170
        %v4175 = vrsqrt.pop %v4164
        %v4176 = vmul.f32 %v4175, %v4164
        %v4177 = vmul.f32 %v4176, %v4175
        %v4178 = vmul.f32 0.5, %v4177
        %v4179 = vsub.f32 1.5, %v4178
        %v4180 = vmul.f32 %v4175, %v4179
        %vm4181 = vweird.f32 %v4164
        %vm4182 = vweird.f32 %v4175
        %vm4183 = vmor %vm4181, %vm4182
        %v4184 = vsel %vm4183, %v4175, %v4180
        %v4185 = vmul.f32 %v4151, %v4174
        %v4186 = vmul.f32 %v4152, %v4184
        %v4187 = vmul.f32 %v4185, %v3125
        %v4188 = vmul.f32 %v4186, %v3125
        %v4189 = vadd.f32 %v4187, %v3132
        %v4190 = vadd.f32 %v4188, %v3132
        %s4191 = scalar_lea.vmem [#allocation6], 48
        %v4192 = vld [vmem:[%s4191] sm:$0xf]
        %v4193 = vld [vmem:[%s4191 + $0x4] sm:$0xf]
        %v4194 = vld [vmem:[%s4191 + $0x8] sm:$0xf]
        %v4195 = vld [vmem:[%s4191 + $0xc] sm:$0xf]
        %s4196 = scalar_lea.vmem [#allocation8], 3
        %v4197 = vld [vmem:[%s4196] sm:$0x1]
        %s4198 = scalar_lea.vmem [#allocation9], 48
        %v4199 = vld [vmem:[%s4198] sm:$0xf]
        %v4200 = vld [vmem:[%s4198 + $0x4] sm:$0xf]
        %v4201 = vld [vmem:[%s4198 + $0x8] sm:$0xf]
        %v4202 = vld [vmem:[%s4198 + $0xc] sm:$0xf]
        %s4203 = scalar_lea.vmem [#allocation11], 3
        %v4204 = vld [vmem:[%s4203] sm:$0x1]
        %v4205 = vpack.c.bf16 %v4190, %v4189
        %v4207 = vperm.slane %v4197, 0
        %v4213 = vunpack.c.l.b16 %v4192
        %v4214 = vunpack.c.l.b16 %v4193
        %v4215 = vunpack.c.l.b16 %v4194
        %v4216 = vunpack.c.l.b16 %v4195
        %v4217 = vpack.c.b16 %v4214, %v4213
        %v4218 = vpack.c.b16 %v4216, %v4215
        %v4222 = vsel %vm463, %v4205, 0
        %4224 = vmatpush.bf16.msra.mxu0 0
        %4225 = vmatpush.bf16.msra.mxu0 0
        %4226 = vmatpush.bf16.msra.mxu0 0
        %4227 = vmatpush.bf16.msra.mxu0 0
        %4228 = vmatpush.bf16.msra.mxu0 0
        %4229 = vmatpush.bf16.msra.mxu0 0
        %4230 = vmatpush.bf16.msra.mxu0 %v4218
        %4231 = vmatpush.bf16.msra.mxu0 %v4217
        %4232 = vmatmul.bf16.gmra.mxu0 %v4222
        %v4233 = vpop.f32.mrf.mxu0
        %v4234 = vadd.f32 %v4207, %v4233
        %v4235 = vpop.f32.mrf.mxu0
        %v4236 = vadd.f32 %v4207, %v4235
        %4237 = vdwg.mxu0
        %v4238 = vpack.c.bf16 %v4142, %v4141
        %4239 = vrot.lane.b32.xlu0 %v4217, 96
        %v4240 = vpop.permute.xlu0 %4239
        %4241 = vrot.lane.b32.xlu0 %v4218, 96
        %v4242 = vpop.permute.xlu0 %4241
        %4245 = vrot.lane.b32.xlu0 %v4207, 96
        %v4246 = vpop.permute.xlu0 %4245
        %v4249 = vsel %vm463, %v4238, 0
        %4251 = vmatpush.bf16.msra.mxu0 0
        %4252 = vmatpush.bf16.msra.mxu0 0
        %4253 = vmatpush.bf16.msra.mxu0 0
        %4254 = vmatpush.bf16.msra.mxu0 0
        %4255 = vmatpush.bf16.msra.mxu0 0
        %4256 = vmatpush.bf16.msra.mxu0 0
        %4257 = vmatpush.bf16.msra.mxu0 %v4242
        %4258 = vmatpush.bf16.msra.mxu0 %v4240
        %4259 = vmatmul.bf16.gmra.mxu0 %v4249
        %v4260 = vpop.f32.mrf.mxu0
        %v4261 = vadd.f32 %v4246, %v4260
        %v4262 = vpop.f32.mrf.mxu0
        %v4263 = vadd.f32 %v4246, %v4262
        %4264 = vdwg.mxu0
        %v4265 = vpack.c.bf16 %v4234, %v4234
        %v4266 = vpack.c.bf16 %v4236, %v4236
        %v4267 = vpack.c.bf16 %v4261, %v4261
        %v4268 = vpack.c.bf16 %v4263, %v4263
        %v4270 = vsel %vm631, %v4265, 0
        %v4273 = vsel %vm631, %v4267, 0
        %4275 = vmatpush.bf16.xpose.msra.mxu0 0
        %4276 = vmatpush.bf16.xpose.msra.mxu0 0
        %4277 = vmatpush.bf16.xpose.msra.mxu0 0
        %4278 = vmatpush.bf16.xpose.msra.mxu0 0
        %4279 = vmatpush.bf16.xpose.msra.mxu0 0
        %4280 = vmatpush.bf16.xpose.msra.mxu0 0
        %4281 = vmatpush.bf16.xpose.msra.mxu0 0
        %4282 = vmatpush.bf16.xpose.msra.mxu0 %v4273
        %4283 = vmatmul.bf16.gmra.mxu0 %v4270
        %v4284 = vpop.f32.mrf.mxu0
        %v4285 = vadd.f32 0.0, %v4284
        %v4286 = vpop.f32.mrf.mxu0
        %4287 = vdwg.mxu0
        %v4289 = vsel %vm631, %v4266, 0
        %v4292 = vsel %vm631, %v4268, 0
        %4294 = vmatpush.bf16.xpose.msra.mxu0 0
        %4295 = vmatpush.bf16.xpose.msra.mxu0 0
        %4296 = vmatpush.bf16.xpose.msra.mxu0 0
        %4297 = vmatpush.bf16.xpose.msra.mxu0 0
        %4298 = vmatpush.bf16.xpose.msra.mxu0 0
        %4299 = vmatpush.bf16.xpose.msra.mxu0 0
        %4300 = vmatpush.bf16.xpose.msra.mxu0 0
        %4301 = vmatpush.bf16.xpose.msra.mxu0 %v4292
        %4302 = vmatmul.bf16.gmra.mxu0 %v4289
        %v4303 = vpop.f32.mrf.mxu0
        %v4304 = vadd.f32 0.0, %v4303
        %v4305 = vpop.f32.mrf.mxu0
        %4306 = vdwg.mxu0
        %v4307 = vsel %vm631, %v4285, -inf
        %4308 = vmax.xlane.f32.xlu0 %v4307
        %v4309 = vpop.xlane.xlu0 %4308
        %v4310 = vsel %vm631, %v4304, -inf
        %4311 = vmax.xlane.f32.xlu0 %v4310
        %v4312 = vpop.xlane.xlu0 %4311
        %v4313 = vsub.f32 %v4285, %v4309
        %v4314 = vsub.f32 %v4304, %v4312
        %v4315 = vmul.f32 %v4313, 1.442695
        %v4316 = vpow.pop %v4315
        %v4317 = vmul.f32 %v4314, 1.442695
        %v4318 = vpow.pop %v4317
        %v4319 = vsel %vm631, %v4316, 0.0
        %4320 = vadd.xlane.f32.xlu0 %v4319
        %v4321 = vpop.xlane.xlu0 %4320
        %v4322 = vsel %vm631, %v4318, 0.0
        %4323 = vadd.xlane.f32.xlu0 %v4322
        %v4324 = vpop.xlane.xlu0 %4323
        %v4325 = vrcp.pop %v4321
        %v4326 = vmul.f32 %v4321, %v4325
        %v4327 = vsub.f32 1.0, %v4326
        %v4328 = vmul.f32 %v4325, %v4327
        %v4329 = vadd.f32 %v4325, %v4328
        %vm4330 = vweird.f32 %v4321
        %vm4331 = vweird.f32 %v4325
        %vm4332 = vmor %vm4330, %vm4331
        %v4333 = vsel %vm4332, %v4325, %v4329
        %v4334 = vand.u32 2147483647, %v4321
        %vm4335 = vcmp.eq.f32.partialorder %v4334, 8.507059e+37
        %v4336 = vand.u32 %v4321, 2147483648
        %v4337 = vor.u32 1.1754944e-38, %v4336
        %v4338 = vsel %vm4335, %v4337, %v4333
        %v4339 = vmul.f32 %v4316, %v4338
        %v4340 = vrcp.pop %v4324
        %v4341 = vmul.f32 %v4324, %v4340
        %v4342 = vsub.f32 1.0, %v4341
        %v4343 = vmul.f32 %v4340, %v4342
        %v4344 = vadd.f32 %v4340, %v4343
        %vm4345 = vweird.f32 %v4324
        %vm4346 = vweird.f32 %v4340
        %vm4347 = vmor %vm4345, %vm4346
        %v4348 = vsel %vm4347, %v4340, %v4344
        %v4349 = vand.u32 2147483647, %v4324
        %vm4350 = vcmp.eq.f32.partialorder %v4349, 8.507059e+37
        %v4351 = vand.u32 %v4324, 2147483648
        %v4352 = vor.u32 1.1754944e-38, %v4351
        %v4353 = vsel %vm4350, %v4352, %v4348
        %v4354 = vmul.f32 %v4318, %v4353
        %v4355 = vpack.c.bf16 %v4339, %v4339
        %v4356 = vpack.c.bf16 %v4354, %v4354
        %v4358 = vunpack.c.l.b16 %v4267
        %v4359 = vpack.c.b16 %v4358, %v4358
        %4360 = vrot.lane.b32.xlu0 %v4359, 96
        %v4361 = vpop.permute.xlu0 %4360
        %v4363 = vsel %vm631, %v4355, 0
        %v4366 = vsel %vm1801, %v4361, 0
        %4368 = vmatpush.bf16.msra.mxu0 0
        %4369 = vmatpush.bf16.msra.mxu0 0
        %4370 = vmatpush.bf16.msra.mxu0 0
        %4371 = vmatpush.bf16.msra.mxu0 0
        %4372 = vmatpush.bf16.msra.mxu0 0
        %4373 = vmatpush.bf16.msra.mxu0 0
        %4374 = vmatpush.bf16.msra.mxu0 0
        %4375 = vmatpush.bf16.msra.mxu0 %v4366
        %4376 = vmatmul.bf16.gmra.mxu0 %v4363
        %v4377 = vpop.f32.mrf.mxu0
        %v4378 = vadd.f32 0.0, %v4377
        %v4379 = vpop.f32.mrf.mxu0
        %4380 = vdwg.mxu0
        %v4382 = vunpack.c.l.b16 %v4268
        %v4383 = vpack.c.b16 %v4382, %v4382
        %4384 = vrot.lane.b32.xlu0 %v4383, 96
        %v4385 = vpop.permute.xlu0 %4384
        %v4387 = vsel %vm631, %v4356, 0
        %v4390 = vsel %vm1801, %v4385, 0
        %4392 = vmatpush.bf16.msra.mxu0 0
        %4393 = vmatpush.bf16.msra.mxu0 0
        %4394 = vmatpush.bf16.msra.mxu0 0
        %4395 = vmatpush.bf16.msra.mxu0 0
        %4396 = vmatpush.bf16.msra.mxu0 0
        %4397 = vmatpush.bf16.msra.mxu0 0
        %4398 = vmatpush.bf16.msra.mxu0 0
        %4399 = vmatpush.bf16.msra.mxu0 %v4390
        %4400 = vmatmul.bf16.gmra.mxu0 %v4387
        %v4401 = vpop.f32.mrf.mxu0
        %v4402 = vadd.f32 0.0, %v4401
        %v4403 = vpop.f32.mrf.mxu0
        %4404 = vdwg.mxu0
        %v4406 = vunpack.c.l.b16 %v4265
        %v4407 = vpack.c.b16 %v4406, %v4406
        %4408 = vrot.lane.b32.xlu0 %v4407, 120
        %v4409 = vpop.permute.xlu0 %4408
        %4410 = vrot.lane.b32.xlu0 %v4359, 120
        %v4411 = vpop.permute.xlu0 %4410
        %v4413 = vsel %vm631, %v4409, 0
        %v4416 = vsel %vm631, %v4411, 0
        %4418 = vmatpush.bf16.xpose.msra.mxu0 0
        %4419 = vmatpush.bf16.xpose.msra.mxu0 0
        %4420 = vmatpush.bf16.xpose.msra.mxu0 0
        %4421 = vmatpush.bf16.xpose.msra.mxu0 0
        %4422 = vmatpush.bf16.xpose.msra.mxu0 0
        %4423 = vmatpush.bf16.xpose.msra.mxu0 0
        %4424 = vmatpush.bf16.xpose.msra.mxu0 0
        %4425 = vmatpush.bf16.xpose.msra.mxu0 %v4416
        %4426 = vmatmul.bf16.gmra.mxu0 %v4413
        %v4427 = vpop.f32.mrf.mxu0
        %v4428 = vadd.f32 0.0, %v4427
        %v4429 = vpop.f32.mrf.mxu0
        %4430 = vdwg.mxu0
        %v4432 = vunpack.c.l.b16 %v4266
        %v4433 = vpack.c.b16 %v4432, %v4432
        %4434 = vrot.lane.b32.xlu0 %v4433, 120
        %v4435 = vpop.permute.xlu0 %4434
        %4436 = vrot.lane.b32.xlu0 %v4383, 120
        %v4437 = vpop.permute.xlu0 %4436
        %v4439 = vsel %vm631, %v4435, 0
        %v4442 = vsel %vm631, %v4437, 0
        %4444 = vmatpush.bf16.xpose.msra.mxu0 0
        %4445 = vmatpush.bf16.xpose.msra.mxu0 0
        %4446 = vmatpush.bf16.xpose.msra.mxu0 0
        %4447 = vmatpush.bf16.xpose.msra.mxu0 0
        %4448 = vmatpush.bf16.xpose.msra.mxu0 0
        %4449 = vmatpush.bf16.xpose.msra.mxu0 0
        %4450 = vmatpush.bf16.xpose.msra.mxu0 0
        %4451 = vmatpush.bf16.xpose.msra.mxu0 %v4442
        %4452 = vmatmul.bf16.gmra.mxu0 %v4439
        %v4453 = vpop.f32.mrf.mxu0
        %v4454 = vadd.f32 0.0, %v4453
        %v4455 = vpop.f32.mrf.mxu0
        %4456 = vdwg.mxu0
        %v4457 = vsel %vm631, %v4428, -inf
        %4458 = vmax.xlane.f32.xlu0 %v4457
        %v4459 = vpop.xlane.xlu0 %4458
        %v4460 = vsel %vm631, %v4454, -inf
        %4461 = vmax.xlane.f32.xlu0 %v4460
        %v4462 = vpop.xlane.xlu0 %4461
        %v4463 = vsub.f32 %v4428, %v4459
        %v4464 = vsub.f32 %v4454, %v4462
        %v4465 = vmul.f32 %v4463, 1.442695
        %v4466 = vpow.pop %v4465
        %v4467 = vmul.f32 %v4464, 1.442695
        %v4468 = vpow.pop %v4467
        %v4469 = vsel %vm631, %v4466, 0.0
        %4470 = vadd.xlane.f32.xlu0 %v4469
        %v4471 = vpop.xlane.xlu0 %4470
        %v4472 = vsel %vm631, %v4468, 0.0
        %4473 = vadd.xlane.f32.xlu0 %v4472
        %v4474 = vpop.xlane.xlu0 %4473
        %v4475 = vrcp.pop %v4471
        %v4476 = vmul.f32 %v4471, %v4475
        %v4477 = vsub.f32 1.0, %v4476
        %v4478 = vmul.f32 %v4475, %v4477
        %v4479 = vadd.f32 %v4475, %v4478
        %vm4480 = vweird.f32 %v4471
        %vm4481 = vweird.f32 %v4475
        %vm4482 = vmor %vm4480, %vm4481
        %v4483 = vsel %vm4482, %v4475, %v4479
        %v4484 = vand.u32 2147483647, %v4471
        %vm4485 = vcmp.eq.f32.partialorder %v4484, 8.507059e+37
        %v4486 = vand.u32 %v4471, 2147483648
        %v4487 = vor.u32 1.1754944e-38, %v4486
        %v4488 = vsel %vm4485, %v4487, %v4483
        %v4489 = vmul.f32 %v4466, %v4488
        %v4490 = vrcp.pop %v4474
        %v4491 = vmul.f32 %v4474, %v4490
        %v4492 = vsub.f32 1.0, %v4491
        %v4493 = vmul.f32 %v4490, %v4492
        %v4494 = vadd.f32 %v4490, %v4493
        %vm4495 = vweird.f32 %v4474
        %vm4496 = vweird.f32 %v4490
        %vm4497 = vmor %vm4495, %vm4496
        %v4498 = vsel %vm4497, %v4490, %v4494
        %v4499 = vand.u32 2147483647, %v4474
        %vm4500 = vcmp.eq.f32.partialorder %v4499, 8.507059e+37
        %v4501 = vand.u32 %v4474, 2147483648
        %v4502 = vor.u32 1.1754944e-38, %v4501
        %v4503 = vsel %vm4500, %v4502, %v4498
        %v4504 = vmul.f32 %v4468, %v4503
        %v4505 = vpack.c.bf16 %v4489, %v4489
        %v4506 = vpack.c.bf16 %v4504, %v4504
        %4507 = vrot.lane.b32.xlu0 %v4359, 88
        %v4508 = vpop.permute.xlu0 %4507
        %v4510 = vsel %vm631, %v4505, 0
        %v4513 = vsel %vm1801, %v4508, 0
        %4515 = vmatpush.bf16.msra.mxu0 0
        %4516 = vmatpush.bf16.msra.mxu0 0
        %4517 = vmatpush.bf16.msra.mxu0 0
        %4518 = vmatpush.bf16.msra.mxu0 0
        %4519 = vmatpush.bf16.msra.mxu0 0
        %4520 = vmatpush.bf16.msra.mxu0 0
        %4521 = vmatpush.bf16.msra.mxu0 0
        %4522 = vmatpush.bf16.msra.mxu0 %v4513
        %4523 = vmatmul.bf16.gmra.mxu0 %v4510
        %v4524 = vpop.f32.mrf.mxu0
        %v4525 = vadd.f32 0.0, %v4524
        %v4526 = vpop.f32.mrf.mxu0
        %4527 = vdwg.mxu0
        %4528 = vrot.lane.b32.xlu0 %v4383, 88
        %v4529 = vpop.permute.xlu0 %4528
        %v4531 = vsel %vm631, %v4506, 0
        %v4534 = vsel %vm1801, %v4529, 0
        %4536 = vmatpush.bf16.msra.mxu0 0
        %4537 = vmatpush.bf16.msra.mxu0 0
        %4538 = vmatpush.bf16.msra.mxu0 0
        %4539 = vmatpush.bf16.msra.mxu0 0
        %4540 = vmatpush.bf16.msra.mxu0 0
        %4541 = vmatpush.bf16.msra.mxu0 0
        %4542 = vmatpush.bf16.msra.mxu0 0
        %4543 = vmatpush.bf16.msra.mxu0 %v4534
        %4544 = vmatmul.bf16.gmra.mxu0 %v4531
        %v4545 = vpop.f32.mrf.mxu0
        %v4546 = vadd.f32 0.0, %v4545
        %v4547 = vpop.f32.mrf.mxu0
        %4548 = vdwg.mxu0
        %4549 = vrot.lane.b32.xlu0 %v4407, 112
        %v4550 = vpop.permute.xlu0 %4549
        %4551 = vrot.lane.b32.xlu0 %v4359, 112
        %v4552 = vpop.permute.xlu0 %4551
        %v4554 = vsel %vm631, %v4550, 0
        %v4557 = vsel %vm631, %v4552, 0
        %4559 = vmatpush.bf16.xpose.msra.mxu0 0
        %4560 = vmatpush.bf16.xpose.msra.mxu0 0
        %4561 = vmatpush.bf16.xpose.msra.mxu0 0
        %4562 = vmatpush.bf16.xpose.msra.mxu0 0
        %4563 = vmatpush.bf16.xpose.msra.mxu0 0
        %4564 = vmatpush.bf16.xpose.msra.mxu0 0
        %4565 = vmatpush.bf16.xpose.msra.mxu0 0
        %4566 = vmatpush.bf16.xpose.msra.mxu0 %v4557
        %4567 = vmatmul.bf16.gmra.mxu0 %v4554
        %v4568 = vpop.f32.mrf.mxu0
        %v4569 = vadd.f32 0.0, %v4568
        %v4570 = vpop.f32.mrf.mxu0
        %4571 = vdwg.mxu0
        %4572 = vrot.lane.b32.xlu0 %v4433, 112
        %v4573 = vpop.permute.xlu0 %4572
        %4574 = vrot.lane.b32.xlu0 %v4383, 112
        %v4575 = vpop.permute.xlu0 %4574
        %v4577 = vsel %vm631, %v4573, 0
        %v4580 = vsel %vm631, %v4575, 0
        %4582 = vmatpush.bf16.xpose.msra.mxu0 0
        %4583 = vmatpush.bf16.xpose.msra.mxu0 0
        %4584 = vmatpush.bf16.xpose.msra.mxu0 0
        %4585 = vmatpush.bf16.xpose.msra.mxu0 0
        %4586 = vmatpush.bf16.xpose.msra.mxu0 0
        %4587 = vmatpush.bf16.xpose.msra.mxu0 0
        %4588 = vmatpush.bf16.xpose.msra.mxu0 0
        %4589 = vmatpush.bf16.xpose.msra.mxu0 %v4580
        %4590 = vmatmul.bf16.gmra.mxu0 %v4577
        %v4591 = vpop.f32.mrf.mxu0
        %v4592 = vadd.f32 0.0, %v4591
        %v4593 = vpop.f32.mrf.mxu0
        %4594 = vdwg.mxu0
        %v4595 = vsel %vm631, %v4569, -inf
        %4596 = vmax.xlane.f32.xlu0 %v4595
        %v4597 = vpop.xlane.xlu0 %4596
        %v4598 = vsel %vm631, %v4592, -inf
        %4599 = vmax.xlane.f32.xlu0 %v4598
        %v4600 = vpop.xlane.xlu0 %4599
        %v4601 = vsub.f32 %v4569, %v4597
        %v4602 = vsub.f32 %v4592, %v4600
        %v4603 = vmul.f32 %v4601, 1.442695
        %v4604 = vpow.pop %v4603
        %v4605 = vmul.f32 %v4602, 1.442695
        %v4606 = vpow.pop %v4605
        %v4607 = vsel %vm631, %v4604, 0.0
        %4608 = vadd.xlane.f32.xlu0 %v4607
        %v4609 = vpop.xlane.xlu0 %4608
        %v4610 = vsel %vm631, %v4606, 0.0
        %4611 = vadd.xlane.f32.xlu0 %v4610
        %v4612 = vpop.xlane.xlu0 %4611
        %v4613 = vrcp.pop %v4609
        %v4614 = vmul.f32 %v4609, %v4613
        %v4615 = vsub.f32 1.0, %v4614
        %v4616 = vmul.f32 %v4613, %v4615
        %v4617 = vadd.f32 %v4613, %v4616
        %vm4618 = vweird.f32 %v4609
        %vm4619 = vweird.f32 %v4613
        %vm4620 = vmor %vm4618, %vm4619
        %v4621 = vsel %vm4620, %v4613, %v4617
        %v4622 = vand.u32 2147483647, %v4609
        %vm4623 = vcmp.eq.f32.partialorder %v4622, 8.507059e+37
        %v4624 = vand.u32 %v4609, 2147483648
        %v4625 = vor.u32 1.1754944e-38, %v4624
        %v4626 = vsel %vm4623, %v4625, %v4621
        %v4627 = vmul.f32 %v4604, %v4626
        %v4628 = vrcp.pop %v4612
        %v4629 = vmul.f32 %v4612, %v4628
        %v4630 = vsub.f32 1.0, %v4629
        %v4631 = vmul.f32 %v4628, %v4630
        %v4632 = vadd.f32 %v4628, %v4631
        %vm4633 = vweird.f32 %v4612
        %vm4634 = vweird.f32 %v4628
        %vm4635 = vmor %vm4633, %vm4634
        %v4636 = vsel %vm4635, %v4628, %v4632
        %v4637 = vand.u32 2147483647, %v4612
        %vm4638 = vcmp.eq.f32.partialorder %v4637, 8.507059e+37
        %v4639 = vand.u32 %v4612, 2147483648
        %v4640 = vor.u32 1.1754944e-38, %v4639
        %v4641 = vsel %vm4638, %v4640, %v4636
        %v4642 = vmul.f32 %v4606, %v4641
        %v4643 = vpack.c.bf16 %v4627, %v4627
        %v4644 = vpack.c.bf16 %v4642, %v4642
        %4645 = vrot.lane.b32.xlu0 %v4359, 80
        %v4646 = vpop.permute.xlu0 %4645
        %v4648 = vsel %vm631, %v4643, 0
        %v4651 = vsel %vm1801, %v4646, 0
        %4653 = vmatpush.bf16.msra.mxu0 0
        %4654 = vmatpush.bf16.msra.mxu0 0
        %4655 = vmatpush.bf16.msra.mxu0 0
        %4656 = vmatpush.bf16.msra.mxu0 0
        %4657 = vmatpush.bf16.msra.mxu0 0
        %4658 = vmatpush.bf16.msra.mxu0 0
        %4659 = vmatpush.bf16.msra.mxu0 0
        %4660 = vmatpush.bf16.msra.mxu0 %v4651
        %4661 = vmatmul.bf16.gmra.mxu0 %v4648
        %v4662 = vpop.f32.mrf.mxu0
        %v4663 = vadd.f32 0.0, %v4662
        %v4664 = vpop.f32.mrf.mxu0
        %4665 = vdwg.mxu0
        %4666 = vrot.lane.b32.xlu0 %v4383, 80
        %v4667 = vpop.permute.xlu0 %4666
        %v4669 = vsel %vm631, %v4644, 0
        %v4672 = vsel %vm1801, %v4667, 0
        %4674 = vmatpush.bf16.msra.mxu0 0
        %4675 = vmatpush.bf16.msra.mxu0 0
        %4676 = vmatpush.bf16.msra.mxu0 0
        %4677 = vmatpush.bf16.msra.mxu0 0
        %4678 = vmatpush.bf16.msra.mxu0 0
        %4679 = vmatpush.bf16.msra.mxu0 0
        %4680 = vmatpush.bf16.msra.mxu0 0
        %4681 = vmatpush.bf16.msra.mxu0 %v4672
        %4682 = vmatmul.bf16.gmra.mxu0 %v4669
        %v4683 = vpop.f32.mrf.mxu0
        %v4684 = vadd.f32 0.0, %v4683
        %v4685 = vpop.f32.mrf.mxu0
        %4686 = vdwg.mxu0
        %4687 = vrot.lane.b32.xlu0 %v4407, 104
        %v4688 = vpop.permute.xlu0 %4687
        %4689 = vrot.lane.b32.xlu0 %v4359, 104
        %v4690 = vpop.permute.xlu0 %4689
        %v4692 = vsel %vm631, %v4688, 0
        %v4695 = vsel %vm631, %v4690, 0
        %4697 = vmatpush.bf16.xpose.msra.mxu0 0
        %4698 = vmatpush.bf16.xpose.msra.mxu0 0
        %4699 = vmatpush.bf16.xpose.msra.mxu0 0
        %4700 = vmatpush.bf16.xpose.msra.mxu0 0
        %4701 = vmatpush.bf16.xpose.msra.mxu0 0
        %4702 = vmatpush.bf16.xpose.msra.mxu0 0
        %4703 = vmatpush.bf16.xpose.msra.mxu0 0
        %4704 = vmatpush.bf16.xpose.msra.mxu0 %v4695
        %4705 = vmatmul.bf16.gmra.mxu0 %v4692
        %v4706 = vpop.f32.mrf.mxu0
        %v4707 = vadd.f32 0.0, %v4706
        %v4708 = vpop.f32.mrf.mxu0
        %4709 = vdwg.mxu0
        %4710 = vrot.lane.b32.xlu0 %v4433, 104
        %v4711 = vpop.permute.xlu0 %4710
        %4712 = vrot.lane.b32.xlu0 %v4383, 104
        %v4713 = vpop.permute.xlu0 %4712
        %v4715 = vsel %vm631, %v4711, 0
        %v4718 = vsel %vm631, %v4713, 0
        %4720 = vmatpush.bf16.xpose.msra.mxu0 0
        %4721 = vmatpush.bf16.xpose.msra.mxu0 0
        %4722 = vmatpush.bf16.xpose.msra.mxu0 0
        %4723 = vmatpush.bf16.xpose.msra.mxu0 0
        %4724 = vmatpush.bf16.xpose.msra.mxu0 0
        %4725 = vmatpush.bf16.xpose.msra.mxu0 0
        %4726 = vmatpush.bf16.xpose.msra.mxu0 0
        %4727 = vmatpush.bf16.xpose.msra.mxu0 %v4718
        %4728 = vmatmul.bf16.gmra.mxu0 %v4715
        %v4729 = vpop.f32.mrf.mxu0
        %v4730 = vadd.f32 0.0, %v4729
        %v4731 = vpop.f32.mrf.mxu0
        %4732 = vdwg.mxu0
        %v4733 = vsel %vm631, %v4707, -inf
        %4734 = vmax.xlane.f32.xlu0 %v4733
        %v4735 = vpop.xlane.xlu0 %4734
        %v4736 = vsel %vm631, %v4730, -inf
        %4737 = vmax.xlane.f32.xlu0 %v4736
        %v4738 = vpop.xlane.xlu0 %4737
        %v4739 = vsub.f32 %v4707, %v4735
        %v4740 = vsub.f32 %v4730, %v4738
        %v4741 = vmul.f32 %v4739, 1.442695
        %v4742 = vpow.pop %v4741
        %v4743 = vmul.f32 %v4740, 1.442695
        %v4744 = vpow.pop %v4743
        %v4745 = vsel %vm631, %v4742, 0.0
        %4746 = vadd.xlane.f32.xlu0 %v4745
        %v4747 = vpop.xlane.xlu0 %4746
        %v4748 = vsel %vm631, %v4744, 0.0
        %4749 = vadd.xlane.f32.xlu0 %v4748
        %v4750 = vpop.xlane.xlu0 %4749
        %v4751 = vrcp.pop %v4747
        %v4752 = vmul.f32 %v4747, %v4751
        %v4753 = vsub.f32 1.0, %v4752
        %v4754 = vmul.f32 %v4751, %v4753
        %v4755 = vadd.f32 %v4751, %v4754
        %vm4756 = vweird.f32 %v4747
        %vm4757 = vweird.f32 %v4751
        %vm4758 = vmor %vm4756, %vm4757
        %v4759 = vsel %vm4758, %v4751, %v4755
        %v4760 = vand.u32 2147483647, %v4747
        %vm4761 = vcmp.eq.f32.partialorder %v4760, 8.507059e+37
        %v4762 = vand.u32 %v4747, 2147483648
        %v4763 = vor.u32 1.1754944e-38, %v4762
        %v4764 = vsel %vm4761, %v4763, %v4759
        %v4765 = vmul.f32 %v4742, %v4764
        %v4766 = vrcp.pop %v4750
        %v4767 = vmul.f32 %v4750, %v4766
        %v4768 = vsub.f32 1.0, %v4767
        %v4769 = vmul.f32 %v4766, %v4768
        %v4770 = vadd.f32 %v4766, %v4769
        %vm4771 = vweird.f32 %v4750
        %vm4772 = vweird.f32 %v4766
        %vm4773 = vmor %vm4771, %vm4772
        %v4774 = vsel %vm4773, %v4766, %v4770
        %v4775 = vand.u32 2147483647, %v4750
        %vm4776 = vcmp.eq.f32.partialorder %v4775, 8.507059e+37
        %v4777 = vand.u32 %v4750, 2147483648
        %v4778 = vor.u32 1.1754944e-38, %v4777
        %v4779 = vsel %vm4776, %v4778, %v4774
        %v4780 = vmul.f32 %v4744, %v4779
        %v4781 = vpack.c.bf16 %v4765, %v4765
        %v4782 = vpack.c.bf16 %v4780, %v4780
        %4783 = vrot.lane.b32.xlu0 %v4359, 72
        %v4784 = vpop.permute.xlu0 %4783
        %v4786 = vsel %vm631, %v4781, 0
        %v4789 = vsel %vm1801, %v4784, 0
        %4791 = vmatpush.bf16.msra.mxu0 0
        %4792 = vmatpush.bf16.msra.mxu0 0
        %4793 = vmatpush.bf16.msra.mxu0 0
        %4794 = vmatpush.bf16.msra.mxu0 0
        %4795 = vmatpush.bf16.msra.mxu0 0
        %4796 = vmatpush.bf16.msra.mxu0 0
        %4797 = vmatpush.bf16.msra.mxu0 0
        %4798 = vmatpush.bf16.msra.mxu0 %v4789
        %4799 = vmatmul.bf16.gmra.mxu0 %v4786
        %v4800 = vpop.f32.mrf.mxu0
        %v4801 = vadd.f32 0.0, %v4800
        %v4802 = vpop.f32.mrf.mxu0
        %4803 = vdwg.mxu0
        %4804 = vrot.lane.b32.xlu0 %v4383, 72
        %v4805 = vpop.permute.xlu0 %4804
        %v4807 = vsel %vm631, %v4782, 0
        %v4810 = vsel %vm1801, %v4805, 0
        %4812 = vmatpush.bf16.msra.mxu0 0
        %4813 = vmatpush.bf16.msra.mxu0 0
        %4814 = vmatpush.bf16.msra.mxu0 0
        %4815 = vmatpush.bf16.msra.mxu0 0
        %4816 = vmatpush.bf16.msra.mxu0 0
        %4817 = vmatpush.bf16.msra.mxu0 0
        %4818 = vmatpush.bf16.msra.mxu0 0
        %4819 = vmatpush.bf16.msra.mxu0 %v4810
        %4820 = vmatmul.bf16.gmra.mxu0 %v4807
        %v4821 = vpop.f32.mrf.mxu0
        %v4822 = vadd.f32 0.0, %v4821
        %v4823 = vpop.f32.mrf.mxu0
        %4824 = vdwg.mxu0
        %4827 = vrot.lane.b32.xlu0 %v4525, 8
        %v4828 = vpop.permute.xlu0 %4827
        %4829 = vrot.lane.b32.xlu0 %v4546, 8
        %v4830 = vpop.permute.xlu0 %4829
        %4835 = vrot.lane.b32.xlu0 %v4663, 16
        %v4836 = vpop.permute.xlu0 %4835
        %4837 = vrot.lane.b32.xlu0 %v4684, 16
        %v4838 = vpop.permute.xlu0 %4837
        %4843 = vrot.lane.b32.xlu0 %v4801, 24
        %v4844 = vpop.permute.xlu0 %4843
        %4845 = vrot.lane.b32.xlu0 %v4822, 24
        %v4846 = vpop.permute.xlu0 %4845
        %v4849 = vsel %vm631, %v4378, %v4828
        %v4850 = vsel %vm631, %v4402, %v4830
        %v4851 = vsel %vm679, %v4849, %v4836
        %v4852 = vsel %vm679, %v4850, %v4838
        %v4853 = vsel %vm1480, %v4851, %v4844
        %v4854 = vsel %vm1480, %v4852, %v4846
        %v4855 = vpack.c.bf16 %v4854, %v4853
        %v4857 = vperm.slane %v4204, 0
        %v4863 = vunpack.c.l.b16 %v4199
        %v4864 = vunpack.c.l.b16 %v4200
        %v4865 = vunpack.c.l.b16 %v4201
        %v4866 = vunpack.c.l.b16 %v4202
        %v4867 = vpack.c.b16 %v4864, %v4863
        %v4868 = vpack.c.b16 %v4866, %v4865
        %v4872 = vsel %vm463, %v4855, 0
        %4874 = vmatpush.bf16.msra.mxu0 0
        %4875 = vmatpush.bf16.msra.mxu0 0
        %4876 = vmatpush.bf16.msra.mxu0 0
        %4877 = vmatpush.bf16.msra.mxu0 0
        %4878 = vmatpush.bf16.msra.mxu0 0
        %4879 = vmatpush.bf16.msra.mxu0 0
        %4880 = vmatpush.bf16.msra.mxu0 %v4868
        %4881 = vmatpush.bf16.msra.mxu0 %v4867
        %4882 = vmatmul.bf16.gmra.mxu0 %v4872
        %v4883 = vpop.f32.mrf.mxu0
        %v4884 = vadd.f32 %v4857, %v4883
        %v4885 = vpop.f32.mrf.mxu0
        %v4886 = vadd.f32 %v4857, %v4885
        %4887 = vdwg.mxu0
        %v4888 = vadd.f32 %v4092, %v4884
        %v4889 = vadd.f32 %v4094, %v4886
        %v4890 = vsel %vm463, %v4888, 0.0
        %4891 = vadd.xlane.f32.xlu0 %v4890
        %v4892 = vpop.xlane.xlu0 %4891
        %v4893 = vsel %vm463, %v4889, 0.0
        %4894 = vadd.xlane.f32.xlu0 %v4893
        %v4895 = vpop.xlane.xlu0 %4894
        %v4896 = vmul.f32 %v4892, %v482
        %v4897 = vmul.f32 %v4895, %v482
        %v4898 = vsub.f32 %v4888, %v4896
        %v4899 = vsub.f32 %v4889, %v4897
        %v4900 = vmul.f32 %v4898, %v4898
        %v4901 = vmul.f32 %v4899, %v4899
        %v4902 = vsel %vm463, %v4900, 0.0
        %4903 = vadd.xlane.f32.xlu0 %v4902
        %v4904 = vpop.xlane.xlu0 %4903
        %v4905 = vsel %vm463, %v4901, 0.0
        %4906 = vadd.xlane.f32.xlu0 %v4905
        %v4907 = vpop.xlane.xlu0 %4906
        %v4908 = vmul.f32 %v4904, %v482
        %v4909 = vmul.f32 %v4907, %v482
        %v4910 = vadd.f32 %v4908, 1e-06
        %v4911 = vadd.f32 %v4909, 1e-06
        %v4912 = vrsqrt.pop %v4910
        %v4913 = vmul.f32 %v4912, %v4910
        %v4914 = vmul.f32 %v4913, %v4912
        %v4915 = vmul.f32 0.5, %v4914
        %v4916 = vsub.f32 1.5, %v4915
        %v4917 = vmul.f32 %v4912, %v4916
        %vm4918 = vweird.f32 %v4910
        %vm4919 = vweird.f32 %v4912
        %vm4920 = vmor %vm4918, %vm4919
        %v4921 = vsel %vm4920, %v4912, %v4917
        %v4922 = vrsqrt.pop %v4911
        %v4923 = vmul.f32 %v4922, %v4911
        %v4924 = vmul.f32 %v4923, %v4922
        %v4925 = vmul.f32 0.5, %v4924
        %v4926 = vsub.f32 1.5, %v4925
        %v4927 = vmul.f32 %v4922, %v4926
        %vm4928 = vweird.f32 %v4911
        %vm4929 = vweird.f32 %v4922
        %vm4930 = vmor %vm4928, %vm4929
        %v4931 = vsel %vm4930, %v4922, %v4927
        %v4932 = vmul.f32 %v4898, %v4921
        %v4933 = vmul.f32 %v4899, %v4931
        %v4934 = vmul.f32 %v4932, %v3125
        %v4935 = vmul.f32 %v4933, %v3125
        %v4936 = vadd.f32 %v4934, %v3132
        %v4937 = vadd.f32 %v4935, %v3132
        %4938 = vmatpush.bf16.msra.mxu0 0
        %4939 = vmatpush.bf16.msra.mxu0 0
        %4940 = vmatpush.bf16.msra.mxu0 0
        %4941 = vmatpush.bf16.msra.mxu0 0
        %4942 = vmatpush.bf16.msra.mxu0 0
        %4943 = vmatpush.bf16.msra.mxu0 0
        %4944 = vmatpush.bf16.msra.mxu0 %v4218
        %4945 = vmatpush.bf16.msra.mxu0 %v4217
        %4946 = vmatmul.bf16.gmra.mxu0 %v4249
        %v4947 = vpop.f32.mrf.mxu0
        %v4948 = vadd.f32 %v4207, %v4947
        %v4949 = vpop.f32.mrf.mxu0
        %v4950 = vadd.f32 %v4207, %v4949
        %4951 = vdwg.mxu0
        %v4952 = vpack.c.bf16 %v4937, %v4936
        %v4954 = vsel %vm463, %v4952, 0
        %4956 = vmatpush.bf16.msra.mxu0 0
        %4957 = vmatpush.bf16.msra.mxu0 0
        %4958 = vmatpush.bf16.msra.mxu0 0
        %4959 = vmatpush.bf16.msra.mxu0 0
        %4960 = vmatpush.bf16.msra.mxu0 0
        %4961 = vmatpush.bf16.msra.mxu0 0
        %4962 = vmatpush.bf16.msra.mxu0 %v4242
        %4963 = vmatpush.bf16.msra.mxu0 %v4240
        %4964 = vmatmul.bf16.gmra.mxu0 %v4954
        %v4965 = vpop.f32.mrf.mxu0
        %v4966 = vadd.f32 %v4246, %v4965
        %v4967 = vpop.f32.mrf.mxu0
        %v4968 = vadd.f32 %v4246, %v4967
        %4969 = vdwg.mxu0
        %v4970 = vpack.c.bf16 %v4948, %v4948
        %v4971 = vpack.c.bf16 %v4950, %v4950
        %v4972 = vpack.c.bf16 %v4966, %v4966
        %v4973 = vpack.c.bf16 %v4968, %v4968
        %v4975 = vsel %vm631, %v4970, 0
        %v4978 = vsel %vm631, %v4972, 0
        %4980 = vmatpush.bf16.xpose.msra.mxu0 0
        %4981 = vmatpush.bf16.xpose.msra.mxu0 0
        %4982 = vmatpush.bf16.xpose.msra.mxu0 0
        %4983 = vmatpush.bf16.xpose.msra.mxu0 0
        %4984 = vmatpush.bf16.xpose.msra.mxu0 0
        %4985 = vmatpush.bf16.xpose.msra.mxu0 0
        %4986 = vmatpush.bf16.xpose.msra.mxu0 0
        %4987 = vmatpush.bf16.xpose.msra.mxu0 %v4978
        %4988 = vmatmul.bf16.gmra.mxu0 %v4975
        %v4989 = vpop.f32.mrf.mxu0
        %v4990 = vadd.f32 0.0, %v4989
        %v4991 = vpop.f32.mrf.mxu0
        %4992 = vdwg.mxu0
        %v4994 = vsel %vm631, %v4971, 0
        %v4997 = vsel %vm631, %v4973, 0
        %4999 = vmatpush.bf16.xpose.msra.mxu0 0
        %5000 = vmatpush.bf16.xpose.msra.mxu0 0
        %5001 = vmatpush.bf16.xpose.msra.mxu0 0
        %5002 = vmatpush.bf16.xpose.msra.mxu0 0
        %5003 = vmatpush.bf16.xpose.msra.mxu0 0
        %5004 = vmatpush.bf16.xpose.msra.mxu0 0
        %5005 = vmatpush.bf16.xpose.msra.mxu0 0
        %5006 = vmatpush.bf16.xpose.msra.mxu0 %v4997
        %5007 = vmatmul.bf16.gmra.mxu0 %v4994
        %v5008 = vpop.f32.mrf.mxu0
        %v5009 = vadd.f32 0.0, %v5008
        %v5010 = vpop.f32.mrf.mxu0
        %5011 = vdwg.mxu0
        %v5012 = vsel %vm631, %v4990, -inf
        %5013 = vmax.xlane.f32.xlu0 %v5012
        %v5014 = vpop.xlane.xlu0 %5013
        %v5015 = vsel %vm631, %v5009, -inf
        %5016 = vmax.xlane.f32.xlu0 %v5015
        %v5017 = vpop.xlane.xlu0 %5016
        %v5018 = vsub.f32 %v4990, %v5014
        %v5019 = vsub.f32 %v5009, %v5017
        %v5020 = vmul.f32 %v5018, 1.442695
        %v5021 = vpow.pop %v5020
        %v5022 = vmul.f32 %v5019, 1.442695
        %v5023 = vpow.pop %v5022
        %v5024 = vsel %vm631, %v5021, 0.0
        %5025 = vadd.xlane.f32.xlu0 %v5024
        %v5026 = vpop.xlane.xlu0 %5025
        %v5027 = vsel %vm631, %v5023, 0.0
        %5028 = vadd.xlane.f32.xlu0 %v5027
        %v5029 = vpop.xlane.xlu0 %5028
        %v5030 = vrcp.pop %v5026
        %v5031 = vmul.f32 %v5026, %v5030
        %v5032 = vsub.f32 1.0, %v5031
        %v5033 = vmul.f32 %v5030, %v5032
        %v5034 = vadd.f32 %v5030, %v5033
        %vm5035 = vweird.f32 %v5026
        %vm5036 = vweird.f32 %v5030
        %vm5037 = vmor %vm5035, %vm5036
        %v5038 = vsel %vm5037, %v5030, %v5034
        %v5039 = vand.u32 2147483647, %v5026
        %vm5040 = vcmp.eq.f32.partialorder %v5039, 8.507059e+37
        %v5041 = vand.u32 %v5026, 2147483648
        %v5042 = vor.u32 1.1754944e-38, %v5041
        %v5043 = vsel %vm5040, %v5042, %v5038
        %v5044 = vmul.f32 %v5021, %v5043
        %v5045 = vrcp.pop %v5029
        %v5046 = vmul.f32 %v5029, %v5045
        %v5047 = vsub.f32 1.0, %v5046
        %v5048 = vmul.f32 %v5045, %v5047
        %v5049 = vadd.f32 %v5045, %v5048
        %vm5050 = vweird.f32 %v5029
        %vm5051 = vweird.f32 %v5045
        %vm5052 = vmor %vm5050, %vm5051
        %v5053 = vsel %vm5052, %v5045, %v5049
        %v5054 = vand.u32 2147483647, %v5029
        %vm5055 = vcmp.eq.f32.partialorder %v5054, 8.507059e+37
        %v5056 = vand.u32 %v5029, 2147483648
        %v5057 = vor.u32 1.1754944e-38, %v5056
        %v5058 = vsel %vm5055, %v5057, %v5053
        %v5059 = vmul.f32 %v5023, %v5058
        %v5060 = vpack.c.bf16 %v5044, %v5044
        %v5061 = vpack.c.bf16 %v5059, %v5059
        %v5063 = vunpack.c.l.b16 %v4972
        %v5064 = vpack.c.b16 %v5063, %v5063
        %5065 = vrot.lane.b32.xlu0 %v5064, 96
        %v5066 = vpop.permute.xlu0 %5065
        %v5068 = vsel %vm631, %v5060, 0
        %v5071 = vsel %vm1801, %v5066, 0
        %5073 = vmatpush.bf16.msra.mxu0 0
        %5074 = vmatpush.bf16.msra.mxu0 0
        %5075 = vmatpush.bf16.msra.mxu0 0
        %5076 = vmatpush.bf16.msra.mxu0 0
        %5077 = vmatpush.bf16.msra.mxu0 0
        %5078 = vmatpush.bf16.msra.mxu0 0
        %5079 = vmatpush.bf16.msra.mxu0 0
        %5080 = vmatpush.bf16.msra.mxu0 %v5071
        %5081 = vmatmul.bf16.gmra.mxu0 %v5068
        %v5082 = vpop.f32.mrf.mxu0
        %v5083 = vadd.f32 0.0, %v5082
        %v5084 = vpop.f32.mrf.mxu0
        %5085 = vdwg.mxu0
        %v5087 = vunpack.c.l.b16 %v4973
        %v5088 = vpack.c.b16 %v5087, %v5087
        %5089 = vrot.lane.b32.xlu0 %v5088, 96
        %v5090 = vpop.permute.xlu0 %5089
        %v5092 = vsel %vm631, %v5061, 0
        %v5095 = vsel %vm1801, %v5090, 0
        %5097 = vmatpush.bf16.msra.mxu0 0
        %5098 = vmatpush.bf16.msra.mxu0 0
        %5099 = vmatpush.bf16.msra.mxu0 0
        %5100 = vmatpush.bf16.msra.mxu0 0
        %5101 = vmatpush.bf16.msra.mxu0 0
        %5102 = vmatpush.bf16.msra.mxu0 0
        %5103 = vmatpush.bf16.msra.mxu0 0
        %5104 = vmatpush.bf16.msra.mxu0 %v5095
        %5105 = vmatmul.bf16.gmra.mxu0 %v5092
        %v5106 = vpop.f32.mrf.mxu0
        %v5107 = vadd.f32 0.0, %v5106
        %v5108 = vpop.f32.mrf.mxu0
        %5109 = vdwg.mxu0
        %v5111 = vunpack.c.l.b16 %v4970
        %v5112 = vpack.c.b16 %v5111, %v5111
        %5113 = vrot.lane.b32.xlu0 %v5112, 120
        %v5114 = vpop.permute.xlu0 %5113
        %5115 = vrot.lane.b32.xlu0 %v5064, 120
        %v5116 = vpop.permute.xlu0 %5115
        %v5118 = vsel %vm631, %v5114, 0
        %v5121 = vsel %vm631, %v5116, 0
        %5123 = vmatpush.bf16.xpose.msra.mxu0 0
        %5124 = vmatpush.bf16.xpose.msra.mxu0 0
        %5125 = vmatpush.bf16.xpose.msra.mxu0 0
        %5126 = vmatpush.bf16.xpose.msra.mxu0 0
        %5127 = vmatpush.bf16.xpose.msra.mxu0 0
        %5128 = vmatpush.bf16.xpose.msra.mxu0 0
        %5129 = vmatpush.bf16.xpose.msra.mxu0 0
        %5130 = vmatpush.bf16.xpose.msra.mxu0 %v5121
        %5131 = vmatmul.bf16.gmra.mxu0 %v5118
        %v5132 = vpop.f32.mrf.mxu0
        %v5133 = vadd.f32 0.0, %v5132
        %v5134 = vpop.f32.mrf.mxu0
        %5135 = vdwg.mxu0
        %v5137 = vunpack.c.l.b16 %v4971
        %v5138 = vpack.c.b16 %v5137, %v5137
        %5139 = vrot.lane.b32.xlu0 %v5138, 120
        %v5140 = vpop.permute.xlu0 %5139
        %5141 = vrot.lane.b32.xlu0 %v5088, 120
        %v5142 = vpop.permute.xlu0 %5141
        %v5144 = vsel %vm631, %v5140, 0
        %v5147 = vsel %vm631, %v5142, 0
        %5149 = vmatpush.bf16.xpose.msra.mxu0 0
        %5150 = vmatpush.bf16.xpose.msra.mxu0 0
        %5151 = vmatpush.bf16.xpose.msra.mxu0 0
        %5152 = vmatpush.bf16.xpose.msra.mxu0 0
        %5153 = vmatpush.bf16.xpose.msra.mxu0 0
        %5154 = vmatpush.bf16.xpose.msra.mxu0 0
        %5155 = vmatpush.bf16.xpose.msra.mxu0 0
        %5156 = vmatpush.bf16.xpose.msra.mxu0 %v5147
        %5157 = vmatmul.bf16.gmra.mxu0 %v5144
        %v5158 = vpop.f32.mrf.mxu0
        %v5159 = vadd.f32 0.0, %v5158
        %v5160 = vpop.f32.mrf.mxu0
        %5161 = vdwg.mxu0
        %v5162 = vsel %vm631, %v5133, -inf
        %5163 = vmax.xlane.f32.xlu0 %v5162
        %v5164 = vpop.xlane.xlu0 %5163
        %v5165 = vsel %vm631, %v5159, -inf
        %5166 = vmax.xlane.f32.xlu0 %v5165
        %v5167 = vpop.xlane.xlu0 %5166
        %v5168 = vsub.f32 %v5133, %v5164
        %v5169 = vsub.f32 %v5159, %v5167
        %v5170 = vmul.f32 %v5168, 1.442695
        %v5171 = vpow.pop %v5170
        %v5172 = vmul.f32 %v5169, 1.442695
        %v5173 = vpow.pop %v5172
        %v5174 = vsel %vm631, %v5171, 0.0
        %5175 = vadd.xlane.f32.xlu0 %v5174
        %v5176 = vpop.xlane.xlu0 %5175
        %v5177 = vsel %vm631, %v5173, 0.0
        %5178 = vadd.xlane.f32.xlu0 %v5177
        %v5179 = vpop.xlane.xlu0 %5178
        %v5180 = vrcp.pop %v5176
        %v5181 = vmul.f32 %v5176, %v5180
        %v5182 = vsub.f32 1.0, %v5181
        %v5183 = vmul.f32 %v5180, %v5182
        %v5184 = vadd.f32 %v5180, %v5183
        %vm5185 = vweird.f32 %v5176
        %vm5186 = vweird.f32 %v5180
        %vm5187 = vmor %vm5185, %vm5186
        %v5188 = vsel %vm5187, %v5180, %v5184
        %v5189 = vand.u32 2147483647, %v5176
        %vm5190 = vcmp.eq.f32.partialorder %v5189, 8.507059e+37
        %v5191 = vand.u32 %v5176, 2147483648
        %v5192 = vor.u32 1.1754944e-38, %v5191
        %v5193 = vsel %vm5190, %v5192, %v5188
        %v5194 = vmul.f32 %v5171, %v5193
        %v5195 = vrcp.pop %v5179
        %v5196 = vmul.f32 %v5179, %v5195
        %v5197 = vsub.f32 1.0, %v5196
        %v5198 = vmul.f32 %v5195, %v5197
        %v5199 = vadd.f32 %v5195, %v5198
        %vm5200 = vweird.f32 %v5179
        %vm5201 = vweird.f32 %v5195
        %vm5202 = vmor %vm5200, %vm5201
        %v5203 = vsel %vm5202, %v5195, %v5199
        %v5204 = vand.u32 2147483647, %v5179
        %vm5205 = vcmp.eq.f32.partialorder %v5204, 8.507059e+37
        %v5206 = vand.u32 %v5179, 2147483648
        %v5207 = vor.u32 1.1754944e-38, %v5206
        %v5208 = vsel %vm5205, %v5207, %v5203
        %v5209 = vmul.f32 %v5173, %v5208
        %v5210 = vpack.c.bf16 %v5194, %v5194
        %v5211 = vpack.c.bf16 %v5209, %v5209
        %5212 = vrot.lane.b32.xlu0 %v5064, 88
        %v5213 = vpop.permute.xlu0 %5212
        %v5215 = vsel %vm631, %v5210, 0
        %v5218 = vsel %vm1801, %v5213, 0
        %5220 = vmatpush.bf16.msra.mxu0 0
        %5221 = vmatpush.bf16.msra.mxu0 0
        %5222 = vmatpush.bf16.msra.mxu0 0
        %5223 = vmatpush.bf16.msra.mxu0 0
        %5224 = vmatpush.bf16.msra.mxu0 0
        %5225 = vmatpush.bf16.msra.mxu0 0
        %5226 = vmatpush.bf16.msra.mxu0 0
        %5227 = vmatpush.bf16.msra.mxu0 %v5218
        %5228 = vmatmul.bf16.gmra.mxu0 %v5215
        %v5229 = vpop.f32.mrf.mxu0
        %v5230 = vadd.f32 0.0, %v5229
        %v5231 = vpop.f32.mrf.mxu0
        %5232 = vdwg.mxu0
        %5233 = vrot.lane.b32.xlu0 %v5088, 88
        %v5234 = vpop.permute.xlu0 %5233
        %v5236 = vsel %vm631, %v5211, 0
        %v5239 = vsel %vm1801, %v5234, 0
        %5241 = vmatpush.bf16.msra.mxu0 0
        %5242 = vmatpush.bf16.msra.mxu0 0
        %5243 = vmatpush.bf16.msra.mxu0 0
        %5244 = vmatpush.bf16.msra.mxu0 0
        %5245 = vmatpush.bf16.msra.mxu0 0
        %5246 = vmatpush.bf16.msra.mxu0 0
        %5247 = vmatpush.bf16.msra.mxu0 0
        %5248 = vmatpush.bf16.msra.mxu0 %v5239
        %5249 = vmatmul.bf16.gmra.mxu0 %v5236
        %v5250 = vpop.f32.mrf.mxu0
        %v5251 = vadd.f32 0.0, %v5250
        %v5252 = vpop.f32.mrf.mxu0
        %5253 = vdwg.mxu0
        %5254 = vrot.lane.b32.xlu0 %v5112, 112
        %v5255 = vpop.permute.xlu0 %5254
        %5256 = vrot.lane.b32.xlu0 %v5064, 112
        %v5257 = vpop.permute.xlu0 %5256
        %v5259 = vsel %vm631, %v5255, 0
        %v5262 = vsel %vm631, %v5257, 0
        %5264 = vmatpush.bf16.xpose.msra.mxu0 0
        %5265 = vmatpush.bf16.xpose.msra.mxu0 0
        %5266 = vmatpush.bf16.xpose.msra.mxu0 0
        %5267 = vmatpush.bf16.xpose.msra.mxu0 0
        %5268 = vmatpush.bf16.xpose.msra.mxu0 0
        %5269 = vmatpush.bf16.xpose.msra.mxu0 0
        %5270 = vmatpush.bf16.xpose.msra.mxu0 0
        %5271 = vmatpush.bf16.xpose.msra.mxu0 %v5262
        %5272 = vmatmul.bf16.gmra.mxu0 %v5259
        %v5273 = vpop.f32.mrf.mxu0
        %v5274 = vadd.f32 0.0, %v5273
        %v5275 = vpop.f32.mrf.mxu0
        %5276 = vdwg.mxu0
        %5277 = vrot.lane.b32.xlu0 %v5138, 112
        %v5278 = vpop.permute.xlu0 %5277
        %5279 = vrot.lane.b32.xlu0 %v5088, 112
        %v5280 = vpop.permute.xlu0 %5279
        %v5282 = vsel %vm631, %v5278, 0
        %v5285 = vsel %vm631, %v5280, 0
        %5287 = vmatpush.bf16.xpose.msra.mxu0 0
        %5288 = vmatpush.bf16.xpose.msra.mxu0 0
        %5289 = vmatpush.bf16.xpose.msra.mxu0 0
        %5290 = vmatpush.bf16.xpose.msra.mxu0 0
        %5291 = vmatpush.bf16.xpose.msra.mxu0 0
        %5292 = vmatpush.bf16.xpose.msra.mxu0 0
        %5293 = vmatpush.bf16.xpose.msra.mxu0 0
        %5294 = vmatpush.bf16.xpose.msra.mxu0 %v5285
        %5295 = vmatmul.bf16.gmra.mxu0 %v5282
        %v5296 = vpop.f32.mrf.mxu0
        %v5297 = vadd.f32 0.0, %v5296
        %v5298 = vpop.f32.mrf.mxu0
        %5299 = vdwg.mxu0
        %v5300 = vsel %vm631, %v5274, -inf
        %5301 = vmax.xlane.f32.xlu0 %v5300
        %v5302 = vpop.xlane.xlu0 %5301
        %v5303 = vsel %vm631, %v5297, -inf
        %5304 = vmax.xlane.f32.xlu0 %v5303
        %v5305 = vpop.xlane.xlu0 %5304
        %v5306 = vsub.f32 %v5274, %v5302
        %v5307 = vsub.f32 %v5297, %v5305
        %v5308 = vmul.f32 %v5306, 1.442695
        %v5309 = vpow.pop %v5308
        %v5310 = vmul.f32 %v5307, 1.442695
        %v5311 = vpow.pop %v5310
        %v5312 = vsel %vm631, %v5309, 0.0
        %5313 = vadd.xlane.f32.xlu0 %v5312
        %v5314 = vpop.xlane.xlu0 %5313
        %v5315 = vsel %vm631, %v5311, 0.0
        %5316 = vadd.xlane.f32.xlu0 %v5315
        %v5317 = vpop.xlane.xlu0 %5316
        %v5318 = vrcp.pop %v5314
        %v5319 = vmul.f32 %v5314, %v5318
        %v5320 = vsub.f32 1.0, %v5319
        %v5321 = vmul.f32 %v5318, %v5320
        %v5322 = vadd.f32 %v5318, %v5321
        %vm5323 = vweird.f32 %v5314
        %vm5324 = vweird.f32 %v5318
        %vm5325 = vmor %vm5323, %vm5324
        %v5326 = vsel %vm5325, %v5318, %v5322
        %v5327 = vand.u32 2147483647, %v5314
        %vm5328 = vcmp.eq.f32.partialorder %v5327, 8.507059e+37
        %v5329 = vand.u32 %v5314, 2147483648
        %v5330 = vor.u32 1.1754944e-38, %v5329
        %v5331 = vsel %vm5328, %v5330, %v5326
        %v5332 = vmul.f32 %v5309, %v5331
        %v5333 = vrcp.pop %v5317
        %v5334 = vmul.f32 %v5317, %v5333
        %v5335 = vsub.f32 1.0, %v5334
        %v5336 = vmul.f32 %v5333, %v5335
        %v5337 = vadd.f32 %v5333, %v5336
        %vm5338 = vweird.f32 %v5317
        %vm5339 = vweird.f32 %v5333
        %vm5340 = vmor %vm5338, %vm5339
        %v5341 = vsel %vm5340, %v5333, %v5337
        %v5342 = vand.u32 2147483647, %v5317
        %vm5343 = vcmp.eq.f32.partialorder %v5342, 8.507059e+37
        %v5344 = vand.u32 %v5317, 2147483648
        %v5345 = vor.u32 1.1754944e-38, %v5344
        %v5346 = vsel %vm5343, %v5345, %v5341
        %v5347 = vmul.f32 %v5311, %v5346
        %v5348 = vpack.c.bf16 %v5332, %v5332
        %v5349 = vpack.c.bf16 %v5347, %v5347
        %5350 = vrot.lane.b32.xlu0 %v5064, 80
        %v5351 = vpop.permute.xlu0 %5350
        %v5353 = vsel %vm631, %v5348, 0
        %v5356 = vsel %vm1801, %v5351, 0
        %5358 = vmatpush.bf16.msra.mxu0 0
        %5359 = vmatpush.bf16.msra.mxu0 0
        %5360 = vmatpush.bf16.msra.mxu0 0
        %5361 = vmatpush.bf16.msra.mxu0 0
        %5362 = vmatpush.bf16.msra.mxu0 0
        %5363 = vmatpush.bf16.msra.mxu0 0
        %5364 = vmatpush.bf16.msra.mxu0 0
        %5365 = vmatpush.bf16.msra.mxu0 %v5356
        %5366 = vmatmul.bf16.gmra.mxu0 %v5353
        %v5367 = vpop.f32.mrf.mxu0
        %v5368 = vadd.f32 0.0, %v5367
        %v5369 = vpop.f32.mrf.mxu0
        %5370 = vdwg.mxu0
        %5371 = vrot.lane.b32.xlu0 %v5088, 80
        %v5372 = vpop.permute.xlu0 %5371
        %v5374 = vsel %vm631, %v5349, 0
        %v5377 = vsel %vm1801, %v5372, 0
        %5379 = vmatpush.bf16.msra.mxu0 0
        %5380 = vmatpush.bf16.msra.mxu0 0
        %5381 = vmatpush.bf16.msra.mxu0 0
        %5382 = vmatpush.bf16.msra.mxu0 0
        %5383 = vmatpush.bf16.msra.mxu0 0
        %5384 = vmatpush.bf16.msra.mxu0 0
        %5385 = vmatpush.bf16.msra.mxu0 0
        %5386 = vmatpush.bf16.msra.mxu0 %v5377
        %5387 = vmatmul.bf16.gmra.mxu0 %v5374
        %v5388 = vpop.f32.mrf.mxu0
        %v5389 = vadd.f32 0.0, %v5388
        %v5390 = vpop.f32.mrf.mxu0
        %5391 = vdwg.mxu0
        %5392 = vrot.lane.b32.xlu0 %v5112, 104
        %v5393 = vpop.permute.xlu0 %5392
        %5394 = vrot.lane.b32.xlu0 %v5064, 104
        %v5395 = vpop.permute.xlu0 %5394
        %v5397 = vsel %vm631, %v5393, 0
        %v5400 = vsel %vm631, %v5395, 0
        %5402 = vmatpush.bf16.xpose.msra.mxu0 0
        %5403 = vmatpush.bf16.xpose.msra.mxu0 0
        %5404 = vmatpush.bf16.xpose.msra.mxu0 0
        %5405 = vmatpush.bf16.xpose.msra.mxu0 0
        %5406 = vmatpush.bf16.xpose.msra.mxu0 0
        %5407 = vmatpush.bf16.xpose.msra.mxu0 0
        %5408 = vmatpush.bf16.xpose.msra.mxu0 0
        %5409 = vmatpush.bf16.xpose.msra.mxu0 %v5400
        %5410 = vmatmul.bf16.gmra.mxu0 %v5397
        %v5411 = vpop.f32.mrf.mxu0
        %v5412 = vadd.f32 0.0, %v5411
        %v5413 = vpop.f32.mrf.mxu0
        %5414 = vdwg.mxu0
        %5415 = vrot.lane.b32.xlu0 %v5138, 104
        %v5416 = vpop.permute.xlu0 %5415
        %5417 = vrot.lane.b32.xlu0 %v5088, 104
        %v5418 = vpop.permute.xlu0 %5417
        %v5420 = vsel %vm631, %v5416, 0
        %v5423 = vsel %vm631, %v5418, 0
        %5425 = vmatpush.bf16.xpose.msra.mxu0 0
        %5426 = vmatpush.bf16.xpose.msra.mxu0 0
        %5427 = vmatpush.bf16.xpose.msra.mxu0 0
        %5428 = vmatpush.bf16.xpose.msra.mxu0 0
        %5429 = vmatpush.bf16.xpose.msra.mxu0 0
        %5430 = vmatpush.bf16.xpose.msra.mxu0 0
        %5431 = vmatpush.bf16.xpose.msra.mxu0 0
        %5432 = vmatpush.bf16.xpose.msra.mxu0 %v5423
        %5433 = vmatmul.bf16.gmra.mxu0 %v5420
        %v5434 = vpop.f32.mrf.mxu0
        %v5435 = vadd.f32 0.0, %v5434
        %v5436 = vpop.f32.mrf.mxu0
        %5437 = vdwg.mxu0
        %v5438 = vsel %vm631, %v5412, -inf
        %5439 = vmax.xlane.f32.xlu0 %v5438
        %v5440 = vpop.xlane.xlu0 %5439
        %v5441 = vsel %vm631, %v5435, -inf
        %5442 = vmax.xlane.f32.xlu0 %v5441
        %v5443 = vpop.xlane.xlu0 %5442
        %v5444 = vsub.f32 %v5412, %v5440
        %v5445 = vsub.f32 %v5435, %v5443
        %v5446 = vmul.f32 %v5444, 1.442695
        %v5447 = vpow.pop %v5446
        %v5448 = vmul.f32 %v5445, 1.442695
        %v5449 = vpow.pop %v5448
        %v5450 = vsel %vm631, %v5447, 0.0
        %5451 = vadd.xlane.f32.xlu0 %v5450
        %v5452 = vpop.xlane.xlu0 %5451
        %v5453 = vsel %vm631, %v5449, 0.0
        %5454 = vadd.xlane.f32.xlu0 %v5453
        %v5455 = vpop.xlane.xlu0 %5454
        %v5456 = vrcp.pop %v5452
        %v5457 = vmul.f32 %v5452, %v5456
        %v5458 = vsub.f32 1.0, %v5457
        %v5459 = vmul.f32 %v5456, %v5458
        %v5460 = vadd.f32 %v5456, %v5459
        %vm5461 = vweird.f32 %v5452
        %vm5462 = vweird.f32 %v5456
        %vm5463 = vmor %vm5461, %vm5462
        %v5464 = vsel %vm5463, %v5456, %v5460
        %v5465 = vand.u32 2147483647, %v5452
        %vm5466 = vcmp.eq.f32.partialorder %v5465, 8.507059e+37
        %v5467 = vand.u32 %v5452, 2147483648
        %v5468 = vor.u32 1.1754944e-38, %v5467
        %v5469 = vsel %vm5466, %v5468, %v5464
        %v5470 = vmul.f32 %v5447, %v5469
        %v5471 = vrcp.pop %v5455
        %v5472 = vmul.f32 %v5455, %v5471
        %v5473 = vsub.f32 1.0, %v5472
        %v5474 = vmul.f32 %v5471, %v5473
        %v5475 = vadd.f32 %v5471, %v5474
        %vm5476 = vweird.f32 %v5455
        %vm5477 = vweird.f32 %v5471
        %vm5478 = vmor %vm5476, %vm5477
        %v5479 = vsel %vm5478, %v5471, %v5475
        %v5480 = vand.u32 2147483647, %v5455
        %vm5481 = vcmp.eq.f32.partialorder %v5480, 8.507059e+37
        %v5482 = vand.u32 %v5455, 2147483648
        %v5483 = vor.u32 1.1754944e-38, %v5482
        %v5484 = vsel %vm5481, %v5483, %v5479
        %v5485 = vmul.f32 %v5449, %v5484
        %v5486 = vpack.c.bf16 %v5470, %v5470
        %v5487 = vpack.c.bf16 %v5485, %v5485
        %5488 = vrot.lane.b32.xlu0 %v5064, 72
        %v5489 = vpop.permute.xlu0 %5488
        %v5491 = vsel %vm631, %v5486, 0
        %v5494 = vsel %vm1801, %v5489, 0
        %5496 = vmatpush.bf16.msra.mxu0 0
        %5497 = vmatpush.bf16.msra.mxu0 0
        %5498 = vmatpush.bf16.msra.mxu0 0
        %5499 = vmatpush.bf16.msra.mxu0 0
        %5500 = vmatpush.bf16.msra.mxu0 0
        %5501 = vmatpush.bf16.msra.mxu0 0
        %5502 = vmatpush.bf16.msra.mxu0 0
        %5503 = vmatpush.bf16.msra.mxu0 %v5494
        %5504 = vmatmul.bf16.gmra.mxu0 %v5491
        %v5505 = vpop.f32.mrf.mxu0
        %v5506 = vadd.f32 0.0, %v5505
        %v5507 = vpop.f32.mrf.mxu0
        %5508 = vdwg.mxu0
        %5509 = vrot.lane.b32.xlu0 %v5088, 72
        %v5510 = vpop.permute.xlu0 %5509
        %v5512 = vsel %vm631, %v5487, 0
        %v5515 = vsel %vm1801, %v5510, 0
        %5517 = vmatpush.bf16.msra.mxu0 0
        %5518 = vmatpush.bf16.msra.mxu0 0
        %5519 = vmatpush.bf16.msra.mxu0 0
        %5520 = vmatpush.bf16.msra.mxu0 0
        %5521 = vmatpush.bf16.msra.mxu0 0
        %5522 = vmatpush.bf16.msra.mxu0 0
        %5523 = vmatpush.bf16.msra.mxu0 0
        %5524 = vmatpush.bf16.msra.mxu0 %v5515
        %5525 = vmatmul.bf16.gmra.mxu0 %v5512
        %v5526 = vpop.f32.mrf.mxu0
        %v5527 = vadd.f32 0.0, %v5526
        %v5528 = vpop.f32.mrf.mxu0
        %5529 = vdwg.mxu0
        %5532 = vrot.lane.b32.xlu0 %v5230, 8
        %v5533 = vpop.permute.xlu0 %5532
        %5534 = vrot.lane.b32.xlu0 %v5251, 8
        %v5535 = vpop.permute.xlu0 %5534
        %5540 = vrot.lane.b32.xlu0 %v5368, 16
        %v5541 = vpop.permute.xlu0 %5540
        %5542 = vrot.lane.b32.xlu0 %v5389, 16
        %v5543 = vpop.permute.xlu0 %5542
        %5548 = vrot.lane.b32.xlu0 %v5506, 24
        %v5549 = vpop.permute.xlu0 %5548
        %5550 = vrot.lane.b32.xlu0 %v5527, 24
        %v5551 = vpop.permute.xlu0 %5550
        %v5554 = vsel %vm631, %v5083, %v5533
        %v5555 = vsel %vm631, %v5107, %v5535
        %v5556 = vsel %vm679, %v5554, %v5541
        %v5557 = vsel %vm679, %v5555, %v5543
        %v5558 = vsel %vm1480, %v5556, %v5549
        %v5559 = vsel %vm1480, %v5557, %v5551
        %v5560 = vpack.c.bf16 %v5559, %v5558
        %v5562 = vsel %vm463, %v5560, 0
        %5564 = vmatpush.bf16.msra.mxu0 0
        %5565 = vmatpush.bf16.msra.mxu0 0
        %5566 = vmatpush.bf16.msra.mxu0 0
        %5567 = vmatpush.bf16.msra.mxu0 0
        %5568 = vmatpush.bf16.msra.mxu0 0
        %5569 = vmatpush.bf16.msra.mxu0 0
        %5570 = vmatpush.bf16.msra.mxu0 %v4868
        %5571 = vmatpush.bf16.msra.mxu0 %v4867
        %5572 = vmatmul.bf16.gmra.mxu0 %v5562
        %v5573 = vpop.f32.mrf.mxu0
        %v5574 = vadd.f32 %v4857, %v5573
        %v5575 = vpop.f32.mrf.mxu0
        %v5576 = vadd.f32 %v4857, %v5575
        %5577 = vdwg.mxu0
        %v5578 = vadd.f32 %v4091, %v5574
        %v5579 = vadd.f32 %v4093, %v5576
        %5580 = vst.msk [vmem:[#allocation2] sm:$0xff] %vm463, %v5578
        %5581 = vst.msk [vmem:[#allocation2 + $0x10] sm:$0xff] %vm463, %v5579
        %5582 = vst.msk [vmem:[#allocation2 + $0x8] sm:$0xff] %vm463, %v4888
        %5583 = vst.msk [vmem:[#allocation2 + $0x18] sm:$0xff] %vm463, %v4889
        %v5584 = vld [vmem:[#allocation2] sm:$0xff]
        %v5585 = vld [vmem:[#allocation2 + $0x8] sm:$0xff]
        %v5586 = vld [vmem:[#allocation2 + $0x10] sm:$0xff]
        %v5587 = vld [vmem:[#allocation2 + $0x18] sm:$0xff]
        %v5588 = vld [vmem:[#allocation12] sm:$0x1]
        %v5589 = vld [vmem:[#allocation14] sm:$0x1]
        %v5590 = vsel %vm463, %v5584, 0.0
        %5591 = vadd.xlane.f32.xlu0 %v5590
        %v5592 = vpop.xlane.xlu0 %5591
        %v5593 = vsel %vm463, %v5585, 0.0
        %5594 = vadd.xlane.f32.xlu0 %v5593
        %v5595 = vpop.xlane.xlu0 %5594
        %v5596 = vsel %vm463, %v5586, 0.0
        %5597 = vadd.xlane.f32.xlu0 %v5596
        %v5598 = vpop.xlane.xlu0 %5597
        %v5599 = vsel %vm463, %v5587, 0.0
        %5600 = vadd.xlane.f32.xlu0 %v5599
        %v5601 = vpop.xlane.xlu0 %5600
        %v5602 = vmul.f32 %v5592, %v482
        %v5603 = vmul.f32 %v5595, %v482
        %v5604 = vmul.f32 %v5598, %v482
        %v5605 = vmul.f32 %v5601, %v482
        %v5606 = vsub.f32 %v5584, %v5602
        %v5607 = vsub.f32 %v5585, %v5603
        %v5608 = vsub.f32 %v5586, %v5604
        %v5609 = vsub.f32 %v5587, %v5605
        %v5610 = vmul.f32 %v5606, %v5606
        %v5611 = vmul.f32 %v5607, %v5607
        %v5612 = vmul.f32 %v5608, %v5608
        %v5613 = vmul.f32 %v5609, %v5609
        %v5614 = vsel %vm463, %v5610, 0.0
        %5615 = vadd.xlane.f32.xlu0 %v5614
        %v5616 = vpop.xlane.xlu0 %5615
        %v5617 = vsel %vm463, %v5611, 0.0
        %5618 = vadd.xlane.f32.xlu0 %v5617
        %v5619 = vpop.xlane.xlu0 %5618
        %v5620 = vsel %vm463, %v5612, 0.0
        %5621 = vadd.xlane.f32.xlu0 %v5620
        %v5622 = vpop.xlane.xlu0 %5621
        %v5623 = vsel %vm463, %v5613, 0.0
        %5624 = vadd.xlane.f32.xlu0 %v5623
        %v5625 = vpop.xlane.xlu0 %5624
        %v5626 = vmul.f32 %v5616, %v482
        %v5627 = vmul.f32 %v5619, %v482
        %v5628 = vmul.f32 %v5622, %v482
        %v5629 = vmul.f32 %v5625, %v482
        %v5630 = vadd.f32 %v5626, 1e-06
        %v5631 = vadd.f32 %v5627, 1e-06
        %v5632 = vadd.f32 %v5628, 1e-06
        %v5633 = vadd.f32 %v5629, 1e-06
        %v5634 = vrsqrt.pop %v5630
        %v5635 = vmul.f32 %v5634, %v5630
        %v5636 = vmul.f32 %v5635, %v5634
        %v5637 = vmul.f32 0.5, %v5636
        %v5638 = vsub.f32 1.5, %v5637
        %v5639 = vmul.f32 %v5634, %v5638
        %vm5640 = vweird.f32 %v5630
        %vm5641 = vweird.f32 %v5634
        %vm5642 = vmor %vm5640, %vm5641
        %v5643 = vsel %vm5642, %v5634, %v5639
        %v5644 = vrsqrt.pop %v5631
        %v5645 = vmul.f32 %v5644, %v5631
        %v5646 = vmul.f32 %v5645, %v5644
        %v5647 = vmul.f32 0.5, %v5646
        %v5648 = vsub.f32 1.5, %v5647
        %v5649 = vmul.f32 %v5644, %v5648
        %vm5650 = vweird.f32 %v5631
        %vm5651 = vweird.f32 %v5644
        %vm5652 = vmor %vm5650, %vm5651
        %v5653 = vsel %vm5652, %v5644, %v5649
        %v5654 = vrsqrt.pop %v5632
        %v5655 = vmul.f32 %v5654, %v5632
        %v5656 = vmul.f32 %v5655, %v5654
        %v5657 = vmul.f32 0.5, %v5656
        %v5658 = vsub.f32 1.5, %v5657
        %v5659 = vmul.f32 %v5654, %v5658
        %vm5660 = vweird.f32 %v5632
        %vm5661 = vweird.f32 %v5654
        %vm5662 = vmor %vm5660, %vm5661
        %v5663 = vsel %vm5662, %v5654, %v5659
        %v5664 = vrsqrt.pop %v5633
        %v5665 = vmul.f32 %v5664, %v5633
        %v5666 = vmul.f32 %v5665, %v5664
        %v5667 = vmul.f32 0.5, %v5666
        %v5668 = vsub.f32 1.5, %v5667
        %v5669 = vmul.f32 %v5664, %v5668
        %vm5670 = vweird.f32 %v5633
        %vm5671 = vweird.f32 %v5664
        %vm5672 = vmor %vm5670, %vm5671
        %v5673 = vsel %vm5672, %v5664, %v5669
        %v5674 = vmul.f32 %v5606, %v5643
        %v5675 = vmul.f32 %v5607, %v5653
        %v5676 = vmul.f32 %v5608, %v5663
        %v5677 = vmul.f32 %v5609, %v5673
        %v5679 = vperm.slane %v5588, 0
        %v5681 = vmul.f32 %v5674, %v5679
        %v5682 = vmul.f32 %v5675, %v5679
        %v5683 = vmul.f32 %v5676, %v5679
        %v5684 = vmul.f32 %v5677, %v5679
        %v5686 = vperm.slane %v5589, 0
        %v5688 = vadd.f32 %v5681, %v5686
        %v5689 = vadd.f32 %v5682, %v5686
        %v5690 = vadd.f32 %v5683, %v5686
        %v5691 = vadd.f32 %v5684, %v5686
        %5692 = vst.msk [vmem:[%s448] sm:$0xff] %vm463, %v5688
        %5693 = vst.msk [vmem:[%s448 + $0x8] sm:$0xff] %vm463, %v5689
        %5694 = vst.msk [vmem:[%s448 + $0x10] sm:$0xff] %vm463, %v5690
        %5695 = vst.msk [vmem:[%s448 + $0x18] sm:$0xff] %vm463, %v5691
        %s5696 = sand.u32 %s231, 1
        %s5697 = scalar_lea.sflag [#allocation5], %s5696
        %s5698 = sand.u32 %s231, 1
        %s5699 = smul.addr %s5698, 32
        %s5700 = scalar_lea.vmem [#allocation15], %s5699
        // Predicated region
        $region85: #{_lambda_.1} parent=55 // pred_check
          %p5701 = pneg %p241
        $region86: #{_lambda_.1} parent=55 // pred_check_branch
          %5703 = sbr.rel (%p5701) target = $region88
        $region87: #{_lambda_.1} parent=55 // pred_region
          %s5704 = smul.u32 2, %s29
          %5706 = vsyncadd %s5697, 0
          %s5707 = smul.addr %s5704, 2
          %s5708 = smul.addr %s5707, 8
          %s5709 = scalar_lea.hbm %s9, %s5708
          %s5710 = sshll.u32 %s5700, 4
          %s5711 = int_to_ptr.vmem [resolvable:$true] %s5710
          %s5712 = sshll.u32 %s5709, 4
          %s5713 = int_to_ptr.hbm [resolvable:$true] %s5712
          %5718 = dma.vmem_to_hbm [thread:$0]  %s5711, 512, %s5713, %s5697, 128, 128, 8
        $region88: #{_lambda_.1} parent=55 // pred_fallthru
          _
      $region56: #{_lambda_.1} parent=5 // pred_fallthru
        _
      %p5719 = scmp.le.s32.totalorder 2, %s24
      // Predicated region
      $region89: #{_lambda_.1} parent=5 // pred_check
        %p5720 = pneg %p5719
      $region90: #{_lambda_.1} parent=5 // pred_check_branch
        %5722 = sbr.rel (%p5720) target = $region92
      $region91: #{_lambda_.1} parent=5 // pred_region
        %s5723 = ssub.s32 %s24, 2
        // Predicated region
        $region93: #{_lambda_.1} parent=91 // pred_check
          %p5724 = pneg %p247
        $region94: #{_lambda_.1} parent=91 // pred_check_branch
          %5726 = sbr.rel (%p5724) target = $region96
        $region95: #{_lambda_.1} parent=91 // pred_region
          %s5727 = sand.u32 %s232, 1
          %s5728 = scalar_lea.sflag [#allocation5], %s5727
          %s5729 = sand.u32 %s232, 1
          %s5730 = smul.addr %s5729, 32
          %s5731 = scalar_lea.vmem [#allocation15], %s5730
          %5733 = dma.done %s5728, 512
        $region96: #{_lambda_.1} parent=91 // pred_fallthru
          _
      $region92: #{_lambda_.1} parent=5 // pred_fallthru
        _
    $region6: #{_lambda_.1} parent=1 // loop_footer
      %s28 = sadd.s32 1, %s24
    $region7: #{_lambda_.1} parent=1 // loop_footer_branch
      %23 = sbr.rel target = $region3
    $region8: #{_lambda_.1} parent=1 // loop_exit
      _
    %5734 = vsyncpa [#allocation4], 1
    %s5735 = scalar_lea.sflag [#allocation4], 1
    %5736 = vsyncpa %s5735, 1
    %5737 = vsyncpa [#allocation7], 1
    %5738 = vsyncpa [#allocation10], 1
    %5739 = vsyncpa [#allocation13], 1
    %5740 = vsyncpa [#allocation5], 1
    %s5741 = scalar_lea.sflag [#allocation5], 1
    %5742 = vsyncpa %s5741, 1

</llo_original>
